<compile_context>
chip_gen: v5e
topology: v5e:2x2
jax: 0.10.0
libtpu: 0.0.40
codegen_flags: <defaults>
</compile_context>

<pallas_src>
import functools

import jax
import jax.numpy as jnp
import numpy as np
from jax.experimental import pallas as pl
from jax.experimental.pallas import tpu as pltpu

LN_EPS = 1e-5                       # torch.nn.LayerNorm default
PREC = jax.lax.Precision.DEFAULT    # native bf16 MXU path inside the kernel


# ----------------------------------------------------------------------------
# Fused Pallas kernel: norm1 + window-MSA + proj + residual + norm2 + MLP + residual
# ----------------------------------------------------------------------------
def _fused_block_kernel(x_ref, bias_ref, wqkv_ref, bqkv_ref, wproj_ref, bproj_ref,
                        w1_ref, b1_ref, w2_ref, b2_ref, o_ref, *, num_heads, head_dim):
    xw = x_ref[...]                                   # (WS, N, C) raw (shifted) windows
    WS, N, C = xw.shape
    T = WS * N
    x2 = xw.reshape(T, C)                             # shortcut, f32

    # ---- LayerNorm(norm1); gamma/beta folded into wqkv/bqkv by the wrapper ----
    mu = jnp.mean(x2, axis=-1, keepdims=True)
    xc = x2 - mu
    var = jnp.mean(xc * xc, axis=-1, keepdims=True)
    xh = (xc * jax.lax.rsqrt(var + LN_EPS)).astype(jnp.bfloat16)

    # ---- fused qkv projection: one wide (C -> 3C) bf16 matmul, f32 accumulate ----
    qkv = jnp.dot(xh, wqkv_ref[...], precision=PREC,
                  preferred_element_type=jnp.float32) + bqkv_ref[...]
    qkv = qkv.astype(jnp.bfloat16).reshape(WS, N, 3 * C)

    bias = bias_ref[...]                              # (1 or WS, num_heads, N, N) f32

    # ---- multi-head window attention (q pre-scaled via the weight fold) ----
    heads = []
    for h in range(num_heads):
        lo = h * head_dim
        qh = qkv[:, :, lo:lo + head_dim]                              # (WS, N, hd) bf16
        kh = qkv[:, :, C + lo:C + lo + head_dim]
        vh = qkv[:, :, 2 * C + lo:2 * C + lo + head_dim]
        s = jnp.einsum('wnd,wmd->wnm', qh, kh, precision=PREC,
                       preferred_element_type=jnp.float32)            # (WS, N, N) f32
        s = s + bias[:, h]                                            # rel bias (+mask)
        s = s - jnp.max(s, axis=-1, keepdims=True)                    # stable softmax
        p = jnp.exp(s)
        denom = jnp.sum(p, axis=-1, keepdims=True)
        oh = jnp.einsum('wnm,wmd->wnd', p.astype(jnp.bfloat16), vh, precision=PREC,
                        preferred_element_type=jnp.float32)           # (WS, N, hd)
        # deferred normalization: scale the narrow output, reciprocal on the EUP
        heads.append(oh * pl.reciprocal(denom, approx=True))
    ao = jnp.concatenate(heads, axis=-1).reshape(T, C).astype(jnp.bfloat16)

    # ---- output projection + residual 1 (drop_path = identity at rate 0) ----
    y = x2 + jnp.dot(ao, wproj_ref[...], precision=PREC,
                     preferred_element_type=jnp.float32) + bproj_ref[...]

    # ---- LayerNorm(norm2) (affine folded into w1/b1) + MLP + residual 2 ----
    mu2 = jnp.mean(y, axis=-1, keepdims=True)
    yc = y - mu2
    var2 = jnp.mean(yc * yc, axis=-1, keepdims=True)
    yh = (yc * jax.lax.rsqrt(var2 + LN_EPS)).astype(jnp.bfloat16)
    hmid = jnp.dot(yh, w1_ref[...], precision=PREC,
                   preferred_element_type=jnp.float32) + b1_ref[...]
    # tanh-approx GELU (see TODO at top of file)
    hmid = 0.5 * hmid * (1.0 + jnp.tanh(0.7978845608028654 *
                                        (hmid + 0.044715 * hmid * hmid * hmid)))
    z = jnp.dot(hmid.astype(jnp.bfloat16), w2_ref[...], precision=PREC,
                preferred_element_type=jnp.float32) + b2_ref[...]
    o_ref[...] = (y + z).reshape(WS, N, C)


# ----------------------------------------------------------------------------
# Glue (pure layout permutes + parameter folding) in plain JAX / numpy
# ----------------------------------------------------------------------------
def get_window_size(x_size, window_size, shift_size=None):
    use_window = list(window_size)
    use_shift = list(shift_size) if shift_size is not None else None
    for i in range(len(x_size)):
        if x_size[i] <= window_size[i]:
            use_window[i] = x_size[i]
            if use_shift is not None:
                use_shift[i] = 0
    if shift_size is None:
        return tuple(use_window)
    return tuple(use_window), tuple(use_shift)


def window_partition(x, ws):
    # (B, D, H, W, C) -> (B, nW, N, C), same enumeration order as the PyTorch code.
    B, D, H, W, C = x.shape
    x = x.reshape(B, D // ws[0], ws[0], H // ws[1], ws[1], W // ws[2], ws[2], C)
    x = x.transpose(0, 1, 3, 5, 2, 4, 6, 7)
    return x.reshape(B, (D // ws[0]) * (H // ws[1]) * (W // ws[2]),
                     ws[0] * ws[1] * ws[2], C)


def window_reverse(win, ws, B, D, H, W):
    C = win.shape[-1]
    x = win.reshape(B, D // ws[0], H // ws[1], W // ws[2], ws[0], ws[1], ws[2], C)
    x = x.transpose(0, 1, 4, 2, 5, 3, 6, 7)
    return x.reshape(B, D, H, W, C)


def compute_mask(D, H, W, window_size, shift_size):
    # Standard video-swin attention mask for SW-MSA (static, numpy).
    img_mask = np.zeros((1, D, H, W, 1), np.float32)
    cnt = 0
    for d in (slice(-window_size[0]), slice(-window_size[0], -shift_size[0]),
              slice(-shift_size[0], None)):
        for h in (slice(-window_size[1]), slice(-window_size[1], -shift_size[1]),
                  slice(-shift_size[1], None)):
            for w in (slice(-window_size[2]), slice(-window_size[2], -shift_size[2]),
                      slice(-shift_size[2], None)):
                img_mask[:, d, h, w, :] = cnt
                cnt += 1
    N = window_size[0] * window_size[1] * window_size[2]
    mw = window_partition(img_mask, window_size).reshape(-1, N)        # (nW, N)
    attn_mask = mw[:, None, :] - mw[:, :, None]
    attn_mask = np.where(attn_mask != 0, -100.0, 0.0).astype(np.float32)
    return jnp.asarray(attn_mask)                                      # (nW, N, N)


def _pick_num_steps(total_windows):
    """Grid granularity per generation: 1 merged step on single-TC parts
    (v5e/v6e), >=2 'parallel' steps per TensorCore on dual-TC parts (v7x)."""
    try:
        kind = jax.devices()[0].device_kind.lower()
    except Exception:  # pragma: no cover - no device info
        kind = ""
    single_tc = any(t in kind for t in ("v2", "v3", "v5 lite", "v5e", "v6 lite", "v6e"))
    target = 1 if single_tc else 4
    target = max(1, min(target, total_windows))
    while total_windows % target:
        target -= 1
    return target


def swin_block_forward(x, params, cfg, attn_mask=None):
    B, D, H, W, C = x.shape
    num_heads = cfg["num_heads"]
    head_dim = C // num_heads
    window_size, shift_size = get_window_size(
        (D, H, W), cfg["window_size"], cfg["shift_size"])
    assert (D % window_size[0] == 0 and H % window_size[1] == 0
            and W % window_size[2] == 0), "padding path not implemented"
    nW = (D // window_size[0]) * (H // window_size[1]) * (W // window_size[2])
    N = window_size[0] * window_size[1] * window_size[2]
    shifted = any(s > 0 for s in shift_size)
    if shifted and attn_mask is None:
        raise ValueError("attn_mask is required when shift_size > 0 (SW-MSA).")

    # --- fold norm1 affine, qkv bias and the q-scale into the (bf16) qkv weight.
    scale = head_dim ** -0.5
    w_qkv = params["gamma1"][:, None] * params["w_qkv"]                  # (C, 3C)
    b_qkv = params["beta1"] @ params["w_qkv"] + params["b_qkv"]          # (3C,)
    qscale = jnp.concatenate([jnp.full((C,), scale, jnp.float32),
                              jnp.ones((2 * C,), jnp.float32)])
    w_qkv = (w_qkv * qscale[None, :]).astype(jnp.bfloat16)
    b_qkv = (b_qkv * qscale)[None, :]                                    # (1, 3C) f32
    w_proj = params["w_proj"].astype(jnp.bfloat16)
    b_proj = params["b_proj"][None, :]

    # --- fold norm2 affine into fc1; weights to bf16, biases stay f32.
    w1 = (params["gamma2"][:, None] * params["w_fc1"]).astype(jnp.bfloat16)
    b1 = (params["beta2"] @ params["w_fc1"] + params["b_fc1"])[None, :]
    w2 = params["w_fc2"].astype(jnp.bfloat16)
    b2 = params["b_fc2"][None, :]
    hidden = w1.shape[1]

    # --- relative position bias (num_heads, N, N); pre-gathered once at init.
    rel_bias = params.get("rel_bias")
    if rel_bias is None or rel_bias.shape != (num_heads, N, N):
        rel_bias = params["rel_table"][params["rel_index"][:N, :N].reshape(-1)]
        rel_bias = rel_bias.reshape(N, N, num_heads).transpose(2, 0, 1)

    # --- cyclic shift + window partition (pure layout permutes).
    if shifted:
        x_sh = jnp.roll(x, (-shift_size[0], -shift_size[1], -shift_size[2]),
                        axis=(1, 2, 3))
        bias = rel_bias[None] + attn_mask[:, None]                       # (nW, nh, N, N)
        bias = jnp.tile(bias, (B, 1, 1, 1))                              # (B*nW, nh, N, N)
    else:
        x_sh = x
        bias = rel_bias[None]                                            # (1, nh, N, N)
    x_win = window_partition(x_sh, window_size).reshape(B * nW, N, C)

    total_w = B * nW
    num_steps = _pick_num_steps(total_w)
    WS = total_w // num_steps

    if shifted:
        bias_spec = pl.BlockSpec((WS, num_heads, N, N), lambda i: (i, 0, 0, 0))
    else:
        bias_spec = pl.BlockSpec((1, num_heads, N, N), lambda i: (0, 0, 0, 0))

    out_win = pl.pallas_call(
        functools.partial(_fused_block_kernel,
                          num_heads=num_heads, head_dim=head_dim),
        out_shape=jax.ShapeDtypeStruct((total_w, N, C), jnp.float32),
        grid=(num_steps,),
        in_specs=[
            pl.BlockSpec((WS, N, C), lambda i: (i, 0, 0)),
            bias_spec,
            pl.BlockSpec((C, 3 * C), lambda i: (0, 0)),
            pl.BlockSpec((1, 3 * C), lambda i: (0, 0)),
            pl.BlockSpec((C, C), lambda i: (0, 0)),
            pl.BlockSpec((1, C), lambda i: (0, 0)),
            pl.BlockSpec((C, hidden), lambda i: (0, 0)),
            pl.BlockSpec((1, hidden), lambda i: (0, 0)),
            pl.BlockSpec((hidden, C), lambda i: (0, 0)),
            pl.BlockSpec((1, C), lambda i: (0, 0)),
        ],
        out_specs=pl.BlockSpec((WS, N, C), lambda i: (i, 0, 0)),
        compiler_params=pltpu.CompilerParams(dimension_semantics=("parallel",)),
    )(x_win, bias, w_qkv, b_qkv, w_proj, b_proj, w1, b1, w2, b2)

    # Single reverse permute of the final block output (both residuals already added).
    out = window_reverse(out_win.reshape(B, nW, N, C), window_size, B, D, H, W)
    if shifted:
        out = jnp.roll(out, shift_size, axis=(1, 2, 3))
    return out


# ----------------------------------------------------------------------------
# Pure-JAX reference (un-folded, literal transcription of the PyTorch forward)
# ----------------------------------------------------------------------------
def reference_forward(x, params, cfg, attn_mask=None):
    B, D, H, W, C = x.shape
    num_heads = cfg["num_heads"]
    head_dim = C // num_heads
    window_size, shift_size = get_window_size(
        (D, H, W), cfg["window_size"], cfg["shift_size"])
    N = window_size[0] * window_size[1] * window_size[2]
    shortcut = x

    def layer_norm(v, g, b):
        mu = jnp.mean(v, -1, keepdims=True)
        var = jnp.mean((v - mu) ** 2, -1, keepdims=True)
        return (v - mu) / jnp.sqrt(var + LN_EPS) * g + b

    x = layer_norm(x, params["gamma1"], params["beta1"])
    if any(s > 0 for s in shift_size):
        x = jnp.roll(x, (-shift_size[0], -shift_size[1], -shift_size[2]),
                     axis=(1, 2, 3))
    xw = window_partition(x, window_size)
    _, nW, _, _ = xw.shape
    xw = xw.reshape(B * nW, N, C)
    qkv = xw @ params["w_qkv"] + params["b_qkv"]
    qkv = qkv.reshape(B * nW, N, 3, num_heads, head_dim).transpose(2, 0, 3, 1, 4)
    q, k, v = qkv[0], qkv[1], qkv[2]
    q = q * (head_dim ** -0.5)
    attn = jnp.einsum('bhnd,bhmd->bhnm', q, k)
    rel = params["rel_table"][params["rel_index"][:N, :N].reshape(-1)]
    attn = attn + rel.reshape(N, N, num_heads).transpose(2, 0, 1)[None]
    if attn_mask is not None and any(s > 0 for s in shift_size):
        attn = attn.reshape(B, nW, num_heads, N, N) + attn_mask[None, :, None]
        attn = attn.reshape(B * nW, num_heads, N, N)
    attn = jax.nn.softmax(attn, axis=-1)
    out = jnp.einsum('bhnm,bhmd->bhnd', attn, v)
    out = out.transpose(0, 2, 1, 3).reshape(B, nW, N, C)
    out = out @ params["w_proj"] + params["b_proj"]
    x = window_reverse(out, window_size, B, D, H, W)
    if any(s > 0 for s in shift_size):
        x = jnp.roll(x, shift_size, axis=(1, 2, 3))
    x = shortcut + x

    y = layer_norm(x, params["gamma2"], params["beta2"])
    h = y @ params["w_fc1"] + params["b_fc1"]
    h = 0.5 * h * (1.0 + jnp.tanh(0.7978845608028654 * (h + 0.044715 * h ** 3)))
    y = h @ params["w_fc2"] + params["b_fc2"]
    return x + y


# ----------------------------------------------------------------------------
# Deterministic parameter initialization (synthetic, not a checkpoint)
# ----------------------------------------------------------------------------
def init_params(key, dim, num_heads, window_size, mlp_ratio):
    hidden = int(dim * mlp_ratio)
    ks = iter(jax.random.split(key, 16))

    def lin(cin, cout):
        w = jax.random.normal(next(ks), (cin, cout), jnp.float32) / np.sqrt(cin)
        b = 0.02 * jax.random.normal(next(ks), (cout,), jnp.float32)
        return w, b

    gamma1 = 1.0 + 0.1 * jax.random.normal(next(ks), (dim,), jnp.float32)
    beta1 = 0.05 * jax.random.normal(next(ks), (dim,), jnp.float32)
    gamma2 = 1.0 + 0.1 * jax.random.normal(next(ks), (dim,), jnp.float32)
    beta2 = 0.05 * jax.random.normal(next(ks), (dim,), jnp.float32)
    w_qkv, b_qkv = lin(dim, 3 * dim)
    w_proj, b_proj = lin(dim, dim)
    w_fc1, b_fc1 = lin(dim, hidden)
    w_fc2, b_fc2 = lin(hidden, dim)

    tbl_size = ((2 * window_size[0] - 1) * (2 * window_size[1] - 1)
                * (2 * window_size[2] - 1))
    rel_table = 0.02 * jax.random.normal(next(ks), (tbl_size, num_heads), jnp.float32)

    # relative_position_index computed exactly as the PyTorch buffer.
    coords = np.stack(np.meshgrid(np.arange(window_size[0]),
                                  np.arange(window_size[1]),
                                  np.arange(window_size[2]), indexing='ij'))
    cf = coords.reshape(3, -1)
    rel = (cf[:, :, None] - cf[:, None, :]).transpose(1, 2, 0).astype(np.int64)
    rel[:, :, 0] += window_size[0] - 1
    rel[:, :, 1] += window_size[1] - 1
    rel[:, :, 2] += window_size[2] - 1
    rel[:, :, 0] *= (2 * window_size[1] - 1) * (2 * window_size[2] - 1)
    rel[:, :, 1] *= (2 * window_size[2] - 1)
    rel_index = jnp.asarray(rel.sum(-1), jnp.int32)

    # Pre-gather the relative-position bias ONCE (hoisted off every forward).
    N = window_size[0] * window_size[1] * window_size[2]
    rel_bias = rel_table[rel_index.reshape(-1)].reshape(N, N, num_heads)
    rel_bias = rel_bias.transpose(2, 0, 1)                              # (nh, N, N)

    return dict(gamma1=gamma1, beta1=beta1, gamma2=gamma2, beta2=beta2,
                w_qkv=w_qkv, b_qkv=b_qkv, w_proj=w_proj, b_proj=b_proj,
                w_fc1=w_fc1, b_fc1=b_fc1, w_fc2=w_fc2, b_fc2=b_fc2,
                rel_table=rel_table, rel_index=rel_index, rel_bias=rel_bias)


# ----------------------------------------------------------------------------
if __name__ == "__main__":
    # 'highest' keeps the pure-JAX f32 reference accurate; the in-kernel dots
    # explicitly use Precision.DEFAULT (native bf16 MXU path).
    jax.config.update("jax_default_matmul_precision", "highest")

    key = jax.random.PRNGKey(0)
    kp, kx = jax.random.split(key)

    B, D, H, W, Cdim = 2, 8, 8, 8, 128
    num_heads = 4
    window_size = (4, 4, 4)
    params = init_params(kp, Cdim, num_heads, window_size, 4.0)
    x = jax.random.normal(kx, (B, D, H, W, Cdim), jnp.float32)

    # ---- W-MSA (no shift) ----
    cfg0 = dict(num_heads=num_heads, window_size=window_size,
                shift_size=(0, 0, 0), mlp_ratio=4.0)
    fwd0 = jax.jit(functools.partial(swin_block_forward, cfg=cfg0))
    out0 = jax.block_until_ready(fwd0(x, params))
    assert out0.shape == (B, D, H, W, Cdim)
    assert bool(jnp.all(jnp.isfinite(out0)))
    ref0 = jax.block_until_ready(
        jax.jit(functools.partial(reference_forward, cfg=cfg0))(x, params))
    err0 = float(jnp.max(jnp.abs(out0 - ref0)))
    merr0 = float(jnp.mean(jnp.abs(out0 - ref0)))
    assert err0 < 1.5e-1 and merr0 < 3e-2, (err0, merr0)

    # ---- SW-MSA (shifted windows with attention mask) ----
    shift = (2, 2, 2)
    cfg1 = dict(num_heads=num_heads, window_size=window_size,
                shift_size=shift, mlp_ratio=4.0)
    attn_mask = compute_mask(D, H, W, window_size, shift)
    fwd1 = jax.jit(functools.partial(swin_block_forward, cfg=cfg1))
    out1 = jax.block_until_ready(fwd1(x, params, attn_mask=attn_mask))
    assert bool(jnp.all(jnp.isfinite(out1)))
    ref1 = jax.block_until_ready(
        jax.jit(functools.partial(reference_forward, cfg=cfg1))(x, params,
                                                                attn_mask=attn_mask))
    err1 = float(jnp.max(jnp.abs(out1 - ref1)))
    merr1 = float(jnp.mean(jnp.abs(out1 - ref1)))
    assert err1 < 1.5e-1 and merr1 < 3e-2, (err1, merr1)

    print("KERNEL_OK")
</pallas_src>

<mosaic_0001>
module attributes {stable_mosaic.version = 11 : i64} {
  func.func @_fused_block_kernel(%arg0: i32, %arg1: memref<4x64x128xf32, #tpu.memory_space<vmem>>, %arg2: memref<1x4x64x64xf32, #tpu.memory_space<vmem>>, %arg3: memref<128x384xbf16, #tpu.memory_space<vmem>>, %arg4: memref<1x384xf32, #tpu.memory_space<vmem>>, %arg5: memref<128x128xbf16, #tpu.memory_space<vmem>>, %arg6: memref<1x128xf32, #tpu.memory_space<vmem>>, %arg7: memref<128x512xbf16, #tpu.memory_space<vmem>>, %arg8: memref<1x512xf32, #tpu.memory_space<vmem>>, %arg9: memref<512x128xbf16, #tpu.memory_space<vmem>>, %arg10: memref<1x128xf32, #tpu.memory_space<vmem>>, %arg11: memref<4x64x128xf32, #tpu.memory_space<vmem>>) attributes {dimension_semantics = [#tpu.dimension_semantics<parallel>], iteration_bounds = array<i64: 4>, scalar_prefetch = 0 : i64, scratch_operands = 0 : i64, tpu.core_type = #tpu.core_type<tc>, window_params = [{transform_indices = @transform_0, window_bounds = array<i64: 4, 64, 128>}, {pipeline_mode = #tpu.pipeline_mode<synchronous>, transform_indices = @transform_1, window_bounds = array<i64: 1, 4, 64, 64>}, {pipeline_mode = #tpu.pipeline_mode<synchronous>, transform_indices = @transform_2, window_bounds = array<i64: 128, 384>}, {pipeline_mode = #tpu.pipeline_mode<synchronous>, transform_indices = @transform_3, window_bounds = array<i64: 1, 384>}, {pipeline_mode = #tpu.pipeline_mode<synchronous>, transform_indices = @transform_4, window_bounds = array<i64: 128, 128>}, {pipeline_mode = #tpu.pipeline_mode<synchronous>, transform_indices = @transform_5, window_bounds = array<i64: 1, 128>}, {pipeline_mode = #tpu.pipeline_mode<synchronous>, transform_indices = @transform_6, window_bounds = array<i64: 128, 512>}, {pipeline_mode = #tpu.pipeline_mode<synchronous>, transform_indices = @transform_7, window_bounds = array<i64: 1, 512>}, {pipeline_mode = #tpu.pipeline_mode<synchronous>, transform_indices = @transform_8, window_bounds = array<i64: 512, 128>}, {pipeline_mode = #tpu.pipeline_mode<synchronous>, transform_indices = @transform_9, window_bounds = array<i64: 1, 128>}, {transform_indices = @transform_10, window_bounds = array<i64: 4, 64, 128>}]} {
    %c0 = arith.constant 0 : index
    %c0_0 = arith.constant 0 : index
    %c0_1 = arith.constant 0 : index
    %0 = vector.load %arg1[%c0, %c0_0, %c0_1] : memref<4x64x128xf32, #tpu.memory_space<vmem>>, vector<4x64x128xf32>
    %1 = vector.shape_cast %0 : vector<4x64x128xf32> to vector<256x128xf32>
    %cst = arith.constant dense<0.000000e+00> : vector<256xf32>
    %2 = vector.multi_reduction <add>, %1, %cst [1] : vector<256x128xf32> to vector<256xf32>
    %3 = vector.shape_cast %2 : vector<256xf32> to vector<256x1xf32>
    %cst_2 = arith.constant 1.280000e+02 : f32
    %4 = vector.broadcast %cst_2 : f32 to vector<256x1xf32>
    %5 = arith.divf %3, %4 : vector<256x1xf32>
    %6 = vector.broadcast %5 : vector<256x1xf32> to vector<256x128xf32>
    %7 = arith.subf %1, %6 : vector<256x128xf32>
    %8 = arith.mulf %7, %7 : vector<256x128xf32>
    %cst_3 = arith.constant dense<0.000000e+00> : vector<256xf32>
    %9 = vector.multi_reduction <add>, %8, %cst_3 [1] : vector<256x128xf32> to vector<256xf32>
    %10 = vector.shape_cast %9 : vector<256xf32> to vector<256x1xf32>
    %cst_4 = arith.constant 1.280000e+02 : f32
    %11 = vector.broadcast %cst_4 : f32 to vector<256x1xf32>
    %12 = arith.divf %10, %11 : vector<256x1xf32>
    %cst_5 = arith.constant 9.99999974E-6 : f32
    %13 = vector.broadcast %cst_5 : f32 to vector<256x1xf32>
    %14 = arith.addf %12, %13 : vector<256x1xf32>
    %15 = math.rsqrt %14 : vector<256x1xf32>
    %16 = vector.broadcast %15 : vector<256x1xf32> to vector<256x128xf32>
    %17 = arith.mulf %7, %16 : vector<256x128xf32>
    %18 = arith.truncf %17 : vector<256x128xf32> to vector<256x128xbf16>
    %c0_6 = arith.constant 0 : index
    %c0_7 = arith.constant 0 : index
    %19 = vector.load %arg3[%c0_6, %c0_7] : memref<128x384xbf16, #tpu.memory_space<vmem>>, vector<128x384xbf16>
    %cst_8 = arith.constant dense<0.000000e+00> : vector<256x384xf32>
    %20 = tpu.matmul %18, %19, %cst_8 {dimension_numbers = #tpu.dot_dimension_numbers<[1], [0], [0], [1], [0, 0, 1, 1], [], []>} : vector<256x128xbf16>, vector<128x384xbf16>, vector<256x384xf32> -> vector<256x384xf32>
    %c0_9 = arith.constant 0 : index
    %c0_10 = arith.constant 0 : index
    %21 = vector.load %arg4[%c0_9, %c0_10] : memref<1x384xf32, #tpu.memory_space<vmem>>, vector<1x384xf32>
    %22 = vector.broadcast %21 : vector<1x384xf32> to vector<256x384xf32>
    %23 = arith.addf %20, %22 : vector<256x384xf32>
    %24 = arith.truncf %23 : vector<256x384xf32> to vector<256x384xbf16>
    %25 = vector.shape_cast %24 : vector<256x384xbf16> to vector<4x64x384xbf16>
    %c0_11 = arith.constant 0 : index
    %c0_12 = arith.constant 0 : index
    %c0_13 = arith.constant 0 : index
    %c0_14 = arith.constant 0 : index
    %26 = vector.load %arg2[%c0_11, %c0_12, %c0_13, %c0_14] : memref<1x4x64x64xf32, #tpu.memory_space<vmem>>, vector<1x4x64x64xf32>
    %27 = vector.extract_strided_slice %25 {offsets = [0, 0, 0], sizes = [4, 64, 32], strides = [1, 1, 1]} : vector<4x64x384xbf16> to vector<4x64x32xbf16>
    %28 = vector.extract_strided_slice %25 {offsets = [0, 0, 128], sizes = [4, 64, 32], strides = [1, 1, 1]} : vector<4x64x384xbf16> to vector<4x64x32xbf16>
    %29 = vector.extract_strided_slice %25 {offsets = [0, 0, 256], sizes = [4, 64, 32], strides = [1, 1, 1]} : vector<4x64x384xbf16> to vector<4x64x32xbf16>
    "tpu.trace_start"() <{level = 10 : i32, message = "wnd,wmd->wnm"}> : () -> ()
    %cst_15 = arith.constant dense<0.000000e+00> : vector<4x64x64xf32>
    %30 = tpu.matmul %27, %28, %cst_15 {dimension_numbers = #tpu.dot_dimension_numbers<[2], [2], [1], [1], [0, 0, 0, 1, 1, 1], [0], [0]>} : vector<4x64x32xbf16>, vector<4x64x32xbf16>, vector<4x64x64xf32> -> vector<4x64x64xf32>
    "tpu.trace_stop"() : () -> ()
    %31 = vector.extract_strided_slice %26 {offsets = [0, 0, 0, 0], sizes = [1, 1, 64, 64], strides = [1, 1, 1, 1]} : vector<1x4x64x64xf32> to vector<1x1x64x64xf32>
    %32 = vector.shape_cast %31 : vector<1x1x64x64xf32> to vector<1x64x64xf32>
    %33 = vector.broadcast %32 : vector<1x64x64xf32> to vector<4x64x64xf32>
    %34 = arith.addf %30, %33 : vector<4x64x64xf32>
    %cst_16 = arith.constant dense<0xFF800000> : vector<4x64xf32>
    %35 = vector.multi_reduction <maximumf>, %34, %cst_16 [2] : vector<4x64x64xf32> to vector<4x64xf32>
    %36 = vector.shape_cast %35 : vector<4x64xf32> to vector<4x64x1xf32>
    %37 = vector.broadcast %36 : vector<4x64x1xf32> to vector<4x64x64xf32>
    %38 = arith.subf %34, %37 : vector<4x64x64xf32>
    %39 = math.exp %38 : vector<4x64x64xf32>
    %cst_17 = arith.constant dense<0.000000e+00> : vector<4x64xf32>
    %40 = vector.multi_reduction <add>, %39, %cst_17 [2] : vector<4x64x64xf32> to vector<4x64xf32>
    %41 = vector.shape_cast %40 : vector<4x64xf32> to vector<4x64x1xf32>
    %42 = arith.truncf %39 : vector<4x64x64xf32> to vector<4x64x64xbf16>
    "tpu.trace_start"() <{level = 10 : i32, message = "wnm,wmd->wnd"}> : () -> ()
    %cst_18 = arith.constant dense<0.000000e+00> : vector<4x64x32xf32>
    %43 = tpu.matmul %42, %29, %cst_18 {dimension_numbers = #tpu.dot_dimension_numbers<[2], [1], [1], [2], [0, 0, 0, 1, 1, 2], [0], [0]>} : vector<4x64x64xbf16>, vector<4x64x32xbf16>, vector<4x64x32xf32> -> vector<4x64x32xf32>
    "tpu.trace_stop"() : () -> ()
    %44 = tpu.reciprocal %41 {approx = true} : vector<4x64x1xf32> -> vector<4x64x1xf32>
    %45 = vector.broadcast %44 : vector<4x64x1xf32> to vector<4x64x32xf32>
    %46 = arith.mulf %43, %45 : vector<4x64x32xf32>
    %47 = vector.extract_strided_slice %25 {offsets = [0, 0, 32], sizes = [4, 64, 32], strides = [1, 1, 1]} : vector<4x64x384xbf16> to vector<4x64x32xbf16>
    %48 = vector.extract_strided_slice %25 {offsets = [0, 0, 160], sizes = [4, 64, 32], strides = [1, 1, 1]} : vector<4x64x384xbf16> to vector<4x64x32xbf16>
    %49 = vector.extract_strided_slice %25 {offsets = [0, 0, 288], sizes = [4, 64, 32], strides = [1, 1, 1]} : vector<4x64x384xbf16> to vector<4x64x32xbf16>
    "tpu.trace_start"() <{level = 10 : i32, message = "wnd,wmd->wnm"}> : () -> ()
    %cst_19 = arith.constant dense<0.000000e+00> : vector<4x64x64xf32>
    %50 = tpu.matmul %47, %48, %cst_19 {dimension_numbers = #tpu.dot_dimension_numbers<[2], [2], [1], [1], [0, 0, 0, 1, 1, 1], [0], [0]>} : vector<4x64x32xbf16>, vector<4x64x32xbf16>, vector<4x64x64xf32> -> vector<4x64x64xf32>
    "tpu.trace_stop"() : () -> ()
    %51 = vector.extract_strided_slice %26 {offsets = [0, 1, 0, 0], sizes = [1, 1, 64, 64], strides = [1, 1, 1, 1]} : vector<1x4x64x64xf32> to vector<1x1x64x64xf32>
    %52 = vector.shape_cast %51 : vector<1x1x64x64xf32> to vector<1x64x64xf32>
    %53 = vector.broadcast %52 : vector<1x64x64xf32> to vector<4x64x64xf32>
    %54 = arith.addf %50, %53 : vector<4x64x64xf32>
    %cst_20 = arith.constant dense<0xFF800000> : vector<4x64xf32>
    %55 = vector.multi_reduction <maximumf>, %54, %cst_20 [2] : vector<4x64x64xf32> to vector<4x64xf32>
    %56 = vector.shape_cast %55 : vector<4x64xf32> to vector<4x64x1xf32>
    %57 = vector.broadcast %56 : vector<4x64x1xf32> to vector<4x64x64xf32>
    %58 = arith.subf %54, %57 : vector<4x64x64xf32>
    %59 = math.exp %58 : vector<4x64x64xf32>
    %cst_21 = arith.constant dense<0.000000e+00> : vector<4x64xf32>
    %60 = vector.multi_reduction <add>, %59, %cst_21 [2] : vector<4x64x64xf32> to vector<4x64xf32>
    %61 = vector.shape_cast %60 : vector<4x64xf32> to vector<4x64x1xf32>
    %62 = arith.truncf %59 : vector<4x64x64xf32> to vector<4x64x64xbf16>
    "tpu.trace_start"() <{level = 10 : i32, message = "wnm,wmd->wnd"}> : () -> ()
    %cst_22 = arith.constant dense<0.000000e+00> : vector<4x64x32xf32>
    %63 = tpu.matmul %62, %49, %cst_22 {dimension_numbers = #tpu.dot_dimension_numbers<[2], [1], [1], [2], [0, 0, 0, 1, 1, 2], [0], [0]>} : vector<4x64x64xbf16>, vector<4x64x32xbf16>, vector<4x64x32xf32> -> vector<4x64x32xf32>
    "tpu.trace_stop"() : () -> ()
    %64 = tpu.reciprocal %61 {approx = true} : vector<4x64x1xf32> -> vector<4x64x1xf32>
    %65 = vector.broadcast %64 : vector<4x64x1xf32> to vector<4x64x32xf32>
    %66 = arith.mulf %63, %65 : vector<4x64x32xf32>
    %67 = vector.extract_strided_slice %25 {offsets = [0, 0, 64], sizes = [4, 64, 32], strides = [1, 1, 1]} : vector<4x64x384xbf16> to vector<4x64x32xbf16>
    %68 = vector.extract_strided_slice %25 {offsets = [0, 0, 192], sizes = [4, 64, 32], strides = [1, 1, 1]} : vector<4x64x384xbf16> to vector<4x64x32xbf16>
    %69 = vector.extract_strided_slice %25 {offsets = [0, 0, 320], sizes = [4, 64, 32], strides = [1, 1, 1]} : vector<4x64x384xbf16> to vector<4x64x32xbf16>
    "tpu.trace_start"() <{level = 10 : i32, message = "wnd,wmd->wnm"}> : () -> ()
    %cst_23 = arith.constant dense<0.000000e+00> : vector<4x64x64xf32>
    %70 = tpu.matmul %67, %68, %cst_23 {dimension_numbers = #tpu.dot_dimension_numbers<[2], [2], [1], [1], [0, 0, 0, 1, 1, 1], [0], [0]>} : vector<4x64x32xbf16>, vector<4x64x32xbf16>, vector<4x64x64xf32> -> vector<4x64x64xf32>
    "tpu.trace_stop"() : () -> ()
    %71 = vector.extract_strided_slice %26 {offsets = [0, 2, 0, 0], sizes = [1, 1, 64, 64], strides = [1, 1, 1, 1]} : vector<1x4x64x64xf32> to vector<1x1x64x64xf32>
    %72 = vector.shape_cast %71 : vector<1x1x64x64xf32> to vector<1x64x64xf32>
    %73 = vector.broadcast %72 : vector<1x64x64xf32> to vector<4x64x64xf32>
    %74 = arith.addf %70, %73 : vector<4x64x64xf32>
    %cst_24 = arith.constant dense<0xFF800000> : vector<4x64xf32>
    %75 = vector.multi_reduction <maximumf>, %74, %cst_24 [2] : vector<4x64x64xf32> to vector<4x64xf32>
    %76 = vector.shape_cast %75 : vector<4x64xf32> to vector<4x64x1xf32>
    %77 = vector.broadcast %76 : vector<4x64x1xf32> to vector<4x64x64xf32>
    %78 = arith.subf %74, %77 : vector<4x64x64xf32>
    %79 = math.exp %78 : vector<4x64x64xf32>
    %cst_25 = arith.constant dense<0.000000e+00> : vector<4x64xf32>
    %80 = vector.multi_reduction <add>, %79, %cst_25 [2] : vector<4x64x64xf32> to vector<4x64xf32>
    %81 = vector.shape_cast %80 : vector<4x64xf32> to vector<4x64x1xf32>
    %82 = arith.truncf %79 : vector<4x64x64xf32> to vector<4x64x64xbf16>
    "tpu.trace_start"() <{level = 10 : i32, message = "wnm,wmd->wnd"}> : () -> ()
    %cst_26 = arith.constant dense<0.000000e+00> : vector<4x64x32xf32>
    %83 = tpu.matmul %82, %69, %cst_26 {dimension_numbers = #tpu.dot_dimension_numbers<[2], [1], [1], [2], [0, 0, 0, 1, 1, 2], [0], [0]>} : vector<4x64x64xbf16>, vector<4x64x32xbf16>, vector<4x64x32xf32> -> vector<4x64x32xf32>
    "tpu.trace_stop"() : () -> ()
    %84 = tpu.reciprocal %81 {approx = true} : vector<4x64x1xf32> -> vector<4x64x1xf32>
    %85 = vector.broadcast %84 : vector<4x64x1xf32> to vector<4x64x32xf32>
    %86 = arith.mulf %83, %85 : vector<4x64x32xf32>
    %87 = vector.extract_strided_slice %25 {offsets = [0, 0, 96], sizes = [4, 64, 32], strides = [1, 1, 1]} : vector<4x64x384xbf16> to vector<4x64x32xbf16>
    %88 = vector.extract_strided_slice %25 {offsets = [0, 0, 224], sizes = [4, 64, 32], strides = [1, 1, 1]} : vector<4x64x384xbf16> to vector<4x64x32xbf16>
    %89 = vector.extract_strided_slice %25 {offsets = [0, 0, 352], sizes = [4, 64, 32], strides = [1, 1, 1]} : vector<4x64x384xbf16> to vector<4x64x32xbf16>
    "tpu.trace_start"() <{level = 10 : i32, message = "wnd,wmd->wnm"}> : () -> ()
    %cst_27 = arith.constant dense<0.000000e+00> : vector<4x64x64xf32>
    %90 = tpu.matmul %87, %88, %cst_27 {dimension_numbers = #tpu.dot_dimension_numbers<[2], [2], [1], [1], [0, 0, 0, 1, 1, 1], [0], [0]>} : vector<4x64x32xbf16>, vector<4x64x32xbf16>, vector<4x64x64xf32> -> vector<4x64x64xf32>
    "tpu.trace_stop"() : () -> ()
    %91 = vector.extract_strided_slice %26 {offsets = [0, 3, 0, 0], sizes = [1, 1, 64, 64], strides = [1, 1, 1, 1]} : vector<1x4x64x64xf32> to vector<1x1x64x64xf32>
    %92 = vector.shape_cast %91 : vector<1x1x64x64xf32> to vector<1x64x64xf32>
    %93 = vector.broadcast %92 : vector<1x64x64xf32> to vector<4x64x64xf32>
    %94 = arith.addf %90, %93 : vector<4x64x64xf32>
    %cst_28 = arith.constant dense<0xFF800000> : vector<4x64xf32>
    %95 = vector.multi_reduction <maximumf>, %94, %cst_28 [2] : vector<4x64x64xf32> to vector<4x64xf32>
    %96 = vector.shape_cast %95 : vector<4x64xf32> to vector<4x64x1xf32>
    %97 = vector.broadcast %96 : vector<4x64x1xf32> to vector<4x64x64xf32>
    %98 = arith.subf %94, %97 : vector<4x64x64xf32>
    %99 = math.exp %98 : vector<4x64x64xf32>
    %cst_29 = arith.constant dense<0.000000e+00> : vector<4x64xf32>
    %100 = vector.multi_reduction <add>, %99, %cst_29 [2] : vector<4x64x64xf32> to vector<4x64xf32>
    %101 = vector.shape_cast %100 : vector<4x64xf32> to vector<4x64x1xf32>
    %102 = arith.truncf %99 : vector<4x64x64xf32> to vector<4x64x64xbf16>
    "tpu.trace_start"() <{level = 10 : i32, message = "wnm,wmd->wnd"}> : () -> ()
    %cst_30 = arith.constant dense<0.000000e+00> : vector<4x64x32xf32>
    %103 = tpu.matmul %102, %89, %cst_30 {dimension_numbers = #tpu.dot_dimension_numbers<[2], [1], [1], [2], [0, 0, 0, 1, 1, 2], [0], [0]>} : vector<4x64x64xbf16>, vector<4x64x32xbf16>, vector<4x64x32xf32> -> vector<4x64x32xf32>
    "tpu.trace_stop"() : () -> ()
    %104 = tpu.reciprocal %101 {approx = true} : vector<4x64x1xf32> -> vector<4x64x1xf32>
    %105 = vector.broadcast %104 : vector<4x64x1xf32> to vector<4x64x32xf32>
    %106 = arith.mulf %103, %105 : vector<4x64x32xf32>
    %107 = tpu.concatenate %46, %66, %86, %106 in 2 : vector<4x64x32xf32>, vector<4x64x32xf32>, vector<4x64x32xf32>, vector<4x64x32xf32> -> vector<4x64x128xf32>
    %108 = vector.shape_cast %107 : vector<4x64x128xf32> to vector<256x128xf32>
    %109 = arith.truncf %108 : vector<256x128xf32> to vector<256x128xbf16>
    %c0_31 = arith.constant 0 : index
    %c0_32 = arith.constant 0 : index
    %110 = vector.load %arg5[%c0_31, %c0_32] : memref<128x128xbf16, #tpu.memory_space<vmem>>, vector<128x128xbf16>
    %cst_33 = arith.constant dense<0.000000e+00> : vector<256x128xf32>
    %111 = tpu.matmul %109, %110, %cst_33 {dimension_numbers = #tpu.dot_dimension_numbers<[1], [0], [0], [1], [0, 0, 1, 1], [], []>} : vector<256x128xbf16>, vector<128x128xbf16>, vector<256x128xf32> -> vector<256x128xf32>
    %112 = arith.addf %1, %111 : vector<256x128xf32>
    %c0_34 = arith.constant 0 : index
    %c0_35 = arith.constant 0 : index
    %113 = vector.load %arg6[%c0_34, %c0_35] : memref<1x128xf32, #tpu.memory_space<vmem>>, vector<1x128xf32>
    %114 = vector.broadcast %113 : vector<1x128xf32> to vector<256x128xf32>
    %115 = arith.addf %112, %114 : vector<256x128xf32>
    %cst_36 = arith.constant dense<0.000000e+00> : vector<256xf32>
    %116 = vector.multi_reduction <add>, %115, %cst_36 [1] : vector<256x128xf32> to vector<256xf32>
    %117 = vector.shape_cast %116 : vector<256xf32> to vector<256x1xf32>
    %cst_37 = arith.constant 1.280000e+02 : f32
    %118 = vector.broadcast %cst_37 : f32 to vector<256x1xf32>
    %119 = arith.divf %117, %118 : vector<256x1xf32>
    %120 = vector.broadcast %119 : vector<256x1xf32> to vector<256x128xf32>
    %121 = arith.subf %115, %120 : vector<256x128xf32>
    %122 = arith.mulf %121, %121 : vector<256x128xf32>
    %cst_38 = arith.constant dense<0.000000e+00> : vector<256xf32>
    %123 = vector.multi_reduction <add>, %122, %cst_38 [1] : vector<256x128xf32> to vector<256xf32>
    %124 = vector.shape_cast %123 : vector<256xf32> to vector<256x1xf32>
    %cst_39 = arith.constant 1.280000e+02 : f32
    %125 = vector.broadcast %cst_39 : f32 to vector<256x1xf32>
    %126 = arith.divf %124, %125 : vector<256x1xf32>
    %cst_40 = arith.constant 9.99999974E-6 : f32
    %127 = vector.broadcast %cst_40 : f32 to vector<256x1xf32>
    %128 = arith.addf %126, %127 : vector<256x1xf32>
    %129 = math.rsqrt %128 : vector<256x1xf32>
    %130 = vector.broadcast %129 : vector<256x1xf32> to vector<256x128xf32>
    %131 = arith.mulf %121, %130 : vector<256x128xf32>
    %132 = arith.truncf %131 : vector<256x128xf32> to vector<256x128xbf16>
    %c0_41 = arith.constant 0 : index
    %c0_42 = arith.constant 0 : index
    %133 = vector.load %arg7[%c0_41, %c0_42] : memref<128x512xbf16, #tpu.memory_space<vmem>>, vector<128x512xbf16>
    %cst_43 = arith.constant dense<0.000000e+00> : vector<256x512xf32>
    %134 = tpu.matmul %132, %133, %cst_43 {dimension_numbers = #tpu.dot_dimension_numbers<[1], [0], [0], [1], [0, 0, 1, 1], [], []>} : vector<256x128xbf16>, vector<128x512xbf16>, vector<256x512xf32> -> vector<256x512xf32>
    %c0_44 = arith.constant 0 : index
    %c0_45 = arith.constant 0 : index
    %135 = vector.load %arg8[%c0_44, %c0_45] : memref<1x512xf32, #tpu.memory_space<vmem>>, vector<1x512xf32>
    %136 = vector.broadcast %135 : vector<1x512xf32> to vector<256x512xf32>
    %137 = arith.addf %134, %136 : vector<256x512xf32>
    %cst_46 = arith.constant 5.000000e-01 : f32
    %138 = vector.broadcast %cst_46 : f32 to vector<256x512xf32>
    %139 = arith.mulf %138, %137 : vector<256x512xf32>
    %cst_47 = arith.constant 4.471500e-02 : f32
    %140 = vector.broadcast %cst_47 : f32 to vector<256x512xf32>
    %141 = arith.mulf %140, %137 : vector<256x512xf32>
    %142 = arith.mulf %141, %137 : vector<256x512xf32>
    %143 = arith.mulf %142, %137 : vector<256x512xf32>
    %144 = arith.addf %137, %143 : vector<256x512xf32>
    %cst_48 = arith.constant 0.797884583 : f32
    %145 = vector.broadcast %cst_48 : f32 to vector<256x512xf32>
    %146 = arith.mulf %145, %144 : vector<256x512xf32>
    %147 = math.tanh %146 : vector<256x512xf32>
    %cst_49 = arith.constant 1.000000e+00 : f32
    %148 = vector.broadcast %cst_49 : f32 to vector<256x512xf32>
    %149 = arith.addf %148, %147 : vector<256x512xf32>
    %150 = arith.mulf %139, %149 : vector<256x512xf32>
    %151 = arith.truncf %150 : vector<256x512xf32> to vector<256x512xbf16>
    %c0_50 = arith.constant 0 : index
    %c0_51 = arith.constant 0 : index
    %152 = vector.load %arg9[%c0_50, %c0_51] : memref<512x128xbf16, #tpu.memory_space<vmem>>, vector<512x128xbf16>
    %cst_52 = arith.constant dense<0.000000e+00> : vector<256x128xf32>
    %153 = tpu.matmul %151, %152, %cst_52 {dimension_numbers = #tpu.dot_dimension_numbers<[1], [0], [0], [1], [0, 0, 1, 1], [], []>} : vector<256x512xbf16>, vector<512x128xbf16>, vector<256x128xf32> -> vector<256x128xf32>
    %c0_53 = arith.constant 0 : index
    %c0_54 = arith.constant 0 : index
    %154 = vector.load %arg10[%c0_53, %c0_54] : memref<1x128xf32, #tpu.memory_space<vmem>>, vector<1x128xf32>
    %155 = vector.broadcast %154 : vector<1x128xf32> to vector<256x128xf32>
    %156 = arith.addf %153, %155 : vector<256x128xf32>
    %157 = arith.addf %115, %156 : vector<256x128xf32>
    %158 = vector.shape_cast %157 : vector<256x128xf32> to vector<4x64x128xf32>
    %c0_55 = arith.constant 0 : index
    %c0_56 = arith.constant 0 : index
    %c0_57 = arith.constant 0 : index
    %159 = vector.load %arg11[%c0_55, %c0_56, %c0_57] : memref<4x64x128xf32, #tpu.memory_space<vmem>>, vector<4x64x128xf32>
    tpu.vector_store %arg11[%c0_55, %c0_56, %c0_57], %158 {strides = array<i32>} : memref<4x64x128xf32, #tpu.memory_space<vmem>>, vector<4x64x128xf32>,
    return
  }
  func.func @transform_0(%arg0: i32) -> (i32, i32, i32) {
    %c0_i32 = arith.constant 0 : i32
    %c0_i32_0 = arith.constant 0 : i32
    %c0_i32_1 = arith.constant 0 : i32
    return %arg0, %c0_i32, %c0_i32_0 : i32, i32, i32
  }
  func.func @transform_1(%arg0: i32) -> (i32, i32, i32, i32) {
    %c0_i32 = arith.constant 0 : i32
    %c0_i32_0 = arith.constant 0 : i32
    %c0_i32_1 = arith.constant 0 : i32
    %c0_i32_2 = arith.constant 0 : i32
    %c0_i32_3 = arith.constant 0 : i32
    return %c0_i32, %c0_i32_0, %c0_i32_1, %c0_i32_2 : i32, i32, i32, i32
  }
  func.func @transform_2(%arg0: i32) -> (i32, i32) {
    %c0_i32 = arith.constant 0 : i32
    %c0_i32_0 = arith.constant 0 : i32
    %c0_i32_1 = arith.constant 0 : i32
    return %c0_i32, %c0_i32_0 : i32, i32
  }
  func.func @transform_3(%arg0: i32) -> (i32, i32) {
    %c0_i32 = arith.constant 0 : i32
    %c0_i32_0 = arith.constant 0 : i32
    %c0_i32_1 = arith.constant 0 : i32
    return %c0_i32, %c0_i32_0 : i32, i32
  }
  func.func @transform_4(%arg0: i32) -> (i32, i32) {
    %c0_i32 = arith.constant 0 : i32
    %c0_i32_0 = arith.constant 0 : i32
    %c0_i32_1 = arith.constant 0 : i32
    return %c0_i32, %c0_i32_0 : i32, i32
  }
  func.func @transform_5(%arg0: i32) -> (i32, i32) {
    %c0_i32 = arith.constant 0 : i32
    %c0_i32_0 = arith.constant 0 : i32
    %c0_i32_1 = arith.constant 0 : i32
    return %c0_i32, %c0_i32_0 : i32, i32
  }
  func.func @transform_6(%arg0: i32) -> (i32, i32) {
    %c0_i32 = arith.constant 0 : i32
    %c0_i32_0 = arith.constant 0 : i32
    %c0_i32_1 = arith.constant 0 : i32
    return %c0_i32, %c0_i32_0 : i32, i32
  }
  func.func @transform_7(%arg0: i32) -> (i32, i32) {
    %c0_i32 = arith.constant 0 : i32
    %c0_i32_0 = arith.constant 0 : i32
    %c0_i32_1 = arith.constant 0 : i32
    return %c0_i32, %c0_i32_0 : i32, i32
  }
  func.func @transform_8(%arg0: i32) -> (i32, i32) {
    %c0_i32 = arith.constant 0 : i32
    %c0_i32_0 = arith.constant 0 : i32
    %c0_i32_1 = arith.constant 0 : i32
    return %c0_i32, %c0_i32_0 : i32, i32
  }
  func.func @transform_9(%arg0: i32) -> (i32, i32) {
    %c0_i32 = arith.constant 0 : i32
    %c0_i32_0 = arith.constant 0 : i32
    %c0_i32_1 = arith.constant 0 : i32
    return %c0_i32, %c0_i32_0 : i32, i32
  }
  func.func @transform_10(%arg0: i32) -> (i32, i32, i32) {
    %c0_i32 = arith.constant 0 : i32
    %c0_i32_0 = arith.constant 0 : i32
    %c0_i32_1 = arith.constant 0 : i32
    return %arg0, %c0_i32, %c0_i32_0 : i32, i32, i32
  }
}

</mosaic_0001>

<llo_original>
// kernel: swin_block_forward.1
$region0: #{swin_block_forward.1}
  #allocation0 [shape = 'u32[]', space=smem, size = 0x4, offset = 0x4, fixed_abs, tag = 'smem constant byte address 0x4 - core index']
  #allocation1 [shape = 'u32[72,128]{1,0:T(1,128)}', space=vmem, size = 0x9000, scoped, tag = 'internal scratch']
  %s0 = inlined_call_operand.vmem [shape: f32[16,64,128], index: 0, kind: input, shape index: {}]
  %s1 = inlined_call_operand.vmem [shape: f32[1,4,64,64], index: 1, kind: input, shape index: {}]
  %s2 = inlined_call_operand.vmem [shape: bf16[128,384], index: 2, kind: input, shape index: {}]
  %s3 = inlined_call_operand.vmem [shape: f32[1,384], index: 3, kind: input, shape index: {}]
  %s4 = inlined_call_operand.vmem [shape: bf16[128,128], index: 4, kind: input, shape index: {}]
  %s5 = inlined_call_operand.vmem [shape: f32[1,128], index: 5, kind: input, shape index: {}]
  %s6 = inlined_call_operand.vmem [shape: bf16[128,512], index: 6, kind: input, shape index: {}]
  %s7 = inlined_call_operand.vmem [shape: f32[1,512], index: 7, kind: input, shape index: {}]
  %s8 = inlined_call_operand.vmem [shape: bf16[512,128], index: 8, kind: input, shape index: {}]
  %s9 = inlined_call_operand.vmem [shape: f32[1,128], index: 9, kind: input, shape index: {}]
  %s10 = inlined_call_operand.vmem [shape: f32[16,64,128], index: 10, kind: output, shape index: {}]
  %s11 = sld [smem:[#allocation0]]
  $region73: #{swin_block_forward.1} parent=0
    _
  %s13 = ssub.s32 1, %s11
  %s14 = scalar_select 0, %s13, %s11
  loop: start=0, step=1, limit=6
  $region2: #{swin_block_forward.1} parent=0 // loop_pre_header
    _
  $region3: #{swin_block_forward.1} parent=0 // loop_header
    %s16 = sphi 0, %s20
    %p17 = scmp.ge.s32.totalorder %s16, 6
    %s26 = sphi 0, %s28
    %s29 = sphi 0, %s26
    %s30 = sphi 0, %s29
    %s46 = sphi 0, %s30
    %s50 = sphi 0, %s50
    %s52 = sphi 0, %s50
    %s53 = sphi 0, %s52
    %s67 = sphi 0, %s53
    %s71 = sphi 0, %s71
    %s73 = sphi 0, %s71
    %s74 = sphi 0, %s73
    %s88 = sphi 0, %s74
    %s92 = sphi 0, %s92
    %s94 = sphi 0, %s92
    %s95 = sphi 0, %s94
    %s109 = sphi 0, %s95
    %s113 = sphi 0, %s113
    %s115 = sphi 0, %s113
    %s116 = sphi 0, %s115
    %s130 = sphi 0, %s116
    %s134 = sphi 0, %s134
    %s136 = sphi 0, %s134
    %s137 = sphi 0, %s136
    %s151 = sphi 0, %s137
    %s155 = sphi 0, %s155
    %s157 = sphi 0, %s155
    %s158 = sphi 0, %s157
    %s172 = sphi 0, %s158
    %s176 = sphi 0, %s176
    %s178 = sphi 0, %s176
    %s179 = sphi 0, %s178
    %s193 = sphi 0, %s179
    %s197 = sphi 0, %s197
    %s199 = sphi 0, %s197
    %s200 = sphi 0, %s199
    %s214 = sphi 0, %s200
    %s218 = sphi 0, %s218
    %s220 = sphi 0, %s218
    %s221 = sphi 0, %s220
    %s235 = sphi 0, %s221
    %s241 = sphi 0, %s243
    %s244 = sphi 0, %s241
    %s245 = sphi 0, %s244
    %s261 = sphi 0, %s245
  $region4: #{swin_block_forward.1} parent=0 // loop_header_branch
    %19 = sbr.rel (%p17) target = $region8
  $region5: #{swin_block_forward.1} parent=0 // loop_body
    %s21 = ssub.s32 %s16, 1
    %s22 = ssub.s32 %s16, 2
    %s23 = sadd.s32 %s16, 1
    %s24 = ssub.s32 %s16, %s23
    %p25 = scmp.eq.s32.totalorder %s24, 0
    %s27 = sadd.s32 %s26, 1
    %s28 = scalar_select %p25, %s26, %s27
    %p31 = pneg %p25
    %p32 = scmp.eq.s32.totalorder %s16, 3
    %p33 = por %p31, %p32
    %p34 = scmp.ne.s32.totalorder %s26, %s29
    %p35 = scmp.eq.s32.totalorder %s16, 0
    %p36 = por %p34, %p35
    %p37 = scmp.ne.s32.totalorder %s26, %s29
    %p38 = scmp.eq.s32.totalorder %s21, 3
    %p39 = por %p37, %p38
    %p40 = scmp.ne.s32.totalorder %s29, %s30
    %p41 = scmp.eq.s32.totalorder %s21, 0
    %p42 = por %p40, %p41
    %p43 = scmp.ne.s32.totalorder %s29, %s30
    %p44 = scmp.eq.s32.totalorder %s22, 3
    %p45 = por %p43, %p44
    %p47 = scmp.ne.s32.totalorder %s30, %s46
    %p48 = scmp.eq.s32.totalorder %s22, 0
    %p49 = por %p47, %p48
    %s51 = sadd.s32 %s50, 1
    %p54 = scmp.eq.s32.totalorder %s16, 3
    %p55 = scmp.ne.s32.totalorder %s50, %s52
    %p56 = scmp.eq.s32.totalorder %s16, 0
    %p57 = por %p55, %p56
    %p58 = scmp.ne.s32.totalorder %s50, %s52
    %p59 = scmp.eq.s32.totalorder %s21, 3
    %p60 = por %p58, %p59
    %p61 = scmp.ne.s32.totalorder %s52, %s53
    %p62 = scmp.eq.s32.totalorder %s21, 0
    %p63 = por %p61, %p62
    %p64 = scmp.ne.s32.totalorder %s52, %s53
    %p65 = scmp.eq.s32.totalorder %s22, 3
    %p66 = por %p64, %p65
    %p68 = scmp.ne.s32.totalorder %s53, %s67
    %p69 = scmp.eq.s32.totalorder %s22, 0
    %p70 = por %p68, %p69
    %s72 = sadd.s32 %s71, 1
    %p75 = scmp.eq.s32.totalorder %s16, 3
    %p76 = scmp.ne.s32.totalorder %s71, %s73
    %p77 = scmp.eq.s32.totalorder %s16, 0
    %p78 = por %p76, %p77
    %p79 = scmp.ne.s32.totalorder %s71, %s73
    %p80 = scmp.eq.s32.totalorder %s21, 3
    %p81 = por %p79, %p80
    %p82 = scmp.ne.s32.totalorder %s73, %s74
    %p83 = scmp.eq.s32.totalorder %s21, 0
    %p84 = por %p82, %p83
    %p85 = scmp.ne.s32.totalorder %s73, %s74
    %p86 = scmp.eq.s32.totalorder %s22, 3
    %p87 = por %p85, %p86
    %p89 = scmp.ne.s32.totalorder %s74, %s88
    %p90 = scmp.eq.s32.totalorder %s22, 0
    %p91 = por %p89, %p90
    %s93 = sadd.s32 %s92, 1
    %p96 = scmp.eq.s32.totalorder %s16, 3
    %p97 = scmp.ne.s32.totalorder %s92, %s94
    %p98 = scmp.eq.s32.totalorder %s16, 0
    %p99 = por %p97, %p98
    %p100 = scmp.ne.s32.totalorder %s92, %s94
    %p101 = scmp.eq.s32.totalorder %s21, 3
    %p102 = por %p100, %p101
    %p103 = scmp.ne.s32.totalorder %s94, %s95
    %p104 = scmp.eq.s32.totalorder %s21, 0
    %p105 = por %p103, %p104
    %p106 = scmp.ne.s32.totalorder %s94, %s95
    %p107 = scmp.eq.s32.totalorder %s22, 3
    %p108 = por %p106, %p107
    %p110 = scmp.ne.s32.totalorder %s95, %s109
    %p111 = scmp.eq.s32.totalorder %s22, 0
    %p112 = por %p110, %p111
    %s114 = sadd.s32 %s113, 1
    %p117 = scmp.eq.s32.totalorder %s16, 3
    %p118 = scmp.ne.s32.totalorder %s113, %s115
    %p119 = scmp.eq.s32.totalorder %s16, 0
    %p120 = por %p118, %p119
    %p121 = scmp.ne.s32.totalorder %s113, %s115
    %p122 = scmp.eq.s32.totalorder %s21, 3
    %p123 = por %p121, %p122
    %p124 = scmp.ne.s32.totalorder %s115, %s116
    %p125 = scmp.eq.s32.totalorder %s21, 0
    %p126 = por %p124, %p125
    %p127 = scmp.ne.s32.totalorder %s115, %s116
    %p128 = scmp.eq.s32.totalorder %s22, 3
    %p129 = por %p127, %p128
    %p131 = scmp.ne.s32.totalorder %s116, %s130
    %p132 = scmp.eq.s32.totalorder %s22, 0
    %p133 = por %p131, %p132
    %s135 = sadd.s32 %s134, 1
    %p138 = scmp.eq.s32.totalorder %s16, 3
    %p139 = scmp.ne.s32.totalorder %s134, %s136
    %p140 = scmp.eq.s32.totalorder %s16, 0
    %p141 = por %p139, %p140
    %p142 = scmp.ne.s32.totalorder %s134, %s136
    %p143 = scmp.eq.s32.totalorder %s21, 3
    %p144 = por %p142, %p143
    %p145 = scmp.ne.s32.totalorder %s136, %s137
    %p146 = scmp.eq.s32.totalorder %s21, 0
    %p147 = por %p145, %p146
    %p148 = scmp.ne.s32.totalorder %s136, %s137
    %p149 = scmp.eq.s32.totalorder %s22, 3
    %p150 = por %p148, %p149
    %p152 = scmp.ne.s32.totalorder %s137, %s151
    %p153 = scmp.eq.s32.totalorder %s22, 0
    %p154 = por %p152, %p153
    %s156 = sadd.s32 %s155, 1
    %p159 = scmp.eq.s32.totalorder %s16, 3
    %p160 = scmp.ne.s32.totalorder %s155, %s157
    %p161 = scmp.eq.s32.totalorder %s16, 0
    %p162 = por %p160, %p161
    %p163 = scmp.ne.s32.totalorder %s155, %s157
    %p164 = scmp.eq.s32.totalorder %s21, 3
    %p165 = por %p163, %p164
    %p166 = scmp.ne.s32.totalorder %s157, %s158
    %p167 = scmp.eq.s32.totalorder %s21, 0
    %p168 = por %p166, %p167
    %p169 = scmp.ne.s32.totalorder %s157, %s158
    %p170 = scmp.eq.s32.totalorder %s22, 3
    %p171 = por %p169, %p170
    %p173 = scmp.ne.s32.totalorder %s158, %s172
    %p174 = scmp.eq.s32.totalorder %s22, 0
    %p175 = por %p173, %p174
    %s177 = sadd.s32 %s176, 1
    %p180 = scmp.eq.s32.totalorder %s16, 3
    %p181 = scmp.ne.s32.totalorder %s176, %s178
    %p182 = scmp.eq.s32.totalorder %s16, 0
    %p183 = por %p181, %p182
    %p184 = scmp.ne.s32.totalorder %s176, %s178
    %p185 = scmp.eq.s32.totalorder %s21, 3
    %p186 = por %p184, %p185
    %p187 = scmp.ne.s32.totalorder %s178, %s179
    %p188 = scmp.eq.s32.totalorder %s21, 0
    %p189 = por %p187, %p188
    %p190 = scmp.ne.s32.totalorder %s178, %s179
    %p191 = scmp.eq.s32.totalorder %s22, 3
    %p192 = por %p190, %p191
    %p194 = scmp.ne.s32.totalorder %s179, %s193
    %p195 = scmp.eq.s32.totalorder %s22, 0
    %p196 = por %p194, %p195
    %s198 = sadd.s32 %s197, 1
    %p201 = scmp.eq.s32.totalorder %s16, 3
    %p202 = scmp.ne.s32.totalorder %s197, %s199
    %p203 = scmp.eq.s32.totalorder %s16, 0
    %p204 = por %p202, %p203
    %p205 = scmp.ne.s32.totalorder %s197, %s199
    %p206 = scmp.eq.s32.totalorder %s21, 3
    %p207 = por %p205, %p206
    %p208 = scmp.ne.s32.totalorder %s199, %s200
    %p209 = scmp.eq.s32.totalorder %s21, 0
    %p210 = por %p208, %p209
    %p211 = scmp.ne.s32.totalorder %s199, %s200
    %p212 = scmp.eq.s32.totalorder %s22, 3
    %p213 = por %p211, %p212
    %p215 = scmp.ne.s32.totalorder %s200, %s214
    %p216 = scmp.eq.s32.totalorder %s22, 0
    %p217 = por %p215, %p216
    %s219 = sadd.s32 %s218, 1
    %p222 = scmp.eq.s32.totalorder %s16, 3
    %p223 = scmp.ne.s32.totalorder %s218, %s220
    %p224 = scmp.eq.s32.totalorder %s16, 0
    %p225 = por %p223, %p224
    %p226 = scmp.ne.s32.totalorder %s218, %s220
    %p227 = scmp.eq.s32.totalorder %s21, 3
    %p228 = por %p226, %p227
    %p229 = scmp.ne.s32.totalorder %s220, %s221
    %p230 = scmp.eq.s32.totalorder %s21, 0
    %p231 = por %p229, %p230
    %p232 = scmp.ne.s32.totalorder %s220, %s221
    %p233 = scmp.eq.s32.totalorder %s22, 3
    %p234 = por %p232, %p233
    %p236 = scmp.ne.s32.totalorder %s221, %s235
    %p237 = scmp.eq.s32.totalorder %s22, 0
    %p238 = por %p236, %p237
    %s239 = ssub.s32 %s16, %s23
    %p240 = scmp.eq.s32.totalorder %s239, 0
    %s242 = sadd.s32 %s241, 1
    %s243 = scalar_select %p240, %s241, %s242
    %p246 = pneg %p240
    %p247 = scmp.eq.s32.totalorder %s16, 3
    %p248 = por %p246, %p247
    %p249 = scmp.ne.s32.totalorder %s241, %s244
    %p250 = scmp.eq.s32.totalorder %s16, 0
    %p251 = por %p249, %p250
    %p252 = scmp.ne.s32.totalorder %s241, %s244
    %p253 = scmp.eq.s32.totalorder %s21, 3
    %p254 = por %p252, %p253
    %p255 = scmp.ne.s32.totalorder %s244, %s245
    %p256 = scmp.eq.s32.totalorder %s21, 0
    %p257 = por %p255, %p256
    %p258 = scmp.ne.s32.totalorder %s244, %s245
    %p259 = scmp.eq.s32.totalorder %s22, 3
    %p260 = por %p258, %p259
    %p262 = scmp.ne.s32.totalorder %s245, %s261
    %p263 = scmp.eq.s32.totalorder %s22, 0
    %p264 = por %p262, %p263
    %p265 = scmp.le.s32.totalorder 1, %s16
    %p266 = scmp.lt.s32.totalorder %s16, 5
    %p267 = pnand %p265, %p266
    %p268 = pneg %p267
    // Predicated region
    $region9: #{swin_block_forward.1} parent=5 // pred_check
      _
    $region10: #{swin_block_forward.1} parent=5 // pred_check_branch
      %270 = sbr.rel (%p267) target = $region12
    $region11: #{swin_block_forward.1} parent=5 // pred_region
      %s271 = ssub.s32 %s16, 1
      // Predicated region
      $region13: #{swin_block_forward.1} parent=11 // pred_check
        %p272 = pneg %p63
      $region14: #{swin_block_forward.1} parent=11 // pred_check_branch
        %274 = sbr.rel (%p272) target = $region16
      $region15: #{swin_block_forward.1} parent=11 // pred_region
        _
      $region16: #{swin_block_forward.1} parent=11 // pred_fallthru
        _
      // Predicated region
      $region17: #{swin_block_forward.1} parent=11 // pred_check
        %p275 = pneg %p84
      $region18: #{swin_block_forward.1} parent=11 // pred_check_branch
        %277 = sbr.rel (%p275) target = $region20
      $region19: #{swin_block_forward.1} parent=11 // pred_region
        _
      $region20: #{swin_block_forward.1} parent=11 // pred_fallthru
        _
      // Predicated region
      $region21: #{swin_block_forward.1} parent=11 // pred_check
        %p278 = pneg %p105
      $region22: #{swin_block_forward.1} parent=11 // pred_check_branch
        %280 = sbr.rel (%p278) target = $region24
      $region23: #{swin_block_forward.1} parent=11 // pred_region
        _
      $region24: #{swin_block_forward.1} parent=11 // pred_fallthru
        _
      // Predicated region
      $region25: #{swin_block_forward.1} parent=11 // pred_check
        %p281 = pneg %p126
      $region26: #{swin_block_forward.1} parent=11 // pred_check_branch
        %283 = sbr.rel (%p281) target = $region28
      $region27: #{swin_block_forward.1} parent=11 // pred_region
        _
      $region28: #{swin_block_forward.1} parent=11 // pred_fallthru
        _
      // Predicated region
      $region29: #{swin_block_forward.1} parent=11 // pred_check
        %p284 = pneg %p147
      $region30: #{swin_block_forward.1} parent=11 // pred_check_branch
        %286 = sbr.rel (%p284) target = $region32
      $region31: #{swin_block_forward.1} parent=11 // pred_region
        _
      $region32: #{swin_block_forward.1} parent=11 // pred_fallthru
        _
      // Predicated region
      $region33: #{swin_block_forward.1} parent=11 // pred_check
        %p287 = pneg %p168
      $region34: #{swin_block_forward.1} parent=11 // pred_check_branch
        %289 = sbr.rel (%p287) target = $region36
      $region35: #{swin_block_forward.1} parent=11 // pred_region
        _
      $region36: #{swin_block_forward.1} parent=11 // pred_fallthru
        _
      // Predicated region
      $region37: #{swin_block_forward.1} parent=11 // pred_check
        %p290 = pneg %p189
      $region38: #{swin_block_forward.1} parent=11 // pred_check_branch
        %292 = sbr.rel (%p290) target = $region40
      $region39: #{swin_block_forward.1} parent=11 // pred_region
        _
      $region40: #{swin_block_forward.1} parent=11 // pred_fallthru
        _
      // Predicated region
      $region41: #{swin_block_forward.1} parent=11 // pred_check
        %p293 = pneg %p210
      $region42: #{swin_block_forward.1} parent=11 // pred_check_branch
        %295 = sbr.rel (%p293) target = $region44
      $region43: #{swin_block_forward.1} parent=11 // pred_region
        _
      $region44: #{swin_block_forward.1} parent=11 // pred_fallthru
        _
      // Predicated region
      $region45: #{swin_block_forward.1} parent=11 // pred_check
        %p296 = pneg %p231
      $region46: #{swin_block_forward.1} parent=11 // pred_check_branch
        %298 = sbr.rel (%p296) target = $region48
      $region47: #{swin_block_forward.1} parent=11 // pred_region
        _
      $region48: #{swin_block_forward.1} parent=11 // pred_fallthru
        _
    $region12: #{swin_block_forward.1} parent=5 // pred_fallthru
      _
    %p299 = scmp.lt.s32.totalorder %s16, 4
    // Predicated region
    $region49: #{swin_block_forward.1} parent=5 // pred_check
      %p300 = pneg %p299
    $region50: #{swin_block_forward.1} parent=5 // pred_check_branch
      %302 = sbr.rel (%p300) target = $region52
    $region51: #{swin_block_forward.1} parent=5 // pred_region
      // Predicated region
      $region53: #{swin_block_forward.1} parent=51 // pred_check
        %p303 = pneg %p36
      $region54: #{swin_block_forward.1} parent=51 // pred_check_branch
        %305 = sbr.rel (%p303) target = $region56
      $region55: #{swin_block_forward.1} parent=51 // pred_region
        %s306 = smul.u32 4, %s16
        %p307 = scmp.lt.s32.totalorder %s306, 15
        %s308 = scalar_select %p307, %s306, 15
        %s309 = smul.addr %s308, 8
        %s310 = smul.addr %s309, 8
        %s311 = scalar_lea.vmem %s0, %s310
        %s312 = smul.u32 4, %s16
      $region56: #{swin_block_forward.1} parent=51 // pred_fallthru
        _
    $region52: #{swin_block_forward.1} parent=5 // pred_fallthru
      _
    %p313 = scmp.le.s32.totalorder 1, %s16
    %p314 = scmp.lt.s32.totalorder %s16, 5
    %p315 = pnand %p313, %p314
    %p316 = pneg %p315
    // Predicated region
    $region57: #{swin_block_forward.1} parent=5 // pred_check
      _
    $region58: #{swin_block_forward.1} parent=5 // pred_check_branch
      %318 = sbr.rel (%p315) target = $region60
    $region59: #{swin_block_forward.1} parent=5 // pred_region
      %s319 = ssub.s32 %s16, 1
      %s320 = smul.u32 4, %s21
      %p321 = scmp.lt.s32.totalorder %s320, 15
      %s322 = scalar_select %p321, %s320, 15
      %s323 = smul.addr %s322, 8
      %s324 = smul.addr %s323, 8
      %s325 = scalar_lea.vmem %s0, %s324
      %p326 = pneg %p42
      %p327 = pneg %p39
      %p328 = pneg %p63
      %p329 = pneg %p60
      %p330 = pneg %p84
      %p331 = pneg %p81
      %p332 = pneg %p105
      %p333 = pneg %p102
      %p334 = pneg %p126
      %p335 = pneg %p123
      %p336 = pneg %p147
      %p337 = pneg %p144
      %p338 = pneg %p168
      %p339 = pneg %p165
      %p340 = pneg %p189
      %p341 = pneg %p186
      %p342 = pneg %p210
      %p343 = pneg %p207
      %p344 = pneg %p231
      %p345 = pneg %p228
      %p346 = pneg %p257
      %p347 = pneg %p254
      %s348 = smul.u32 4, %s21
      %p349 = scmp.lt.s32.totalorder %s348, 15
      %s350 = scalar_select %p349, %s348, 15
      %s351 = smul.addr %s350, 8
      %s352 = smul.addr %s351, 8
      %s353 = scalar_lea.vmem %s10, %s352
      %s354 = smul.u32 4, %s21
      %p355 = scmp.lt.s32.totalorder %s354, 15
      %s356 = scalar_select %p355, %s354, 15
      %s357 = smul.addr %s356, 8
      %s358 = smul.addr %s357, 8
      %s359 = scalar_lea.vmem %s0, %s358
      %s360 = smul.u32 4, %s21
      %s361 = smul.u32 4, %s21
      %p362 = scmp.lt.s32.totalorder %s361, 15
      %s363 = scalar_select %p362, %s361, 15
      %s364 = smul.addr %s363, 8
      %s365 = smul.addr %s364, 8
      %s366 = scalar_lea.vmem %s10, %s365
      %s367 = smul.u32 4, %s21
      %v369 = vld [vmem:[%s359] sm:$0xff]
      %v370 = vld [vmem:[%s359 + $0x8] sm:$0xff]
      %v371 = vld [vmem:[%s359 + $0x10] sm:$0xff]
      %v372 = vld [vmem:[%s359 + $0x18] sm:$0xff]
      %v373 = vld [vmem:[%s359 + $0x20] sm:$0xff]
      %v374 = vld [vmem:[%s359 + $0x28] sm:$0xff]
      %v375 = vld [vmem:[%s359 + $0x30] sm:$0xff]
      %v376 = vld [vmem:[%s359 + $0x38] sm:$0xff]
      %v377 = vld [vmem:[%s359 + $0x40] sm:$0xff]
      %v378 = vld [vmem:[%s359 + $0x48] sm:$0xff]
      %v379 = vld [vmem:[%s359 + $0x50] sm:$0xff]
      %v380 = vld [vmem:[%s359 + $0x58] sm:$0xff]
      %v381 = vld [vmem:[%s359 + $0x60] sm:$0xff]
      %v382 = vld [vmem:[%s359 + $0x68] sm:$0xff]
      %v383 = vld [vmem:[%s359 + $0x70] sm:$0xff]
      %v384 = vld [vmem:[%s359 + $0x78] sm:$0xff]
      %v385 = vld [vmem:[%s359 + $0x80] sm:$0xff]
      %v386 = vld [vmem:[%s359 + $0x88] sm:$0xff]
      %v387 = vld [vmem:[%s359 + $0x90] sm:$0xff]
      %v388 = vld [vmem:[%s359 + $0x98] sm:$0xff]
      %v389 = vld [vmem:[%s359 + $0xa0] sm:$0xff]
      %v390 = vld [vmem:[%s359 + $0xa8] sm:$0xff]
      %v391 = vld [vmem:[%s359 + $0xb0] sm:$0xff]
      %v392 = vld [vmem:[%s359 + $0xb8] sm:$0xff]
      %v393 = vld [vmem:[%s359 + $0xc0] sm:$0xff]
      %v394 = vld [vmem:[%s359 + $0xc8] sm:$0xff]
      %v395 = vld [vmem:[%s359 + $0xd0] sm:$0xff]
      %v396 = vld [vmem:[%s359 + $0xd8] sm:$0xff]
      %v397 = vld [vmem:[%s359 + $0xe0] sm:$0xff]
      %v398 = vld [vmem:[%s359 + $0xe8] sm:$0xff]
      %v399 = vld [vmem:[%s359 + $0xf0] sm:$0xff]
      %v400 = vld [vmem:[%s359 + $0xf8] sm:$0xff]
      %401 = vadd.xlane.f32.xlu0 %v369
      %v402 = vpop.xlane.xlu0 %401
      %403 = vadd.xlane.f32.xlu0 %v370
      %v404 = vpop.xlane.xlu0 %403
      %405 = vadd.xlane.f32.xlu0 %v371
      %v406 = vpop.xlane.xlu0 %405
      %407 = vadd.xlane.f32.xlu0 %v372
      %v408 = vpop.xlane.xlu0 %407
      %409 = vadd.xlane.f32.xlu0 %v373
      %v410 = vpop.xlane.xlu0 %409
      %411 = vadd.xlane.f32.xlu0 %v374
      %v412 = vpop.xlane.xlu0 %411
      %413 = vadd.xlane.f32.xlu0 %v375
      %v414 = vpop.xlane.xlu0 %413
      %415 = vadd.xlane.f32.xlu0 %v376
      %v416 = vpop.xlane.xlu0 %415
      %417 = vadd.xlane.f32.xlu0 %v377
      %v418 = vpop.xlane.xlu0 %417
      %419 = vadd.xlane.f32.xlu0 %v378
      %v420 = vpop.xlane.xlu0 %419
      %421 = vadd.xlane.f32.xlu0 %v379
      %v422 = vpop.xlane.xlu0 %421
      %423 = vadd.xlane.f32.xlu0 %v380
      %v424 = vpop.xlane.xlu0 %423
      %425 = vadd.xlane.f32.xlu0 %v381
      %v426 = vpop.xlane.xlu0 %425
      %427 = vadd.xlane.f32.xlu0 %v382
      %v428 = vpop.xlane.xlu0 %427
      %429 = vadd.xlane.f32.xlu0 %v383
      %v430 = vpop.xlane.xlu0 %429
      %431 = vadd.xlane.f32.xlu0 %v384
      %v432 = vpop.xlane.xlu0 %431
      %433 = vadd.xlane.f32.xlu0 %v385
      %v434 = vpop.xlane.xlu0 %433
      %435 = vadd.xlane.f32.xlu0 %v386
      %v436 = vpop.xlane.xlu0 %435
      %437 = vadd.xlane.f32.xlu0 %v387
      %v438 = vpop.xlane.xlu0 %437
      %439 = vadd.xlane.f32.xlu0 %v388
      %v440 = vpop.xlane.xlu0 %439
      %441 = vadd.xlane.f32.xlu0 %v389
      %v442 = vpop.xlane.xlu0 %441
      %443 = vadd.xlane.f32.xlu0 %v390
      %v444 = vpop.xlane.xlu0 %443
      %445 = vadd.xlane.f32.xlu0 %v391
      %v446 = vpop.xlane.xlu0 %445
      %447 = vadd.xlane.f32.xlu0 %v392
      %v448 = vpop.xlane.xlu0 %447
      %449 = vadd.xlane.f32.xlu0 %v393
      %v450 = vpop.xlane.xlu0 %449
      %451 = vadd.xlane.f32.xlu0 %v394
      %v452 = vpop.xlane.xlu0 %451
      %453 = vadd.xlane.f32.xlu0 %v395
      %v454 = vpop.xlane.xlu0 %453
      %455 = vadd.xlane.f32.xlu0 %v396
      %v456 = vpop.xlane.xlu0 %455
      %457 = vadd.xlane.f32.xlu0 %v397
      %v458 = vpop.xlane.xlu0 %457
      %459 = vadd.xlane.f32.xlu0 %v398
      %v460 = vpop.xlane.xlu0 %459
      %461 = vadd.xlane.f32.xlu0 %v399
      %v462 = vpop.xlane.xlu0 %461
      %463 = vadd.xlane.f32.xlu0 %v400
      %v464 = vpop.xlane.xlu0 %463
      %v465 = vrcp.pop 128.0
      %v466 = vmul.f32 128.0, %v465
      %v467 = vsub.f32 1.0, %v466
      %v468 = vmul.f32 %v465, %v467
      %v469 = vadd.f32 %v465, %v468
      %vm470 = vweird.f32 %v465
      %v471 = vsel %vm470, %v465, %v469
      %v472 = vmul.f32 %v402, %v471
      %v473 = vmul.f32 %v404, %v471
      %v474 = vmul.f32 %v406, %v471
      %v475 = vmul.f32 %v408, %v471
      %v476 = vmul.f32 %v410, %v471
      %v477 = vmul.f32 %v412, %v471
      %v478 = vmul.f32 %v414, %v471
      %v479 = vmul.f32 %v416, %v471
      %v480 = vmul.f32 %v418, %v471
      %v481 = vmul.f32 %v420, %v471
      %v482 = vmul.f32 %v422, %v471
      %v483 = vmul.f32 %v424, %v471
      %v484 = vmul.f32 %v426, %v471
      %v485 = vmul.f32 %v428, %v471
      %v486 = vmul.f32 %v430, %v471
      %v487 = vmul.f32 %v432, %v471
      %v488 = vmul.f32 %v434, %v471
      %v489 = vmul.f32 %v436, %v471
      %v490 = vmul.f32 %v438, %v471
      %v491 = vmul.f32 %v440, %v471
      %v492 = vmul.f32 %v442, %v471
      %v493 = vmul.f32 %v444, %v471
      %v494 = vmul.f32 %v446, %v471
      %v495 = vmul.f32 %v448, %v471
      %v496 = vmul.f32 %v450, %v471
      %v497 = vmul.f32 %v452, %v471
      %v498 = vmul.f32 %v454, %v471
      %v499 = vmul.f32 %v456, %v471
      %v500 = vmul.f32 %v458, %v471
      %v501 = vmul.f32 %v460, %v471
      %v502 = vmul.f32 %v462, %v471
      %v503 = vmul.f32 %v464, %v471
      %v504 = vsub.f32 %v369, %v472
      %v505 = vsub.f32 %v370, %v473
      %v506 = vsub.f32 %v371, %v474
      %v507 = vsub.f32 %v372, %v475
      %v508 = vsub.f32 %v373, %v476
      %v509 = vsub.f32 %v374, %v477
      %v510 = vsub.f32 %v375, %v478
      %v511 = vsub.f32 %v376, %v479
      %v512 = vsub.f32 %v377, %v480
      %v513 = vsub.f32 %v378, %v481
      %v514 = vsub.f32 %v379, %v482
      %v515 = vsub.f32 %v380, %v483
      %v516 = vsub.f32 %v381, %v484
      %v517 = vsub.f32 %v382, %v485
      %v518 = vsub.f32 %v383, %v486
      %v519 = vsub.f32 %v384, %v487
      %v520 = vsub.f32 %v385, %v488
      %v521 = vsub.f32 %v386, %v489
      %v522 = vsub.f32 %v387, %v490
      %v523 = vsub.f32 %v388, %v491
      %v524 = vsub.f32 %v389, %v492
      %v525 = vsub.f32 %v390, %v493
      %v526 = vsub.f32 %v391, %v494
      %v527 = vsub.f32 %v392, %v495
      %v528 = vsub.f32 %v393, %v496
      %v529 = vsub.f32 %v394, %v497
      %v530 = vsub.f32 %v395, %v498
      %v531 = vsub.f32 %v396, %v499
      %v532 = vsub.f32 %v397, %v500
      %v533 = vsub.f32 %v398, %v501
      %v534 = vsub.f32 %v399, %v502
      %v535 = vsub.f32 %v400, %v503
      %v536 = vmul.f32 %v504, %v504
      %v537 = vmul.f32 %v505, %v505
      %v538 = vmul.f32 %v506, %v506
      %v539 = vmul.f32 %v507, %v507
      %v540 = vmul.f32 %v508, %v508
      %v541 = vmul.f32 %v509, %v509
      %v542 = vmul.f32 %v510, %v510
      %v543 = vmul.f32 %v511, %v511
      %v544 = vmul.f32 %v512, %v512
      %v545 = vmul.f32 %v513, %v513
      %v546 = vmul.f32 %v514, %v514
      %v547 = vmul.f32 %v515, %v515
      %v548 = vmul.f32 %v516, %v516
      %v549 = vmul.f32 %v517, %v517
      %v550 = vmul.f32 %v518, %v518
      %v551 = vmul.f32 %v519, %v519
      %v552 = vmul.f32 %v520, %v520
      %v553 = vmul.f32 %v521, %v521
      %v554 = vmul.f32 %v522, %v522
      %v555 = vmul.f32 %v523, %v523
      %v556 = vmul.f32 %v524, %v524
      %v557 = vmul.f32 %v525, %v525
      %v558 = vmul.f32 %v526, %v526
      %v559 = vmul.f32 %v527, %v527
      %v560 = vmul.f32 %v528, %v528
      %v561 = vmul.f32 %v529, %v529
      %v562 = vmul.f32 %v530, %v530
      %v563 = vmul.f32 %v531, %v531
      %v564 = vmul.f32 %v532, %v532
      %v565 = vmul.f32 %v533, %v533
      %v566 = vmul.f32 %v534, %v534
      %v567 = vmul.f32 %v535, %v535
      %568 = vadd.xlane.f32.xlu0 %v536
      %v569 = vpop.xlane.xlu0 %568
      %570 = vadd.xlane.f32.xlu0 %v537
      %v571 = vpop.xlane.xlu0 %570
      %572 = vadd.xlane.f32.xlu0 %v538
      %v573 = vpop.xlane.xlu0 %572
      %574 = vadd.xlane.f32.xlu0 %v539
      %v575 = vpop.xlane.xlu0 %574
      %576 = vadd.xlane.f32.xlu0 %v540
      %v577 = vpop.xlane.xlu0 %576
      %578 = vadd.xlane.f32.xlu0 %v541
      %v579 = vpop.xlane.xlu0 %578
      %580 = vadd.xlane.f32.xlu0 %v542
      %v581 = vpop.xlane.xlu0 %580
      %582 = vadd.xlane.f32.xlu0 %v543
      %v583 = vpop.xlane.xlu0 %582
      %584 = vadd.xlane.f32.xlu0 %v544
      %v585 = vpop.xlane.xlu0 %584
      %586 = vadd.xlane.f32.xlu0 %v545
      %v587 = vpop.xlane.xlu0 %586
      %588 = vadd.xlane.f32.xlu0 %v546
      %v589 = vpop.xlane.xlu0 %588
      %590 = vadd.xlane.f32.xlu0 %v547
      %v591 = vpop.xlane.xlu0 %590
      %592 = vadd.xlane.f32.xlu0 %v548
      %v593 = vpop.xlane.xlu0 %592
      %594 = vadd.xlane.f32.xlu0 %v549
      %v595 = vpop.xlane.xlu0 %594
      %596 = vadd.xlane.f32.xlu0 %v550
      %v597 = vpop.xlane.xlu0 %596
      %598 = vadd.xlane.f32.xlu0 %v551
      %v599 = vpop.xlane.xlu0 %598
      %600 = vadd.xlane.f32.xlu0 %v552
      %v601 = vpop.xlane.xlu0 %600
      %602 = vadd.xlane.f32.xlu0 %v553
      %v603 = vpop.xlane.xlu0 %602
      %604 = vadd.xlane.f32.xlu0 %v554
      %v605 = vpop.xlane.xlu0 %604
      %606 = vadd.xlane.f32.xlu0 %v555
      %v607 = vpop.xlane.xlu0 %606
      %608 = vadd.xlane.f32.xlu0 %v556
      %v609 = vpop.xlane.xlu0 %608
      %610 = vadd.xlane.f32.xlu0 %v557
      %v611 = vpop.xlane.xlu0 %610
      %612 = vadd.xlane.f32.xlu0 %v558
      %v613 = vpop.xlane.xlu0 %612
      %614 = vadd.xlane.f32.xlu0 %v559
      %v615 = vpop.xlane.xlu0 %614
      %616 = vadd.xlane.f32.xlu0 %v560
      %v617 = vpop.xlane.xlu0 %616
      %618 = vadd.xlane.f32.xlu0 %v561
      %v619 = vpop.xlane.xlu0 %618
      %620 = vadd.xlane.f32.xlu0 %v562
      %v621 = vpop.xlane.xlu0 %620
      %622 = vadd.xlane.f32.xlu0 %v563
      %v623 = vpop.xlane.xlu0 %622
      %624 = vadd.xlane.f32.xlu0 %v564
      %v625 = vpop.xlane.xlu0 %624
      %626 = vadd.xlane.f32.xlu0 %v565
      %v627 = vpop.xlane.xlu0 %626
      %628 = vadd.xlane.f32.xlu0 %v566
      %v629 = vpop.xlane.xlu0 %628
      %630 = vadd.xlane.f32.xlu0 %v567
      %v631 = vpop.xlane.xlu0 %630
      %v632 = vmul.f32 %v569, %v471
      %v633 = vmul.f32 %v571, %v471
      %v634 = vmul.f32 %v573, %v471
      %v635 = vmul.f32 %v575, %v471
      %v636 = vmul.f32 %v577, %v471
      %v637 = vmul.f32 %v579, %v471
      %v638 = vmul.f32 %v581, %v471
      %v639 = vmul.f32 %v583, %v471
      %v640 = vmul.f32 %v585, %v471
      %v641 = vmul.f32 %v587, %v471
      %v642 = vmul.f32 %v589, %v471
      %v643 = vmul.f32 %v591, %v471
      %v644 = vmul.f32 %v593, %v471
      %v645 = vmul.f32 %v595, %v471
      %v646 = vmul.f32 %v597, %v471
      %v647 = vmul.f32 %v599, %v471
      %v648 = vmul.f32 %v601, %v471
      %v649 = vmul.f32 %v603, %v471
      %v650 = vmul.f32 %v605, %v471
      %v651 = vmul.f32 %v607, %v471
      %v652 = vmul.f32 %v609, %v471
      %v653 = vmul.f32 %v611, %v471
      %v654 = vmul.f32 %v613, %v471
      %v655 = vmul.f32 %v615, %v471
      %v656 = vmul.f32 %v617, %v471
      %v657 = vmul.f32 %v619, %v471
      %v658 = vmul.f32 %v621, %v471
      %v659 = vmul.f32 %v623, %v471
      %v660 = vmul.f32 %v625, %v471
      %v661 = vmul.f32 %v627, %v471
      %v662 = vmul.f32 %v629, %v471
      %v663 = vmul.f32 %v631, %v471
      %v664 = vadd.f32 %v632, 1e-05
      %v665 = vadd.f32 %v633, 1e-05
      %v666 = vadd.f32 %v634, 1e-05
      %v667 = vadd.f32 %v635, 1e-05
      %v668 = vadd.f32 %v636, 1e-05
      %v669 = vadd.f32 %v637, 1e-05
      %v670 = vadd.f32 %v638, 1e-05
      %v671 = vadd.f32 %v639, 1e-05
      %v672 = vadd.f32 %v640, 1e-05
      %v673 = vadd.f32 %v641, 1e-05
      %v674 = vadd.f32 %v642, 1e-05
      %v675 = vadd.f32 %v643, 1e-05
      %v676 = vadd.f32 %v644, 1e-05
      %v677 = vadd.f32 %v645, 1e-05
      %v678 = vadd.f32 %v646, 1e-05
      %v679 = vadd.f32 %v647, 1e-05
      %v680 = vadd.f32 %v648, 1e-05
      %v681 = vadd.f32 %v649, 1e-05
      %v682 = vadd.f32 %v650, 1e-05
      %v683 = vadd.f32 %v651, 1e-05
      %v684 = vadd.f32 %v652, 1e-05
      %v685 = vadd.f32 %v653, 1e-05
      %v686 = vadd.f32 %v654, 1e-05
      %v687 = vadd.f32 %v655, 1e-05
      %v688 = vadd.f32 %v656, 1e-05
      %v689 = vadd.f32 %v657, 1e-05
      %v690 = vadd.f32 %v658, 1e-05
      %v691 = vadd.f32 %v659, 1e-05
      %v692 = vadd.f32 %v660, 1e-05
      %v693 = vadd.f32 %v661, 1e-05
      %v694 = vadd.f32 %v662, 1e-05
      %v695 = vadd.f32 %v663, 1e-05
      %v696 = vrsqrt.pop %v664
      %v697 = vmul.f32 %v696, %v664
      %v698 = vmul.f32 %v697, %v696
      %v699 = vmul.f32 0.5, %v698
      %v700 = vsub.f32 1.5, %v699
      %v701 = vmul.f32 %v696, %v700
      %vm702 = vweird.f32 %v664
      %vm703 = vweird.f32 %v696
      %vm704 = vmor %vm702, %vm703
      %v705 = vsel %vm704, %v696, %v701
      %v706 = vrsqrt.pop %v665
      %v707 = vmul.f32 %v706, %v665
      %v708 = vmul.f32 %v707, %v706
      %v709 = vmul.f32 0.5, %v708
      %v710 = vsub.f32 1.5, %v709
      %v711 = vmul.f32 %v706, %v710
      %vm712 = vweird.f32 %v665
      %vm713 = vweird.f32 %v706
      %vm714 = vmor %vm712, %vm713
      %v715 = vsel %vm714, %v706, %v711
      %v716 = vrsqrt.pop %v666
      %v717 = vmul.f32 %v716, %v666
      %v718 = vmul.f32 %v717, %v716
      %v719 = vmul.f32 0.5, %v718
      %v720 = vsub.f32 1.5, %v719
      %v721 = vmul.f32 %v716, %v720
      %vm722 = vweird.f32 %v666
      %vm723 = vweird.f32 %v716
      %vm724 = vmor %vm722, %vm723
      %v725 = vsel %vm724, %v716, %v721
      %v726 = vrsqrt.pop %v667
      %v727 = vmul.f32 %v726, %v667
      %v728 = vmul.f32 %v727, %v726
      %v729 = vmul.f32 0.5, %v728
      %v730 = vsub.f32 1.5, %v729
      %v731 = vmul.f32 %v726, %v730
      %vm732 = vweird.f32 %v667
      %vm733 = vweird.f32 %v726
      %vm734 = vmor %vm732, %vm733
      %v735 = vsel %vm734, %v726, %v731
      %v736 = vrsqrt.pop %v668
      %v737 = vmul.f32 %v736, %v668
      %v738 = vmul.f32 %v737, %v736
      %v739 = vmul.f32 0.5, %v738
      %v740 = vsub.f32 1.5, %v739
      %v741 = vmul.f32 %v736, %v740
      %vm742 = vweird.f32 %v668
      %vm743 = vweird.f32 %v736
      %vm744 = vmor %vm742, %vm743
      %v745 = vsel %vm744, %v736, %v741
      %v746 = vrsqrt.pop %v669
      %v747 = vmul.f32 %v746, %v669
      %v748 = vmul.f32 %v747, %v746
      %v749 = vmul.f32 0.5, %v748
      %v750 = vsub.f32 1.5, %v749
      %v751 = vmul.f32 %v746, %v750
      %vm752 = vweird.f32 %v669
      %vm753 = vweird.f32 %v746
      %vm754 = vmor %vm752, %vm753
      %v755 = vsel %vm754, %v746, %v751
      %v756 = vrsqrt.pop %v670
      %v757 = vmul.f32 %v756, %v670
      %v758 = vmul.f32 %v757, %v756
      %v759 = vmul.f32 0.5, %v758
      %v760 = vsub.f32 1.5, %v759
      %v761 = vmul.f32 %v756, %v760
      %vm762 = vweird.f32 %v670
      %vm763 = vweird.f32 %v756
      %vm764 = vmor %vm762, %vm763
      %v765 = vsel %vm764, %v756, %v761
      %v766 = vrsqrt.pop %v671
      %v767 = vmul.f32 %v766, %v671
      %v768 = vmul.f32 %v767, %v766
      %v769 = vmul.f32 0.5, %v768
      %v770 = vsub.f32 1.5, %v769
      %v771 = vmul.f32 %v766, %v770
      %vm772 = vweird.f32 %v671
      %vm773 = vweird.f32 %v766
      %vm774 = vmor %vm772, %vm773
      %v775 = vsel %vm774, %v766, %v771
      %v776 = vrsqrt.pop %v672
      %v777 = vmul.f32 %v776, %v672
      %v778 = vmul.f32 %v777, %v776
      %v779 = vmul.f32 0.5, %v778
      %v780 = vsub.f32 1.5, %v779
      %v781 = vmul.f32 %v776, %v780
      %vm782 = vweird.f32 %v672
      %vm783 = vweird.f32 %v776
      %vm784 = vmor %vm782, %vm783
      %v785 = vsel %vm784, %v776, %v781
      %v786 = vrsqrt.pop %v673
      %v787 = vmul.f32 %v786, %v673
      %v788 = vmul.f32 %v787, %v786
      %v789 = vmul.f32 0.5, %v788
      %v790 = vsub.f32 1.5, %v789
      %v791 = vmul.f32 %v786, %v790
      %vm792 = vweird.f32 %v673
      %vm793 = vweird.f32 %v786
      %vm794 = vmor %vm792, %vm793
      %v795 = vsel %vm794, %v786, %v791
      %v796 = vrsqrt.pop %v674
      %v797 = vmul.f32 %v796, %v674
      %v798 = vmul.f32 %v797, %v796
      %v799 = vmul.f32 0.5, %v798
      %v800 = vsub.f32 1.5, %v799
      %v801 = vmul.f32 %v796, %v800
      %vm802 = vweird.f32 %v674
      %vm803 = vweird.f32 %v796
      %vm804 = vmor %vm802, %vm803
      %v805 = vsel %vm804, %v796, %v801
      %v806 = vrsqrt.pop %v675
      %v807 = vmul.f32 %v806, %v675
      %v808 = vmul.f32 %v807, %v806
      %v809 = vmul.f32 0.5, %v808
      %v810 = vsub.f32 1.5, %v809
      %v811 = vmul.f32 %v806, %v810
      %vm812 = vweird.f32 %v675
      %vm813 = vweird.f32 %v806
      %vm814 = vmor %vm812, %vm813
      %v815 = vsel %vm814, %v806, %v811
      %v816 = vrsqrt.pop %v676
      %v817 = vmul.f32 %v816, %v676
      %v818 = vmul.f32 %v817, %v816
      %v819 = vmul.f32 0.5, %v818
      %v820 = vsub.f32 1.5, %v819
      %v821 = vmul.f32 %v816, %v820
      %vm822 = vweird.f32 %v676
      %vm823 = vweird.f32 %v816
      %vm824 = vmor %vm822, %vm823
      %v825 = vsel %vm824, %v816, %v821
      %v826 = vrsqrt.pop %v677
      %v827 = vmul.f32 %v826, %v677
      %v828 = vmul.f32 %v827, %v826
      %v829 = vmul.f32 0.5, %v828
      %v830 = vsub.f32 1.5, %v829
      %v831 = vmul.f32 %v826, %v830
      %vm832 = vweird.f32 %v677
      %vm833 = vweird.f32 %v826
      %vm834 = vmor %vm832, %vm833
      %v835 = vsel %vm834, %v826, %v831
      %v836 = vrsqrt.pop %v678
      %v837 = vmul.f32 %v836, %v678
      %v838 = vmul.f32 %v837, %v836
      %v839 = vmul.f32 0.5, %v838
      %v840 = vsub.f32 1.5, %v839
      %v841 = vmul.f32 %v836, %v840
      %vm842 = vweird.f32 %v678
      %vm843 = vweird.f32 %v836
      %vm844 = vmor %vm842, %vm843
      %v845 = vsel %vm844, %v836, %v841
      %v846 = vrsqrt.pop %v679
      %v847 = vmul.f32 %v846, %v679
      %v848 = vmul.f32 %v847, %v846
      %v849 = vmul.f32 0.5, %v848
      %v850 = vsub.f32 1.5, %v849
      %v851 = vmul.f32 %v846, %v850
      %vm852 = vweird.f32 %v679
      %vm853 = vweird.f32 %v846
      %vm854 = vmor %vm852, %vm853
      %v855 = vsel %vm854, %v846, %v851
      %v856 = vrsqrt.pop %v680
      %v857 = vmul.f32 %v856, %v680
      %v858 = vmul.f32 %v857, %v856
      %v859 = vmul.f32 0.5, %v858
      %v860 = vsub.f32 1.5, %v859
      %v861 = vmul.f32 %v856, %v860
      %vm862 = vweird.f32 %v680
      %vm863 = vweird.f32 %v856
      %vm864 = vmor %vm862, %vm863
      %v865 = vsel %vm864, %v856, %v861
      %v866 = vrsqrt.pop %v681
      %v867 = vmul.f32 %v866, %v681
      %v868 = vmul.f32 %v867, %v866
      %v869 = vmul.f32 0.5, %v868
      %v870 = vsub.f32 1.5, %v869
      %v871 = vmul.f32 %v866, %v870
      %vm872 = vweird.f32 %v681
      %vm873 = vweird.f32 %v866
      %vm874 = vmor %vm872, %vm873
      %v875 = vsel %vm874, %v866, %v871
      %v876 = vrsqrt.pop %v682
      %v877 = vmul.f32 %v876, %v682
      %v878 = vmul.f32 %v877, %v876
      %v879 = vmul.f32 0.5, %v878
      %v880 = vsub.f32 1.5, %v879
      %v881 = vmul.f32 %v876, %v880
      %vm882 = vweird.f32 %v682
      %vm883 = vweird.f32 %v876
      %vm884 = vmor %vm882, %vm883
      %v885 = vsel %vm884, %v876, %v881
      %v886 = vrsqrt.pop %v683
      %v887 = vmul.f32 %v886, %v683
      %v888 = vmul.f32 %v887, %v886
      %v889 = vmul.f32 0.5, %v888
      %v890 = vsub.f32 1.5, %v889
      %v891 = vmul.f32 %v886, %v890
      %vm892 = vweird.f32 %v683
      %vm893 = vweird.f32 %v886
      %vm894 = vmor %vm892, %vm893
      %v895 = vsel %vm894, %v886, %v891
      %v896 = vrsqrt.pop %v684
      %v897 = vmul.f32 %v896, %v684
      %v898 = vmul.f32 %v897, %v896
      %v899 = vmul.f32 0.5, %v898
      %v900 = vsub.f32 1.5, %v899
      %v901 = vmul.f32 %v896, %v900
      %vm902 = vweird.f32 %v684
      %vm903 = vweird.f32 %v896
      %vm904 = vmor %vm902, %vm903
      %v905 = vsel %vm904, %v896, %v901
      %v906 = vrsqrt.pop %v685
      %v907 = vmul.f32 %v906, %v685
      %v908 = vmul.f32 %v907, %v906
      %v909 = vmul.f32 0.5, %v908
      %v910 = vsub.f32 1.5, %v909
      %v911 = vmul.f32 %v906, %v910
      %vm912 = vweird.f32 %v685
      %vm913 = vweird.f32 %v906
      %vm914 = vmor %vm912, %vm913
      %v915 = vsel %vm914, %v906, %v911
      %v916 = vrsqrt.pop %v686
      %v917 = vmul.f32 %v916, %v686
      %v918 = vmul.f32 %v917, %v916
      %v919 = vmul.f32 0.5, %v918
      %v920 = vsub.f32 1.5, %v919
      %v921 = vmul.f32 %v916, %v920
      %vm922 = vweird.f32 %v686
      %vm923 = vweird.f32 %v916
      %vm924 = vmor %vm922, %vm923
      %v925 = vsel %vm924, %v916, %v921
      %v926 = vrsqrt.pop %v687
      %v927 = vmul.f32 %v926, %v687
      %v928 = vmul.f32 %v927, %v926
      %v929 = vmul.f32 0.5, %v928
      %v930 = vsub.f32 1.5, %v929
      %v931 = vmul.f32 %v926, %v930
      %vm932 = vweird.f32 %v687
      %vm933 = vweird.f32 %v926
      %vm934 = vmor %vm932, %vm933
      %v935 = vsel %vm934, %v926, %v931
      %v936 = vrsqrt.pop %v688
      %v937 = vmul.f32 %v936, %v688
      %v938 = vmul.f32 %v937, %v936
      %v939 = vmul.f32 0.5, %v938
      %v940 = vsub.f32 1.5, %v939
      %v941 = vmul.f32 %v936, %v940
      %vm942 = vweird.f32 %v688
      %vm943 = vweird.f32 %v936
      %vm944 = vmor %vm942, %vm943
      %v945 = vsel %vm944, %v936, %v941
      %v946 = vrsqrt.pop %v689
      %v947 = vmul.f32 %v946, %v689
      %v948 = vmul.f32 %v947, %v946
      %v949 = vmul.f32 0.5, %v948
      %v950 = vsub.f32 1.5, %v949
      %v951 = vmul.f32 %v946, %v950
      %vm952 = vweird.f32 %v689
      %vm953 = vweird.f32 %v946
      %vm954 = vmor %vm952, %vm953
      %v955 = vsel %vm954, %v946, %v951
      %v956 = vrsqrt.pop %v690
      %v957 = vmul.f32 %v956, %v690
      %v958 = vmul.f32 %v957, %v956
      %v959 = vmul.f32 0.5, %v958
      %v960 = vsub.f32 1.5, %v959
      %v961 = vmul.f32 %v956, %v960
      %vm962 = vweird.f32 %v690
      %vm963 = vweird.f32 %v956
      %vm964 = vmor %vm962, %vm963
      %v965 = vsel %vm964, %v956, %v961
      %v966 = vrsqrt.pop %v691
      %v967 = vmul.f32 %v966, %v691
      %v968 = vmul.f32 %v967, %v966
      %v969 = vmul.f32 0.5, %v968
      %v970 = vsub.f32 1.5, %v969
      %v971 = vmul.f32 %v966, %v970
      %vm972 = vweird.f32 %v691
      %vm973 = vweird.f32 %v966
      %vm974 = vmor %vm972, %vm973
      %v975 = vsel %vm974, %v966, %v971
      %v976 = vrsqrt.pop %v692
      %v977 = vmul.f32 %v976, %v692
      %v978 = vmul.f32 %v977, %v976
      %v979 = vmul.f32 0.5, %v978
      %v980 = vsub.f32 1.5, %v979
      %v981 = vmul.f32 %v976, %v980
      %vm982 = vweird.f32 %v692
      %vm983 = vweird.f32 %v976
      %vm984 = vmor %vm982, %vm983
      %v985 = vsel %vm984, %v976, %v981
      %v986 = vrsqrt.pop %v693
      %v987 = vmul.f32 %v986, %v693
      %v988 = vmul.f32 %v987, %v986
      %v989 = vmul.f32 0.5, %v988
      %v990 = vsub.f32 1.5, %v989
      %v991 = vmul.f32 %v986, %v990
      %vm992 = vweird.f32 %v693
      %vm993 = vweird.f32 %v986
      %vm994 = vmor %vm992, %vm993
      %v995 = vsel %vm994, %v986, %v991
      %v996 = vrsqrt.pop %v694
      %v997 = vmul.f32 %v996, %v694
      %v998 = vmul.f32 %v997, %v996
      %v999 = vmul.f32 0.5, %v998
      %v1000 = vsub.f32 1.5, %v999
      %v1001 = vmul.f32 %v996, %v1000
      %vm1002 = vweird.f32 %v694
      %vm1003 = vweird.f32 %v996
      %vm1004 = vmor %vm1002, %vm1003
      %v1005 = vsel %vm1004, %v996, %v1001
      %v1006 = vrsqrt.pop %v695
      %v1007 = vmul.f32 %v1006, %v695
      %v1008 = vmul.f32 %v1007, %v1006
      %v1009 = vmul.f32 0.5, %v1008
      %v1010 = vsub.f32 1.5, %v1009
      %v1011 = vmul.f32 %v1006, %v1010
      %vm1012 = vweird.f32 %v695
      %vm1013 = vweird.f32 %v1006
      %vm1014 = vmor %vm1012, %vm1013
      %v1015 = vsel %vm1014, %v1006, %v1011
      %v1016 = vmul.f32 %v504, %v705
      %v1017 = vmul.f32 %v505, %v715
      %v1018 = vmul.f32 %v506, %v725
      %v1019 = vmul.f32 %v507, %v735
      %v1020 = vmul.f32 %v508, %v745
      %v1021 = vmul.f32 %v509, %v755
      %v1022 = vmul.f32 %v510, %v765
      %v1023 = vmul.f32 %v511, %v775
      %v1024 = vmul.f32 %v512, %v785
      %v1025 = vmul.f32 %v513, %v795
      %v1026 = vmul.f32 %v514, %v805
      %v1027 = vmul.f32 %v515, %v815
      %v1028 = vmul.f32 %v516, %v825
      %v1029 = vmul.f32 %v517, %v835
      %v1030 = vmul.f32 %v518, %v845
      %v1031 = vmul.f32 %v519, %v855
      %v1032 = vmul.f32 %v520, %v865
      %v1033 = vmul.f32 %v521, %v875
      %v1034 = vmul.f32 %v522, %v885
      %v1035 = vmul.f32 %v523, %v895
      %v1036 = vmul.f32 %v524, %v905
      %v1037 = vmul.f32 %v525, %v915
      %v1038 = vmul.f32 %v526, %v925
      %v1039 = vmul.f32 %v527, %v935
      %v1040 = vmul.f32 %v528, %v945
      %v1041 = vmul.f32 %v529, %v955
      %v1042 = vmul.f32 %v530, %v965
      %v1043 = vmul.f32 %v531, %v975
      %v1044 = vmul.f32 %v532, %v985
      %v1045 = vmul.f32 %v533, %v995
      %v1046 = vmul.f32 %v534, %v1005
      %v1047 = vmul.f32 %v535, %v1015
      %v1048 = vpack.c.bf16 %v1017, %v1016
      %v1049 = vpack.c.bf16 %v1019, %v1018
      %v1050 = vpack.c.bf16 %v1021, %v1020
      %v1051 = vpack.c.bf16 %v1023, %v1022
      %v1052 = vpack.c.bf16 %v1025, %v1024
      %v1053 = vpack.c.bf16 %v1027, %v1026
      %v1054 = vpack.c.bf16 %v1029, %v1028
      %v1055 = vpack.c.bf16 %v1031, %v1030
      %v1056 = vpack.c.bf16 %v1033, %v1032
      %v1057 = vpack.c.bf16 %v1035, %v1034
      %v1058 = vpack.c.bf16 %v1037, %v1036
      %v1059 = vpack.c.bf16 %v1039, %v1038
      %v1060 = vpack.c.bf16 %v1041, %v1040
      %v1061 = vpack.c.bf16 %v1043, %v1042
      %v1062 = vpack.c.bf16 %v1045, %v1044
      %v1063 = vpack.c.bf16 %v1047, %v1046
      %v1064 = vld [vmem:[%s2] sm:$0xff]
      %v1065 = vld [vmem:[%s2 + $0x8] sm:$0xf]
      %v1066 = vld [vmem:[%s2 + $0xc] sm:$0xff]
      %v1067 = vld [vmem:[%s2 + $0x14] sm:$0xf]
      %v1068 = vld [vmem:[%s2 + $0x18] sm:$0xff]
      %v1069 = vld [vmem:[%s2 + $0x20] sm:$0xf]
      %v1070 = vld [vmem:[%s2 + $0x24] sm:$0xff]
      %v1071 = vld [vmem:[%s2 + $0x2c] sm:$0xf]
      %v1072 = vld [vmem:[%s2 + $0x30] sm:$0xff]
      %v1073 = vld [vmem:[%s2 + $0x38] sm:$0xf]
      %v1074 = vld [vmem:[%s2 + $0x3c] sm:$0xff]
      %v1075 = vld [vmem:[%s2 + $0x44] sm:$0xf]
      %v1076 = vld [vmem:[%s2 + $0x48] sm:$0xff]
      %v1077 = vld [vmem:[%s2 + $0x50] sm:$0xf]
      %v1078 = vld [vmem:[%s2 + $0x54] sm:$0xff]
      %v1079 = vld [vmem:[%s2 + $0x5c] sm:$0xf]
      %v1080 = vld [vmem:[%s2 + $0x60] sm:$0xff]
      %v1081 = vld [vmem:[%s2 + $0x68] sm:$0xf]
      %v1082 = vld [vmem:[%s2 + $0x6c] sm:$0xff]
      %v1083 = vld [vmem:[%s2 + $0x74] sm:$0xf]
      %v1084 = vld [vmem:[%s2 + $0x78] sm:$0xff]
      %v1085 = vld [vmem:[%s2 + $0x80] sm:$0xf]
      %v1086 = vld [vmem:[%s2 + $0x84] sm:$0xff]
      %v1087 = vld [vmem:[%s2 + $0x8c] sm:$0xf]
      %v1088 = vld [vmem:[%s2 + $0x90] sm:$0xff]
      %v1089 = vld [vmem:[%s2 + $0x98] sm:$0xf]
      %v1090 = vld [vmem:[%s2 + $0x9c] sm:$0xff]
      %v1091 = vld [vmem:[%s2 + $0xa4] sm:$0xf]
      %v1092 = vld [vmem:[%s2 + $0xa8] sm:$0xff]
      %v1093 = vld [vmem:[%s2 + $0xb0] sm:$0xf]
      %v1094 = vld [vmem:[%s2 + $0xb4] sm:$0xff]
      %v1095 = vld [vmem:[%s2 + $0xbc] sm:$0xf]
      %v1096 = vld [vmem:[%s3] sm:$0x7]
      %v1098 = vperm.slane %v1096, 0
      %v1099 = vperm.slane %v1096, 1
      %v1100 = vperm.slane %v1096, 2
      %v1136 = vunpack.c.l.b16 %v1064
      %v1137 = vunpack.c.h.b16 %v1064
      %v1138 = vunpack.c.l.b16 %v1065
      %v1139 = vunpack.c.l.b16 %v1066
      %v1140 = vunpack.c.h.b16 %v1066
      %v1141 = vunpack.c.l.b16 %v1067
      %v1142 = vunpack.c.l.b16 %v1068
      %v1143 = vunpack.c.h.b16 %v1068
      %v1144 = vunpack.c.l.b16 %v1069
      %v1145 = vunpack.c.l.b16 %v1070
      %v1146 = vunpack.c.h.b16 %v1070
      %v1147 = vunpack.c.l.b16 %v1071
      %v1148 = vunpack.c.l.b16 %v1072
      %v1149 = vunpack.c.h.b16 %v1072
      %v1150 = vunpack.c.l.b16 %v1073
      %v1151 = vunpack.c.l.b16 %v1074
      %v1152 = vunpack.c.h.b16 %v1074
      %v1153 = vunpack.c.l.b16 %v1075
      %v1154 = vunpack.c.l.b16 %v1076
      %v1155 = vunpack.c.h.b16 %v1076
      %v1156 = vunpack.c.l.b16 %v1077
      %v1157 = vunpack.c.l.b16 %v1078
      %v1158 = vunpack.c.h.b16 %v1078
      %v1159 = vunpack.c.l.b16 %v1079
      %v1160 = vunpack.c.l.b16 %v1080
      %v1161 = vunpack.c.h.b16 %v1080
      %v1162 = vunpack.c.l.b16 %v1081
      %v1163 = vunpack.c.l.b16 %v1082
      %v1164 = vunpack.c.h.b16 %v1082
      %v1165 = vunpack.c.l.b16 %v1083
      %v1166 = vunpack.c.l.b16 %v1084
      %v1167 = vunpack.c.h.b16 %v1084
      %v1168 = vunpack.c.l.b16 %v1085
      %v1169 = vunpack.c.l.b16 %v1086
      %v1170 = vunpack.c.h.b16 %v1086
      %v1171 = vunpack.c.l.b16 %v1087
      %v1172 = vunpack.c.l.b16 %v1088
      %v1173 = vunpack.c.h.b16 %v1088
      %v1174 = vunpack.c.l.b16 %v1089
      %v1175 = vunpack.c.l.b16 %v1090
      %v1176 = vunpack.c.h.b16 %v1090
      %v1177 = vunpack.c.l.b16 %v1091
      %v1178 = vunpack.c.l.b16 %v1092
      %v1179 = vunpack.c.h.b16 %v1092
      %v1180 = vunpack.c.l.b16 %v1093
      %v1181 = vunpack.c.l.b16 %v1094
      %v1182 = vunpack.c.h.b16 %v1094
      %v1183 = vunpack.c.l.b16 %v1095
      %v1184 = vpack.c.b16 %v1139, %v1136
      %v1185 = vpack.c.b16 %v1140, %v1137
      %v1186 = vpack.c.b16 %v1141, %v1138
      %v1187 = vpack.c.b16 %v1145, %v1142
      %v1188 = vpack.c.b16 %v1146, %v1143
      %v1189 = vpack.c.b16 %v1147, %v1144
      %v1190 = vpack.c.b16 %v1151, %v1148
      %v1191 = vpack.c.b16 %v1152, %v1149
      %v1192 = vpack.c.b16 %v1153, %v1150
      %v1193 = vpack.c.b16 %v1157, %v1154
      %v1194 = vpack.c.b16 %v1158, %v1155
      %v1195 = vpack.c.b16 %v1159, %v1156
      %v1196 = vpack.c.b16 %v1163, %v1160
      %v1197 = vpack.c.b16 %v1164, %v1161
      %v1198 = vpack.c.b16 %v1165, %v1162
      %v1199 = vpack.c.b16 %v1169, %v1166
      %v1200 = vpack.c.b16 %v1170, %v1167
      %v1201 = vpack.c.b16 %v1171, %v1168
      %v1202 = vpack.c.b16 %v1175, %v1172
      %v1203 = vpack.c.b16 %v1176, %v1173
      %v1204 = vpack.c.b16 %v1177, %v1174
      %v1205 = vpack.c.b16 %v1181, %v1178
      %v1206 = vpack.c.b16 %v1182, %v1179
      %v1207 = vpack.c.b16 %v1183, %v1180
      %1232 = vmatpush.bf16.msra.mxu0 %v1205
      %1233 = vmatpush.bf16.msra.mxu0 %v1202
      %1234 = vmatpush.bf16.msra.mxu0 %v1199
      %1235 = vmatpush.bf16.msra.mxu0 %v1196
      %1236 = vmatpush.bf16.msra.mxu0 %v1193
      %1237 = vmatpush.bf16.msra.mxu0 %v1190
      %1238 = vmatpush.bf16.msra.mxu0 %v1187
      %1239 = vmatpush.bf16.msra.mxu0 %v1184
      %1240 = vmatmul.bf16.gmra.mxu0 %v1048
      %v1241 = vpop.f32.mrf.mxu0
      %v1242 = vadd.f32 %v1098, %v1241
      %v1243 = vpop.f32.mrf.mxu0
      %v1244 = vadd.f32 %v1098, %v1243
      %1245 = vmatmul.bf16.gmra.mxu0 %v1049
      %v1246 = vpop.f32.mrf.mxu0
      %v1247 = vadd.f32 %v1098, %v1246
      %v1248 = vpop.f32.mrf.mxu0
      %v1249 = vadd.f32 %v1098, %v1248
      %1250 = vmatmul.bf16.gmra.mxu0 %v1050
      %v1251 = vpop.f32.mrf.mxu0
      %v1252 = vadd.f32 %v1098, %v1251
      %v1253 = vpop.f32.mrf.mxu0
      %v1254 = vadd.f32 %v1098, %v1253
      %1255 = vmatmul.bf16.gmra.mxu0 %v1051
      %v1256 = vpop.f32.mrf.mxu0
      %v1257 = vadd.f32 %v1098, %v1256
      %v1258 = vpop.f32.mrf.mxu0
      %v1259 = vadd.f32 %v1098, %v1258
      %1260 = vmatmul.bf16.gmra.mxu0 %v1052
      %v1261 = vpop.f32.mrf.mxu0
      %v1262 = vadd.f32 %v1098, %v1261
      %v1263 = vpop.f32.mrf.mxu0
      %v1264 = vadd.f32 %v1098, %v1263
      %1265 = vmatmul.bf16.gmra.mxu0 %v1053
      %v1266 = vpop.f32.mrf.mxu0
      %v1267 = vadd.f32 %v1098, %v1266
      %v1268 = vpop.f32.mrf.mxu0
      %v1269 = vadd.f32 %v1098, %v1268
      %1270 = vmatmul.bf16.gmra.mxu0 %v1054
      %v1271 = vpop.f32.mrf.mxu0
      %v1272 = vadd.f32 %v1098, %v1271
      %v1273 = vpop.f32.mrf.mxu0
      %v1274 = vadd.f32 %v1098, %v1273
      %1275 = vmatmul.bf16.gmra.mxu0 %v1055
      %v1276 = vpop.f32.mrf.mxu0
      %v1277 = vadd.f32 %v1098, %v1276
      %v1278 = vpop.f32.mrf.mxu0
      %v1279 = vadd.f32 %v1098, %v1278
      %1280 = vmatmul.bf16.gmra.mxu0 %v1056
      %v1281 = vpop.f32.mrf.mxu0
      %v1282 = vadd.f32 %v1098, %v1281
      %v1283 = vpop.f32.mrf.mxu0
      %v1284 = vadd.f32 %v1098, %v1283
      %1285 = vmatmul.bf16.gmra.mxu0 %v1057
      %v1286 = vpop.f32.mrf.mxu0
      %v1287 = vadd.f32 %v1098, %v1286
      %v1288 = vpop.f32.mrf.mxu0
      %v1289 = vadd.f32 %v1098, %v1288
      %1290 = vmatmul.bf16.gmra.mxu0 %v1058
      %v1291 = vpop.f32.mrf.mxu0
      %v1292 = vadd.f32 %v1098, %v1291
      %v1293 = vpop.f32.mrf.mxu0
      %v1294 = vadd.f32 %v1098, %v1293
      %1295 = vmatmul.bf16.gmra.mxu0 %v1059
      %v1296 = vpop.f32.mrf.mxu0
      %v1297 = vadd.f32 %v1098, %v1296
      %v1298 = vpop.f32.mrf.mxu0
      %v1299 = vadd.f32 %v1098, %v1298
      %1300 = vmatmul.bf16.gmra.mxu0 %v1060
      %v1301 = vpop.f32.mrf.mxu0
      %v1302 = vadd.f32 %v1098, %v1301
      %v1303 = vpop.f32.mrf.mxu0
      %v1304 = vadd.f32 %v1098, %v1303
      %1305 = vmatmul.bf16.gmra.mxu0 %v1061
      %v1306 = vpop.f32.mrf.mxu0
      %v1307 = vadd.f32 %v1098, %v1306
      %v1308 = vpop.f32.mrf.mxu0
      %v1309 = vadd.f32 %v1098, %v1308
      %1310 = vmatmul.bf16.gmra.mxu0 %v1062
      %v1311 = vpop.f32.mrf.mxu0
      %v1312 = vadd.f32 %v1098, %v1311
      %v1313 = vpop.f32.mrf.mxu0
      %v1314 = vadd.f32 %v1098, %v1313
      %1315 = vmatmul.bf16.gmra.mxu0 %v1063
      %v1316 = vpop.f32.mrf.mxu0
      %v1317 = vadd.f32 %v1098, %v1316
      %v1318 = vpop.f32.mrf.mxu0
      %v1319 = vadd.f32 %v1098, %v1318
      %1320 = vdwg.mxu0
      %1321 = vmatpush.bf16.msra.mxu0 %v1206
      %1322 = vmatpush.bf16.msra.mxu0 %v1203
      %1323 = vmatpush.bf16.msra.mxu0 %v1200
      %1324 = vmatpush.bf16.msra.mxu0 %v1197
      %1325 = vmatpush.bf16.msra.mxu0 %v1194
      %1326 = vmatpush.bf16.msra.mxu0 %v1191
      %1327 = vmatpush.bf16.msra.mxu0 %v1188
      %1328 = vmatpush.bf16.msra.mxu0 %v1185
      %1329 = vmatmul.bf16.gmra.mxu0 %v1048
      %v1330 = vpop.f32.mrf.mxu0
      %v1331 = vadd.f32 %v1099, %v1330
      %v1332 = vpop.f32.mrf.mxu0
      %v1333 = vadd.f32 %v1099, %v1332
      %1334 = vmatmul.bf16.gmra.mxu0 %v1049
      %v1335 = vpop.f32.mrf.mxu0
      %v1336 = vadd.f32 %v1099, %v1335
      %v1337 = vpop.f32.mrf.mxu0
      %v1338 = vadd.f32 %v1099, %v1337
      %1339 = vmatmul.bf16.gmra.mxu0 %v1050
      %v1340 = vpop.f32.mrf.mxu0
      %v1341 = vadd.f32 %v1099, %v1340
      %v1342 = vpop.f32.mrf.mxu0
      %v1343 = vadd.f32 %v1099, %v1342
      %1344 = vmatmul.bf16.gmra.mxu0 %v1051
      %v1345 = vpop.f32.mrf.mxu0
      %v1346 = vadd.f32 %v1099, %v1345
      %v1347 = vpop.f32.mrf.mxu0
      %v1348 = vadd.f32 %v1099, %v1347
      %1349 = vmatmul.bf16.gmra.mxu0 %v1052
      %v1350 = vpop.f32.mrf.mxu0
      %v1351 = vadd.f32 %v1099, %v1350
      %v1352 = vpop.f32.mrf.mxu0
      %v1353 = vadd.f32 %v1099, %v1352
      %1354 = vmatmul.bf16.gmra.mxu0 %v1053
      %v1355 = vpop.f32.mrf.mxu0
      %v1356 = vadd.f32 %v1099, %v1355
      %v1357 = vpop.f32.mrf.mxu0
      %v1358 = vadd.f32 %v1099, %v1357
      %1359 = vmatmul.bf16.gmra.mxu0 %v1054
      %v1360 = vpop.f32.mrf.mxu0
      %v1361 = vadd.f32 %v1099, %v1360
      %v1362 = vpop.f32.mrf.mxu0
      %v1363 = vadd.f32 %v1099, %v1362
      %1364 = vmatmul.bf16.gmra.mxu0 %v1055
      %v1365 = vpop.f32.mrf.mxu0
      %v1366 = vadd.f32 %v1099, %v1365
      %v1367 = vpop.f32.mrf.mxu0
      %v1368 = vadd.f32 %v1099, %v1367
      %1369 = vmatmul.bf16.gmra.mxu0 %v1056
      %v1370 = vpop.f32.mrf.mxu0
      %v1371 = vadd.f32 %v1099, %v1370
      %v1372 = vpop.f32.mrf.mxu0
      %v1373 = vadd.f32 %v1099, %v1372
      %1374 = vmatmul.bf16.gmra.mxu0 %v1057
      %v1375 = vpop.f32.mrf.mxu0
      %v1376 = vadd.f32 %v1099, %v1375
      %v1377 = vpop.f32.mrf.mxu0
      %v1378 = vadd.f32 %v1099, %v1377
      %1379 = vmatmul.bf16.gmra.mxu0 %v1058
      %v1380 = vpop.f32.mrf.mxu0
      %v1381 = vadd.f32 %v1099, %v1380
      %v1382 = vpop.f32.mrf.mxu0
      %v1383 = vadd.f32 %v1099, %v1382
      %1384 = vmatmul.bf16.gmra.mxu0 %v1059
      %v1385 = vpop.f32.mrf.mxu0
      %v1386 = vadd.f32 %v1099, %v1385
      %v1387 = vpop.f32.mrf.mxu0
      %v1388 = vadd.f32 %v1099, %v1387
      %1389 = vmatmul.bf16.gmra.mxu0 %v1060
      %v1390 = vpop.f32.mrf.mxu0
      %v1391 = vadd.f32 %v1099, %v1390
      %v1392 = vpop.f32.mrf.mxu0
      %v1393 = vadd.f32 %v1099, %v1392
      %1394 = vmatmul.bf16.gmra.mxu0 %v1061
      %v1395 = vpop.f32.mrf.mxu0
      %v1396 = vadd.f32 %v1099, %v1395
      %v1397 = vpop.f32.mrf.mxu0
      %v1398 = vadd.f32 %v1099, %v1397
      %1399 = vmatmul.bf16.gmra.mxu0 %v1062
      %v1400 = vpop.f32.mrf.mxu0
      %v1401 = vadd.f32 %v1099, %v1400
      %v1402 = vpop.f32.mrf.mxu0
      %v1403 = vadd.f32 %v1099, %v1402
      %1404 = vmatmul.bf16.gmra.mxu0 %v1063
      %v1405 = vpop.f32.mrf.mxu0
      %v1406 = vadd.f32 %v1099, %v1405
      %v1407 = vpop.f32.mrf.mxu0
      %v1408 = vadd.f32 %v1099, %v1407
      %1409 = vdwg.mxu0
      %1410 = vmatpush.bf16.msra.mxu0 %v1207
      %1411 = vmatpush.bf16.msra.mxu0 %v1204
      %1412 = vmatpush.bf16.msra.mxu0 %v1201
      %1413 = vmatpush.bf16.msra.mxu0 %v1198
      %1414 = vmatpush.bf16.msra.mxu0 %v1195
      %1415 = vmatpush.bf16.msra.mxu0 %v1192
      %1416 = vmatpush.bf16.msra.mxu0 %v1189
      %1417 = vmatpush.bf16.msra.mxu0 %v1186
      %1418 = vmatmul.bf16.gmra.mxu0 %v1048
      %v1419 = vpop.f32.mrf.mxu0
      %v1420 = vadd.f32 %v1100, %v1419
      %v1421 = vpop.f32.mrf.mxu0
      %v1422 = vadd.f32 %v1100, %v1421
      %1423 = vmatmul.bf16.gmra.mxu0 %v1049
      %v1424 = vpop.f32.mrf.mxu0
      %v1425 = vadd.f32 %v1100, %v1424
      %v1426 = vpop.f32.mrf.mxu0
      %v1427 = vadd.f32 %v1100, %v1426
      %1428 = vmatmul.bf16.gmra.mxu0 %v1050
      %v1429 = vpop.f32.mrf.mxu0
      %v1430 = vadd.f32 %v1100, %v1429
      %v1431 = vpop.f32.mrf.mxu0
      %v1432 = vadd.f32 %v1100, %v1431
      %1433 = vmatmul.bf16.gmra.mxu0 %v1051
      %v1434 = vpop.f32.mrf.mxu0
      %v1435 = vadd.f32 %v1100, %v1434
      %v1436 = vpop.f32.mrf.mxu0
      %v1437 = vadd.f32 %v1100, %v1436
      %1438 = vmatmul.bf16.gmra.mxu0 %v1052
      %v1439 = vpop.f32.mrf.mxu0
      %v1440 = vadd.f32 %v1100, %v1439
      %v1441 = vpop.f32.mrf.mxu0
      %v1442 = vadd.f32 %v1100, %v1441
      %1443 = vmatmul.bf16.gmra.mxu0 %v1053
      %v1444 = vpop.f32.mrf.mxu0
      %v1445 = vadd.f32 %v1100, %v1444
      %v1446 = vpop.f32.mrf.mxu0
      %v1447 = vadd.f32 %v1100, %v1446
      %1448 = vmatmul.bf16.gmra.mxu0 %v1054
      %v1449 = vpop.f32.mrf.mxu0
      %v1450 = vadd.f32 %v1100, %v1449
      %v1451 = vpop.f32.mrf.mxu0
      %v1452 = vadd.f32 %v1100, %v1451
      %1453 = vmatmul.bf16.gmra.mxu0 %v1055
      %v1454 = vpop.f32.mrf.mxu0
      %v1455 = vadd.f32 %v1100, %v1454
      %v1456 = vpop.f32.mrf.mxu0
      %v1457 = vadd.f32 %v1100, %v1456
      %1458 = vmatmul.bf16.gmra.mxu0 %v1056
      %v1459 = vpop.f32.mrf.mxu0
      %v1460 = vadd.f32 %v1100, %v1459
      %v1461 = vpop.f32.mrf.mxu0
      %v1462 = vadd.f32 %v1100, %v1461
      %1463 = vmatmul.bf16.gmra.mxu0 %v1057
      %v1464 = vpop.f32.mrf.mxu0
      %v1465 = vadd.f32 %v1100, %v1464
      %v1466 = vpop.f32.mrf.mxu0
      %v1467 = vadd.f32 %v1100, %v1466
      %1468 = vmatmul.bf16.gmra.mxu0 %v1058
      %v1469 = vpop.f32.mrf.mxu0
      %v1470 = vadd.f32 %v1100, %v1469
      %v1471 = vpop.f32.mrf.mxu0
      %v1472 = vadd.f32 %v1100, %v1471
      %1473 = vmatmul.bf16.gmra.mxu0 %v1059
      %v1474 = vpop.f32.mrf.mxu0
      %v1475 = vadd.f32 %v1100, %v1474
      %v1476 = vpop.f32.mrf.mxu0
      %v1477 = vadd.f32 %v1100, %v1476
      %1478 = vmatmul.bf16.gmra.mxu0 %v1060
      %v1479 = vpop.f32.mrf.mxu0
      %v1480 = vadd.f32 %v1100, %v1479
      %v1481 = vpop.f32.mrf.mxu0
      %v1482 = vadd.f32 %v1100, %v1481
      %1483 = vmatmul.bf16.gmra.mxu0 %v1061
      %v1484 = vpop.f32.mrf.mxu0
      %v1485 = vadd.f32 %v1100, %v1484
      %v1486 = vpop.f32.mrf.mxu0
      %v1487 = vadd.f32 %v1100, %v1486
      %1488 = vmatmul.bf16.gmra.mxu0 %v1062
      %v1489 = vpop.f32.mrf.mxu0
      %v1490 = vadd.f32 %v1100, %v1489
      %v1491 = vpop.f32.mrf.mxu0
      %v1492 = vadd.f32 %v1100, %v1491
      %1493 = vmatmul.bf16.gmra.mxu0 %v1063
      %v1494 = vpop.f32.mrf.mxu0
      %v1495 = vadd.f32 %v1100, %v1494
      %v1496 = vpop.f32.mrf.mxu0
      %v1497 = vadd.f32 %v1100, %v1496
      %1498 = vdwg.mxu0
      %v1499 = vpack.c.bf16 %v1331, %v1242
      %v1500 = vpack.c.bf16 %v1420, %v1420
      %v1501 = vpack.c.bf16 %v1333, %v1244
      %v1502 = vpack.c.bf16 %v1422, %v1422
      %v1503 = vpack.c.bf16 %v1336, %v1247
      %v1504 = vpack.c.bf16 %v1425, %v1425
      %v1505 = vpack.c.bf16 %v1338, %v1249
      %v1506 = vpack.c.bf16 %v1427, %v1427
      %v1507 = vpack.c.bf16 %v1341, %v1252
      %v1508 = vpack.c.bf16 %v1430, %v1430
      %v1509 = vpack.c.bf16 %v1343, %v1254
      %v1510 = vpack.c.bf16 %v1432, %v1432
      %v1511 = vpack.c.bf16 %v1346, %v1257
      %v1512 = vpack.c.bf16 %v1435, %v1435
      %v1513 = vpack.c.bf16 %v1348, %v1259
      %v1514 = vpack.c.bf16 %v1437, %v1437
      %v1515 = vpack.c.bf16 %v1351, %v1262
      %v1516 = vpack.c.bf16 %v1440, %v1440
      %v1517 = vpack.c.bf16 %v1353, %v1264
      %v1518 = vpack.c.bf16 %v1442, %v1442
      %v1519 = vpack.c.bf16 %v1356, %v1267
      %v1520 = vpack.c.bf16 %v1445, %v1445
      %v1521 = vpack.c.bf16 %v1358, %v1269
      %v1522 = vpack.c.bf16 %v1447, %v1447
      %v1523 = vpack.c.bf16 %v1361, %v1272
      %v1524 = vpack.c.bf16 %v1450, %v1450
      %v1525 = vpack.c.bf16 %v1363, %v1274
      %v1526 = vpack.c.bf16 %v1452, %v1452
      %v1527 = vpack.c.bf16 %v1366, %v1277
      %v1528 = vpack.c.bf16 %v1455, %v1455
      %v1529 = vpack.c.bf16 %v1368, %v1279
      %v1530 = vpack.c.bf16 %v1457, %v1457
      %v1531 = vpack.c.bf16 %v1371, %v1282
      %v1532 = vpack.c.bf16 %v1460, %v1460
      %v1533 = vpack.c.bf16 %v1373, %v1284
      %v1534 = vpack.c.bf16 %v1462, %v1462
      %v1535 = vpack.c.bf16 %v1376, %v1287
      %v1536 = vpack.c.bf16 %v1465, %v1465
      %v1537 = vpack.c.bf16 %v1378, %v1289
      %v1538 = vpack.c.bf16 %v1467, %v1467
      %v1539 = vpack.c.bf16 %v1381, %v1292
      %v1540 = vpack.c.bf16 %v1470, %v1470
      %v1541 = vpack.c.bf16 %v1383, %v1294
      %v1542 = vpack.c.bf16 %v1472, %v1472
      %v1543 = vpack.c.bf16 %v1386, %v1297
      %v1544 = vpack.c.bf16 %v1475, %v1475
      %v1545 = vpack.c.bf16 %v1388, %v1299
      %v1546 = vpack.c.bf16 %v1477, %v1477
      %v1547 = vpack.c.bf16 %v1391, %v1302
      %v1548 = vpack.c.bf16 %v1480, %v1480
      %v1549 = vpack.c.bf16 %v1393, %v1304
      %v1550 = vpack.c.bf16 %v1482, %v1482
      %v1551 = vpack.c.bf16 %v1396, %v1307
      %v1552 = vpack.c.bf16 %v1485, %v1485
      %v1553 = vpack.c.bf16 %v1398, %v1309
      %v1554 = vpack.c.bf16 %v1487, %v1487
      %v1555 = vpack.c.bf16 %v1401, %v1312
      %v1556 = vpack.c.bf16 %v1490, %v1490
      %v1557 = vpack.c.bf16 %v1403, %v1314
      %v1558 = vpack.c.bf16 %v1492, %v1492
      %v1559 = vpack.c.bf16 %v1406, %v1317
      %v1560 = vpack.c.bf16 %v1495, %v1495
      %v1561 = vpack.c.bf16 %v1408, %v1319
      %v1562 = vpack.c.bf16 %v1497, %v1497
      %v1563 = vld [vmem:[%s1] sm:$0xff]
      %v1564 = vld [vmem:[%s1 + $0x8] sm:$0xff]
      %v1565 = vld [vmem:[%s1 + $0x10] sm:$0xff]
      %v1566 = vld [vmem:[%s1 + $0x18] sm:$0xff]
      %v1567 = vld [vmem:[%s1 + $0x20] sm:$0xff]
      %v1568 = vld [vmem:[%s1 + $0x28] sm:$0xff]
      %v1569 = vld [vmem:[%s1 + $0x30] sm:$0xff]
      %v1570 = vld [vmem:[%s1 + $0x38] sm:$0xff]
      %v1571 = vld [vmem:[%s1 + $0x40] sm:$0xff]
      %v1572 = vld [vmem:[%s1 + $0x48] sm:$0xff]
      %v1573 = vld [vmem:[%s1 + $0x50] sm:$0xff]
      %v1574 = vld [vmem:[%s1 + $0x58] sm:$0xff]
      %v1575 = vld [vmem:[%s1 + $0x60] sm:$0xff]
      %v1576 = vld [vmem:[%s1 + $0x68] sm:$0xff]
      %v1577 = vld [vmem:[%s1 + $0x70] sm:$0xff]
      %v1578 = vld [vmem:[%s1 + $0x78] sm:$0xff]
      %v1579 = vld [vmem:[%s1 + $0x80] sm:$0xff]
      %v1580 = vld [vmem:[%s1 + $0x88] sm:$0xff]
      %v1581 = vld [vmem:[%s1 + $0x90] sm:$0xff]
      %v1582 = vld [vmem:[%s1 + $0x98] sm:$0xff]
      %v1583 = vld [vmem:[%s1 + $0xa0] sm:$0xff]
      %v1584 = vld [vmem:[%s1 + $0xa8] sm:$0xff]
      %v1585 = vld [vmem:[%s1 + $0xb0] sm:$0xff]
      %v1586 = vld [vmem:[%s1 + $0xb8] sm:$0xff]
      %v1587 = vld [vmem:[%s1 + $0xc0] sm:$0xff]
      %v1588 = vld [vmem:[%s1 + $0xc8] sm:$0xff]
      %v1589 = vld [vmem:[%s1 + $0xd0] sm:$0xff]
      %v1590 = vld [vmem:[%s1 + $0xd8] sm:$0xff]
      %v1591 = vld [vmem:[%s1 + $0xe0] sm:$0xff]
      %v1592 = vld [vmem:[%s1 + $0xe8] sm:$0xff]
      %v1593 = vld [vmem:[%s1 + $0xf0] sm:$0xff]
      %v1594 = vld [vmem:[%s1 + $0xf8] sm:$0xff]
      %v1603 = vrot.slane %v1499, 4
      %v1604 = vrot.slane %v1501, 4
      %v1605 = vrot.slane %v1503, 4
      %v1606 = vrot.slane %v1505, 4
      %v1607 = vrot.slane %v1507, 4
      %v1608 = vrot.slane %v1509, 4
      %v1609 = vrot.slane %v1511, 4
      %v1610 = vrot.slane %v1513, 4
      %v1611 = vunpack.c.l.b16 %v1499
      %v1612 = vunpack.c.l.b16 %v1501
      %v1613 = vunpack.c.l.b16 %v1503
      %v1614 = vunpack.c.l.b16 %v1505
      %v1615 = vunpack.c.l.b16 %v1507
      %v1616 = vunpack.c.l.b16 %v1509
      %v1617 = vunpack.c.l.b16 %v1511
      %v1618 = vunpack.c.l.b16 %v1513
      %v1619 = vpack.c.b16 %v1612, %v1611
      %v1620 = vpack.c.b16 %v1614, %v1613
      %v1621 = vpack.c.b16 %v1616, %v1615
      %v1622 = vpack.c.b16 %v1618, %v1617
      %v1623 = vunpack.c.l.b16 %v1603
      %v1624 = vunpack.c.l.b16 %v1604
      %v1625 = vunpack.c.l.b16 %v1605
      %v1626 = vunpack.c.l.b16 %v1606
      %v1627 = vunpack.c.l.b16 %v1607
      %v1628 = vunpack.c.l.b16 %v1608
      %v1629 = vunpack.c.l.b16 %v1609
      %v1630 = vunpack.c.l.b16 %v1610
      %v1631 = vpack.c.b16 %v1624, %v1623
      %v1632 = vpack.c.b16 %v1626, %v1625
      %v1633 = vpack.c.b16 %v1628, %v1627
      %v1634 = vpack.c.b16 %v1630, %v1629
      %vm1635 = vcmask 261120
      %v1637 = vsel %vm1635, %v1619, 0
      %v1640 = vsel %vm1635, %v1620, 0
      %v1643 = vsel %vm1635, %v1621, 0
      %v1646 = vsel %vm1635, %v1622, 0
      %v1649 = vsel %vm1635, %v1631, 0
      %v1652 = vsel %vm1635, %v1632, 0
      %v1655 = vsel %vm1635, %v1633, 0
      %v1658 = vsel %vm1635, %v1634, 0
      %1660 = vmatpush.bf16.xpose.msra.mxu0 0
      %1661 = vmatpush.bf16.xpose.msra.mxu0 0
      %1662 = vmatpush.bf16.xpose.msra.mxu0 0
      %1663 = vmatpush.bf16.xpose.msra.mxu0 0
      %1664 = vmatpush.bf16.xpose.msra.mxu0 %v1658
      %1665 = vmatpush.bf16.xpose.msra.mxu0 %v1655
      %1666 = vmatpush.bf16.xpose.msra.mxu0 %v1652
      %1667 = vmatpush.bf16.xpose.msra.mxu0 %v1649
      %1668 = vmatmul.bf16.gmra.mxu0 %v1637
      %v1669 = vpop.f32.mrf.mxu0
      %v1670 = vadd.f32 %v1563, %v1669
      %v1671 = vpop.f32.mrf.mxu0
      %v1672 = vadd.f32 %v1564, %v1671
      %1673 = vmatmul.bf16.gmra.mxu0 %v1640
      %v1674 = vpop.f32.mrf.mxu0
      %v1675 = vadd.f32 %v1565, %v1674
      %v1676 = vpop.f32.mrf.mxu0
      %v1677 = vadd.f32 %v1566, %v1676
      %1678 = vmatmul.bf16.gmra.mxu0 %v1643
      %v1679 = vpop.f32.mrf.mxu0
      %v1680 = vadd.f32 %v1567, %v1679
      %v1681 = vpop.f32.mrf.mxu0
      %v1682 = vadd.f32 %v1568, %v1681
      %1683 = vmatmul.bf16.gmra.mxu0 %v1646
      %v1684 = vpop.f32.mrf.mxu0
      %v1685 = vadd.f32 %v1569, %v1684
      %v1686 = vpop.f32.mrf.mxu0
      %v1687 = vadd.f32 %v1570, %v1686
      %1688 = vdwg.mxu0
      %v1697 = vrot.slane %v1515, 4
      %v1698 = vrot.slane %v1517, 4
      %v1699 = vrot.slane %v1519, 4
      %v1700 = vrot.slane %v1521, 4
      %v1701 = vrot.slane %v1523, 4
      %v1702 = vrot.slane %v1525, 4
      %v1703 = vrot.slane %v1527, 4
      %v1704 = vrot.slane %v1529, 4
      %v1705 = vunpack.c.l.b16 %v1515
      %v1706 = vunpack.c.l.b16 %v1517
      %v1707 = vunpack.c.l.b16 %v1519
      %v1708 = vunpack.c.l.b16 %v1521
      %v1709 = vunpack.c.l.b16 %v1523
      %v1710 = vunpack.c.l.b16 %v1525
      %v1711 = vunpack.c.l.b16 %v1527
      %v1712 = vunpack.c.l.b16 %v1529
      %v1713 = vpack.c.b16 %v1706, %v1705
      %v1714 = vpack.c.b16 %v1708, %v1707
      %v1715 = vpack.c.b16 %v1710, %v1709
      %v1716 = vpack.c.b16 %v1712, %v1711
      %v1717 = vunpack.c.l.b16 %v1697
      %v1718 = vunpack.c.l.b16 %v1698
      %v1719 = vunpack.c.l.b16 %v1699
      %v1720 = vunpack.c.l.b16 %v1700
      %v1721 = vunpack.c.l.b16 %v1701
      %v1722 = vunpack.c.l.b16 %v1702
      %v1723 = vunpack.c.l.b16 %v1703
      %v1724 = vunpack.c.l.b16 %v1704
      %v1725 = vpack.c.b16 %v1718, %v1717
      %v1726 = vpack.c.b16 %v1720, %v1719
      %v1727 = vpack.c.b16 %v1722, %v1721
      %v1728 = vpack.c.b16 %v1724, %v1723
      %v1730 = vsel %vm1635, %v1713, 0
      %v1733 = vsel %vm1635, %v1714, 0
      %v1736 = vsel %vm1635, %v1715, 0
      %v1739 = vsel %vm1635, %v1716, 0
      %v1742 = vsel %vm1635, %v1725, 0
      %v1745 = vsel %vm1635, %v1726, 0
      %v1748 = vsel %vm1635, %v1727, 0
      %v1751 = vsel %vm1635, %v1728, 0
      %1753 = vmatpush.bf16.xpose.msra.mxu0 0
      %1754 = vmatpush.bf16.xpose.msra.mxu0 0
      %1755 = vmatpush.bf16.xpose.msra.mxu0 0
      %1756 = vmatpush.bf16.xpose.msra.mxu0 0
      %1757 = vmatpush.bf16.xpose.msra.mxu0 %v1751
      %1758 = vmatpush.bf16.xpose.msra.mxu0 %v1748
      %1759 = vmatpush.bf16.xpose.msra.mxu0 %v1745
      %1760 = vmatpush.bf16.xpose.msra.mxu0 %v1742
      %1761 = vmatmul.bf16.gmra.mxu0 %v1730
      %v1762 = vpop.f32.mrf.mxu0
      %v1763 = vadd.f32 %v1563, %v1762
      %v1764 = vpop.f32.mrf.mxu0
      %v1765 = vadd.f32 %v1564, %v1764
      %1766 = vmatmul.bf16.gmra.mxu0 %v1733
      %v1767 = vpop.f32.mrf.mxu0
      %v1768 = vadd.f32 %v1565, %v1767
      %v1769 = vpop.f32.mrf.mxu0
      %v1770 = vadd.f32 %v1566, %v1769
      %1771 = vmatmul.bf16.gmra.mxu0 %v1736
      %v1772 = vpop.f32.mrf.mxu0
      %v1773 = vadd.f32 %v1567, %v1772
      %v1774 = vpop.f32.mrf.mxu0
      %v1775 = vadd.f32 %v1568, %v1774
      %1776 = vmatmul.bf16.gmra.mxu0 %v1739
      %v1777 = vpop.f32.mrf.mxu0
      %v1778 = vadd.f32 %v1569, %v1777
      %v1779 = vpop.f32.mrf.mxu0
      %v1780 = vadd.f32 %v1570, %v1779
      %1781 = vdwg.mxu0
      %v1790 = vrot.slane %v1531, 4
      %v1791 = vrot.slane %v1533, 4
      %v1792 = vrot.slane %v1535, 4
      %v1793 = vrot.slane %v1537, 4
      %v1794 = vrot.slane %v1539, 4
      %v1795 = vrot.slane %v1541, 4
      %v1796 = vrot.slane %v1543, 4
      %v1797 = vrot.slane %v1545, 4
      %v1798 = vunpack.c.l.b16 %v1531
      %v1799 = vunpack.c.l.b16 %v1533
      %v1800 = vunpack.c.l.b16 %v1535
      %v1801 = vunpack.c.l.b16 %v1537
      %v1802 = vunpack.c.l.b16 %v1539
      %v1803 = vunpack.c.l.b16 %v1541
      %v1804 = vunpack.c.l.b16 %v1543
      %v1805 = vunpack.c.l.b16 %v1545
      %v1806 = vpack.c.b16 %v1799, %v1798
      %v1807 = vpack.c.b16 %v1801, %v1800
      %v1808 = vpack.c.b16 %v1803, %v1802
      %v1809 = vpack.c.b16 %v1805, %v1804
      %v1810 = vunpack.c.l.b16 %v1790
      %v1811 = vunpack.c.l.b16 %v1791
      %v1812 = vunpack.c.l.b16 %v1792
      %v1813 = vunpack.c.l.b16 %v1793
      %v1814 = vunpack.c.l.b16 %v1794
      %v1815 = vunpack.c.l.b16 %v1795
      %v1816 = vunpack.c.l.b16 %v1796
      %v1817 = vunpack.c.l.b16 %v1797
      %v1818 = vpack.c.b16 %v1811, %v1810
      %v1819 = vpack.c.b16 %v1813, %v1812
      %v1820 = vpack.c.b16 %v1815, %v1814
      %v1821 = vpack.c.b16 %v1817, %v1816
      %v1823 = vsel %vm1635, %v1806, 0
      %v1826 = vsel %vm1635, %v1807, 0
      %v1829 = vsel %vm1635, %v1808, 0
      %v1832 = vsel %vm1635, %v1809, 0
      %v1835 = vsel %vm1635, %v1818, 0
      %v1838 = vsel %vm1635, %v1819, 0
      %v1841 = vsel %vm1635, %v1820, 0
      %v1844 = vsel %vm1635, %v1821, 0
      %1846 = vmatpush.bf16.xpose.msra.mxu0 0
      %1847 = vmatpush.bf16.xpose.msra.mxu0 0
      %1848 = vmatpush.bf16.xpose.msra.mxu0 0
      %1849 = vmatpush.bf16.xpose.msra.mxu0 0
      %1850 = vmatpush.bf16.xpose.msra.mxu0 %v1844
      %1851 = vmatpush.bf16.xpose.msra.mxu0 %v1841
      %1852 = vmatpush.bf16.xpose.msra.mxu0 %v1838
      %1853 = vmatpush.bf16.xpose.msra.mxu0 %v1835
      %1854 = vmatmul.bf16.gmra.mxu0 %v1823
      %v1855 = vpop.f32.mrf.mxu0
      %v1856 = vadd.f32 %v1563, %v1855
      %v1857 = vpop.f32.mrf.mxu0
      %v1858 = vadd.f32 %v1564, %v1857
      %1859 = vmatmul.bf16.gmra.mxu0 %v1826
      %v1860 = vpop.f32.mrf.mxu0
      %v1861 = vadd.f32 %v1565, %v1860
      %v1862 = vpop.f32.mrf.mxu0
      %v1863 = vadd.f32 %v1566, %v1862
      %1864 = vmatmul.bf16.gmra.mxu0 %v1829
      %v1865 = vpop.f32.mrf.mxu0
      %v1866 = vadd.f32 %v1567, %v1865
      %v1867 = vpop.f32.mrf.mxu0
      %v1868 = vadd.f32 %v1568, %v1867
      %1869 = vmatmul.bf16.gmra.mxu0 %v1832
      %v1870 = vpop.f32.mrf.mxu0
      %v1871 = vadd.f32 %v1569, %v1870
      %v1872 = vpop.f32.mrf.mxu0
      %v1873 = vadd.f32 %v1570, %v1872
      %1874 = vdwg.mxu0
      %v1883 = vrot.slane %v1547, 4
      %v1884 = vrot.slane %v1549, 4
      %v1885 = vrot.slane %v1551, 4
      %v1886 = vrot.slane %v1553, 4
      %v1887 = vrot.slane %v1555, 4
      %v1888 = vrot.slane %v1557, 4
      %v1889 = vrot.slane %v1559, 4
      %v1890 = vrot.slane %v1561, 4
      %v1891 = vunpack.c.l.b16 %v1547
      %v1892 = vunpack.c.l.b16 %v1549
      %v1893 = vunpack.c.l.b16 %v1551
      %v1894 = vunpack.c.l.b16 %v1553
      %v1895 = vunpack.c.l.b16 %v1555
      %v1896 = vunpack.c.l.b16 %v1557
      %v1897 = vunpack.c.l.b16 %v1559
      %v1898 = vunpack.c.l.b16 %v1561
      %v1899 = vpack.c.b16 %v1892, %v1891
      %v1900 = vpack.c.b16 %v1894, %v1893
      %v1901 = vpack.c.b16 %v1896, %v1895
      %v1902 = vpack.c.b16 %v1898, %v1897
      %v1903 = vunpack.c.l.b16 %v1883
      %v1904 = vunpack.c.l.b16 %v1884
      %v1905 = vunpack.c.l.b16 %v1885
      %v1906 = vunpack.c.l.b16 %v1886
      %v1907 = vunpack.c.l.b16 %v1887
      %v1908 = vunpack.c.l.b16 %v1888
      %v1909 = vunpack.c.l.b16 %v1889
      %v1910 = vunpack.c.l.b16 %v1890
      %v1911 = vpack.c.b16 %v1904, %v1903
      %v1912 = vpack.c.b16 %v1906, %v1905
      %v1913 = vpack.c.b16 %v1908, %v1907
      %v1914 = vpack.c.b16 %v1910, %v1909
      %v1916 = vsel %vm1635, %v1899, 0
      %v1919 = vsel %vm1635, %v1900, 0
      %v1922 = vsel %vm1635, %v1901, 0
      %v1925 = vsel %vm1635, %v1902, 0
      %v1928 = vsel %vm1635, %v1911, 0
      %v1931 = vsel %vm1635, %v1912, 0
      %v1934 = vsel %vm1635, %v1913, 0
      %v1937 = vsel %vm1635, %v1914, 0
      %1939 = vmatpush.bf16.xpose.msra.mxu0 0
      %1940 = vmatpush.bf16.xpose.msra.mxu0 0
      %1941 = vmatpush.bf16.xpose.msra.mxu0 0
      %1942 = vmatpush.bf16.xpose.msra.mxu0 0
      %1943 = vmatpush.bf16.xpose.msra.mxu0 %v1937
      %1944 = vmatpush.bf16.xpose.msra.mxu0 %v1934
      %1945 = vmatpush.bf16.xpose.msra.mxu0 %v1931
      %1946 = vmatpush.bf16.xpose.msra.mxu0 %v1928
      %1947 = vmatmul.bf16.gmra.mxu0 %v1916
      %v1948 = vpop.f32.mrf.mxu0
      %v1949 = vadd.f32 %v1563, %v1948
      %v1950 = vpop.f32.mrf.mxu0
      %v1951 = vadd.f32 %v1564, %v1950
      %1952 = vmatmul.bf16.gmra.mxu0 %v1919
      %v1953 = vpop.f32.mrf.mxu0
      %v1954 = vadd.f32 %v1565, %v1953
      %v1955 = vpop.f32.mrf.mxu0
      %v1956 = vadd.f32 %v1566, %v1955
      %1957 = vmatmul.bf16.gmra.mxu0 %v1922
      %v1958 = vpop.f32.mrf.mxu0
      %v1959 = vadd.f32 %v1567, %v1958
      %v1960 = vpop.f32.mrf.mxu0
      %v1961 = vadd.f32 %v1568, %v1960
      %1962 = vmatmul.bf16.gmra.mxu0 %v1925
      %v1963 = vpop.f32.mrf.mxu0
      %v1964 = vadd.f32 %v1569, %v1963
      %v1965 = vpop.f32.mrf.mxu0
      %v1966 = vadd.f32 %v1570, %v1965
      %1967 = vdwg.mxu0
      %vm1968 = vcmask 523264
      %v1969 = vsel %vm1968, %v1670, -inf
      %1970 = vmax.xlane.f32.xlu0 %v1969
      %v1971 = vpop.xlane.xlu0 %1970
      %v1972 = vsel %vm1968, %v1672, -inf
      %1973 = vmax.xlane.f32.xlu0 %v1972
      %v1974 = vpop.xlane.xlu0 %1973
      %v1975 = vsel %vm1968, %v1675, -inf
      %1976 = vmax.xlane.f32.xlu0 %v1975
      %v1977 = vpop.xlane.xlu0 %1976
      %v1978 = vsel %vm1968, %v1677, -inf
      %1979 = vmax.xlane.f32.xlu0 %v1978
      %v1980 = vpop.xlane.xlu0 %1979
      %v1981 = vsel %vm1968, %v1680, -inf
      %1982 = vmax.xlane.f32.xlu0 %v1981
      %v1983 = vpop.xlane.xlu0 %1982
      %v1984 = vsel %vm1968, %v1682, -inf
      %1985 = vmax.xlane.f32.xlu0 %v1984
      %v1986 = vpop.xlane.xlu0 %1985
      %v1987 = vsel %vm1968, %v1685, -inf
      %1988 = vmax.xlane.f32.xlu0 %v1987
      %v1989 = vpop.xlane.xlu0 %1988
      %v1990 = vsel %vm1968, %v1687, -inf
      %1991 = vmax.xlane.f32.xlu0 %v1990
      %v1992 = vpop.xlane.xlu0 %1991
      %v1993 = vsel %vm1968, %v1763, -inf
      %1994 = vmax.xlane.f32.xlu0 %v1993
      %v1995 = vpop.xlane.xlu0 %1994
      %v1996 = vsel %vm1968, %v1765, -inf
      %1997 = vmax.xlane.f32.xlu0 %v1996
      %v1998 = vpop.xlane.xlu0 %1997
      %v1999 = vsel %vm1968, %v1768, -inf
      %2000 = vmax.xlane.f32.xlu0 %v1999
      %v2001 = vpop.xlane.xlu0 %2000
      %v2002 = vsel %vm1968, %v1770, -inf
      %2003 = vmax.xlane.f32.xlu0 %v2002
      %v2004 = vpop.xlane.xlu0 %2003
      %v2005 = vsel %vm1968, %v1773, -inf
      %2006 = vmax.xlane.f32.xlu0 %v2005
      %v2007 = vpop.xlane.xlu0 %2006
      %v2008 = vsel %vm1968, %v1775, -inf
      %2009 = vmax.xlane.f32.xlu0 %v2008
      %v2010 = vpop.xlane.xlu0 %2009
      %v2011 = vsel %vm1968, %v1778, -inf
      %2012 = vmax.xlane.f32.xlu0 %v2011
      %v2013 = vpop.xlane.xlu0 %2012
      %v2014 = vsel %vm1968, %v1780, -inf
      %2015 = vmax.xlane.f32.xlu0 %v2014
      %v2016 = vpop.xlane.xlu0 %2015
      %v2017 = vsel %vm1968, %v1856, -inf
      %2018 = vmax.xlane.f32.xlu0 %v2017
      %v2019 = vpop.xlane.xlu0 %2018
      %v2020 = vsel %vm1968, %v1858, -inf
      %2021 = vmax.xlane.f32.xlu0 %v2020
      %v2022 = vpop.xlane.xlu0 %2021
      %v2023 = vsel %vm1968, %v1861, -inf
      %2024 = vmax.xlane.f32.xlu0 %v2023
      %v2025 = vpop.xlane.xlu0 %2024
      %v2026 = vsel %vm1968, %v1863, -inf
      %2027 = vmax.xlane.f32.xlu0 %v2026
      %v2028 = vpop.xlane.xlu0 %2027
      %v2029 = vsel %vm1968, %v1866, -inf
      %2030 = vmax.xlane.f32.xlu0 %v2029
      %v2031 = vpop.xlane.xlu0 %2030
      %v2032 = vsel %vm1968, %v1868, -inf
      %2033 = vmax.xlane.f32.xlu0 %v2032
      %v2034 = vpop.xlane.xlu0 %2033
      %v2035 = vsel %vm1968, %v1871, -inf
      %2036 = vmax.xlane.f32.xlu0 %v2035
      %v2037 = vpop.xlane.xlu0 %2036
      %v2038 = vsel %vm1968, %v1873, -inf
      %2039 = vmax.xlane.f32.xlu0 %v2038
      %v2040 = vpop.xlane.xlu0 %2039
      %v2041 = vsel %vm1968, %v1949, -inf
      %2042 = vmax.xlane.f32.xlu0 %v2041
      %v2043 = vpop.xlane.xlu0 %2042
      %v2044 = vsel %vm1968, %v1951, -inf
      %2045 = vmax.xlane.f32.xlu0 %v2044
      %v2046 = vpop.xlane.xlu0 %2045
      %v2047 = vsel %vm1968, %v1954, -inf
      %2048 = vmax.xlane.f32.xlu0 %v2047
      %v2049 = vpop.xlane.xlu0 %2048
      %v2050 = vsel %vm1968, %v1956, -inf
      %2051 = vmax.xlane.f32.xlu0 %v2050
      %v2052 = vpop.xlane.xlu0 %2051
      %v2053 = vsel %vm1968, %v1959, -inf
      %2054 = vmax.xlane.f32.xlu0 %v2053
      %v2055 = vpop.xlane.xlu0 %2054
      %v2056 = vsel %vm1968, %v1961, -inf
      %2057 = vmax.xlane.f32.xlu0 %v2056
      %v2058 = vpop.xlane.xlu0 %2057
      %v2059 = vsel %vm1968, %v1964, -inf
      %2060 = vmax.xlane.f32.xlu0 %v2059
      %v2061 = vpop.xlane.xlu0 %2060
      %v2062 = vsel %vm1968, %v1966, -inf
      %2063 = vmax.xlane.f32.xlu0 %v2062
      %v2064 = vpop.xlane.xlu0 %2063
      %v2065 = vsub.f32 %v1670, %v1971
      %v2066 = vsub.f32 %v1672, %v1974
      %v2067 = vsub.f32 %v1675, %v1977
      %v2068 = vsub.f32 %v1677, %v1980
      %v2069 = vsub.f32 %v1680, %v1983
      %v2070 = vsub.f32 %v1682, %v1986
      %v2071 = vsub.f32 %v1685, %v1989
      %v2072 = vsub.f32 %v1687, %v1992
      %v2073 = vsub.f32 %v1763, %v1995
      %v2074 = vsub.f32 %v1765, %v1998
      %v2075 = vsub.f32 %v1768, %v2001
      %v2076 = vsub.f32 %v1770, %v2004
      %v2077 = vsub.f32 %v1773, %v2007
      %v2078 = vsub.f32 %v1775, %v2010
      %v2079 = vsub.f32 %v1778, %v2013
      %v2080 = vsub.f32 %v1780, %v2016
      %v2081 = vsub.f32 %v1856, %v2019
      %v2082 = vsub.f32 %v1858, %v2022
      %v2083 = vsub.f32 %v1861, %v2025
      %v2084 = vsub.f32 %v1863, %v2028
      %v2085 = vsub.f32 %v1866, %v2031
      %v2086 = vsub.f32 %v1868, %v2034
      %v2087 = vsub.f32 %v1871, %v2037
      %v2088 = vsub.f32 %v1873, %v2040
      %v2089 = vsub.f32 %v1949, %v2043
      %v2090 = vsub.f32 %v1951, %v2046
      %v2091 = vsub.f32 %v1954, %v2049
      %v2092 = vsub.f32 %v1956, %v2052
      %v2093 = vsub.f32 %v1959, %v2055
      %v2094 = vsub.f32 %v1961, %v2058
      %v2095 = vsub.f32 %v1964, %v2061
      %v2096 = vsub.f32 %v1966, %v2064
      %v2097 = vmul.f32 %v2065, 1.442695
      %v2098 = vpow.pop %v2097
      %v2099 = vmul.f32 %v2066, 1.442695
      %v2100 = vpow.pop %v2099
      %v2101 = vmul.f32 %v2067, 1.442695
      %v2102 = vpow.pop %v2101
      %v2103 = vmul.f32 %v2068, 1.442695
      %v2104 = vpow.pop %v2103
      %v2105 = vmul.f32 %v2069, 1.442695
      %v2106 = vpow.pop %v2105
      %v2107 = vmul.f32 %v2070, 1.442695
      %v2108 = vpow.pop %v2107
      %v2109 = vmul.f32 %v2071, 1.442695
      %v2110 = vpow.pop %v2109
      %v2111 = vmul.f32 %v2072, 1.442695
      %v2112 = vpow.pop %v2111
      %v2113 = vmul.f32 %v2073, 1.442695
      %v2114 = vpow.pop %v2113
      %v2115 = vmul.f32 %v2074, 1.442695
      %v2116 = vpow.pop %v2115
      %v2117 = vmul.f32 %v2075, 1.442695
      %v2118 = vpow.pop %v2117
      %v2119 = vmul.f32 %v2076, 1.442695
      %v2120 = vpow.pop %v2119
      %v2121 = vmul.f32 %v2077, 1.442695
      %v2122 = vpow.pop %v2121
      %v2123 = vmul.f32 %v2078, 1.442695
      %v2124 = vpow.pop %v2123
      %v2125 = vmul.f32 %v2079, 1.442695
      %v2126 = vpow.pop %v2125
      %v2127 = vmul.f32 %v2080, 1.442695
      %v2128 = vpow.pop %v2127
      %v2129 = vmul.f32 %v2081, 1.442695
      %v2130 = vpow.pop %v2129
      %v2131 = vmul.f32 %v2082, 1.442695
      %v2132 = vpow.pop %v2131
      %v2133 = vmul.f32 %v2083, 1.442695
      %v2134 = vpow.pop %v2133
      %v2135 = vmul.f32 %v2084, 1.442695
      %v2136 = vpow.pop %v2135
      %v2137 = vmul.f32 %v2085, 1.442695
      %v2138 = vpow.pop %v2137
      %v2139 = vmul.f32 %v2086, 1.442695
      %v2140 = vpow.pop %v2139
      %v2141 = vmul.f32 %v2087, 1.442695
      %v2142 = vpow.pop %v2141
      %v2143 = vmul.f32 %v2088, 1.442695
      %v2144 = vpow.pop %v2143
      %v2145 = vmul.f32 %v2089, 1.442695
      %v2146 = vpow.pop %v2145
      %v2147 = vmul.f32 %v2090, 1.442695
      %v2148 = vpow.pop %v2147
      %v2149 = vmul.f32 %v2091, 1.442695
      %v2150 = vpow.pop %v2149
      %v2151 = vmul.f32 %v2092, 1.442695
      %v2152 = vpow.pop %v2151
      %v2153 = vmul.f32 %v2093, 1.442695
      %v2154 = vpow.pop %v2153
      %v2155 = vmul.f32 %v2094, 1.442695
      %v2156 = vpow.pop %v2155
      %v2157 = vmul.f32 %v2095, 1.442695
      %v2158 = vpow.pop %v2157
      %v2159 = vmul.f32 %v2096, 1.442695
      %v2160 = vpow.pop %v2159
      %v2161 = vsel %vm1968, %v2098, 0.0
      %2162 = vadd.xlane.f32.xlu0 %v2161
      %v2163 = vpop.xlane.xlu0 %2162
      %v2164 = vsel %vm1968, %v2100, 0.0
      %2165 = vadd.xlane.f32.xlu0 %v2164
      %v2166 = vpop.xlane.xlu0 %2165
      %v2167 = vsel %vm1968, %v2102, 0.0
      %2168 = vadd.xlane.f32.xlu0 %v2167
      %v2169 = vpop.xlane.xlu0 %2168
      %v2170 = vsel %vm1968, %v2104, 0.0
      %2171 = vadd.xlane.f32.xlu0 %v2170
      %v2172 = vpop.xlane.xlu0 %2171
      %v2173 = vsel %vm1968, %v2106, 0.0
      %2174 = vadd.xlane.f32.xlu0 %v2173
      %v2175 = vpop.xlane.xlu0 %2174
      %v2176 = vsel %vm1968, %v2108, 0.0
      %2177 = vadd.xlane.f32.xlu0 %v2176
      %v2178 = vpop.xlane.xlu0 %2177
      %v2179 = vsel %vm1968, %v2110, 0.0
      %2180 = vadd.xlane.f32.xlu0 %v2179
      %v2181 = vpop.xlane.xlu0 %2180
      %v2182 = vsel %vm1968, %v2112, 0.0
      %2183 = vadd.xlane.f32.xlu0 %v2182
      %v2184 = vpop.xlane.xlu0 %2183
      %v2185 = vsel %vm1968, %v2114, 0.0
      %2186 = vadd.xlane.f32.xlu0 %v2185
      %v2187 = vpop.xlane.xlu0 %2186
      %v2188 = vsel %vm1968, %v2116, 0.0
      %2189 = vadd.xlane.f32.xlu0 %v2188
      %v2190 = vpop.xlane.xlu0 %2189
      %v2191 = vsel %vm1968, %v2118, 0.0
      %2192 = vadd.xlane.f32.xlu0 %v2191
      %v2193 = vpop.xlane.xlu0 %2192
      %v2194 = vsel %vm1968, %v2120, 0.0
      %2195 = vadd.xlane.f32.xlu0 %v2194
      %v2196 = vpop.xlane.xlu0 %2195
      %v2197 = vsel %vm1968, %v2122, 0.0
      %2198 = vadd.xlane.f32.xlu0 %v2197
      %v2199 = vpop.xlane.xlu0 %2198
      %v2200 = vsel %vm1968, %v2124, 0.0
      %2201 = vadd.xlane.f32.xlu0 %v2200
      %v2202 = vpop.xlane.xlu0 %2201
      %v2203 = vsel %vm1968, %v2126, 0.0
      %2204 = vadd.xlane.f32.xlu0 %v2203
      %v2205 = vpop.xlane.xlu0 %2204
      %v2206 = vsel %vm1968, %v2128, 0.0
      %2207 = vadd.xlane.f32.xlu0 %v2206
      %v2208 = vpop.xlane.xlu0 %2207
      %v2209 = vsel %vm1968, %v2130, 0.0
      %2210 = vadd.xlane.f32.xlu0 %v2209
      %v2211 = vpop.xlane.xlu0 %2210
      %v2212 = vsel %vm1968, %v2132, 0.0
      %2213 = vadd.xlane.f32.xlu0 %v2212
      %v2214 = vpop.xlane.xlu0 %2213
      %v2215 = vsel %vm1968, %v2134, 0.0
      %2216 = vadd.xlane.f32.xlu0 %v2215
      %v2217 = vpop.xlane.xlu0 %2216
      %v2218 = vsel %vm1968, %v2136, 0.0
      %2219 = vadd.xlane.f32.xlu0 %v2218
      %v2220 = vpop.xlane.xlu0 %2219
      %v2221 = vsel %vm1968, %v2138, 0.0
      %2222 = vadd.xlane.f32.xlu0 %v2221
      %v2223 = vpop.xlane.xlu0 %2222
      %v2224 = vsel %vm1968, %v2140, 0.0
      %2225 = vadd.xlane.f32.xlu0 %v2224
      %v2226 = vpop.xlane.xlu0 %2225
      %v2227 = vsel %vm1968, %v2142, 0.0
      %2228 = vadd.xlane.f32.xlu0 %v2227
      %v2229 = vpop.xlane.xlu0 %2228
      %v2230 = vsel %vm1968, %v2144, 0.0
      %2231 = vadd.xlane.f32.xlu0 %v2230
      %v2232 = vpop.xlane.xlu0 %2231
      %v2233 = vsel %vm1968, %v2146, 0.0
      %2234 = vadd.xlane.f32.xlu0 %v2233
      %v2235 = vpop.xlane.xlu0 %2234
      %v2236 = vsel %vm1968, %v2148, 0.0
      %2237 = vadd.xlane.f32.xlu0 %v2236
      %v2238 = vpop.xlane.xlu0 %2237
      %v2239 = vsel %vm1968, %v2150, 0.0
      %2240 = vadd.xlane.f32.xlu0 %v2239
      %v2241 = vpop.xlane.xlu0 %2240
      %v2242 = vsel %vm1968, %v2152, 0.0
      %2243 = vadd.xlane.f32.xlu0 %v2242
      %v2244 = vpop.xlane.xlu0 %2243
      %v2245 = vsel %vm1968, %v2154, 0.0
      %2246 = vadd.xlane.f32.xlu0 %v2245
      %v2247 = vpop.xlane.xlu0 %2246
      %v2248 = vsel %vm1968, %v2156, 0.0
      %2249 = vadd.xlane.f32.xlu0 %v2248
      %v2250 = vpop.xlane.xlu0 %2249
      %v2251 = vsel %vm1968, %v2158, 0.0
      %2252 = vadd.xlane.f32.xlu0 %v2251
      %v2253 = vpop.xlane.xlu0 %2252
      %v2254 = vsel %vm1968, %v2160, 0.0
      %2255 = vadd.xlane.f32.xlu0 %v2254
      %v2256 = vpop.xlane.xlu0 %2255
      %v2257 = vpack.c.bf16 %v2098, %v2098
      %v2258 = vpack.c.bf16 %v2100, %v2100
      %v2259 = vpack.c.bf16 %v2102, %v2102
      %v2260 = vpack.c.bf16 %v2104, %v2104
      %v2261 = vpack.c.bf16 %v2106, %v2106
      %v2262 = vpack.c.bf16 %v2108, %v2108
      %v2263 = vpack.c.bf16 %v2110, %v2110
      %v2264 = vpack.c.bf16 %v2112, %v2112
      %v2265 = vpack.c.bf16 %v2114, %v2114
      %v2266 = vpack.c.bf16 %v2116, %v2116
      %v2267 = vpack.c.bf16 %v2118, %v2118
      %v2268 = vpack.c.bf16 %v2120, %v2120
      %v2269 = vpack.c.bf16 %v2122, %v2122
      %v2270 = vpack.c.bf16 %v2124, %v2124
      %v2271 = vpack.c.bf16 %v2126, %v2126
      %v2272 = vpack.c.bf16 %v2128, %v2128
      %v2273 = vpack.c.bf16 %v2130, %v2130
      %v2274 = vpack.c.bf16 %v2132, %v2132
      %v2275 = vpack.c.bf16 %v2134, %v2134
      %v2276 = vpack.c.bf16 %v2136, %v2136
      %v2277 = vpack.c.bf16 %v2138, %v2138
      %v2278 = vpack.c.bf16 %v2140, %v2140
      %v2279 = vpack.c.bf16 %v2142, %v2142
      %v2280 = vpack.c.bf16 %v2144, %v2144
      %v2281 = vpack.c.bf16 %v2146, %v2146
      %v2282 = vpack.c.bf16 %v2148, %v2148
      %v2283 = vpack.c.bf16 %v2150, %v2150
      %v2284 = vpack.c.bf16 %v2152, %v2152
      %v2285 = vpack.c.bf16 %v2154, %v2154
      %v2286 = vpack.c.bf16 %v2156, %v2156
      %v2287 = vpack.c.bf16 %v2158, %v2158
      %v2288 = vpack.c.bf16 %v2160, %v2160
      %v2297 = vunpack.c.l.b16 %v2257
      %v2298 = vunpack.c.l.b16 %v2258
      %v2299 = vunpack.c.l.b16 %v2259
      %v2300 = vunpack.c.l.b16 %v2260
      %v2301 = vunpack.c.l.b16 %v2261
      %v2302 = vunpack.c.l.b16 %v2262
      %v2303 = vunpack.c.l.b16 %v2263
      %v2304 = vunpack.c.l.b16 %v2264
      %v2305 = vpack.c.b16 %v2298, %v2297
      %v2306 = vpack.c.b16 %v2300, %v2299
      %v2307 = vpack.c.b16 %v2302, %v2301
      %v2308 = vpack.c.b16 %v2304, %v2303
      %v2317 = vunpack.c.l.b16 %v1500
      %v2318 = vunpack.c.l.b16 %v1502
      %v2319 = vunpack.c.l.b16 %v1504
      %v2320 = vunpack.c.l.b16 %v1506
      %v2321 = vunpack.c.l.b16 %v1508
      %v2322 = vunpack.c.l.b16 %v1510
      %v2323 = vunpack.c.l.b16 %v1512
      %v2324 = vunpack.c.l.b16 %v1514
      %v2325 = vpack.c.b16 %v2318, %v2317
      %v2326 = vpack.c.b16 %v2320, %v2319
      %v2327 = vpack.c.b16 %v2322, %v2321
      %v2328 = vpack.c.b16 %v2324, %v2323
      %v2334 = vsel %vm1968, %v2305, 0
      %v2337 = vsel %vm1968, %v2306, 0
      %v2340 = vsel %vm1968, %v2307, 0
      %v2343 = vsel %vm1968, %v2308, 0
      %2345 = vmatpush.bf16.msra.mxu0 0
      %2346 = vmatpush.bf16.msra.mxu0 0
      %2347 = vmatpush.bf16.msra.mxu0 0
      %2348 = vmatpush.bf16.msra.mxu0 0
      %2349 = vmatpush.bf16.msra.mxu0 %v2328
      %2350 = vmatpush.bf16.msra.mxu0 %v2327
      %2351 = vmatpush.bf16.msra.mxu0 %v2326
      %2352 = vmatpush.bf16.msra.mxu0 %v2325
      %2353 = vmatmul.bf16.gmra.mxu0 %v2334
      %v2354 = vpop.f32.mrf.mxu0
      %v2355 = vadd.f32 0.0, %v2354
      %v2356 = vpop.f32.mrf.mxu0
      %v2357 = vadd.f32 0.0, %v2356
      %2358 = vmatmul.bf16.gmra.mxu0 %v2337
      %v2359 = vpop.f32.mrf.mxu0
      %v2360 = vadd.f32 0.0, %v2359
      %v2361 = vpop.f32.mrf.mxu0
      %v2362 = vadd.f32 0.0, %v2361
      %2363 = vmatmul.bf16.gmra.mxu0 %v2340
      %v2364 = vpop.f32.mrf.mxu0
      %v2365 = vadd.f32 0.0, %v2364
      %v2366 = vpop.f32.mrf.mxu0
      %v2367 = vadd.f32 0.0, %v2366
      %2368 = vmatmul.bf16.gmra.mxu0 %v2343
      %v2369 = vpop.f32.mrf.mxu0
      %v2370 = vadd.f32 0.0, %v2369
      %v2371 = vpop.f32.mrf.mxu0
      %v2372 = vadd.f32 0.0, %v2371
      %2373 = vdwg.mxu0
      %v2382 = vunpack.c.l.b16 %v2265
      %v2383 = vunpack.c.l.b16 %v2266
      %v2384 = vunpack.c.l.b16 %v2267
      %v2385 = vunpack.c.l.b16 %v2268
      %v2386 = vunpack.c.l.b16 %v2269
      %v2387 = vunpack.c.l.b16 %v2270
      %v2388 = vunpack.c.l.b16 %v2271
      %v2389 = vunpack.c.l.b16 %v2272
      %v2390 = vpack.c.b16 %v2383, %v2382
      %v2391 = vpack.c.b16 %v2385, %v2384
      %v2392 = vpack.c.b16 %v2387, %v2386
      %v2393 = vpack.c.b16 %v2389, %v2388
      %v2402 = vunpack.c.l.b16 %v1516
      %v2403 = vunpack.c.l.b16 %v1518
      %v2404 = vunpack.c.l.b16 %v1520
      %v2405 = vunpack.c.l.b16 %v1522
      %v2406 = vunpack.c.l.b16 %v1524
      %v2407 = vunpack.c.l.b16 %v1526
      %v2408 = vunpack.c.l.b16 %v1528
      %v2409 = vunpack.c.l.b16 %v1530
      %v2410 = vpack.c.b16 %v2403, %v2402
      %v2411 = vpack.c.b16 %v2405, %v2404
      %v2412 = vpack.c.b16 %v2407, %v2406
      %v2413 = vpack.c.b16 %v2409, %v2408
      %v2419 = vsel %vm1968, %v2390, 0
      %v2422 = vsel %vm1968, %v2391, 0
      %v2425 = vsel %vm1968, %v2392, 0
      %v2428 = vsel %vm1968, %v2393, 0
      %2430 = vmatpush.bf16.msra.mxu0 0
      %2431 = vmatpush.bf16.msra.mxu0 0
      %2432 = vmatpush.bf16.msra.mxu0 0
      %2433 = vmatpush.bf16.msra.mxu0 0
      %2434 = vmatpush.bf16.msra.mxu0 %v2413
      %2435 = vmatpush.bf16.msra.mxu0 %v2412
      %2436 = vmatpush.bf16.msra.mxu0 %v2411
      %2437 = vmatpush.bf16.msra.mxu0 %v2410
      %2438 = vmatmul.bf16.gmra.mxu0 %v2419
      %v2439 = vpop.f32.mrf.mxu0
      %v2440 = vadd.f32 0.0, %v2439
      %v2441 = vpop.f32.mrf.mxu0
      %v2442 = vadd.f32 0.0, %v2441
      %2443 = vmatmul.bf16.gmra.mxu0 %v2422
      %v2444 = vpop.f32.mrf.mxu0
      %v2445 = vadd.f32 0.0, %v2444
      %v2446 = vpop.f32.mrf.mxu0
      %v2447 = vadd.f32 0.0, %v2446
      %2448 = vmatmul.bf16.gmra.mxu0 %v2425
      %v2449 = vpop.f32.mrf.mxu0
      %v2450 = vadd.f32 0.0, %v2449
      %v2451 = vpop.f32.mrf.mxu0
      %v2452 = vadd.f32 0.0, %v2451
      %2453 = vmatmul.bf16.gmra.mxu0 %v2428
      %v2454 = vpop.f32.mrf.mxu0
      %v2455 = vadd.f32 0.0, %v2454
      %v2456 = vpop.f32.mrf.mxu0
      %v2457 = vadd.f32 0.0, %v2456
      %2458 = vdwg.mxu0
      %v2467 = vunpack.c.l.b16 %v2273
      %v2468 = vunpack.c.l.b16 %v2274
      %v2469 = vunpack.c.l.b16 %v2275
      %v2470 = vunpack.c.l.b16 %v2276
      %v2471 = vunpack.c.l.b16 %v2277
      %v2472 = vunpack.c.l.b16 %v2278
      %v2473 = vunpack.c.l.b16 %v2279
      %v2474 = vunpack.c.l.b16 %v2280
      %v2475 = vpack.c.b16 %v2468, %v2467
      %v2476 = vpack.c.b16 %v2470, %v2469
      %v2477 = vpack.c.b16 %v2472, %v2471
      %v2478 = vpack.c.b16 %v2474, %v2473
      %v2487 = vunpack.c.l.b16 %v1532
      %v2488 = vunpack.c.l.b16 %v1534
      %v2489 = vunpack.c.l.b16 %v1536
      %v2490 = vunpack.c.l.b16 %v1538
      %v2491 = vunpack.c.l.b16 %v1540
      %v2492 = vunpack.c.l.b16 %v1542
      %v2493 = vunpack.c.l.b16 %v1544
      %v2494 = vunpack.c.l.b16 %v1546
      %v2495 = vpack.c.b16 %v2488, %v2487
      %v2496 = vpack.c.b16 %v2490, %v2489
      %v2497 = vpack.c.b16 %v2492, %v2491
      %v2498 = vpack.c.b16 %v2494, %v2493
      %v2504 = vsel %vm1968, %v2475, 0
      %v2507 = vsel %vm1968, %v2476, 0
      %v2510 = vsel %vm1968, %v2477, 0
      %v2513 = vsel %vm1968, %v2478, 0
      %2515 = vmatpush.bf16.msra.mxu0 0
      %2516 = vmatpush.bf16.msra.mxu0 0
      %2517 = vmatpush.bf16.msra.mxu0 0
      %2518 = vmatpush.bf16.msra.mxu0 0
      %2519 = vmatpush.bf16.msra.mxu0 %v2498
      %2520 = vmatpush.bf16.msra.mxu0 %v2497
      %2521 = vmatpush.bf16.msra.mxu0 %v2496
      %2522 = vmatpush.bf16.msra.mxu0 %v2495
      %2523 = vmatmul.bf16.gmra.mxu0 %v2504
      %v2524 = vpop.f32.mrf.mxu0
      %v2525 = vadd.f32 0.0, %v2524
      %v2526 = vpop.f32.mrf.mxu0
      %v2527 = vadd.f32 0.0, %v2526
      %2528 = vmatmul.bf16.gmra.mxu0 %v2507
      %v2529 = vpop.f32.mrf.mxu0
      %v2530 = vadd.f32 0.0, %v2529
      %v2531 = vpop.f32.mrf.mxu0
      %v2532 = vadd.f32 0.0, %v2531
      %2533 = vmatmul.bf16.gmra.mxu0 %v2510
      %v2534 = vpop.f32.mrf.mxu0
      %v2535 = vadd.f32 0.0, %v2534
      %v2536 = vpop.f32.mrf.mxu0
      %v2537 = vadd.f32 0.0, %v2536
      %2538 = vmatmul.bf16.gmra.mxu0 %v2513
      %v2539 = vpop.f32.mrf.mxu0
      %v2540 = vadd.f32 0.0, %v2539
      %v2541 = vpop.f32.mrf.mxu0
      %v2542 = vadd.f32 0.0, %v2541
      %2543 = vdwg.mxu0
      %v2552 = vunpack.c.l.b16 %v2281
      %v2553 = vunpack.c.l.b16 %v2282
      %v2554 = vunpack.c.l.b16 %v2283
      %v2555 = vunpack.c.l.b16 %v2284
      %v2556 = vunpack.c.l.b16 %v2285
      %v2557 = vunpack.c.l.b16 %v2286
      %v2558 = vunpack.c.l.b16 %v2287
      %v2559 = vunpack.c.l.b16 %v2288
      %v2560 = vpack.c.b16 %v2553, %v2552
      %v2561 = vpack.c.b16 %v2555, %v2554
      %v2562 = vpack.c.b16 %v2557, %v2556
      %v2563 = vpack.c.b16 %v2559, %v2558
      %v2572 = vunpack.c.l.b16 %v1548
      %v2573 = vunpack.c.l.b16 %v1550
      %v2574 = vunpack.c.l.b16 %v1552
      %v2575 = vunpack.c.l.b16 %v1554
      %v2576 = vunpack.c.l.b16 %v1556
      %v2577 = vunpack.c.l.b16 %v1558
      %v2578 = vunpack.c.l.b16 %v1560
      %v2579 = vunpack.c.l.b16 %v1562
      %v2580 = vpack.c.b16 %v2573, %v2572
      %v2581 = vpack.c.b16 %v2575, %v2574
      %v2582 = vpack.c.b16 %v2577, %v2576
      %v2583 = vpack.c.b16 %v2579, %v2578
      %v2589 = vsel %vm1968, %v2560, 0
      %v2592 = vsel %vm1968, %v2561, 0
      %v2595 = vsel %vm1968, %v2562, 0
      %v2598 = vsel %vm1968, %v2563, 0
      %2600 = vmatpush.bf16.msra.mxu0 0
      %2601 = vmatpush.bf16.msra.mxu0 0
      %2602 = vmatpush.bf16.msra.mxu0 0
      %2603 = vmatpush.bf16.msra.mxu0 0
      %2604 = vmatpush.bf16.msra.mxu0 %v2583
      %2605 = vmatpush.bf16.msra.mxu0 %v2582
      %2606 = vmatpush.bf16.msra.mxu0 %v2581
      %2607 = vmatpush.bf16.msra.mxu0 %v2580
      %2608 = vmatmul.bf16.gmra.mxu0 %v2589
      %v2609 = vpop.f32.mrf.mxu0
      %v2610 = vadd.f32 0.0, %v2609
      %v2611 = vpop.f32.mrf.mxu0
      %v2612 = vadd.f32 0.0, %v2611
      %2613 = vmatmul.bf16.gmra.mxu0 %v2592
      %v2614 = vpop.f32.mrf.mxu0
      %v2615 = vadd.f32 0.0, %v2614
      %v2616 = vpop.f32.mrf.mxu0
      %v2617 = vadd.f32 0.0, %v2616
      %2618 = vmatmul.bf16.gmra.mxu0 %v2595
      %v2619 = vpop.f32.mrf.mxu0
      %v2620 = vadd.f32 0.0, %v2619
      %v2621 = vpop.f32.mrf.mxu0
      %v2622 = vadd.f32 0.0, %v2621
      %2623 = vmatmul.bf16.gmra.mxu0 %v2598
      %v2624 = vpop.f32.mrf.mxu0
      %v2625 = vadd.f32 0.0, %v2624
      %v2626 = vpop.f32.mrf.mxu0
      %v2627 = vadd.f32 0.0, %v2626
      %2628 = vdwg.mxu0
      %v2629 = vrcp.pop %v2163
      %v2630 = vrcp.pop %v2166
      %v2631 = vrcp.pop %v2169
      %v2632 = vrcp.pop %v2172
      %v2633 = vrcp.pop %v2175
      %v2634 = vrcp.pop %v2178
      %v2635 = vrcp.pop %v2181
      %v2636 = vrcp.pop %v2184
      %v2637 = vrcp.pop %v2187
      %v2638 = vrcp.pop %v2190
      %v2639 = vrcp.pop %v2193
      %v2640 = vrcp.pop %v2196
      %v2641 = vrcp.pop %v2199
      %v2642 = vrcp.pop %v2202
      %v2643 = vrcp.pop %v2205
      %v2644 = vrcp.pop %v2208
      %v2645 = vrcp.pop %v2211
      %v2646 = vrcp.pop %v2214
      %v2647 = vrcp.pop %v2217
      %v2648 = vrcp.pop %v2220
      %v2649 = vrcp.pop %v2223
      %v2650 = vrcp.pop %v2226
      %v2651 = vrcp.pop %v2229
      %v2652 = vrcp.pop %v2232
      %v2653 = vrcp.pop %v2235
      %v2654 = vrcp.pop %v2238
      %v2655 = vrcp.pop %v2241
      %v2656 = vrcp.pop %v2244
      %v2657 = vrcp.pop %v2247
      %v2658 = vrcp.pop %v2250
      %v2659 = vrcp.pop %v2253
      %v2660 = vrcp.pop %v2256
      %v2661 = vmul.f32 %v2355, %v2629
      %v2662 = vmul.f32 %v2357, %v2630
      %v2663 = vmul.f32 %v2360, %v2631
      %v2664 = vmul.f32 %v2362, %v2632
      %v2665 = vmul.f32 %v2365, %v2633
      %v2666 = vmul.f32 %v2367, %v2634
      %v2667 = vmul.f32 %v2370, %v2635
      %v2668 = vmul.f32 %v2372, %v2636
      %v2669 = vmul.f32 %v2440, %v2637
      %v2670 = vmul.f32 %v2442, %v2638
      %v2671 = vmul.f32 %v2445, %v2639
      %v2672 = vmul.f32 %v2447, %v2640
      %v2673 = vmul.f32 %v2450, %v2641
      %v2674 = vmul.f32 %v2452, %v2642
      %v2675 = vmul.f32 %v2455, %v2643
      %v2676 = vmul.f32 %v2457, %v2644
      %v2677 = vmul.f32 %v2525, %v2645
      %v2678 = vmul.f32 %v2527, %v2646
      %v2679 = vmul.f32 %v2530, %v2647
      %v2680 = vmul.f32 %v2532, %v2648
      %v2681 = vmul.f32 %v2535, %v2649
      %v2682 = vmul.f32 %v2537, %v2650
      %v2683 = vmul.f32 %v2540, %v2651
      %v2684 = vmul.f32 %v2542, %v2652
      %v2685 = vmul.f32 %v2610, %v2653
      %v2686 = vmul.f32 %v2612, %v2654
      %v2687 = vmul.f32 %v2615, %v2655
      %v2688 = vmul.f32 %v2617, %v2656
      %v2689 = vmul.f32 %v2620, %v2657
      %v2690 = vmul.f32 %v2622, %v2658
      %v2691 = vmul.f32 %v2625, %v2659
      %v2692 = vmul.f32 %v2627, %v2660
      %2693 = vrot.lane.b32.xlu0 %v1499, 96
      %v2694 = vpop.permute.xlu0 %2693
      %2695 = vrot.lane.b32.xlu0 %v1501, 96
      %v2696 = vpop.permute.xlu0 %2695
      %2697 = vrot.lane.b32.xlu0 %v1503, 96
      %v2698 = vpop.permute.xlu0 %2697
      %2699 = vrot.lane.b32.xlu0 %v1505, 96
      %v2700 = vpop.permute.xlu0 %2699
      %2701 = vrot.lane.b32.xlu0 %v1507, 96
      %v2702 = vpop.permute.xlu0 %2701
      %2703 = vrot.lane.b32.xlu0 %v1509, 96
      %v2704 = vpop.permute.xlu0 %2703
      %2705 = vrot.lane.b32.xlu0 %v1511, 96
      %v2706 = vpop.permute.xlu0 %2705
      %2707 = vrot.lane.b32.xlu0 %v1513, 96
      %v2708 = vpop.permute.xlu0 %2707
      %v2709 = vrot.slane %v2694, 4
      %v2710 = vrot.slane %v2696, 4
      %v2711 = vrot.slane %v2698, 4
      %v2712 = vrot.slane %v2700, 4
      %v2713 = vrot.slane %v2702, 4
      %v2714 = vrot.slane %v2704, 4
      %v2715 = vrot.slane %v2706, 4
      %v2716 = vrot.slane %v2708, 4
      %2717 = vrot.lane.b32.xlu0 %v1619, 96
      %v2718 = vpop.permute.xlu0 %2717
      %2719 = vrot.lane.b32.xlu0 %v1620, 96
      %v2720 = vpop.permute.xlu0 %2719
      %2721 = vrot.lane.b32.xlu0 %v1621, 96
      %v2722 = vpop.permute.xlu0 %2721
      %2723 = vrot.lane.b32.xlu0 %v1622, 96
      %v2724 = vpop.permute.xlu0 %2723
      %v2725 = vunpack.c.l.b16 %v2709
      %v2726 = vunpack.c.l.b16 %v2710
      %v2727 = vunpack.c.l.b16 %v2711
      %v2728 = vunpack.c.l.b16 %v2712
      %v2729 = vunpack.c.l.b16 %v2713
      %v2730 = vunpack.c.l.b16 %v2714
      %v2731 = vunpack.c.l.b16 %v2715
      %v2732 = vunpack.c.l.b16 %v2716
      %v2733 = vpack.c.b16 %v2726, %v2725
      %v2734 = vpack.c.b16 %v2728, %v2727
      %v2735 = vpack.c.b16 %v2730, %v2729
      %v2736 = vpack.c.b16 %v2732, %v2731
      %v2738 = vsel %vm1635, %v2718, 0
      %v2741 = vsel %vm1635, %v2720, 0
      %v2744 = vsel %vm1635, %v2722, 0
      %v2747 = vsel %vm1635, %v2724, 0
      %v2750 = vsel %vm1635, %v2733, 0
      %v2753 = vsel %vm1635, %v2734, 0
      %v2756 = vsel %vm1635, %v2735, 0
      %v2759 = vsel %vm1635, %v2736, 0
      %2761 = vmatpush.bf16.xpose.msra.mxu0 0
      %2762 = vmatpush.bf16.xpose.msra.mxu0 0
      %2763 = vmatpush.bf16.xpose.msra.mxu0 0
      %2764 = vmatpush.bf16.xpose.msra.mxu0 0
      %2765 = vmatpush.bf16.xpose.msra.mxu0 %v2759
      %2766 = vmatpush.bf16.xpose.msra.mxu0 %v2756
      %2767 = vmatpush.bf16.xpose.msra.mxu0 %v2753
      %2768 = vmatpush.bf16.xpose.msra.mxu0 %v2750
      %2769 = vmatmul.bf16.gmra.mxu0 %v2738
      %v2770 = vpop.f32.mrf.mxu0
      %v2771 = vadd.f32 %v1571, %v2770
      %v2772 = vpop.f32.mrf.mxu0
      %v2773 = vadd.f32 %v1572, %v2772
      %2774 = vmatmul.bf16.gmra.mxu0 %v2741
      %v2775 = vpop.f32.mrf.mxu0
      %v2776 = vadd.f32 %v1573, %v2775
      %v2777 = vpop.f32.mrf.mxu0
      %v2778 = vadd.f32 %v1574, %v2777
      %2779 = vmatmul.bf16.gmra.mxu0 %v2744
      %v2780 = vpop.f32.mrf.mxu0
      %v2781 = vadd.f32 %v1575, %v2780
      %v2782 = vpop.f32.mrf.mxu0
      %v2783 = vadd.f32 %v1576, %v2782
      %2784 = vmatmul.bf16.gmra.mxu0 %v2747
      %v2785 = vpop.f32.mrf.mxu0
      %v2786 = vadd.f32 %v1577, %v2785
      %v2787 = vpop.f32.mrf.mxu0
      %v2788 = vadd.f32 %v1578, %v2787
      %2789 = vdwg.mxu0
      %2790 = vrot.lane.b32.xlu0 %v1515, 96
      %v2791 = vpop.permute.xlu0 %2790
      %2792 = vrot.lane.b32.xlu0 %v1517, 96
      %v2793 = vpop.permute.xlu0 %2792
      %2794 = vrot.lane.b32.xlu0 %v1519, 96
      %v2795 = vpop.permute.xlu0 %2794
      %2796 = vrot.lane.b32.xlu0 %v1521, 96
      %v2797 = vpop.permute.xlu0 %2796
      %2798 = vrot.lane.b32.xlu0 %v1523, 96
      %v2799 = vpop.permute.xlu0 %2798
      %2800 = vrot.lane.b32.xlu0 %v1525, 96
      %v2801 = vpop.permute.xlu0 %2800
      %2802 = vrot.lane.b32.xlu0 %v1527, 96
      %v2803 = vpop.permute.xlu0 %2802
      %2804 = vrot.lane.b32.xlu0 %v1529, 96
      %v2805 = vpop.permute.xlu0 %2804
      %v2806 = vrot.slane %v2791, 4
      %v2807 = vrot.slane %v2793, 4
      %v2808 = vrot.slane %v2795, 4
      %v2809 = vrot.slane %v2797, 4
      %v2810 = vrot.slane %v2799, 4
      %v2811 = vrot.slane %v2801, 4
      %v2812 = vrot.slane %v2803, 4
      %v2813 = vrot.slane %v2805, 4
      %2814 = vrot.lane.b32.xlu0 %v1713, 96
      %v2815 = vpop.permute.xlu0 %2814
      %2816 = vrot.lane.b32.xlu0 %v1714, 96
      %v2817 = vpop.permute.xlu0 %2816
      %2818 = vrot.lane.b32.xlu0 %v1715, 96
      %v2819 = vpop.permute.xlu0 %2818
      %2820 = vrot.lane.b32.xlu0 %v1716, 96
      %v2821 = vpop.permute.xlu0 %2820
      %v2822 = vunpack.c.l.b16 %v2806
      %v2823 = vunpack.c.l.b16 %v2807
      %v2824 = vunpack.c.l.b16 %v2808
      %v2825 = vunpack.c.l.b16 %v2809
      %v2826 = vunpack.c.l.b16 %v2810
      %v2827 = vunpack.c.l.b16 %v2811
      %v2828 = vunpack.c.l.b16 %v2812
      %v2829 = vunpack.c.l.b16 %v2813
      %v2830 = vpack.c.b16 %v2823, %v2822
      %v2831 = vpack.c.b16 %v2825, %v2824
      %v2832 = vpack.c.b16 %v2827, %v2826
      %v2833 = vpack.c.b16 %v2829, %v2828
      %v2835 = vsel %vm1635, %v2815, 0
      %v2838 = vsel %vm1635, %v2817, 0
      %v2841 = vsel %vm1635, %v2819, 0
      %v2844 = vsel %vm1635, %v2821, 0
      %v2847 = vsel %vm1635, %v2830, 0
      %v2850 = vsel %vm1635, %v2831, 0
      %v2853 = vsel %vm1635, %v2832, 0
      %v2856 = vsel %vm1635, %v2833, 0
      %2858 = vmatpush.bf16.xpose.msra.mxu0 0
      %2859 = vmatpush.bf16.xpose.msra.mxu0 0
      %2860 = vmatpush.bf16.xpose.msra.mxu0 0
      %2861 = vmatpush.bf16.xpose.msra.mxu0 0
      %2862 = vmatpush.bf16.xpose.msra.mxu0 %v2856
      %2863 = vmatpush.bf16.xpose.msra.mxu0 %v2853
      %2864 = vmatpush.bf16.xpose.msra.mxu0 %v2850
      %2865 = vmatpush.bf16.xpose.msra.mxu0 %v2847
      %2866 = vmatmul.bf16.gmra.mxu0 %v2835
      %v2867 = vpop.f32.mrf.mxu0
      %v2868 = vadd.f32 %v1571, %v2867
      %v2869 = vpop.f32.mrf.mxu0
      %v2870 = vadd.f32 %v1572, %v2869
      %2871 = vmatmul.bf16.gmra.mxu0 %v2838
      %v2872 = vpop.f32.mrf.mxu0
      %v2873 = vadd.f32 %v1573, %v2872
      %v2874 = vpop.f32.mrf.mxu0
      %v2875 = vadd.f32 %v1574, %v2874
      %2876 = vmatmul.bf16.gmra.mxu0 %v2841
      %v2877 = vpop.f32.mrf.mxu0
      %v2878 = vadd.f32 %v1575, %v2877
      %v2879 = vpop.f32.mrf.mxu0
      %v2880 = vadd.f32 %v1576, %v2879
      %2881 = vmatmul.bf16.gmra.mxu0 %v2844
      %v2882 = vpop.f32.mrf.mxu0
      %v2883 = vadd.f32 %v1577, %v2882
      %v2884 = vpop.f32.mrf.mxu0
      %v2885 = vadd.f32 %v1578, %v2884
      %2886 = vdwg.mxu0
      %2887 = vrot.lane.b32.xlu0 %v1531, 96
      %v2888 = vpop.permute.xlu0 %2887
      %2889 = vrot.lane.b32.xlu0 %v1533, 96
      %v2890 = vpop.permute.xlu0 %2889
      %2891 = vrot.lane.b32.xlu0 %v1535, 96
      %v2892 = vpop.permute.xlu0 %2891
      %2893 = vrot.lane.b32.xlu0 %v1537, 96
      %v2894 = vpop.permute.xlu0 %2893
      %2895 = vrot.lane.b32.xlu0 %v1539, 96
      %v2896 = vpop.permute.xlu0 %2895
      %2897 = vrot.lane.b32.xlu0 %v1541, 96
      %v2898 = vpop.permute.xlu0 %2897
      %2899 = vrot.lane.b32.xlu0 %v1543, 96
      %v2900 = vpop.permute.xlu0 %2899
      %2901 = vrot.lane.b32.xlu0 %v1545, 96
      %v2902 = vpop.permute.xlu0 %2901
      %v2903 = vrot.slane %v2888, 4
      %v2904 = vrot.slane %v2890, 4
      %v2905 = vrot.slane %v2892, 4
      %v2906 = vrot.slane %v2894, 4
      %v2907 = vrot.slane %v2896, 4
      %v2908 = vrot.slane %v2898, 4
      %v2909 = vrot.slane %v2900, 4
      %v2910 = vrot.slane %v2902, 4
      %2911 = vrot.lane.b32.xlu0 %v1806, 96
      %v2912 = vpop.permute.xlu0 %2911
      %2913 = vrot.lane.b32.xlu0 %v1807, 96
      %v2914 = vpop.permute.xlu0 %2913
      %2915 = vrot.lane.b32.xlu0 %v1808, 96
      %v2916 = vpop.permute.xlu0 %2915
      %2917 = vrot.lane.b32.xlu0 %v1809, 96
      %v2918 = vpop.permute.xlu0 %2917
      %v2919 = vunpack.c.l.b16 %v2903
      %v2920 = vunpack.c.l.b16 %v2904
      %v2921 = vunpack.c.l.b16 %v2905
      %v2922 = vunpack.c.l.b16 %v2906
      %v2923 = vunpack.c.l.b16 %v2907
      %v2924 = vunpack.c.l.b16 %v2908
      %v2925 = vunpack.c.l.b16 %v2909
      %v2926 = vunpack.c.l.b16 %v2910
      %v2927 = vpack.c.b16 %v2920, %v2919
      %v2928 = vpack.c.b16 %v2922, %v2921
      %v2929 = vpack.c.b16 %v2924, %v2923
      %v2930 = vpack.c.b16 %v2926, %v2925
      %v2932 = vsel %vm1635, %v2912, 0
      %v2935 = vsel %vm1635, %v2914, 0
      %v2938 = vsel %vm1635, %v2916, 0
      %v2941 = vsel %vm1635, %v2918, 0
      %v2944 = vsel %vm1635, %v2927, 0
      %v2947 = vsel %vm1635, %v2928, 0
      %v2950 = vsel %vm1635, %v2929, 0
      %v2953 = vsel %vm1635, %v2930, 0
      %2955 = vmatpush.bf16.xpose.msra.mxu0 0
      %2956 = vmatpush.bf16.xpose.msra.mxu0 0
      %2957 = vmatpush.bf16.xpose.msra.mxu0 0
      %2958 = vmatpush.bf16.xpose.msra.mxu0 0
      %2959 = vmatpush.bf16.xpose.msra.mxu0 %v2953
      %2960 = vmatpush.bf16.xpose.msra.mxu0 %v2950
      %2961 = vmatpush.bf16.xpose.msra.mxu0 %v2947
      %2962 = vmatpush.bf16.xpose.msra.mxu0 %v2944
      %2963 = vmatmul.bf16.gmra.mxu0 %v2932
      %v2964 = vpop.f32.mrf.mxu0
      %v2965 = vadd.f32 %v1571, %v2964
      %v2966 = vpop.f32.mrf.mxu0
      %v2967 = vadd.f32 %v1572, %v2966
      %2968 = vmatmul.bf16.gmra.mxu0 %v2935
      %v2969 = vpop.f32.mrf.mxu0
      %v2970 = vadd.f32 %v1573, %v2969
      %v2971 = vpop.f32.mrf.mxu0
      %v2972 = vadd.f32 %v1574, %v2971
      %2973 = vmatmul.bf16.gmra.mxu0 %v2938
      %v2974 = vpop.f32.mrf.mxu0
      %v2975 = vadd.f32 %v1575, %v2974
      %v2976 = vpop.f32.mrf.mxu0
      %v2977 = vadd.f32 %v1576, %v2976
      %2978 = vmatmul.bf16.gmra.mxu0 %v2941
      %v2979 = vpop.f32.mrf.mxu0
      %v2980 = vadd.f32 %v1577, %v2979
      %v2981 = vpop.f32.mrf.mxu0
      %v2982 = vadd.f32 %v1578, %v2981
      %2983 = vdwg.mxu0
      %2984 = vrot.lane.b32.xlu0 %v1547, 96
      %v2985 = vpop.permute.xlu0 %2984
      %2986 = vrot.lane.b32.xlu0 %v1549, 96
      %v2987 = vpop.permute.xlu0 %2986
      %2988 = vrot.lane.b32.xlu0 %v1551, 96
      %v2989 = vpop.permute.xlu0 %2988
      %2990 = vrot.lane.b32.xlu0 %v1553, 96
      %v2991 = vpop.permute.xlu0 %2990
      %2992 = vrot.lane.b32.xlu0 %v1555, 96
      %v2993 = vpop.permute.xlu0 %2992
      %2994 = vrot.lane.b32.xlu0 %v1557, 96
      %v2995 = vpop.permute.xlu0 %2994
      %2996 = vrot.lane.b32.xlu0 %v1559, 96
      %v2997 = vpop.permute.xlu0 %2996
      %2998 = vrot.lane.b32.xlu0 %v1561, 96
      %v2999 = vpop.permute.xlu0 %2998
      %v3000 = vrot.slane %v2985, 4
      %v3001 = vrot.slane %v2987, 4
      %v3002 = vrot.slane %v2989, 4
      %v3003 = vrot.slane %v2991, 4
      %v3004 = vrot.slane %v2993, 4
      %v3005 = vrot.slane %v2995, 4
      %v3006 = vrot.slane %v2997, 4
      %v3007 = vrot.slane %v2999, 4
      %3008 = vrot.lane.b32.xlu0 %v1899, 96
      %v3009 = vpop.permute.xlu0 %3008
      %3010 = vrot.lane.b32.xlu0 %v1900, 96
      %v3011 = vpop.permute.xlu0 %3010
      %3012 = vrot.lane.b32.xlu0 %v1901, 96
      %v3013 = vpop.permute.xlu0 %3012
      %3014 = vrot.lane.b32.xlu0 %v1902, 96
      %v3015 = vpop.permute.xlu0 %3014
      %v3016 = vunpack.c.l.b16 %v3000
      %v3017 = vunpack.c.l.b16 %v3001
      %v3018 = vunpack.c.l.b16 %v3002
      %v3019 = vunpack.c.l.b16 %v3003
      %v3020 = vunpack.c.l.b16 %v3004
      %v3021 = vunpack.c.l.b16 %v3005
      %v3022 = vunpack.c.l.b16 %v3006
      %v3023 = vunpack.c.l.b16 %v3007
      %v3024 = vpack.c.b16 %v3017, %v3016
      %v3025 = vpack.c.b16 %v3019, %v3018
      %v3026 = vpack.c.b16 %v3021, %v3020
      %v3027 = vpack.c.b16 %v3023, %v3022
      %v3029 = vsel %vm1635, %v3009, 0
      %v3032 = vsel %vm1635, %v3011, 0
      %v3035 = vsel %vm1635, %v3013, 0
      %v3038 = vsel %vm1635, %v3015, 0
      %v3041 = vsel %vm1635, %v3024, 0
      %v3044 = vsel %vm1635, %v3025, 0
      %v3047 = vsel %vm1635, %v3026, 0
      %v3050 = vsel %vm1635, %v3027, 0
      %3052 = vmatpush.bf16.xpose.msra.mxu0 0
      %3053 = vmatpush.bf16.xpose.msra.mxu0 0
      %3054 = vmatpush.bf16.xpose.msra.mxu0 0
      %3055 = vmatpush.bf16.xpose.msra.mxu0 0
      %3056 = vmatpush.bf16.xpose.msra.mxu0 %v3050
      %3057 = vmatpush.bf16.xpose.msra.mxu0 %v3047
      %3058 = vmatpush.bf16.xpose.msra.mxu0 %v3044
      %3059 = vmatpush.bf16.xpose.msra.mxu0 %v3041
      %3060 = vmatmul.bf16.gmra.mxu0 %v3029
      %v3061 = vpop.f32.mrf.mxu0
      %v3062 = vadd.f32 %v1571, %v3061
      %v3063 = vpop.f32.mrf.mxu0
      %v3064 = vadd.f32 %v1572, %v3063
      %3065 = vmatmul.bf16.gmra.mxu0 %v3032
      %v3066 = vpop.f32.mrf.mxu0
      %v3067 = vadd.f32 %v1573, %v3066
      %v3068 = vpop.f32.mrf.mxu0
      %v3069 = vadd.f32 %v1574, %v3068
      %3070 = vmatmul.bf16.gmra.mxu0 %v3035
      %v3071 = vpop.f32.mrf.mxu0
      %v3072 = vadd.f32 %v1575, %v3071
      %v3073 = vpop.f32.mrf.mxu0
      %v3074 = vadd.f32 %v1576, %v3073
      %3075 = vmatmul.bf16.gmra.mxu0 %v3038
      %v3076 = vpop.f32.mrf.mxu0
      %v3077 = vadd.f32 %v1577, %v3076
      %v3078 = vpop.f32.mrf.mxu0
      %v3079 = vadd.f32 %v1578, %v3078
      %3080 = vdwg.mxu0
      %v3081 = vsel %vm1968, %v2771, -inf
      %3082 = vmax.xlane.f32.xlu0 %v3081
      %v3083 = vpop.xlane.xlu0 %3082
      %v3084 = vsel %vm1968, %v2773, -inf
      %3085 = vmax.xlane.f32.xlu0 %v3084
      %v3086 = vpop.xlane.xlu0 %3085
      %v3087 = vsel %vm1968, %v2776, -inf
      %3088 = vmax.xlane.f32.xlu0 %v3087
      %v3089 = vpop.xlane.xlu0 %3088
      %v3090 = vsel %vm1968, %v2778, -inf
      %3091 = vmax.xlane.f32.xlu0 %v3090
      %v3092 = vpop.xlane.xlu0 %3091
      %v3093 = vsel %vm1968, %v2781, -inf
      %3094 = vmax.xlane.f32.xlu0 %v3093
      %v3095 = vpop.xlane.xlu0 %3094
      %v3096 = vsel %vm1968, %v2783, -inf
      %3097 = vmax.xlane.f32.xlu0 %v3096
      %v3098 = vpop.xlane.xlu0 %3097
      %v3099 = vsel %vm1968, %v2786, -inf
      %3100 = vmax.xlane.f32.xlu0 %v3099
      %v3101 = vpop.xlane.xlu0 %3100
      %v3102 = vsel %vm1968, %v2788, -inf
      %3103 = vmax.xlane.f32.xlu0 %v3102
      %v3104 = vpop.xlane.xlu0 %3103
      %v3105 = vsel %vm1968, %v2868, -inf
      %3106 = vmax.xlane.f32.xlu0 %v3105
      %v3107 = vpop.xlane.xlu0 %3106
      %v3108 = vsel %vm1968, %v2870, -inf
      %3109 = vmax.xlane.f32.xlu0 %v3108
      %v3110 = vpop.xlane.xlu0 %3109
      %v3111 = vsel %vm1968, %v2873, -inf
      %3112 = vmax.xlane.f32.xlu0 %v3111
      %v3113 = vpop.xlane.xlu0 %3112
      %v3114 = vsel %vm1968, %v2875, -inf
      %3115 = vmax.xlane.f32.xlu0 %v3114
      %v3116 = vpop.xlane.xlu0 %3115
      %v3117 = vsel %vm1968, %v2878, -inf
      %3118 = vmax.xlane.f32.xlu0 %v3117
      %v3119 = vpop.xlane.xlu0 %3118
      %v3120 = vsel %vm1968, %v2880, -inf
      %3121 = vmax.xlane.f32.xlu0 %v3120
      %v3122 = vpop.xlane.xlu0 %3121
      %v3123 = vsel %vm1968, %v2883, -inf
      %3124 = vmax.xlane.f32.xlu0 %v3123
      %v3125 = vpop.xlane.xlu0 %3124
      %v3126 = vsel %vm1968, %v2885, -inf
      %3127 = vmax.xlane.f32.xlu0 %v3126
      %v3128 = vpop.xlane.xlu0 %3127
      %v3129 = vsel %vm1968, %v2965, -inf
      %3130 = vmax.xlane.f32.xlu0 %v3129
      %v3131 = vpop.xlane.xlu0 %3130
      %v3132 = vsel %vm1968, %v2967, -inf
      %3133 = vmax.xlane.f32.xlu0 %v3132
      %v3134 = vpop.xlane.xlu0 %3133
      %v3135 = vsel %vm1968, %v2970, -inf
      %3136 = vmax.xlane.f32.xlu0 %v3135
      %v3137 = vpop.xlane.xlu0 %3136
      %v3138 = vsel %vm1968, %v2972, -inf
      %3139 = vmax.xlane.f32.xlu0 %v3138
      %v3140 = vpop.xlane.xlu0 %3139
      %v3141 = vsel %vm1968, %v2975, -inf
      %3142 = vmax.xlane.f32.xlu0 %v3141
      %v3143 = vpop.xlane.xlu0 %3142
      %v3144 = vsel %vm1968, %v2977, -inf
      %3145 = vmax.xlane.f32.xlu0 %v3144
      %v3146 = vpop.xlane.xlu0 %3145
      %v3147 = vsel %vm1968, %v2980, -inf
      %3148 = vmax.xlane.f32.xlu0 %v3147
      %v3149 = vpop.xlane.xlu0 %3148
      %v3150 = vsel %vm1968, %v2982, -inf
      %3151 = vmax.xlane.f32.xlu0 %v3150
      %v3152 = vpop.xlane.xlu0 %3151
      %v3153 = vsel %vm1968, %v3062, -inf
      %3154 = vmax.xlane.f32.xlu0 %v3153
      %v3155 = vpop.xlane.xlu0 %3154
      %v3156 = vsel %vm1968, %v3064, -inf
      %3157 = vmax.xlane.f32.xlu0 %v3156
      %v3158 = vpop.xlane.xlu0 %3157
      %v3159 = vsel %vm1968, %v3067, -inf
      %3160 = vmax.xlane.f32.xlu0 %v3159
      %v3161 = vpop.xlane.xlu0 %3160
      %v3162 = vsel %vm1968, %v3069, -inf
      %3163 = vmax.xlane.f32.xlu0 %v3162
      %v3164 = vpop.xlane.xlu0 %3163
      %v3165 = vsel %vm1968, %v3072, -inf
      %3166 = vmax.xlane.f32.xlu0 %v3165
      %v3167 = vpop.xlane.xlu0 %3166
      %v3168 = vsel %vm1968, %v3074, -inf
      %3169 = vmax.xlane.f32.xlu0 %v3168
      %v3170 = vpop.xlane.xlu0 %3169
      %v3171 = vsel %vm1968, %v3077, -inf
      %3172 = vmax.xlane.f32.xlu0 %v3171
      %v3173 = vpop.xlane.xlu0 %3172
      %v3174 = vsel %vm1968, %v3079, -inf
      %3175 = vmax.xlane.f32.xlu0 %v3174
      %v3176 = vpop.xlane.xlu0 %3175
      %v3177 = vsub.f32 %v2771, %v3083
      %v3178 = vsub.f32 %v2773, %v3086
      %v3179 = vsub.f32 %v2776, %v3089
      %v3180 = vsub.f32 %v2778, %v3092
      %v3181 = vsub.f32 %v2781, %v3095
      %v3182 = vsub.f32 %v2783, %v3098
      %v3183 = vsub.f32 %v2786, %v3101
      %v3184 = vsub.f32 %v2788, %v3104
      %v3185 = vsub.f32 %v2868, %v3107
      %v3186 = vsub.f32 %v2870, %v3110
      %v3187 = vsub.f32 %v2873, %v3113
      %v3188 = vsub.f32 %v2875, %v3116
      %v3189 = vsub.f32 %v2878, %v3119
      %v3190 = vsub.f32 %v2880, %v3122
      %v3191 = vsub.f32 %v2883, %v3125
      %v3192 = vsub.f32 %v2885, %v3128
      %v3193 = vsub.f32 %v2965, %v3131
      %v3194 = vsub.f32 %v2967, %v3134
      %v3195 = vsub.f32 %v2970, %v3137
      %v3196 = vsub.f32 %v2972, %v3140
      %v3197 = vsub.f32 %v2975, %v3143
      %v3198 = vsub.f32 %v2977, %v3146
      %v3199 = vsub.f32 %v2980, %v3149
      %v3200 = vsub.f32 %v2982, %v3152
      %v3201 = vsub.f32 %v3062, %v3155
      %v3202 = vsub.f32 %v3064, %v3158
      %v3203 = vsub.f32 %v3067, %v3161
      %v3204 = vsub.f32 %v3069, %v3164
      %v3205 = vsub.f32 %v3072, %v3167
      %v3206 = vsub.f32 %v3074, %v3170
      %v3207 = vsub.f32 %v3077, %v3173
      %v3208 = vsub.f32 %v3079, %v3176
      %v3209 = vmul.f32 %v3177, 1.442695
      %v3210 = vpow.pop %v3209
      %v3211 = vmul.f32 %v3178, 1.442695
      %v3212 = vpow.pop %v3211
      %v3213 = vmul.f32 %v3179, 1.442695
      %v3214 = vpow.pop %v3213
      %v3215 = vmul.f32 %v3180, 1.442695
      %v3216 = vpow.pop %v3215
      %v3217 = vmul.f32 %v3181, 1.442695
      %v3218 = vpow.pop %v3217
      %v3219 = vmul.f32 %v3182, 1.442695
      %v3220 = vpow.pop %v3219
      %v3221 = vmul.f32 %v3183, 1.442695
      %v3222 = vpow.pop %v3221
      %v3223 = vmul.f32 %v3184, 1.442695
      %v3224 = vpow.pop %v3223
      %v3225 = vmul.f32 %v3185, 1.442695
      %v3226 = vpow.pop %v3225
      %v3227 = vmul.f32 %v3186, 1.442695
      %v3228 = vpow.pop %v3227
      %v3229 = vmul.f32 %v3187, 1.442695
      %v3230 = vpow.pop %v3229
      %v3231 = vmul.f32 %v3188, 1.442695
      %v3232 = vpow.pop %v3231
      %v3233 = vmul.f32 %v3189, 1.442695
      %v3234 = vpow.pop %v3233
      %v3235 = vmul.f32 %v3190, 1.442695
      %v3236 = vpow.pop %v3235
      %v3237 = vmul.f32 %v3191, 1.442695
      %v3238 = vpow.pop %v3237
      %v3239 = vmul.f32 %v3192, 1.442695
      %v3240 = vpow.pop %v3239
      %v3241 = vmul.f32 %v3193, 1.442695
      %v3242 = vpow.pop %v3241
      %v3243 = vmul.f32 %v3194, 1.442695
      %v3244 = vpow.pop %v3243
      %v3245 = vmul.f32 %v3195, 1.442695
      %v3246 = vpow.pop %v3245
      %v3247 = vmul.f32 %v3196, 1.442695
      %v3248 = vpow.pop %v3247
      %v3249 = vmul.f32 %v3197, 1.442695
      %v3250 = vpow.pop %v3249
      %v3251 = vmul.f32 %v3198, 1.442695
      %v3252 = vpow.pop %v3251
      %v3253 = vmul.f32 %v3199, 1.442695
      %v3254 = vpow.pop %v3253
      %v3255 = vmul.f32 %v3200, 1.442695
      %v3256 = vpow.pop %v3255
      %v3257 = vmul.f32 %v3201, 1.442695
      %v3258 = vpow.pop %v3257
      %v3259 = vmul.f32 %v3202, 1.442695
      %v3260 = vpow.pop %v3259
      %v3261 = vmul.f32 %v3203, 1.442695
      %v3262 = vpow.pop %v3261
      %v3263 = vmul.f32 %v3204, 1.442695
      %v3264 = vpow.pop %v3263
      %v3265 = vmul.f32 %v3205, 1.442695
      %v3266 = vpow.pop %v3265
      %v3267 = vmul.f32 %v3206, 1.442695
      %v3268 = vpow.pop %v3267
      %v3269 = vmul.f32 %v3207, 1.442695
      %v3270 = vpow.pop %v3269
      %v3271 = vmul.f32 %v3208, 1.442695
      %v3272 = vpow.pop %v3271
      %v3273 = vsel %vm1968, %v3210, 0.0
      %3274 = vadd.xlane.f32.xlu0 %v3273
      %v3275 = vpop.xlane.xlu0 %3274
      %v3276 = vsel %vm1968, %v3212, 0.0
      %3277 = vadd.xlane.f32.xlu0 %v3276
      %v3278 = vpop.xlane.xlu0 %3277
      %v3279 = vsel %vm1968, %v3214, 0.0
      %3280 = vadd.xlane.f32.xlu0 %v3279
      %v3281 = vpop.xlane.xlu0 %3280
      %v3282 = vsel %vm1968, %v3216, 0.0
      %3283 = vadd.xlane.f32.xlu0 %v3282
      %v3284 = vpop.xlane.xlu0 %3283
      %v3285 = vsel %vm1968, %v3218, 0.0
      %3286 = vadd.xlane.f32.xlu0 %v3285
      %v3287 = vpop.xlane.xlu0 %3286
      %v3288 = vsel %vm1968, %v3220, 0.0
      %3289 = vadd.xlane.f32.xlu0 %v3288
      %v3290 = vpop.xlane.xlu0 %3289
      %v3291 = vsel %vm1968, %v3222, 0.0
      %3292 = vadd.xlane.f32.xlu0 %v3291
      %v3293 = vpop.xlane.xlu0 %3292
      %v3294 = vsel %vm1968, %v3224, 0.0
      %3295 = vadd.xlane.f32.xlu0 %v3294
      %v3296 = vpop.xlane.xlu0 %3295
      %v3297 = vsel %vm1968, %v3226, 0.0
      %3298 = vadd.xlane.f32.xlu0 %v3297
      %v3299 = vpop.xlane.xlu0 %3298
      %v3300 = vsel %vm1968, %v3228, 0.0
      %3301 = vadd.xlane.f32.xlu0 %v3300
      %v3302 = vpop.xlane.xlu0 %3301
      %v3303 = vsel %vm1968, %v3230, 0.0
      %3304 = vadd.xlane.f32.xlu0 %v3303
      %v3305 = vpop.xlane.xlu0 %3304
      %v3306 = vsel %vm1968, %v3232, 0.0
      %3307 = vadd.xlane.f32.xlu0 %v3306
      %v3308 = vpop.xlane.xlu0 %3307
      %v3309 = vsel %vm1968, %v3234, 0.0
      %3310 = vadd.xlane.f32.xlu0 %v3309
      %v3311 = vpop.xlane.xlu0 %3310
      %v3312 = vsel %vm1968, %v3236, 0.0
      %3313 = vadd.xlane.f32.xlu0 %v3312
      %v3314 = vpop.xlane.xlu0 %3313
      %v3315 = vsel %vm1968, %v3238, 0.0
      %3316 = vadd.xlane.f32.xlu0 %v3315
      %v3317 = vpop.xlane.xlu0 %3316
      %v3318 = vsel %vm1968, %v3240, 0.0
      %3319 = vadd.xlane.f32.xlu0 %v3318
      %v3320 = vpop.xlane.xlu0 %3319
      %v3321 = vsel %vm1968, %v3242, 0.0
      %3322 = vadd.xlane.f32.xlu0 %v3321
      %v3323 = vpop.xlane.xlu0 %3322
      %v3324 = vsel %vm1968, %v3244, 0.0
      %3325 = vadd.xlane.f32.xlu0 %v3324
      %v3326 = vpop.xlane.xlu0 %3325
      %v3327 = vsel %vm1968, %v3246, 0.0
      %3328 = vadd.xlane.f32.xlu0 %v3327
      %v3329 = vpop.xlane.xlu0 %3328
      %v3330 = vsel %vm1968, %v3248, 0.0
      %3331 = vadd.xlane.f32.xlu0 %v3330
      %v3332 = vpop.xlane.xlu0 %3331
      %v3333 = vsel %vm1968, %v3250, 0.0
      %3334 = vadd.xlane.f32.xlu0 %v3333
      %v3335 = vpop.xlane.xlu0 %3334
      %v3336 = vsel %vm1968, %v3252, 0.0
      %3337 = vadd.xlane.f32.xlu0 %v3336
      %v3338 = vpop.xlane.xlu0 %3337
      %v3339 = vsel %vm1968, %v3254, 0.0
      %3340 = vadd.xlane.f32.xlu0 %v3339
      %v3341 = vpop.xlane.xlu0 %3340
      %v3342 = vsel %vm1968, %v3256, 0.0
      %3343 = vadd.xlane.f32.xlu0 %v3342
      %v3344 = vpop.xlane.xlu0 %3343
      %v3345 = vsel %vm1968, %v3258, 0.0
      %3346 = vadd.xlane.f32.xlu0 %v3345
      %v3347 = vpop.xlane.xlu0 %3346
      %v3348 = vsel %vm1968, %v3260, 0.0
      %3349 = vadd.xlane.f32.xlu0 %v3348
      %v3350 = vpop.xlane.xlu0 %3349
      %v3351 = vsel %vm1968, %v3262, 0.0
      %3352 = vadd.xlane.f32.xlu0 %v3351
      %v3353 = vpop.xlane.xlu0 %3352
      %v3354 = vsel %vm1968, %v3264, 0.0
      %3355 = vadd.xlane.f32.xlu0 %v3354
      %v3356 = vpop.xlane.xlu0 %3355
      %v3357 = vsel %vm1968, %v3266, 0.0
      %3358 = vadd.xlane.f32.xlu0 %v3357
      %v3359 = vpop.xlane.xlu0 %3358
      %v3360 = vsel %vm1968, %v3268, 0.0
      %3361 = vadd.xlane.f32.xlu0 %v3360
      %v3362 = vpop.xlane.xlu0 %3361
      %v3363 = vsel %vm1968, %v3270, 0.0
      %3364 = vadd.xlane.f32.xlu0 %v3363
      %v3365 = vpop.xlane.xlu0 %3364
      %v3366 = vsel %vm1968, %v3272, 0.0
      %3367 = vadd.xlane.f32.xlu0 %v3366
      %v3368 = vpop.xlane.xlu0 %3367
      %v3369 = vpack.c.bf16 %v3210, %v3210
      %v3370 = vpack.c.bf16 %v3212, %v3212
      %v3371 = vpack.c.bf16 %v3214, %v3214
      %v3372 = vpack.c.bf16 %v3216, %v3216
      %v3373 = vpack.c.bf16 %v3218, %v3218
      %v3374 = vpack.c.bf16 %v3220, %v3220
      %v3375 = vpack.c.bf16 %v3222, %v3222
      %v3376 = vpack.c.bf16 %v3224, %v3224
      %v3377 = vpack.c.bf16 %v3226, %v3226
      %v3378 = vpack.c.bf16 %v3228, %v3228
      %v3379 = vpack.c.bf16 %v3230, %v3230
      %v3380 = vpack.c.bf16 %v3232, %v3232
      %v3381 = vpack.c.bf16 %v3234, %v3234
      %v3382 = vpack.c.bf16 %v3236, %v3236
      %v3383 = vpack.c.bf16 %v3238, %v3238
      %v3384 = vpack.c.bf16 %v3240, %v3240
      %v3385 = vpack.c.bf16 %v3242, %v3242
      %v3386 = vpack.c.bf16 %v3244, %v3244
      %v3387 = vpack.c.bf16 %v3246, %v3246
      %v3388 = vpack.c.bf16 %v3248, %v3248
      %v3389 = vpack.c.bf16 %v3250, %v3250
      %v3390 = vpack.c.bf16 %v3252, %v3252
      %v3391 = vpack.c.bf16 %v3254, %v3254
      %v3392 = vpack.c.bf16 %v3256, %v3256
      %v3393 = vpack.c.bf16 %v3258, %v3258
      %v3394 = vpack.c.bf16 %v3260, %v3260
      %v3395 = vpack.c.bf16 %v3262, %v3262
      %v3396 = vpack.c.bf16 %v3264, %v3264
      %v3397 = vpack.c.bf16 %v3266, %v3266
      %v3398 = vpack.c.bf16 %v3268, %v3268
      %v3399 = vpack.c.bf16 %v3270, %v3270
      %v3400 = vpack.c.bf16 %v3272, %v3272
      %v3409 = vunpack.c.l.b16 %v3369
      %v3410 = vunpack.c.l.b16 %v3370
      %v3411 = vunpack.c.l.b16 %v3371
      %v3412 = vunpack.c.l.b16 %v3372
      %v3413 = vunpack.c.l.b16 %v3373
      %v3414 = vunpack.c.l.b16 %v3374
      %v3415 = vunpack.c.l.b16 %v3375
      %v3416 = vunpack.c.l.b16 %v3376
      %v3417 = vpack.c.b16 %v3410, %v3409
      %v3418 = vpack.c.b16 %v3412, %v3411
      %v3419 = vpack.c.b16 %v3414, %v3413
      %v3420 = vpack.c.b16 %v3416, %v3415
      %3421 = vrot.lane.b32.xlu0 %v2325, 96
      %v3422 = vpop.permute.xlu0 %3421
      %3423 = vrot.lane.b32.xlu0 %v2326, 96
      %v3424 = vpop.permute.xlu0 %3423
      %3425 = vrot.lane.b32.xlu0 %v2327, 96
      %v3426 = vpop.permute.xlu0 %3425
      %3427 = vrot.lane.b32.xlu0 %v2328, 96
      %v3428 = vpop.permute.xlu0 %3427
      %v3434 = vsel %vm1968, %v3417, 0
      %v3437 = vsel %vm1968, %v3418, 0
      %v3440 = vsel %vm1968, %v3419, 0
      %v3443 = vsel %vm1968, %v3420, 0
      %3445 = vmatpush.bf16.msra.mxu0 0
      %3446 = vmatpush.bf16.msra.mxu0 0
      %3447 = vmatpush.bf16.msra.mxu0 0
      %3448 = vmatpush.bf16.msra.mxu0 0
      %3449 = vmatpush.bf16.msra.mxu0 %v3428
      %3450 = vmatpush.bf16.msra.mxu0 %v3426
      %3451 = vmatpush.bf16.msra.mxu0 %v3424
      %3452 = vmatpush.bf16.msra.mxu0 %v3422
      %3453 = vmatmul.bf16.gmra.mxu0 %v3434
      %v3454 = vpop.f32.mrf.mxu0
      %v3455 = vadd.f32 0.0, %v3454
      %v3456 = vpop.f32.mrf.mxu0
      %v3457 = vadd.f32 0.0, %v3456
      %3458 = vmatmul.bf16.gmra.mxu0 %v3437
      %v3459 = vpop.f32.mrf.mxu0
      %v3460 = vadd.f32 0.0, %v3459
      %v3461 = vpop.f32.mrf.mxu0
      %v3462 = vadd.f32 0.0, %v3461
      %3463 = vmatmul.bf16.gmra.mxu0 %v3440
      %v3464 = vpop.f32.mrf.mxu0
      %v3465 = vadd.f32 0.0, %v3464
      %v3466 = vpop.f32.mrf.mxu0
      %v3467 = vadd.f32 0.0, %v3466
      %3468 = vmatmul.bf16.gmra.mxu0 %v3443
      %v3469 = vpop.f32.mrf.mxu0
      %v3470 = vadd.f32 0.0, %v3469
      %v3471 = vpop.f32.mrf.mxu0
      %v3472 = vadd.f32 0.0, %v3471
      %3473 = vdwg.mxu0
      %v3482 = vunpack.c.l.b16 %v3377
      %v3483 = vunpack.c.l.b16 %v3378
      %v3484 = vunpack.c.l.b16 %v3379
      %v3485 = vunpack.c.l.b16 %v3380
      %v3486 = vunpack.c.l.b16 %v3381
      %v3487 = vunpack.c.l.b16 %v3382
      %v3488 = vunpack.c.l.b16 %v3383
      %v3489 = vunpack.c.l.b16 %v3384
      %v3490 = vpack.c.b16 %v3483, %v3482
      %v3491 = vpack.c.b16 %v3485, %v3484
      %v3492 = vpack.c.b16 %v3487, %v3486
      %v3493 = vpack.c.b16 %v3489, %v3488
      %3494 = vrot.lane.b32.xlu0 %v2410, 96
      %v3495 = vpop.permute.xlu0 %3494
      %3496 = vrot.lane.b32.xlu0 %v2411, 96
      %v3497 = vpop.permute.xlu0 %3496
      %3498 = vrot.lane.b32.xlu0 %v2412, 96
      %v3499 = vpop.permute.xlu0 %3498
      %3500 = vrot.lane.b32.xlu0 %v2413, 96
      %v3501 = vpop.permute.xlu0 %3500
      %v3507 = vsel %vm1968, %v3490, 0
      %v3510 = vsel %vm1968, %v3491, 0
      %v3513 = vsel %vm1968, %v3492, 0
      %v3516 = vsel %vm1968, %v3493, 0
      %3518 = vmatpush.bf16.msra.mxu0 0
      %3519 = vmatpush.bf16.msra.mxu0 0
      %3520 = vmatpush.bf16.msra.mxu0 0
      %3521 = vmatpush.bf16.msra.mxu0 0
      %3522 = vmatpush.bf16.msra.mxu0 %v3501
      %3523 = vmatpush.bf16.msra.mxu0 %v3499
      %3524 = vmatpush.bf16.msra.mxu0 %v3497
      %3525 = vmatpush.bf16.msra.mxu0 %v3495
      %3526 = vmatmul.bf16.gmra.mxu0 %v3507
      %v3527 = vpop.f32.mrf.mxu0
      %v3528 = vadd.f32 0.0, %v3527
      %v3529 = vpop.f32.mrf.mxu0
      %v3530 = vadd.f32 0.0, %v3529
      %3531 = vmatmul.bf16.gmra.mxu0 %v3510
      %v3532 = vpop.f32.mrf.mxu0
      %v3533 = vadd.f32 0.0, %v3532
      %v3534 = vpop.f32.mrf.mxu0
      %v3535 = vadd.f32 0.0, %v3534
      %3536 = vmatmul.bf16.gmra.mxu0 %v3513
      %v3537 = vpop.f32.mrf.mxu0
      %v3538 = vadd.f32 0.0, %v3537
      %v3539 = vpop.f32.mrf.mxu0
      %v3540 = vadd.f32 0.0, %v3539
      %3541 = vmatmul.bf16.gmra.mxu0 %v3516
      %v3542 = vpop.f32.mrf.mxu0
      %v3543 = vadd.f32 0.0, %v3542
      %v3544 = vpop.f32.mrf.mxu0
      %v3545 = vadd.f32 0.0, %v3544
      %3546 = vdwg.mxu0
      %v3555 = vunpack.c.l.b16 %v3385
      %v3556 = vunpack.c.l.b16 %v3386
      %v3557 = vunpack.c.l.b16 %v3387
      %v3558 = vunpack.c.l.b16 %v3388
      %v3559 = vunpack.c.l.b16 %v3389
      %v3560 = vunpack.c.l.b16 %v3390
      %v3561 = vunpack.c.l.b16 %v3391
      %v3562 = vunpack.c.l.b16 %v3392
      %v3563 = vpack.c.b16 %v3556, %v3555
      %v3564 = vpack.c.b16 %v3558, %v3557
      %v3565 = vpack.c.b16 %v3560, %v3559
      %v3566 = vpack.c.b16 %v3562, %v3561
      %3567 = vrot.lane.b32.xlu0 %v2495, 96
      %v3568 = vpop.permute.xlu0 %3567
      %3569 = vrot.lane.b32.xlu0 %v2496, 96
      %v3570 = vpop.permute.xlu0 %3569
      %3571 = vrot.lane.b32.xlu0 %v2497, 96
      %v3572 = vpop.permute.xlu0 %3571
      %3573 = vrot.lane.b32.xlu0 %v2498, 96
      %v3574 = vpop.permute.xlu0 %3573
      %v3580 = vsel %vm1968, %v3563, 0
      %v3583 = vsel %vm1968, %v3564, 0
      %v3586 = vsel %vm1968, %v3565, 0
      %v3589 = vsel %vm1968, %v3566, 0
      %3591 = vmatpush.bf16.msra.mxu0 0
      %3592 = vmatpush.bf16.msra.mxu0 0
      %3593 = vmatpush.bf16.msra.mxu0 0
      %3594 = vmatpush.bf16.msra.mxu0 0
      %3595 = vmatpush.bf16.msra.mxu0 %v3574
      %3596 = vmatpush.bf16.msra.mxu0 %v3572
      %3597 = vmatpush.bf16.msra.mxu0 %v3570
      %3598 = vmatpush.bf16.msra.mxu0 %v3568
      %3599 = vmatmul.bf16.gmra.mxu0 %v3580
      %v3600 = vpop.f32.mrf.mxu0
      %v3601 = vadd.f32 0.0, %v3600
      %v3602 = vpop.f32.mrf.mxu0
      %v3603 = vadd.f32 0.0, %v3602
      %3604 = vmatmul.bf16.gmra.mxu0 %v3583
      %v3605 = vpop.f32.mrf.mxu0
      %v3606 = vadd.f32 0.0, %v3605
      %v3607 = vpop.f32.mrf.mxu0
      %v3608 = vadd.f32 0.0, %v3607
      %3609 = vmatmul.bf16.gmra.mxu0 %v3586
      %v3610 = vpop.f32.mrf.mxu0
      %v3611 = vadd.f32 0.0, %v3610
      %v3612 = vpop.f32.mrf.mxu0
      %v3613 = vadd.f32 0.0, %v3612
      %3614 = vmatmul.bf16.gmra.mxu0 %v3589
      %v3615 = vpop.f32.mrf.mxu0
      %v3616 = vadd.f32 0.0, %v3615
      %v3617 = vpop.f32.mrf.mxu0
      %v3618 = vadd.f32 0.0, %v3617
      %3619 = vdwg.mxu0
      %v3628 = vunpack.c.l.b16 %v3393
      %v3629 = vunpack.c.l.b16 %v3394
      %v3630 = vunpack.c.l.b16 %v3395
      %v3631 = vunpack.c.l.b16 %v3396
      %v3632 = vunpack.c.l.b16 %v3397
      %v3633 = vunpack.c.l.b16 %v3398
      %v3634 = vunpack.c.l.b16 %v3399
      %v3635 = vunpack.c.l.b16 %v3400
      %v3636 = vpack.c.b16 %v3629, %v3628
      %v3637 = vpack.c.b16 %v3631, %v3630
      %v3638 = vpack.c.b16 %v3633, %v3632
      %v3639 = vpack.c.b16 %v3635, %v3634
      %3640 = vrot.lane.b32.xlu0 %v2580, 96
      %v3641 = vpop.permute.xlu0 %3640
      %3642 = vrot.lane.b32.xlu0 %v2581, 96
      %v3643 = vpop.permute.xlu0 %3642
      %3644 = vrot.lane.b32.xlu0 %v2582, 96
      %v3645 = vpop.permute.xlu0 %3644
      %3646 = vrot.lane.b32.xlu0 %v2583, 96
      %v3647 = vpop.permute.xlu0 %3646
      %v3653 = vsel %vm1968, %v3636, 0
      %v3656 = vsel %vm1968, %v3637, 0
      %v3659 = vsel %vm1968, %v3638, 0
      %v3662 = vsel %vm1968, %v3639, 0
      %3664 = vmatpush.bf16.msra.mxu0 0
      %3665 = vmatpush.bf16.msra.mxu0 0
      %3666 = vmatpush.bf16.msra.mxu0 0
      %3667 = vmatpush.bf16.msra.mxu0 0
      %3668 = vmatpush.bf16.msra.mxu0 %v3647
      %3669 = vmatpush.bf16.msra.mxu0 %v3645
      %3670 = vmatpush.bf16.msra.mxu0 %v3643
      %3671 = vmatpush.bf16.msra.mxu0 %v3641
      %3672 = vmatmul.bf16.gmra.mxu0 %v3653
      %v3673 = vpop.f32.mrf.mxu0
      %v3674 = vadd.f32 0.0, %v3673
      %v3675 = vpop.f32.mrf.mxu0
      %v3676 = vadd.f32 0.0, %v3675
      %3677 = vmatmul.bf16.gmra.mxu0 %v3656
      %v3678 = vpop.f32.mrf.mxu0
      %v3679 = vadd.f32 0.0, %v3678
      %v3680 = vpop.f32.mrf.mxu0
      %v3681 = vadd.f32 0.0, %v3680
      %3682 = vmatmul.bf16.gmra.mxu0 %v3659
      %v3683 = vpop.f32.mrf.mxu0
      %v3684 = vadd.f32 0.0, %v3683
      %v3685 = vpop.f32.mrf.mxu0
      %v3686 = vadd.f32 0.0, %v3685
      %3687 = vmatmul.bf16.gmra.mxu0 %v3662
      %v3688 = vpop.f32.mrf.mxu0
      %v3689 = vadd.f32 0.0, %v3688
      %v3690 = vpop.f32.mrf.mxu0
      %v3691 = vadd.f32 0.0, %v3690
      %3692 = vdwg.mxu0
      %v3693 = vrcp.pop %v3275
      %v3694 = vrcp.pop %v3278
      %v3695 = vrcp.pop %v3281
      %v3696 = vrcp.pop %v3284
      %v3697 = vrcp.pop %v3287
      %v3698 = vrcp.pop %v3290
      %v3699 = vrcp.pop %v3293
      %v3700 = vrcp.pop %v3296
      %v3701 = vrcp.pop %v3299
      %v3702 = vrcp.pop %v3302
      %v3703 = vrcp.pop %v3305
      %v3704 = vrcp.pop %v3308
      %v3705 = vrcp.pop %v3311
      %v3706 = vrcp.pop %v3314
      %v3707 = vrcp.pop %v3317
      %v3708 = vrcp.pop %v3320
      %v3709 = vrcp.pop %v3323
      %v3710 = vrcp.pop %v3326
      %v3711 = vrcp.pop %v3329
      %v3712 = vrcp.pop %v3332
      %v3713 = vrcp.pop %v3335
      %v3714 = vrcp.pop %v3338
      %v3715 = vrcp.pop %v3341
      %v3716 = vrcp.pop %v3344
      %v3717 = vrcp.pop %v3347
      %v3718 = vrcp.pop %v3350
      %v3719 = vrcp.pop %v3353
      %v3720 = vrcp.pop %v3356
      %v3721 = vrcp.pop %v3359
      %v3722 = vrcp.pop %v3362
      %v3723 = vrcp.pop %v3365
      %v3724 = vrcp.pop %v3368
      %v3725 = vmul.f32 %v3455, %v3693
      %v3726 = vmul.f32 %v3457, %v3694
      %v3727 = vmul.f32 %v3460, %v3695
      %v3728 = vmul.f32 %v3462, %v3696
      %v3729 = vmul.f32 %v3465, %v3697
      %v3730 = vmul.f32 %v3467, %v3698
      %v3731 = vmul.f32 %v3470, %v3699
      %v3732 = vmul.f32 %v3472, %v3700
      %v3733 = vmul.f32 %v3528, %v3701
      %v3734 = vmul.f32 %v3530, %v3702
      %v3735 = vmul.f32 %v3533, %v3703
      %v3736 = vmul.f32 %v3535, %v3704
      %v3737 = vmul.f32 %v3538, %v3705
      %v3738 = vmul.f32 %v3540, %v3706
      %v3739 = vmul.f32 %v3543, %v3707
      %v3740 = vmul.f32 %v3545, %v3708
      %v3741 = vmul.f32 %v3601, %v3709
      %v3742 = vmul.f32 %v3603, %v3710
      %v3743 = vmul.f32 %v3606, %v3711
      %v3744 = vmul.f32 %v3608, %v3712
      %v3745 = vmul.f32 %v3611, %v3713
      %v3746 = vmul.f32 %v3613, %v3714
      %v3747 = vmul.f32 %v3616, %v3715
      %v3748 = vmul.f32 %v3618, %v3716
      %v3749 = vmul.f32 %v3674, %v3717
      %v3750 = vmul.f32 %v3676, %v3718
      %v3751 = vmul.f32 %v3679, %v3719
      %v3752 = vmul.f32 %v3681, %v3720
      %v3753 = vmul.f32 %v3684, %v3721
      %v3754 = vmul.f32 %v3686, %v3722
      %v3755 = vmul.f32 %v3689, %v3723
      %v3756 = vmul.f32 %v3691, %v3724
      %3757 = vrot.lane.b32.xlu0 %v1499, 64
      %v3758 = vpop.permute.xlu0 %3757
      %3759 = vrot.lane.b32.xlu0 %v1501, 64
      %v3760 = vpop.permute.xlu0 %3759
      %3761 = vrot.lane.b32.xlu0 %v1503, 64
      %v3762 = vpop.permute.xlu0 %3761
      %3763 = vrot.lane.b32.xlu0 %v1505, 64
      %v3764 = vpop.permute.xlu0 %3763
      %3765 = vrot.lane.b32.xlu0 %v1507, 64
      %v3766 = vpop.permute.xlu0 %3765
      %3767 = vrot.lane.b32.xlu0 %v1509, 64
      %v3768 = vpop.permute.xlu0 %3767
      %3769 = vrot.lane.b32.xlu0 %v1511, 64
      %v3770 = vpop.permute.xlu0 %3769
      %3771 = vrot.lane.b32.xlu0 %v1513, 64
      %v3772 = vpop.permute.xlu0 %3771
      %v3773 = vrot.slane %v3758, 4
      %v3774 = vrot.slane %v3760, 4
      %v3775 = vrot.slane %v3762, 4
      %v3776 = vrot.slane %v3764, 4
      %v3777 = vrot.slane %v3766, 4
      %v3778 = vrot.slane %v3768, 4
      %v3779 = vrot.slane %v3770, 4
      %v3780 = vrot.slane %v3772, 4
      %3781 = vrot.lane.b32.xlu0 %v1619, 64
      %v3782 = vpop.permute.xlu0 %3781
      %3783 = vrot.lane.b32.xlu0 %v1620, 64
      %v3784 = vpop.permute.xlu0 %3783
      %3785 = vrot.lane.b32.xlu0 %v1621, 64
      %v3786 = vpop.permute.xlu0 %3785
      %3787 = vrot.lane.b32.xlu0 %v1622, 64
      %v3788 = vpop.permute.xlu0 %3787
      %v3789 = vunpack.c.l.b16 %v3773
      %v3790 = vunpack.c.l.b16 %v3774
      %v3791 = vunpack.c.l.b16 %v3775
      %v3792 = vunpack.c.l.b16 %v3776
      %v3793 = vunpack.c.l.b16 %v3777
      %v3794 = vunpack.c.l.b16 %v3778
      %v3795 = vunpack.c.l.b16 %v3779
      %v3796 = vunpack.c.l.b16 %v3780
      %v3797 = vpack.c.b16 %v3790, %v3789
      %v3798 = vpack.c.b16 %v3792, %v3791
      %v3799 = vpack.c.b16 %v3794, %v3793
      %v3800 = vpack.c.b16 %v3796, %v3795
      %v3802 = vsel %vm1635, %v3782, 0
      %v3805 = vsel %vm1635, %v3784, 0
      %v3808 = vsel %vm1635, %v3786, 0
      %v3811 = vsel %vm1635, %v3788, 0
      %v3814 = vsel %vm1635, %v3797, 0
      %v3817 = vsel %vm1635, %v3798, 0
      %v3820 = vsel %vm1635, %v3799, 0
      %v3823 = vsel %vm1635, %v3800, 0
      %3825 = vmatpush.bf16.xpose.msra.mxu0 0
      %3826 = vmatpush.bf16.xpose.msra.mxu0 0
      %3827 = vmatpush.bf16.xpose.msra.mxu0 0
      %3828 = vmatpush.bf16.xpose.msra.mxu0 0
      %3829 = vmatpush.bf16.xpose.msra.mxu0 %v3823
      %3830 = vmatpush.bf16.xpose.msra.mxu0 %v3820
      %3831 = vmatpush.bf16.xpose.msra.mxu0 %v3817
      %3832 = vmatpush.bf16.xpose.msra.mxu0 %v3814
      %3833 = vmatmul.bf16.gmra.mxu0 %v3802
      %v3834 = vpop.f32.mrf.mxu0
      %v3835 = vadd.f32 %v1579, %v3834
      %v3836 = vpop.f32.mrf.mxu0
      %v3837 = vadd.f32 %v1580, %v3836
      %3838 = vmatmul.bf16.gmra.mxu0 %v3805
      %v3839 = vpop.f32.mrf.mxu0
      %v3840 = vadd.f32 %v1581, %v3839
      %v3841 = vpop.f32.mrf.mxu0
      %v3842 = vadd.f32 %v1582, %v3841
      %3843 = vmatmul.bf16.gmra.mxu0 %v3808
      %v3844 = vpop.f32.mrf.mxu0
      %v3845 = vadd.f32 %v1583, %v3844
      %v3846 = vpop.f32.mrf.mxu0
      %v3847 = vadd.f32 %v1584, %v3846
      %3848 = vmatmul.bf16.gmra.mxu0 %v3811
      %v3849 = vpop.f32.mrf.mxu0
      %v3850 = vadd.f32 %v1585, %v3849
      %v3851 = vpop.f32.mrf.mxu0
      %v3852 = vadd.f32 %v1586, %v3851
      %3853 = vdwg.mxu0
      %3854 = vrot.lane.b32.xlu0 %v1515, 64
      %v3855 = vpop.permute.xlu0 %3854
      %3856 = vrot.lane.b32.xlu0 %v1517, 64
      %v3857 = vpop.permute.xlu0 %3856
      %3858 = vrot.lane.b32.xlu0 %v1519, 64
      %v3859 = vpop.permute.xlu0 %3858
      %3860 = vrot.lane.b32.xlu0 %v1521, 64
      %v3861 = vpop.permute.xlu0 %3860
      %3862 = vrot.lane.b32.xlu0 %v1523, 64
      %v3863 = vpop.permute.xlu0 %3862
      %3864 = vrot.lane.b32.xlu0 %v1525, 64
      %v3865 = vpop.permute.xlu0 %3864
      %3866 = vrot.lane.b32.xlu0 %v1527, 64
      %v3867 = vpop.permute.xlu0 %3866
      %3868 = vrot.lane.b32.xlu0 %v1529, 64
      %v3869 = vpop.permute.xlu0 %3868
      %v3870 = vrot.slane %v3855, 4
      %v3871 = vrot.slane %v3857, 4
      %v3872 = vrot.slane %v3859, 4
      %v3873 = vrot.slane %v3861, 4
      %v3874 = vrot.slane %v3863, 4
      %v3875 = vrot.slane %v3865, 4
      %v3876 = vrot.slane %v3867, 4
      %v3877 = vrot.slane %v3869, 4
      %3878 = vrot.lane.b32.xlu0 %v1713, 64
      %v3879 = vpop.permute.xlu0 %3878
      %3880 = vrot.lane.b32.xlu0 %v1714, 64
      %v3881 = vpop.permute.xlu0 %3880
      %3882 = vrot.lane.b32.xlu0 %v1715, 64
      %v3883 = vpop.permute.xlu0 %3882
      %3884 = vrot.lane.b32.xlu0 %v1716, 64
      %v3885 = vpop.permute.xlu0 %3884
      %v3886 = vunpack.c.l.b16 %v3870
      %v3887 = vunpack.c.l.b16 %v3871
      %v3888 = vunpack.c.l.b16 %v3872
      %v3889 = vunpack.c.l.b16 %v3873
      %v3890 = vunpack.c.l.b16 %v3874
      %v3891 = vunpack.c.l.b16 %v3875
      %v3892 = vunpack.c.l.b16 %v3876
      %v3893 = vunpack.c.l.b16 %v3877
      %v3894 = vpack.c.b16 %v3887, %v3886
      %v3895 = vpack.c.b16 %v3889, %v3888
      %v3896 = vpack.c.b16 %v3891, %v3890
      %v3897 = vpack.c.b16 %v3893, %v3892
      %v3899 = vsel %vm1635, %v3879, 0
      %v3902 = vsel %vm1635, %v3881, 0
      %v3905 = vsel %vm1635, %v3883, 0
      %v3908 = vsel %vm1635, %v3885, 0
      %v3911 = vsel %vm1635, %v3894, 0
      %v3914 = vsel %vm1635, %v3895, 0
      %v3917 = vsel %vm1635, %v3896, 0
      %v3920 = vsel %vm1635, %v3897, 0
      %3922 = vmatpush.bf16.xpose.msra.mxu0 0
      %3923 = vmatpush.bf16.xpose.msra.mxu0 0
      %3924 = vmatpush.bf16.xpose.msra.mxu0 0
      %3925 = vmatpush.bf16.xpose.msra.mxu0 0
      %3926 = vmatpush.bf16.xpose.msra.mxu0 %v3920
      %3927 = vmatpush.bf16.xpose.msra.mxu0 %v3917
      %3928 = vmatpush.bf16.xpose.msra.mxu0 %v3914
      %3929 = vmatpush.bf16.xpose.msra.mxu0 %v3911
      %3930 = vmatmul.bf16.gmra.mxu0 %v3899
      %v3931 = vpop.f32.mrf.mxu0
      %v3932 = vadd.f32 %v1579, %v3931
      %v3933 = vpop.f32.mrf.mxu0
      %v3934 = vadd.f32 %v1580, %v3933
      %3935 = vmatmul.bf16.gmra.mxu0 %v3902
      %v3936 = vpop.f32.mrf.mxu0
      %v3937 = vadd.f32 %v1581, %v3936
      %v3938 = vpop.f32.mrf.mxu0
      %v3939 = vadd.f32 %v1582, %v3938
      %3940 = vmatmul.bf16.gmra.mxu0 %v3905
      %v3941 = vpop.f32.mrf.mxu0
      %v3942 = vadd.f32 %v1583, %v3941
      %v3943 = vpop.f32.mrf.mxu0
      %v3944 = vadd.f32 %v1584, %v3943
      %3945 = vmatmul.bf16.gmra.mxu0 %v3908
      %v3946 = vpop.f32.mrf.mxu0
      %v3947 = vadd.f32 %v1585, %v3946
      %v3948 = vpop.f32.mrf.mxu0
      %v3949 = vadd.f32 %v1586, %v3948
      %3950 = vdwg.mxu0
      %3951 = vrot.lane.b32.xlu0 %v1531, 64
      %v3952 = vpop.permute.xlu0 %3951
      %3953 = vrot.lane.b32.xlu0 %v1533, 64
      %v3954 = vpop.permute.xlu0 %3953
      %3955 = vrot.lane.b32.xlu0 %v1535, 64
      %v3956 = vpop.permute.xlu0 %3955
      %3957 = vrot.lane.b32.xlu0 %v1537, 64
      %v3958 = vpop.permute.xlu0 %3957
      %3959 = vrot.lane.b32.xlu0 %v1539, 64
      %v3960 = vpop.permute.xlu0 %3959
      %3961 = vrot.lane.b32.xlu0 %v1541, 64
      %v3962 = vpop.permute.xlu0 %3961
      %3963 = vrot.lane.b32.xlu0 %v1543, 64
      %v3964 = vpop.permute.xlu0 %3963
      %3965 = vrot.lane.b32.xlu0 %v1545, 64
      %v3966 = vpop.permute.xlu0 %3965
      %v3967 = vrot.slane %v3952, 4
      %v3968 = vrot.slane %v3954, 4
      %v3969 = vrot.slane %v3956, 4
      %v3970 = vrot.slane %v3958, 4
      %v3971 = vrot.slane %v3960, 4
      %v3972 = vrot.slane %v3962, 4
      %v3973 = vrot.slane %v3964, 4
      %v3974 = vrot.slane %v3966, 4
      %3975 = vrot.lane.b32.xlu0 %v1806, 64
      %v3976 = vpop.permute.xlu0 %3975
      %3977 = vrot.lane.b32.xlu0 %v1807, 64
      %v3978 = vpop.permute.xlu0 %3977
      %3979 = vrot.lane.b32.xlu0 %v1808, 64
      %v3980 = vpop.permute.xlu0 %3979
      %3981 = vrot.lane.b32.xlu0 %v1809, 64
      %v3982 = vpop.permute.xlu0 %3981
      %v3983 = vunpack.c.l.b16 %v3967
      %v3984 = vunpack.c.l.b16 %v3968
      %v3985 = vunpack.c.l.b16 %v3969
      %v3986 = vunpack.c.l.b16 %v3970
      %v3987 = vunpack.c.l.b16 %v3971
      %v3988 = vunpack.c.l.b16 %v3972
      %v3989 = vunpack.c.l.b16 %v3973
      %v3990 = vunpack.c.l.b16 %v3974
      %v3991 = vpack.c.b16 %v3984, %v3983
      %v3992 = vpack.c.b16 %v3986, %v3985
      %v3993 = vpack.c.b16 %v3988, %v3987
      %v3994 = vpack.c.b16 %v3990, %v3989
      %v3996 = vsel %vm1635, %v3976, 0
      %v3999 = vsel %vm1635, %v3978, 0
      %v4002 = vsel %vm1635, %v3980, 0
      %v4005 = vsel %vm1635, %v3982, 0
      %v4008 = vsel %vm1635, %v3991, 0
      %v4011 = vsel %vm1635, %v3992, 0
      %v4014 = vsel %vm1635, %v3993, 0
      %v4017 = vsel %vm1635, %v3994, 0
      %4019 = vmatpush.bf16.xpose.msra.mxu0 0
      %4020 = vmatpush.bf16.xpose.msra.mxu0 0
      %4021 = vmatpush.bf16.xpose.msra.mxu0 0
      %4022 = vmatpush.bf16.xpose.msra.mxu0 0
      %4023 = vmatpush.bf16.xpose.msra.mxu0 %v4017
      %4024 = vmatpush.bf16.xpose.msra.mxu0 %v4014
      %4025 = vmatpush.bf16.xpose.msra.mxu0 %v4011
      %4026 = vmatpush.bf16.xpose.msra.mxu0 %v4008
      %4027 = vmatmul.bf16.gmra.mxu0 %v3996
      %v4028 = vpop.f32.mrf.mxu0
      %v4029 = vadd.f32 %v1579, %v4028
      %v4030 = vpop.f32.mrf.mxu0
      %v4031 = vadd.f32 %v1580, %v4030
      %4032 = vmatmul.bf16.gmra.mxu0 %v3999
      %v4033 = vpop.f32.mrf.mxu0
      %v4034 = vadd.f32 %v1581, %v4033
      %v4035 = vpop.f32.mrf.mxu0
      %v4036 = vadd.f32 %v1582, %v4035
      %4037 = vmatmul.bf16.gmra.mxu0 %v4002
      %v4038 = vpop.f32.mrf.mxu0
      %v4039 = vadd.f32 %v1583, %v4038
      %v4040 = vpop.f32.mrf.mxu0
      %v4041 = vadd.f32 %v1584, %v4040
      %4042 = vmatmul.bf16.gmra.mxu0 %v4005
      %v4043 = vpop.f32.mrf.mxu0
      %v4044 = vadd.f32 %v1585, %v4043
      %v4045 = vpop.f32.mrf.mxu0
      %v4046 = vadd.f32 %v1586, %v4045
      %4047 = vdwg.mxu0
      %4048 = vrot.lane.b32.xlu0 %v1547, 64
      %v4049 = vpop.permute.xlu0 %4048
      %4050 = vrot.lane.b32.xlu0 %v1549, 64
      %v4051 = vpop.permute.xlu0 %4050
      %4052 = vrot.lane.b32.xlu0 %v1551, 64
      %v4053 = vpop.permute.xlu0 %4052
      %4054 = vrot.lane.b32.xlu0 %v1553, 64
      %v4055 = vpop.permute.xlu0 %4054
      %4056 = vrot.lane.b32.xlu0 %v1555, 64
      %v4057 = vpop.permute.xlu0 %4056
      %4058 = vrot.lane.b32.xlu0 %v1557, 64
      %v4059 = vpop.permute.xlu0 %4058
      %4060 = vrot.lane.b32.xlu0 %v1559, 64
      %v4061 = vpop.permute.xlu0 %4060
      %4062 = vrot.lane.b32.xlu0 %v1561, 64
      %v4063 = vpop.permute.xlu0 %4062
      %v4064 = vrot.slane %v4049, 4
      %v4065 = vrot.slane %v4051, 4
      %v4066 = vrot.slane %v4053, 4
      %v4067 = vrot.slane %v4055, 4
      %v4068 = vrot.slane %v4057, 4
      %v4069 = vrot.slane %v4059, 4
      %v4070 = vrot.slane %v4061, 4
      %v4071 = vrot.slane %v4063, 4
      %4072 = vrot.lane.b32.xlu0 %v1899, 64
      %v4073 = vpop.permute.xlu0 %4072
      %4074 = vrot.lane.b32.xlu0 %v1900, 64
      %v4075 = vpop.permute.xlu0 %4074
      %4076 = vrot.lane.b32.xlu0 %v1901, 64
      %v4077 = vpop.permute.xlu0 %4076
      %4078 = vrot.lane.b32.xlu0 %v1902, 64
      %v4079 = vpop.permute.xlu0 %4078
      %v4080 = vunpack.c.l.b16 %v4064
      %v4081 = vunpack.c.l.b16 %v4065
      %v4082 = vunpack.c.l.b16 %v4066
      %v4083 = vunpack.c.l.b16 %v4067
      %v4084 = vunpack.c.l.b16 %v4068
      %v4085 = vunpack.c.l.b16 %v4069
      %v4086 = vunpack.c.l.b16 %v4070
      %v4087 = vunpack.c.l.b16 %v4071
      %v4088 = vpack.c.b16 %v4081, %v4080
      %v4089 = vpack.c.b16 %v4083, %v4082
      %v4090 = vpack.c.b16 %v4085, %v4084
      %v4091 = vpack.c.b16 %v4087, %v4086
      %v4093 = vsel %vm1635, %v4073, 0
      %v4096 = vsel %vm1635, %v4075, 0
      %v4099 = vsel %vm1635, %v4077, 0
      %v4102 = vsel %vm1635, %v4079, 0
      %v4105 = vsel %vm1635, %v4088, 0
      %v4108 = vsel %vm1635, %v4089, 0
      %v4111 = vsel %vm1635, %v4090, 0
      %v4114 = vsel %vm1635, %v4091, 0
      %4116 = vmatpush.bf16.xpose.msra.mxu0 0
      %4117 = vmatpush.bf16.xpose.msra.mxu0 0
      %4118 = vmatpush.bf16.xpose.msra.mxu0 0
      %4119 = vmatpush.bf16.xpose.msra.mxu0 0
      %4120 = vmatpush.bf16.xpose.msra.mxu0 %v4114
      %4121 = vmatpush.bf16.xpose.msra.mxu0 %v4111
      %4122 = vmatpush.bf16.xpose.msra.mxu0 %v4108
      %4123 = vmatpush.bf16.xpose.msra.mxu0 %v4105
      %4124 = vmatmul.bf16.gmra.mxu0 %v4093
      %v4125 = vpop.f32.mrf.mxu0
      %v4126 = vadd.f32 %v1579, %v4125
      %v4127 = vpop.f32.mrf.mxu0
      %v4128 = vadd.f32 %v1580, %v4127
      %4129 = vmatmul.bf16.gmra.mxu0 %v4096
      %v4130 = vpop.f32.mrf.mxu0
      %v4131 = vadd.f32 %v1581, %v4130
      %v4132 = vpop.f32.mrf.mxu0
      %v4133 = vadd.f32 %v1582, %v4132
      %4134 = vmatmul.bf16.gmra.mxu0 %v4099
      %v4135 = vpop.f32.mrf.mxu0
      %v4136 = vadd.f32 %v1583, %v4135
      %v4137 = vpop.f32.mrf.mxu0
      %v4138 = vadd.f32 %v1584, %v4137
      %4139 = vmatmul.bf16.gmra.mxu0 %v4102
      %v4140 = vpop.f32.mrf.mxu0
      %v4141 = vadd.f32 %v1585, %v4140
      %v4142 = vpop.f32.mrf.mxu0
      %v4143 = vadd.f32 %v1586, %v4142
      %4144 = vdwg.mxu0
      %v4145 = vsel %vm1968, %v3835, -inf
      %4146 = vmax.xlane.f32.xlu0 %v4145
      %v4147 = vpop.xlane.xlu0 %4146
      %v4148 = vsel %vm1968, %v3837, -inf
      %4149 = vmax.xlane.f32.xlu0 %v4148
      %v4150 = vpop.xlane.xlu0 %4149
      %v4151 = vsel %vm1968, %v3840, -inf
      %4152 = vmax.xlane.f32.xlu0 %v4151
      %v4153 = vpop.xlane.xlu0 %4152
      %v4154 = vsel %vm1968, %v3842, -inf
      %4155 = vmax.xlane.f32.xlu0 %v4154
      %v4156 = vpop.xlane.xlu0 %4155
      %v4157 = vsel %vm1968, %v3845, -inf
      %4158 = vmax.xlane.f32.xlu0 %v4157
      %v4159 = vpop.xlane.xlu0 %4158
      %v4160 = vsel %vm1968, %v3847, -inf
      %4161 = vmax.xlane.f32.xlu0 %v4160
      %v4162 = vpop.xlane.xlu0 %4161
      %v4163 = vsel %vm1968, %v3850, -inf
      %4164 = vmax.xlane.f32.xlu0 %v4163
      %v4165 = vpop.xlane.xlu0 %4164
      %v4166 = vsel %vm1968, %v3852, -inf
      %4167 = vmax.xlane.f32.xlu0 %v4166
      %v4168 = vpop.xlane.xlu0 %4167
      %v4169 = vsel %vm1968, %v3932, -inf
      %4170 = vmax.xlane.f32.xlu0 %v4169
      %v4171 = vpop.xlane.xlu0 %4170
      %v4172 = vsel %vm1968, %v3934, -inf
      %4173 = vmax.xlane.f32.xlu0 %v4172
      %v4174 = vpop.xlane.xlu0 %4173
      %v4175 = vsel %vm1968, %v3937, -inf
      %4176 = vmax.xlane.f32.xlu0 %v4175
      %v4177 = vpop.xlane.xlu0 %4176
      %v4178 = vsel %vm1968, %v3939, -inf
      %4179 = vmax.xlane.f32.xlu0 %v4178
      %v4180 = vpop.xlane.xlu0 %4179
      %v4181 = vsel %vm1968, %v3942, -inf
      %4182 = vmax.xlane.f32.xlu0 %v4181
      %v4183 = vpop.xlane.xlu0 %4182
      %v4184 = vsel %vm1968, %v3944, -inf
      %4185 = vmax.xlane.f32.xlu0 %v4184
      %v4186 = vpop.xlane.xlu0 %4185
      %v4187 = vsel %vm1968, %v3947, -inf
      %4188 = vmax.xlane.f32.xlu0 %v4187
      %v4189 = vpop.xlane.xlu0 %4188
      %v4190 = vsel %vm1968, %v3949, -inf
      %4191 = vmax.xlane.f32.xlu0 %v4190
      %v4192 = vpop.xlane.xlu0 %4191
      %v4193 = vsel %vm1968, %v4029, -inf
      %4194 = vmax.xlane.f32.xlu0 %v4193
      %v4195 = vpop.xlane.xlu0 %4194
      %v4196 = vsel %vm1968, %v4031, -inf
      %4197 = vmax.xlane.f32.xlu0 %v4196
      %v4198 = vpop.xlane.xlu0 %4197
      %v4199 = vsel %vm1968, %v4034, -inf
      %4200 = vmax.xlane.f32.xlu0 %v4199
      %v4201 = vpop.xlane.xlu0 %4200
      %v4202 = vsel %vm1968, %v4036, -inf
      %4203 = vmax.xlane.f32.xlu0 %v4202
      %v4204 = vpop.xlane.xlu0 %4203
      %v4205 = vsel %vm1968, %v4039, -inf
      %4206 = vmax.xlane.f32.xlu0 %v4205
      %v4207 = vpop.xlane.xlu0 %4206
      %v4208 = vsel %vm1968, %v4041, -inf
      %4209 = vmax.xlane.f32.xlu0 %v4208
      %v4210 = vpop.xlane.xlu0 %4209
      %v4211 = vsel %vm1968, %v4044, -inf
      %4212 = vmax.xlane.f32.xlu0 %v4211
      %v4213 = vpop.xlane.xlu0 %4212
      %v4214 = vsel %vm1968, %v4046, -inf
      %4215 = vmax.xlane.f32.xlu0 %v4214
      %v4216 = vpop.xlane.xlu0 %4215
      %v4217 = vsel %vm1968, %v4126, -inf
      %4218 = vmax.xlane.f32.xlu0 %v4217
      %v4219 = vpop.xlane.xlu0 %4218
      %v4220 = vsel %vm1968, %v4128, -inf
      %4221 = vmax.xlane.f32.xlu0 %v4220
      %v4222 = vpop.xlane.xlu0 %4221
      %v4223 = vsel %vm1968, %v4131, -inf
      %4224 = vmax.xlane.f32.xlu0 %v4223
      %v4225 = vpop.xlane.xlu0 %4224
      %v4226 = vsel %vm1968, %v4133, -inf
      %4227 = vmax.xlane.f32.xlu0 %v4226
      %v4228 = vpop.xlane.xlu0 %4227
      %v4229 = vsel %vm1968, %v4136, -inf
      %4230 = vmax.xlane.f32.xlu0 %v4229
      %v4231 = vpop.xlane.xlu0 %4230
      %v4232 = vsel %vm1968, %v4138, -inf
      %4233 = vmax.xlane.f32.xlu0 %v4232
      %v4234 = vpop.xlane.xlu0 %4233
      %v4235 = vsel %vm1968, %v4141, -inf
      %4236 = vmax.xlane.f32.xlu0 %v4235
      %v4237 = vpop.xlane.xlu0 %4236
      %v4238 = vsel %vm1968, %v4143, -inf
      %4239 = vmax.xlane.f32.xlu0 %v4238
      %v4240 = vpop.xlane.xlu0 %4239
      %v4241 = vsub.f32 %v3835, %v4147
      %v4242 = vsub.f32 %v3837, %v4150
      %v4243 = vsub.f32 %v3840, %v4153
      %v4244 = vsub.f32 %v3842, %v4156
      %v4245 = vsub.f32 %v3845, %v4159
      %v4246 = vsub.f32 %v3847, %v4162
      %v4247 = vsub.f32 %v3850, %v4165
      %v4248 = vsub.f32 %v3852, %v4168
      %v4249 = vsub.f32 %v3932, %v4171
      %v4250 = vsub.f32 %v3934, %v4174
      %v4251 = vsub.f32 %v3937, %v4177
      %v4252 = vsub.f32 %v3939, %v4180
      %v4253 = vsub.f32 %v3942, %v4183
      %v4254 = vsub.f32 %v3944, %v4186
      %v4255 = vsub.f32 %v3947, %v4189
      %v4256 = vsub.f32 %v3949, %v4192
      %v4257 = vsub.f32 %v4029, %v4195
      %v4258 = vsub.f32 %v4031, %v4198
      %v4259 = vsub.f32 %v4034, %v4201
      %v4260 = vsub.f32 %v4036, %v4204
      %v4261 = vsub.f32 %v4039, %v4207
      %v4262 = vsub.f32 %v4041, %v4210
      %v4263 = vsub.f32 %v4044, %v4213
      %v4264 = vsub.f32 %v4046, %v4216
      %v4265 = vsub.f32 %v4126, %v4219
      %v4266 = vsub.f32 %v4128, %v4222
      %v4267 = vsub.f32 %v4131, %v4225
      %v4268 = vsub.f32 %v4133, %v4228
      %v4269 = vsub.f32 %v4136, %v4231
      %v4270 = vsub.f32 %v4138, %v4234
      %v4271 = vsub.f32 %v4141, %v4237
      %v4272 = vsub.f32 %v4143, %v4240
      %v4273 = vmul.f32 %v4241, 1.442695
      %v4274 = vpow.pop %v4273
      %v4275 = vmul.f32 %v4242, 1.442695
      %v4276 = vpow.pop %v4275
      %v4277 = vmul.f32 %v4243, 1.442695
      %v4278 = vpow.pop %v4277
      %v4279 = vmul.f32 %v4244, 1.442695
      %v4280 = vpow.pop %v4279
      %v4281 = vmul.f32 %v4245, 1.442695
      %v4282 = vpow.pop %v4281
      %v4283 = vmul.f32 %v4246, 1.442695
      %v4284 = vpow.pop %v4283
      %v4285 = vmul.f32 %v4247, 1.442695
      %v4286 = vpow.pop %v4285
      %v4287 = vmul.f32 %v4248, 1.442695
      %v4288 = vpow.pop %v4287
      %v4289 = vmul.f32 %v4249, 1.442695
      %v4290 = vpow.pop %v4289
      %v4291 = vmul.f32 %v4250, 1.442695
      %v4292 = vpow.pop %v4291
      %v4293 = vmul.f32 %v4251, 1.442695
      %v4294 = vpow.pop %v4293
      %v4295 = vmul.f32 %v4252, 1.442695
      %v4296 = vpow.pop %v4295
      %v4297 = vmul.f32 %v4253, 1.442695
      %v4298 = vpow.pop %v4297
      %v4299 = vmul.f32 %v4254, 1.442695
      %v4300 = vpow.pop %v4299
      %v4301 = vmul.f32 %v4255, 1.442695
      %v4302 = vpow.pop %v4301
      %v4303 = vmul.f32 %v4256, 1.442695
      %v4304 = vpow.pop %v4303
      %v4305 = vmul.f32 %v4257, 1.442695
      %v4306 = vpow.pop %v4305
      %v4307 = vmul.f32 %v4258, 1.442695
      %v4308 = vpow.pop %v4307
      %v4309 = vmul.f32 %v4259, 1.442695
      %v4310 = vpow.pop %v4309
      %v4311 = vmul.f32 %v4260, 1.442695
      %v4312 = vpow.pop %v4311
      %v4313 = vmul.f32 %v4261, 1.442695
      %v4314 = vpow.pop %v4313
      %v4315 = vmul.f32 %v4262, 1.442695
      %v4316 = vpow.pop %v4315
      %v4317 = vmul.f32 %v4263, 1.442695
      %v4318 = vpow.pop %v4317
      %v4319 = vmul.f32 %v4264, 1.442695
      %v4320 = vpow.pop %v4319
      %v4321 = vmul.f32 %v4265, 1.442695
      %v4322 = vpow.pop %v4321
      %v4323 = vmul.f32 %v4266, 1.442695
      %v4324 = vpow.pop %v4323
      %v4325 = vmul.f32 %v4267, 1.442695
      %v4326 = vpow.pop %v4325
      %v4327 = vmul.f32 %v4268, 1.442695
      %v4328 = vpow.pop %v4327
      %v4329 = vmul.f32 %v4269, 1.442695
      %v4330 = vpow.pop %v4329
      %v4331 = vmul.f32 %v4270, 1.442695
      %v4332 = vpow.pop %v4331
      %v4333 = vmul.f32 %v4271, 1.442695
      %v4334 = vpow.pop %v4333
      %v4335 = vmul.f32 %v4272, 1.442695
      %v4336 = vpow.pop %v4335
      %v4337 = vsel %vm1968, %v4274, 0.0
      %4338 = vadd.xlane.f32.xlu0 %v4337
      %v4339 = vpop.xlane.xlu0 %4338
      %v4340 = vsel %vm1968, %v4276, 0.0
      %4341 = vadd.xlane.f32.xlu0 %v4340
      %v4342 = vpop.xlane.xlu0 %4341
      %v4343 = vsel %vm1968, %v4278, 0.0
      %4344 = vadd.xlane.f32.xlu0 %v4343
      %v4345 = vpop.xlane.xlu0 %4344
      %v4346 = vsel %vm1968, %v4280, 0.0
      %4347 = vadd.xlane.f32.xlu0 %v4346
      %v4348 = vpop.xlane.xlu0 %4347
      %v4349 = vsel %vm1968, %v4282, 0.0
      %4350 = vadd.xlane.f32.xlu0 %v4349
      %v4351 = vpop.xlane.xlu0 %4350
      %v4352 = vsel %vm1968, %v4284, 0.0
      %4353 = vadd.xlane.f32.xlu0 %v4352
      %v4354 = vpop.xlane.xlu0 %4353
      %v4355 = vsel %vm1968, %v4286, 0.0
      %4356 = vadd.xlane.f32.xlu0 %v4355
      %v4357 = vpop.xlane.xlu0 %4356
      %v4358 = vsel %vm1968, %v4288, 0.0
      %4359 = vadd.xlane.f32.xlu0 %v4358
      %v4360 = vpop.xlane.xlu0 %4359
      %v4361 = vsel %vm1968, %v4290, 0.0
      %4362 = vadd.xlane.f32.xlu0 %v4361
      %v4363 = vpop.xlane.xlu0 %4362
      %v4364 = vsel %vm1968, %v4292, 0.0
      %4365 = vadd.xlane.f32.xlu0 %v4364
      %v4366 = vpop.xlane.xlu0 %4365
      %v4367 = vsel %vm1968, %v4294, 0.0
      %4368 = vadd.xlane.f32.xlu0 %v4367
      %v4369 = vpop.xlane.xlu0 %4368
      %v4370 = vsel %vm1968, %v4296, 0.0
      %4371 = vadd.xlane.f32.xlu0 %v4370
      %v4372 = vpop.xlane.xlu0 %4371
      %v4373 = vsel %vm1968, %v4298, 0.0
      %4374 = vadd.xlane.f32.xlu0 %v4373
      %v4375 = vpop.xlane.xlu0 %4374
      %v4376 = vsel %vm1968, %v4300, 0.0
      %4377 = vadd.xlane.f32.xlu0 %v4376
      %v4378 = vpop.xlane.xlu0 %4377
      %v4379 = vsel %vm1968, %v4302, 0.0
      %4380 = vadd.xlane.f32.xlu0 %v4379
      %v4381 = vpop.xlane.xlu0 %4380
      %v4382 = vsel %vm1968, %v4304, 0.0
      %4383 = vadd.xlane.f32.xlu0 %v4382
      %v4384 = vpop.xlane.xlu0 %4383
      %v4385 = vsel %vm1968, %v4306, 0.0
      %4386 = vadd.xlane.f32.xlu0 %v4385
      %v4387 = vpop.xlane.xlu0 %4386
      %v4388 = vsel %vm1968, %v4308, 0.0
      %4389 = vadd.xlane.f32.xlu0 %v4388
      %v4390 = vpop.xlane.xlu0 %4389
      %v4391 = vsel %vm1968, %v4310, 0.0
      %4392 = vadd.xlane.f32.xlu0 %v4391
      %v4393 = vpop.xlane.xlu0 %4392
      %v4394 = vsel %vm1968, %v4312, 0.0
      %4395 = vadd.xlane.f32.xlu0 %v4394
      %v4396 = vpop.xlane.xlu0 %4395
      %v4397 = vsel %vm1968, %v4314, 0.0
      %4398 = vadd.xlane.f32.xlu0 %v4397
      %v4399 = vpop.xlane.xlu0 %4398
      %v4400 = vsel %vm1968, %v4316, 0.0
      %4401 = vadd.xlane.f32.xlu0 %v4400
      %v4402 = vpop.xlane.xlu0 %4401
      %v4403 = vsel %vm1968, %v4318, 0.0
      %4404 = vadd.xlane.f32.xlu0 %v4403
      %v4405 = vpop.xlane.xlu0 %4404
      %v4406 = vsel %vm1968, %v4320, 0.0
      %4407 = vadd.xlane.f32.xlu0 %v4406
      %v4408 = vpop.xlane.xlu0 %4407
      %v4409 = vsel %vm1968, %v4322, 0.0
      %4410 = vadd.xlane.f32.xlu0 %v4409
      %v4411 = vpop.xlane.xlu0 %4410
      %v4412 = vsel %vm1968, %v4324, 0.0
      %4413 = vadd.xlane.f32.xlu0 %v4412
      %v4414 = vpop.xlane.xlu0 %4413
      %v4415 = vsel %vm1968, %v4326, 0.0
      %4416 = vadd.xlane.f32.xlu0 %v4415
      %v4417 = vpop.xlane.xlu0 %4416
      %v4418 = vsel %vm1968, %v4328, 0.0
      %4419 = vadd.xlane.f32.xlu0 %v4418
      %v4420 = vpop.xlane.xlu0 %4419
      %v4421 = vsel %vm1968, %v4330, 0.0
      %4422 = vadd.xlane.f32.xlu0 %v4421
      %v4423 = vpop.xlane.xlu0 %4422
      %v4424 = vsel %vm1968, %v4332, 0.0
      %4425 = vadd.xlane.f32.xlu0 %v4424
      %v4426 = vpop.xlane.xlu0 %4425
      %v4427 = vsel %vm1968, %v4334, 0.0
      %4428 = vadd.xlane.f32.xlu0 %v4427
      %v4429 = vpop.xlane.xlu0 %4428
      %v4430 = vsel %vm1968, %v4336, 0.0
      %4431 = vadd.xlane.f32.xlu0 %v4430
      %v4432 = vpop.xlane.xlu0 %4431
      %v4433 = vpack.c.bf16 %v4274, %v4274
      %v4434 = vpack.c.bf16 %v4276, %v4276
      %v4435 = vpack.c.bf16 %v4278, %v4278
      %v4436 = vpack.c.bf16 %v4280, %v4280
      %v4437 = vpack.c.bf16 %v4282, %v4282
      %v4438 = vpack.c.bf16 %v4284, %v4284
      %v4439 = vpack.c.bf16 %v4286, %v4286
      %v4440 = vpack.c.bf16 %v4288, %v4288
      %v4441 = vpack.c.bf16 %v4290, %v4290
      %v4442 = vpack.c.bf16 %v4292, %v4292
      %v4443 = vpack.c.bf16 %v4294, %v4294
      %v4444 = vpack.c.bf16 %v4296, %v4296
      %v4445 = vpack.c.bf16 %v4298, %v4298
      %v4446 = vpack.c.bf16 %v4300, %v4300
      %v4447 = vpack.c.bf16 %v4302, %v4302
      %v4448 = vpack.c.bf16 %v4304, %v4304
      %v4449 = vpack.c.bf16 %v4306, %v4306
      %v4450 = vpack.c.bf16 %v4308, %v4308
      %v4451 = vpack.c.bf16 %v4310, %v4310
      %v4452 = vpack.c.bf16 %v4312, %v4312
      %v4453 = vpack.c.bf16 %v4314, %v4314
      %v4454 = vpack.c.bf16 %v4316, %v4316
      %v4455 = vpack.c.bf16 %v4318, %v4318
      %v4456 = vpack.c.bf16 %v4320, %v4320
      %v4457 = vpack.c.bf16 %v4322, %v4322
      %v4458 = vpack.c.bf16 %v4324, %v4324
      %v4459 = vpack.c.bf16 %v4326, %v4326
      %v4460 = vpack.c.bf16 %v4328, %v4328
      %v4461 = vpack.c.bf16 %v4330, %v4330
      %v4462 = vpack.c.bf16 %v4332, %v4332
      %v4463 = vpack.c.bf16 %v4334, %v4334
      %v4464 = vpack.c.bf16 %v4336, %v4336
      %v4473 = vunpack.c.l.b16 %v4433
      %v4474 = vunpack.c.l.b16 %v4434
      %v4475 = vunpack.c.l.b16 %v4435
      %v4476 = vunpack.c.l.b16 %v4436
      %v4477 = vunpack.c.l.b16 %v4437
      %v4478 = vunpack.c.l.b16 %v4438
      %v4479 = vunpack.c.l.b16 %v4439
      %v4480 = vunpack.c.l.b16 %v4440
      %v4481 = vpack.c.b16 %v4474, %v4473
      %v4482 = vpack.c.b16 %v4476, %v4475
      %v4483 = vpack.c.b16 %v4478, %v4477
      %v4484 = vpack.c.b16 %v4480, %v4479
      %4485 = vrot.lane.b32.xlu0 %v2325, 64
      %v4486 = vpop.permute.xlu0 %4485
      %4487 = vrot.lane.b32.xlu0 %v2326, 64
      %v4488 = vpop.permute.xlu0 %4487
      %4489 = vrot.lane.b32.xlu0 %v2327, 64
      %v4490 = vpop.permute.xlu0 %4489
      %4491 = vrot.lane.b32.xlu0 %v2328, 64
      %v4492 = vpop.permute.xlu0 %4491
      %v4498 = vsel %vm1968, %v4481, 0
      %v4501 = vsel %vm1968, %v4482, 0
      %v4504 = vsel %vm1968, %v4483, 0
      %v4507 = vsel %vm1968, %v4484, 0
      %4509 = vmatpush.bf16.msra.mxu0 0
      %4510 = vmatpush.bf16.msra.mxu0 0
      %4511 = vmatpush.bf16.msra.mxu0 0
      %4512 = vmatpush.bf16.msra.mxu0 0
      %4513 = vmatpush.bf16.msra.mxu0 %v4492
      %4514 = vmatpush.bf16.msra.mxu0 %v4490
      %4515 = vmatpush.bf16.msra.mxu0 %v4488
      %4516 = vmatpush.bf16.msra.mxu0 %v4486
      %4517 = vmatmul.bf16.gmra.mxu0 %v4498
      %v4518 = vpop.f32.mrf.mxu0
      %v4519 = vadd.f32 0.0, %v4518
      %v4520 = vpop.f32.mrf.mxu0
      %v4521 = vadd.f32 0.0, %v4520
      %4522 = vmatmul.bf16.gmra.mxu0 %v4501
      %v4523 = vpop.f32.mrf.mxu0
      %v4524 = vadd.f32 0.0, %v4523
      %v4525 = vpop.f32.mrf.mxu0
      %v4526 = vadd.f32 0.0, %v4525
      %4527 = vmatmul.bf16.gmra.mxu0 %v4504
      %v4528 = vpop.f32.mrf.mxu0
      %v4529 = vadd.f32 0.0, %v4528
      %v4530 = vpop.f32.mrf.mxu0
      %v4531 = vadd.f32 0.0, %v4530
      %4532 = vmatmul.bf16.gmra.mxu0 %v4507
      %v4533 = vpop.f32.mrf.mxu0
      %v4534 = vadd.f32 0.0, %v4533
      %v4535 = vpop.f32.mrf.mxu0
      %v4536 = vadd.f32 0.0, %v4535
      %4537 = vdwg.mxu0
      %v4546 = vunpack.c.l.b16 %v4441
      %v4547 = vunpack.c.l.b16 %v4442
      %v4548 = vunpack.c.l.b16 %v4443
      %v4549 = vunpack.c.l.b16 %v4444
      %v4550 = vunpack.c.l.b16 %v4445
      %v4551 = vunpack.c.l.b16 %v4446
      %v4552 = vunpack.c.l.b16 %v4447
      %v4553 = vunpack.c.l.b16 %v4448
      %v4554 = vpack.c.b16 %v4547, %v4546
      %v4555 = vpack.c.b16 %v4549, %v4548
      %v4556 = vpack.c.b16 %v4551, %v4550
      %v4557 = vpack.c.b16 %v4553, %v4552
      %4558 = vrot.lane.b32.xlu0 %v2410, 64
      %v4559 = vpop.permute.xlu0 %4558
      %4560 = vrot.lane.b32.xlu0 %v2411, 64
      %v4561 = vpop.permute.xlu0 %4560
      %4562 = vrot.lane.b32.xlu0 %v2412, 64
      %v4563 = vpop.permute.xlu0 %4562
      %4564 = vrot.lane.b32.xlu0 %v2413, 64
      %v4565 = vpop.permute.xlu0 %4564
      %v4571 = vsel %vm1968, %v4554, 0
      %v4574 = vsel %vm1968, %v4555, 0
      %v4577 = vsel %vm1968, %v4556, 0
      %v4580 = vsel %vm1968, %v4557, 0
      %4582 = vmatpush.bf16.msra.mxu0 0
      %4583 = vmatpush.bf16.msra.mxu0 0
      %4584 = vmatpush.bf16.msra.mxu0 0
      %4585 = vmatpush.bf16.msra.mxu0 0
      %4586 = vmatpush.bf16.msra.mxu0 %v4565
      %4587 = vmatpush.bf16.msra.mxu0 %v4563
      %4588 = vmatpush.bf16.msra.mxu0 %v4561
      %4589 = vmatpush.bf16.msra.mxu0 %v4559
      %4590 = vmatmul.bf16.gmra.mxu0 %v4571
      %v4591 = vpop.f32.mrf.mxu0
      %v4592 = vadd.f32 0.0, %v4591
      %v4593 = vpop.f32.mrf.mxu0
      %v4594 = vadd.f32 0.0, %v4593
      %4595 = vmatmul.bf16.gmra.mxu0 %v4574
      %v4596 = vpop.f32.mrf.mxu0
      %v4597 = vadd.f32 0.0, %v4596
      %v4598 = vpop.f32.mrf.mxu0
      %v4599 = vadd.f32 0.0, %v4598
      %4600 = vmatmul.bf16.gmra.mxu0 %v4577
      %v4601 = vpop.f32.mrf.mxu0
      %v4602 = vadd.f32 0.0, %v4601
      %v4603 = vpop.f32.mrf.mxu0
      %v4604 = vadd.f32 0.0, %v4603
      %4605 = vmatmul.bf16.gmra.mxu0 %v4580
      %v4606 = vpop.f32.mrf.mxu0
      %v4607 = vadd.f32 0.0, %v4606
      %v4608 = vpop.f32.mrf.mxu0
      %v4609 = vadd.f32 0.0, %v4608
      %4610 = vdwg.mxu0
      %v4619 = vunpack.c.l.b16 %v4449
      %v4620 = vunpack.c.l.b16 %v4450
      %v4621 = vunpack.c.l.b16 %v4451
      %v4622 = vunpack.c.l.b16 %v4452
      %v4623 = vunpack.c.l.b16 %v4453
      %v4624 = vunpack.c.l.b16 %v4454
      %v4625 = vunpack.c.l.b16 %v4455
      %v4626 = vunpack.c.l.b16 %v4456
      %v4627 = vpack.c.b16 %v4620, %v4619
      %v4628 = vpack.c.b16 %v4622, %v4621
      %v4629 = vpack.c.b16 %v4624, %v4623
      %v4630 = vpack.c.b16 %v4626, %v4625
      %4631 = vrot.lane.b32.xlu0 %v2495, 64
      %v4632 = vpop.permute.xlu0 %4631
      %4633 = vrot.lane.b32.xlu0 %v2496, 64
      %v4634 = vpop.permute.xlu0 %4633
      %4635 = vrot.lane.b32.xlu0 %v2497, 64
      %v4636 = vpop.permute.xlu0 %4635
      %4637 = vrot.lane.b32.xlu0 %v2498, 64
      %v4638 = vpop.permute.xlu0 %4637
      %v4644 = vsel %vm1968, %v4627, 0
      %v4647 = vsel %vm1968, %v4628, 0
      %v4650 = vsel %vm1968, %v4629, 0
      %v4653 = vsel %vm1968, %v4630, 0
      %4655 = vmatpush.bf16.msra.mxu0 0
      %4656 = vmatpush.bf16.msra.mxu0 0
      %4657 = vmatpush.bf16.msra.mxu0 0
      %4658 = vmatpush.bf16.msra.mxu0 0
      %4659 = vmatpush.bf16.msra.mxu0 %v4638
      %4660 = vmatpush.bf16.msra.mxu0 %v4636
      %4661 = vmatpush.bf16.msra.mxu0 %v4634
      %4662 = vmatpush.bf16.msra.mxu0 %v4632
      %4663 = vmatmul.bf16.gmra.mxu0 %v4644
      %v4664 = vpop.f32.mrf.mxu0
      %v4665 = vadd.f32 0.0, %v4664
      %v4666 = vpop.f32.mrf.mxu0
      %v4667 = vadd.f32 0.0, %v4666
      %4668 = vmatmul.bf16.gmra.mxu0 %v4647
      %v4669 = vpop.f32.mrf.mxu0
      %v4670 = vadd.f32 0.0, %v4669
      %v4671 = vpop.f32.mrf.mxu0
      %v4672 = vadd.f32 0.0, %v4671
      %4673 = vmatmul.bf16.gmra.mxu0 %v4650
      %v4674 = vpop.f32.mrf.mxu0
      %v4675 = vadd.f32 0.0, %v4674
      %v4676 = vpop.f32.mrf.mxu0
      %v4677 = vadd.f32 0.0, %v4676
      %4678 = vmatmul.bf16.gmra.mxu0 %v4653
      %v4679 = vpop.f32.mrf.mxu0
      %v4680 = vadd.f32 0.0, %v4679
      %v4681 = vpop.f32.mrf.mxu0
      %v4682 = vadd.f32 0.0, %v4681
      %4683 = vdwg.mxu0
      %v4692 = vunpack.c.l.b16 %v4457
      %v4693 = vunpack.c.l.b16 %v4458
      %v4694 = vunpack.c.l.b16 %v4459
      %v4695 = vunpack.c.l.b16 %v4460
      %v4696 = vunpack.c.l.b16 %v4461
      %v4697 = vunpack.c.l.b16 %v4462
      %v4698 = vunpack.c.l.b16 %v4463
      %v4699 = vunpack.c.l.b16 %v4464
      %v4700 = vpack.c.b16 %v4693, %v4692
      %v4701 = vpack.c.b16 %v4695, %v4694
      %v4702 = vpack.c.b16 %v4697, %v4696
      %v4703 = vpack.c.b16 %v4699, %v4698
      %4704 = vrot.lane.b32.xlu0 %v2580, 64
      %v4705 = vpop.permute.xlu0 %4704
      %4706 = vrot.lane.b32.xlu0 %v2581, 64
      %v4707 = vpop.permute.xlu0 %4706
      %4708 = vrot.lane.b32.xlu0 %v2582, 64
      %v4709 = vpop.permute.xlu0 %4708
      %4710 = vrot.lane.b32.xlu0 %v2583, 64
      %v4711 = vpop.permute.xlu0 %4710
      %v4717 = vsel %vm1968, %v4700, 0
      %v4720 = vsel %vm1968, %v4701, 0
      %v4723 = vsel %vm1968, %v4702, 0
      %v4726 = vsel %vm1968, %v4703, 0
      %4728 = vmatpush.bf16.msra.mxu0 0
      %4729 = vmatpush.bf16.msra.mxu0 0
      %4730 = vmatpush.bf16.msra.mxu0 0
      %4731 = vmatpush.bf16.msra.mxu0 0
      %4732 = vmatpush.bf16.msra.mxu0 %v4711
      %4733 = vmatpush.bf16.msra.mxu0 %v4709
      %4734 = vmatpush.bf16.msra.mxu0 %v4707
      %4735 = vmatpush.bf16.msra.mxu0 %v4705
      %4736 = vmatmul.bf16.gmra.mxu0 %v4717
      %v4737 = vpop.f32.mrf.mxu0
      %v4738 = vadd.f32 0.0, %v4737
      %v4739 = vpop.f32.mrf.mxu0
      %v4740 = vadd.f32 0.0, %v4739
      %4741 = vmatmul.bf16.gmra.mxu0 %v4720
      %v4742 = vpop.f32.mrf.mxu0
      %v4743 = vadd.f32 0.0, %v4742
      %v4744 = vpop.f32.mrf.mxu0
      %v4745 = vadd.f32 0.0, %v4744
      %4746 = vmatmul.bf16.gmra.mxu0 %v4723
      %v4747 = vpop.f32.mrf.mxu0
      %v4748 = vadd.f32 0.0, %v4747
      %v4749 = vpop.f32.mrf.mxu0
      %v4750 = vadd.f32 0.0, %v4749
      %4751 = vmatmul.bf16.gmra.mxu0 %v4726
      %v4752 = vpop.f32.mrf.mxu0
      %v4753 = vadd.f32 0.0, %v4752
      %v4754 = vpop.f32.mrf.mxu0
      %v4755 = vadd.f32 0.0, %v4754
      %4756 = vdwg.mxu0
      %v4757 = vrcp.pop %v4339
      %v4758 = vrcp.pop %v4342
      %v4759 = vrcp.pop %v4345
      %v4760 = vrcp.pop %v4348
      %v4761 = vrcp.pop %v4351
      %v4762 = vrcp.pop %v4354
      %v4763 = vrcp.pop %v4357
      %v4764 = vrcp.pop %v4360
      %v4765 = vrcp.pop %v4363
      %v4766 = vrcp.pop %v4366
      %v4767 = vrcp.pop %v4369
      %v4768 = vrcp.pop %v4372
      %v4769 = vrcp.pop %v4375
      %v4770 = vrcp.pop %v4378
      %v4771 = vrcp.pop %v4381
      %v4772 = vrcp.pop %v4384
      %v4773 = vrcp.pop %v4387
      %v4774 = vrcp.pop %v4390
      %v4775 = vrcp.pop %v4393
      %v4776 = vrcp.pop %v4396
      %v4777 = vrcp.pop %v4399
      %v4778 = vrcp.pop %v4402
      %v4779 = vrcp.pop %v4405
      %v4780 = vrcp.pop %v4408
      %v4781 = vrcp.pop %v4411
      %v4782 = vrcp.pop %v4414
      %v4783 = vrcp.pop %v4417
      %v4784 = vrcp.pop %v4420
      %v4785 = vrcp.pop %v4423
      %v4786 = vrcp.pop %v4426
      %v4787 = vrcp.pop %v4429
      %v4788 = vrcp.pop %v4432
      %v4789 = vmul.f32 %v4519, %v4757
      %v4790 = vmul.f32 %v4521, %v4758
      %v4791 = vmul.f32 %v4524, %v4759
      %v4792 = vmul.f32 %v4526, %v4760
      %v4793 = vmul.f32 %v4529, %v4761
      %v4794 = vmul.f32 %v4531, %v4762
      %v4795 = vmul.f32 %v4534, %v4763
      %v4796 = vmul.f32 %v4536, %v4764
      %v4797 = vmul.f32 %v4592, %v4765
      %v4798 = vmul.f32 %v4594, %v4766
      %v4799 = vmul.f32 %v4597, %v4767
      %v4800 = vmul.f32 %v4599, %v4768
      %v4801 = vmul.f32 %v4602, %v4769
      %v4802 = vmul.f32 %v4604, %v4770
      %v4803 = vmul.f32 %v4607, %v4771
      %v4804 = vmul.f32 %v4609, %v4772
      %v4805 = vmul.f32 %v4665, %v4773
      %v4806 = vmul.f32 %v4667, %v4774
      %v4807 = vmul.f32 %v4670, %v4775
      %v4808 = vmul.f32 %v4672, %v4776
      %v4809 = vmul.f32 %v4675, %v4777
      %v4810 = vmul.f32 %v4677, %v4778
      %v4811 = vmul.f32 %v4680, %v4779
      %v4812 = vmul.f32 %v4682, %v4780
      %v4813 = vmul.f32 %v4738, %v4781
      %v4814 = vmul.f32 %v4740, %v4782
      %v4815 = vmul.f32 %v4743, %v4783
      %v4816 = vmul.f32 %v4745, %v4784
      %v4817 = vmul.f32 %v4748, %v4785
      %v4818 = vmul.f32 %v4750, %v4786
      %v4819 = vmul.f32 %v4753, %v4787
      %v4820 = vmul.f32 %v4755, %v4788
      %4821 = vrot.lane.b32.xlu0 %v1499, 32
      %v4822 = vpop.permute.xlu0 %4821
      %4823 = vrot.lane.b32.xlu0 %v1501, 32
      %v4824 = vpop.permute.xlu0 %4823
      %4825 = vrot.lane.b32.xlu0 %v1503, 32
      %v4826 = vpop.permute.xlu0 %4825
      %4827 = vrot.lane.b32.xlu0 %v1505, 32
      %v4828 = vpop.permute.xlu0 %4827
      %4829 = vrot.lane.b32.xlu0 %v1507, 32
      %v4830 = vpop.permute.xlu0 %4829
      %4831 = vrot.lane.b32.xlu0 %v1509, 32
      %v4832 = vpop.permute.xlu0 %4831
      %4833 = vrot.lane.b32.xlu0 %v1511, 32
      %v4834 = vpop.permute.xlu0 %4833
      %4835 = vrot.lane.b32.xlu0 %v1513, 32
      %v4836 = vpop.permute.xlu0 %4835
      %v4837 = vrot.slane %v4822, 4
      %v4838 = vrot.slane %v4824, 4
      %v4839 = vrot.slane %v4826, 4
      %v4840 = vrot.slane %v4828, 4
      %v4841 = vrot.slane %v4830, 4
      %v4842 = vrot.slane %v4832, 4
      %v4843 = vrot.slane %v4834, 4
      %v4844 = vrot.slane %v4836, 4
      %4845 = vrot.lane.b32.xlu0 %v1619, 32
      %v4846 = vpop.permute.xlu0 %4845
      %4847 = vrot.lane.b32.xlu0 %v1620, 32
      %v4848 = vpop.permute.xlu0 %4847
      %4849 = vrot.lane.b32.xlu0 %v1621, 32
      %v4850 = vpop.permute.xlu0 %4849
      %4851 = vrot.lane.b32.xlu0 %v1622, 32
      %v4852 = vpop.permute.xlu0 %4851
      %v4853 = vunpack.c.l.b16 %v4837
      %v4854 = vunpack.c.l.b16 %v4838
      %v4855 = vunpack.c.l.b16 %v4839
      %v4856 = vunpack.c.l.b16 %v4840
      %v4857 = vunpack.c.l.b16 %v4841
      %v4858 = vunpack.c.l.b16 %v4842
      %v4859 = vunpack.c.l.b16 %v4843
      %v4860 = vunpack.c.l.b16 %v4844
      %v4861 = vpack.c.b16 %v4854, %v4853
      %v4862 = vpack.c.b16 %v4856, %v4855
      %v4863 = vpack.c.b16 %v4858, %v4857
      %v4864 = vpack.c.b16 %v4860, %v4859
      %v4866 = vsel %vm1635, %v4846, 0
      %v4869 = vsel %vm1635, %v4848, 0
      %v4872 = vsel %vm1635, %v4850, 0
      %v4875 = vsel %vm1635, %v4852, 0
      %v4878 = vsel %vm1635, %v4861, 0
      %v4881 = vsel %vm1635, %v4862, 0
      %v4884 = vsel %vm1635, %v4863, 0
      %v4887 = vsel %vm1635, %v4864, 0
      %4889 = vmatpush.bf16.xpose.msra.mxu0 0
      %4890 = vmatpush.bf16.xpose.msra.mxu0 0
      %4891 = vmatpush.bf16.xpose.msra.mxu0 0
      %4892 = vmatpush.bf16.xpose.msra.mxu0 0
      %4893 = vmatpush.bf16.xpose.msra.mxu0 %v4887
      %4894 = vmatpush.bf16.xpose.msra.mxu0 %v4884
      %4895 = vmatpush.bf16.xpose.msra.mxu0 %v4881
      %4896 = vmatpush.bf16.xpose.msra.mxu0 %v4878
      %4897 = vmatmul.bf16.gmra.mxu0 %v4866
      %v4898 = vpop.f32.mrf.mxu0
      %v4899 = vadd.f32 %v1587, %v4898
      %v4900 = vpop.f32.mrf.mxu0
      %v4901 = vadd.f32 %v1588, %v4900
      %4902 = vmatmul.bf16.gmra.mxu0 %v4869
      %v4903 = vpop.f32.mrf.mxu0
      %v4904 = vadd.f32 %v1589, %v4903
      %v4905 = vpop.f32.mrf.mxu0
      %v4906 = vadd.f32 %v1590, %v4905
      %4907 = vmatmul.bf16.gmra.mxu0 %v4872
      %v4908 = vpop.f32.mrf.mxu0
      %v4909 = vadd.f32 %v1591, %v4908
      %v4910 = vpop.f32.mrf.mxu0
      %v4911 = vadd.f32 %v1592, %v4910
      %4912 = vmatmul.bf16.gmra.mxu0 %v4875
      %v4913 = vpop.f32.mrf.mxu0
      %v4914 = vadd.f32 %v1593, %v4913
      %v4915 = vpop.f32.mrf.mxu0
      %v4916 = vadd.f32 %v1594, %v4915
      %4917 = vdwg.mxu0
      %4918 = vrot.lane.b32.xlu0 %v1515, 32
      %v4919 = vpop.permute.xlu0 %4918
      %4920 = vrot.lane.b32.xlu0 %v1517, 32
      %v4921 = vpop.permute.xlu0 %4920
      %4922 = vrot.lane.b32.xlu0 %v1519, 32
      %v4923 = vpop.permute.xlu0 %4922
      %4924 = vrot.lane.b32.xlu0 %v1521, 32
      %v4925 = vpop.permute.xlu0 %4924
      %4926 = vrot.lane.b32.xlu0 %v1523, 32
      %v4927 = vpop.permute.xlu0 %4926
      %4928 = vrot.lane.b32.xlu0 %v1525, 32
      %v4929 = vpop.permute.xlu0 %4928
      %4930 = vrot.lane.b32.xlu0 %v1527, 32
      %v4931 = vpop.permute.xlu0 %4930
      %4932 = vrot.lane.b32.xlu0 %v1529, 32
      %v4933 = vpop.permute.xlu0 %4932
      %v4934 = vrot.slane %v4919, 4
      %v4935 = vrot.slane %v4921, 4
      %v4936 = vrot.slane %v4923, 4
      %v4937 = vrot.slane %v4925, 4
      %v4938 = vrot.slane %v4927, 4
      %v4939 = vrot.slane %v4929, 4
      %v4940 = vrot.slane %v4931, 4
      %v4941 = vrot.slane %v4933, 4
      %4942 = vrot.lane.b32.xlu0 %v1713, 32
      %v4943 = vpop.permute.xlu0 %4942
      %4944 = vrot.lane.b32.xlu0 %v1714, 32
      %v4945 = vpop.permute.xlu0 %4944
      %4946 = vrot.lane.b32.xlu0 %v1715, 32
      %v4947 = vpop.permute.xlu0 %4946
      %4948 = vrot.lane.b32.xlu0 %v1716, 32
      %v4949 = vpop.permute.xlu0 %4948
      %v4950 = vunpack.c.l.b16 %v4934
      %v4951 = vunpack.c.l.b16 %v4935
      %v4952 = vunpack.c.l.b16 %v4936
      %v4953 = vunpack.c.l.b16 %v4937
      %v4954 = vunpack.c.l.b16 %v4938
      %v4955 = vunpack.c.l.b16 %v4939
      %v4956 = vunpack.c.l.b16 %v4940
      %v4957 = vunpack.c.l.b16 %v4941
      %v4958 = vpack.c.b16 %v4951, %v4950
      %v4959 = vpack.c.b16 %v4953, %v4952
      %v4960 = vpack.c.b16 %v4955, %v4954
      %v4961 = vpack.c.b16 %v4957, %v4956
      %v4963 = vsel %vm1635, %v4943, 0
      %v4966 = vsel %vm1635, %v4945, 0
      %v4969 = vsel %vm1635, %v4947, 0
      %v4972 = vsel %vm1635, %v4949, 0
      %v4975 = vsel %vm1635, %v4958, 0
      %v4978 = vsel %vm1635, %v4959, 0
      %v4981 = vsel %vm1635, %v4960, 0
      %v4984 = vsel %vm1635, %v4961, 0
      %4986 = vmatpush.bf16.xpose.msra.mxu0 0
      %4987 = vmatpush.bf16.xpose.msra.mxu0 0
      %4988 = vmatpush.bf16.xpose.msra.mxu0 0
      %4989 = vmatpush.bf16.xpose.msra.mxu0 0
      %4990 = vmatpush.bf16.xpose.msra.mxu0 %v4984
      %4991 = vmatpush.bf16.xpose.msra.mxu0 %v4981
      %4992 = vmatpush.bf16.xpose.msra.mxu0 %v4978
      %4993 = vmatpush.bf16.xpose.msra.mxu0 %v4975
      %4994 = vmatmul.bf16.gmra.mxu0 %v4963
      %v4995 = vpop.f32.mrf.mxu0
      %v4996 = vadd.f32 %v1587, %v4995
      %v4997 = vpop.f32.mrf.mxu0
      %v4998 = vadd.f32 %v1588, %v4997
      %4999 = vmatmul.bf16.gmra.mxu0 %v4966
      %v5000 = vpop.f32.mrf.mxu0
      %v5001 = vadd.f32 %v1589, %v5000
      %v5002 = vpop.f32.mrf.mxu0
      %v5003 = vadd.f32 %v1590, %v5002
      %5004 = vmatmul.bf16.gmra.mxu0 %v4969
      %v5005 = vpop.f32.mrf.mxu0
      %v5006 = vadd.f32 %v1591, %v5005
      %v5007 = vpop.f32.mrf.mxu0
      %v5008 = vadd.f32 %v1592, %v5007
      %5009 = vmatmul.bf16.gmra.mxu0 %v4972
      %v5010 = vpop.f32.mrf.mxu0
      %v5011 = vadd.f32 %v1593, %v5010
      %v5012 = vpop.f32.mrf.mxu0
      %v5013 = vadd.f32 %v1594, %v5012
      %5014 = vdwg.mxu0
      %5015 = vrot.lane.b32.xlu0 %v1531, 32
      %v5016 = vpop.permute.xlu0 %5015
      %5017 = vrot.lane.b32.xlu0 %v1533, 32
      %v5018 = vpop.permute.xlu0 %5017
      %5019 = vrot.lane.b32.xlu0 %v1535, 32
      %v5020 = vpop.permute.xlu0 %5019
      %5021 = vrot.lane.b32.xlu0 %v1537, 32
      %v5022 = vpop.permute.xlu0 %5021
      %5023 = vrot.lane.b32.xlu0 %v1539, 32
      %v5024 = vpop.permute.xlu0 %5023
      %5025 = vrot.lane.b32.xlu0 %v1541, 32
      %v5026 = vpop.permute.xlu0 %5025
      %5027 = vrot.lane.b32.xlu0 %v1543, 32
      %v5028 = vpop.permute.xlu0 %5027
      %5029 = vrot.lane.b32.xlu0 %v1545, 32
      %v5030 = vpop.permute.xlu0 %5029
      %v5031 = vrot.slane %v5016, 4
      %v5032 = vrot.slane %v5018, 4
      %v5033 = vrot.slane %v5020, 4
      %v5034 = vrot.slane %v5022, 4
      %v5035 = vrot.slane %v5024, 4
      %v5036 = vrot.slane %v5026, 4
      %v5037 = vrot.slane %v5028, 4
      %v5038 = vrot.slane %v5030, 4
      %5039 = vrot.lane.b32.xlu0 %v1806, 32
      %v5040 = vpop.permute.xlu0 %5039
      %5041 = vrot.lane.b32.xlu0 %v1807, 32
      %v5042 = vpop.permute.xlu0 %5041
      %5043 = vrot.lane.b32.xlu0 %v1808, 32
      %v5044 = vpop.permute.xlu0 %5043
      %5045 = vrot.lane.b32.xlu0 %v1809, 32
      %v5046 = vpop.permute.xlu0 %5045
      %v5047 = vunpack.c.l.b16 %v5031
      %v5048 = vunpack.c.l.b16 %v5032
      %v5049 = vunpack.c.l.b16 %v5033
      %v5050 = vunpack.c.l.b16 %v5034
      %v5051 = vunpack.c.l.b16 %v5035
      %v5052 = vunpack.c.l.b16 %v5036
      %v5053 = vunpack.c.l.b16 %v5037
      %v5054 = vunpack.c.l.b16 %v5038
      %v5055 = vpack.c.b16 %v5048, %v5047
      %v5056 = vpack.c.b16 %v5050, %v5049
      %v5057 = vpack.c.b16 %v5052, %v5051
      %v5058 = vpack.c.b16 %v5054, %v5053
      %v5060 = vsel %vm1635, %v5040, 0
      %v5063 = vsel %vm1635, %v5042, 0
      %v5066 = vsel %vm1635, %v5044, 0
      %v5069 = vsel %vm1635, %v5046, 0
      %v5072 = vsel %vm1635, %v5055, 0
      %v5075 = vsel %vm1635, %v5056, 0
      %v5078 = vsel %vm1635, %v5057, 0
      %v5081 = vsel %vm1635, %v5058, 0
      %5083 = vmatpush.bf16.xpose.msra.mxu0 0
      %5084 = vmatpush.bf16.xpose.msra.mxu0 0
      %5085 = vmatpush.bf16.xpose.msra.mxu0 0
      %5086 = vmatpush.bf16.xpose.msra.mxu0 0
      %5087 = vmatpush.bf16.xpose.msra.mxu0 %v5081
      %5088 = vmatpush.bf16.xpose.msra.mxu0 %v5078
      %5089 = vmatpush.bf16.xpose.msra.mxu0 %v5075
      %5090 = vmatpush.bf16.xpose.msra.mxu0 %v5072
      %5091 = vmatmul.bf16.gmra.mxu0 %v5060
      %v5092 = vpop.f32.mrf.mxu0
      %v5093 = vadd.f32 %v1587, %v5092
      %v5094 = vpop.f32.mrf.mxu0
      %v5095 = vadd.f32 %v1588, %v5094
      %5096 = vmatmul.bf16.gmra.mxu0 %v5063
      %v5097 = vpop.f32.mrf.mxu0
      %v5098 = vadd.f32 %v1589, %v5097
      %v5099 = vpop.f32.mrf.mxu0
      %v5100 = vadd.f32 %v1590, %v5099
      %5101 = vmatmul.bf16.gmra.mxu0 %v5066
      %v5102 = vpop.f32.mrf.mxu0
      %v5103 = vadd.f32 %v1591, %v5102
      %v5104 = vpop.f32.mrf.mxu0
      %v5105 = vadd.f32 %v1592, %v5104
      %5106 = vmatmul.bf16.gmra.mxu0 %v5069
      %v5107 = vpop.f32.mrf.mxu0
      %v5108 = vadd.f32 %v1593, %v5107
      %v5109 = vpop.f32.mrf.mxu0
      %v5110 = vadd.f32 %v1594, %v5109
      %5111 = vdwg.mxu0
      %5112 = vrot.lane.b32.xlu0 %v1547, 32
      %v5113 = vpop.permute.xlu0 %5112
      %5114 = vrot.lane.b32.xlu0 %v1549, 32
      %v5115 = vpop.permute.xlu0 %5114
      %5116 = vrot.lane.b32.xlu0 %v1551, 32
      %v5117 = vpop.permute.xlu0 %5116
      %5118 = vrot.lane.b32.xlu0 %v1553, 32
      %v5119 = vpop.permute.xlu0 %5118
      %5120 = vrot.lane.b32.xlu0 %v1555, 32
      %v5121 = vpop.permute.xlu0 %5120
      %5122 = vrot.lane.b32.xlu0 %v1557, 32
      %v5123 = vpop.permute.xlu0 %5122
      %5124 = vrot.lane.b32.xlu0 %v1559, 32
      %v5125 = vpop.permute.xlu0 %5124
      %5126 = vrot.lane.b32.xlu0 %v1561, 32
      %v5127 = vpop.permute.xlu0 %5126
      %v5128 = vrot.slane %v5113, 4
      %v5129 = vrot.slane %v5115, 4
      %v5130 = vrot.slane %v5117, 4
      %v5131 = vrot.slane %v5119, 4
      %v5132 = vrot.slane %v5121, 4
      %v5133 = vrot.slane %v5123, 4
      %v5134 = vrot.slane %v5125, 4
      %v5135 = vrot.slane %v5127, 4
      %5136 = vrot.lane.b32.xlu0 %v1899, 32
      %v5137 = vpop.permute.xlu0 %5136
      %5138 = vrot.lane.b32.xlu0 %v1900, 32
      %v5139 = vpop.permute.xlu0 %5138
      %5140 = vrot.lane.b32.xlu0 %v1901, 32
      %v5141 = vpop.permute.xlu0 %5140
      %5142 = vrot.lane.b32.xlu0 %v1902, 32
      %v5143 = vpop.permute.xlu0 %5142
      %v5144 = vunpack.c.l.b16 %v5128
      %v5145 = vunpack.c.l.b16 %v5129
      %v5146 = vunpack.c.l.b16 %v5130
      %v5147 = vunpack.c.l.b16 %v5131
      %v5148 = vunpack.c.l.b16 %v5132
      %v5149 = vunpack.c.l.b16 %v5133
      %v5150 = vunpack.c.l.b16 %v5134
      %v5151 = vunpack.c.l.b16 %v5135
      %v5152 = vpack.c.b16 %v5145, %v5144
      %v5153 = vpack.c.b16 %v5147, %v5146
      %v5154 = vpack.c.b16 %v5149, %v5148
      %v5155 = vpack.c.b16 %v5151, %v5150
      %v5157 = vsel %vm1635, %v5137, 0
      %v5160 = vsel %vm1635, %v5139, 0
      %v5163 = vsel %vm1635, %v5141, 0
      %v5166 = vsel %vm1635, %v5143, 0
      %v5169 = vsel %vm1635, %v5152, 0
      %v5172 = vsel %vm1635, %v5153, 0
      %v5175 = vsel %vm1635, %v5154, 0
      %v5178 = vsel %vm1635, %v5155, 0
      %5180 = vmatpush.bf16.xpose.msra.mxu0 0
      %5181 = vmatpush.bf16.xpose.msra.mxu0 0
      %5182 = vmatpush.bf16.xpose.msra.mxu0 0
      %5183 = vmatpush.bf16.xpose.msra.mxu0 0
      %5184 = vmatpush.bf16.xpose.msra.mxu0 %v5178
      %5185 = vmatpush.bf16.xpose.msra.mxu0 %v5175
      %5186 = vmatpush.bf16.xpose.msra.mxu0 %v5172
      %5187 = vmatpush.bf16.xpose.msra.mxu0 %v5169
      %5188 = vmatmul.bf16.gmra.mxu0 %v5157
      %v5189 = vpop.f32.mrf.mxu0
      %v5190 = vadd.f32 %v1587, %v5189
      %v5191 = vpop.f32.mrf.mxu0
      %v5192 = vadd.f32 %v1588, %v5191
      %5193 = vmatmul.bf16.gmra.mxu0 %v5160
      %v5194 = vpop.f32.mrf.mxu0
      %v5195 = vadd.f32 %v1589, %v5194
      %v5196 = vpop.f32.mrf.mxu0
      %v5197 = vadd.f32 %v1590, %v5196
      %5198 = vmatmul.bf16.gmra.mxu0 %v5163
      %v5199 = vpop.f32.mrf.mxu0
      %v5200 = vadd.f32 %v1591, %v5199
      %v5201 = vpop.f32.mrf.mxu0
      %v5202 = vadd.f32 %v1592, %v5201
      %5203 = vmatmul.bf16.gmra.mxu0 %v5166
      %v5204 = vpop.f32.mrf.mxu0
      %v5205 = vadd.f32 %v1593, %v5204
      %v5206 = vpop.f32.mrf.mxu0
      %v5207 = vadd.f32 %v1594, %v5206
      %5208 = vdwg.mxu0
      %v5209 = vsel %vm1968, %v4899, -inf
      %5210 = vmax.xlane.f32.xlu0 %v5209
      %v5211 = vpop.xlane.xlu0 %5210
      %v5212 = vsel %vm1968, %v4901, -inf
      %5213 = vmax.xlane.f32.xlu0 %v5212
      %v5214 = vpop.xlane.xlu0 %5213
      %v5215 = vsel %vm1968, %v4904, -inf
      %5216 = vmax.xlane.f32.xlu0 %v5215
      %v5217 = vpop.xlane.xlu0 %5216
      %v5218 = vsel %vm1968, %v4906, -inf
      %5219 = vmax.xlane.f32.xlu0 %v5218
      %v5220 = vpop.xlane.xlu0 %5219
      %v5221 = vsel %vm1968, %v4909, -inf
      %5222 = vmax.xlane.f32.xlu0 %v5221
      %v5223 = vpop.xlane.xlu0 %5222
      %v5224 = vsel %vm1968, %v4911, -inf
      %5225 = vmax.xlane.f32.xlu0 %v5224
      %v5226 = vpop.xlane.xlu0 %5225
      %v5227 = vsel %vm1968, %v4914, -inf
      %5228 = vmax.xlane.f32.xlu0 %v5227
      %v5229 = vpop.xlane.xlu0 %5228
      %v5230 = vsel %vm1968, %v4916, -inf
      %5231 = vmax.xlane.f32.xlu0 %v5230
      %v5232 = vpop.xlane.xlu0 %5231
      %v5233 = vsel %vm1968, %v4996, -inf
      %5234 = vmax.xlane.f32.xlu0 %v5233
      %v5235 = vpop.xlane.xlu0 %5234
      %v5236 = vsel %vm1968, %v4998, -inf
      %5237 = vmax.xlane.f32.xlu0 %v5236
      %v5238 = vpop.xlane.xlu0 %5237
      %v5239 = vsel %vm1968, %v5001, -inf
      %5240 = vmax.xlane.f32.xlu0 %v5239
      %v5241 = vpop.xlane.xlu0 %5240
      %v5242 = vsel %vm1968, %v5003, -inf
      %5243 = vmax.xlane.f32.xlu0 %v5242
      %v5244 = vpop.xlane.xlu0 %5243
      %v5245 = vsel %vm1968, %v5006, -inf
      %5246 = vmax.xlane.f32.xlu0 %v5245
      %v5247 = vpop.xlane.xlu0 %5246
      %v5248 = vsel %vm1968, %v5008, -inf
      %5249 = vmax.xlane.f32.xlu0 %v5248
      %v5250 = vpop.xlane.xlu0 %5249
      %v5251 = vsel %vm1968, %v5011, -inf
      %5252 = vmax.xlane.f32.xlu0 %v5251
      %v5253 = vpop.xlane.xlu0 %5252
      %v5254 = vsel %vm1968, %v5013, -inf
      %5255 = vmax.xlane.f32.xlu0 %v5254
      %v5256 = vpop.xlane.xlu0 %5255
      %v5257 = vsel %vm1968, %v5093, -inf
      %5258 = vmax.xlane.f32.xlu0 %v5257
      %v5259 = vpop.xlane.xlu0 %5258
      %v5260 = vsel %vm1968, %v5095, -inf
      %5261 = vmax.xlane.f32.xlu0 %v5260
      %v5262 = vpop.xlane.xlu0 %5261
      %v5263 = vsel %vm1968, %v5098, -inf
      %5264 = vmax.xlane.f32.xlu0 %v5263
      %v5265 = vpop.xlane.xlu0 %5264
      %v5266 = vsel %vm1968, %v5100, -inf
      %5267 = vmax.xlane.f32.xlu0 %v5266
      %v5268 = vpop.xlane.xlu0 %5267
      %v5269 = vsel %vm1968, %v5103, -inf
      %5270 = vmax.xlane.f32.xlu0 %v5269
      %v5271 = vpop.xlane.xlu0 %5270
      %v5272 = vsel %vm1968, %v5105, -inf
      %5273 = vmax.xlane.f32.xlu0 %v5272
      %v5274 = vpop.xlane.xlu0 %5273
      %v5275 = vsel %vm1968, %v5108, -inf
      %5276 = vmax.xlane.f32.xlu0 %v5275
      %v5277 = vpop.xlane.xlu0 %5276
      %v5278 = vsel %vm1968, %v5110, -inf
      %5279 = vmax.xlane.f32.xlu0 %v5278
      %v5280 = vpop.xlane.xlu0 %5279
      %v5281 = vsel %vm1968, %v5190, -inf
      %5282 = vmax.xlane.f32.xlu0 %v5281
      %v5283 = vpop.xlane.xlu0 %5282
      %v5284 = vsel %vm1968, %v5192, -inf
      %5285 = vmax.xlane.f32.xlu0 %v5284
      %v5286 = vpop.xlane.xlu0 %5285
      %v5287 = vsel %vm1968, %v5195, -inf
      %5288 = vmax.xlane.f32.xlu0 %v5287
      %v5289 = vpop.xlane.xlu0 %5288
      %v5290 = vsel %vm1968, %v5197, -inf
      %5291 = vmax.xlane.f32.xlu0 %v5290
      %v5292 = vpop.xlane.xlu0 %5291
      %v5293 = vsel %vm1968, %v5200, -inf
      %5294 = vmax.xlane.f32.xlu0 %v5293
      %v5295 = vpop.xlane.xlu0 %5294
      %v5296 = vsel %vm1968, %v5202, -inf
      %5297 = vmax.xlane.f32.xlu0 %v5296
      %v5298 = vpop.xlane.xlu0 %5297
      %v5299 = vsel %vm1968, %v5205, -inf
      %5300 = vmax.xlane.f32.xlu0 %v5299
      %v5301 = vpop.xlane.xlu0 %5300
      %v5302 = vsel %vm1968, %v5207, -inf
      %5303 = vmax.xlane.f32.xlu0 %v5302
      %v5304 = vpop.xlane.xlu0 %5303
      %v5305 = vsub.f32 %v4899, %v5211
      %v5306 = vsub.f32 %v4901, %v5214
      %v5307 = vsub.f32 %v4904, %v5217
      %v5308 = vsub.f32 %v4906, %v5220
      %v5309 = vsub.f32 %v4909, %v5223
      %v5310 = vsub.f32 %v4911, %v5226
      %v5311 = vsub.f32 %v4914, %v5229
      %v5312 = vsub.f32 %v4916, %v5232
      %v5313 = vsub.f32 %v4996, %v5235
      %v5314 = vsub.f32 %v4998, %v5238
      %v5315 = vsub.f32 %v5001, %v5241
      %v5316 = vsub.f32 %v5003, %v5244
      %v5317 = vsub.f32 %v5006, %v5247
      %v5318 = vsub.f32 %v5008, %v5250
      %v5319 = vsub.f32 %v5011, %v5253
      %v5320 = vsub.f32 %v5013, %v5256
      %v5321 = vsub.f32 %v5093, %v5259
      %v5322 = vsub.f32 %v5095, %v5262
      %v5323 = vsub.f32 %v5098, %v5265
      %v5324 = vsub.f32 %v5100, %v5268
      %v5325 = vsub.f32 %v5103, %v5271
      %v5326 = vsub.f32 %v5105, %v5274
      %v5327 = vsub.f32 %v5108, %v5277
      %v5328 = vsub.f32 %v5110, %v5280
      %v5329 = vsub.f32 %v5190, %v5283
      %v5330 = vsub.f32 %v5192, %v5286
      %v5331 = vsub.f32 %v5195, %v5289
      %v5332 = vsub.f32 %v5197, %v5292
      %v5333 = vsub.f32 %v5200, %v5295
      %v5334 = vsub.f32 %v5202, %v5298
      %v5335 = vsub.f32 %v5205, %v5301
      %v5336 = vsub.f32 %v5207, %v5304
      %v5337 = vmul.f32 %v5305, 1.442695
      %v5338 = vpow.pop %v5337
      %v5339 = vmul.f32 %v5306, 1.442695
      %v5340 = vpow.pop %v5339
      %v5341 = vmul.f32 %v5307, 1.442695
      %v5342 = vpow.pop %v5341
      %v5343 = vmul.f32 %v5308, 1.442695
      %v5344 = vpow.pop %v5343
      %v5345 = vmul.f32 %v5309, 1.442695
      %v5346 = vpow.pop %v5345
      %v5347 = vmul.f32 %v5310, 1.442695
      %v5348 = vpow.pop %v5347
      %v5349 = vmul.f32 %v5311, 1.442695
      %v5350 = vpow.pop %v5349
      %v5351 = vmul.f32 %v5312, 1.442695
      %v5352 = vpow.pop %v5351
      %v5353 = vmul.f32 %v5313, 1.442695
      %v5354 = vpow.pop %v5353
      %v5355 = vmul.f32 %v5314, 1.442695
      %v5356 = vpow.pop %v5355
      %v5357 = vmul.f32 %v5315, 1.442695
      %v5358 = vpow.pop %v5357
      %v5359 = vmul.f32 %v5316, 1.442695
      %v5360 = vpow.pop %v5359
      %v5361 = vmul.f32 %v5317, 1.442695
      %v5362 = vpow.pop %v5361
      %v5363 = vmul.f32 %v5318, 1.442695
      %v5364 = vpow.pop %v5363
      %v5365 = vmul.f32 %v5319, 1.442695
      %v5366 = vpow.pop %v5365
      %v5367 = vmul.f32 %v5320, 1.442695
      %v5368 = vpow.pop %v5367
      %v5369 = vmul.f32 %v5321, 1.442695
      %v5370 = vpow.pop %v5369
      %v5371 = vmul.f32 %v5322, 1.442695
      %v5372 = vpow.pop %v5371
      %v5373 = vmul.f32 %v5323, 1.442695
      %v5374 = vpow.pop %v5373
      %v5375 = vmul.f32 %v5324, 1.442695
      %v5376 = vpow.pop %v5375
      %v5377 = vmul.f32 %v5325, 1.442695
      %v5378 = vpow.pop %v5377
      %v5379 = vmul.f32 %v5326, 1.442695
      %v5380 = vpow.pop %v5379
      %v5381 = vmul.f32 %v5327, 1.442695
      %v5382 = vpow.pop %v5381
      %v5383 = vmul.f32 %v5328, 1.442695
      %v5384 = vpow.pop %v5383
      %v5385 = vmul.f32 %v5329, 1.442695
      %v5386 = vpow.pop %v5385
      %v5387 = vmul.f32 %v5330, 1.442695
      %v5388 = vpow.pop %v5387
      %v5389 = vmul.f32 %v5331, 1.442695
      %v5390 = vpow.pop %v5389
      %v5391 = vmul.f32 %v5332, 1.442695
      %v5392 = vpow.pop %v5391
      %v5393 = vmul.f32 %v5333, 1.442695
      %v5394 = vpow.pop %v5393
      %v5395 = vmul.f32 %v5334, 1.442695
      %v5396 = vpow.pop %v5395
      %v5397 = vmul.f32 %v5335, 1.442695
      %v5398 = vpow.pop %v5397
      %v5399 = vmul.f32 %v5336, 1.442695
      %v5400 = vpow.pop %v5399
      %v5401 = vsel %vm1968, %v5338, 0.0
      %5402 = vadd.xlane.f32.xlu0 %v5401
      %v5403 = vpop.xlane.xlu0 %5402
      %v5404 = vsel %vm1968, %v5340, 0.0
      %5405 = vadd.xlane.f32.xlu0 %v5404
      %v5406 = vpop.xlane.xlu0 %5405
      %v5407 = vsel %vm1968, %v5342, 0.0
      %5408 = vadd.xlane.f32.xlu0 %v5407
      %v5409 = vpop.xlane.xlu0 %5408
      %v5410 = vsel %vm1968, %v5344, 0.0
      %5411 = vadd.xlane.f32.xlu0 %v5410
      %v5412 = vpop.xlane.xlu0 %5411
      %v5413 = vsel %vm1968, %v5346, 0.0
      %5414 = vadd.xlane.f32.xlu0 %v5413
      %v5415 = vpop.xlane.xlu0 %5414
      %v5416 = vsel %vm1968, %v5348, 0.0
      %5417 = vadd.xlane.f32.xlu0 %v5416
      %v5418 = vpop.xlane.xlu0 %5417
      %v5419 = vsel %vm1968, %v5350, 0.0
      %5420 = vadd.xlane.f32.xlu0 %v5419
      %v5421 = vpop.xlane.xlu0 %5420
      %v5422 = vsel %vm1968, %v5352, 0.0
      %5423 = vadd.xlane.f32.xlu0 %v5422
      %v5424 = vpop.xlane.xlu0 %5423
      %v5425 = vsel %vm1968, %v5354, 0.0
      %5426 = vadd.xlane.f32.xlu0 %v5425
      %v5427 = vpop.xlane.xlu0 %5426
      %v5428 = vsel %vm1968, %v5356, 0.0
      %5429 = vadd.xlane.f32.xlu0 %v5428
      %v5430 = vpop.xlane.xlu0 %5429
      %v5431 = vsel %vm1968, %v5358, 0.0
      %5432 = vadd.xlane.f32.xlu0 %v5431
      %v5433 = vpop.xlane.xlu0 %5432
      %v5434 = vsel %vm1968, %v5360, 0.0
      %5435 = vadd.xlane.f32.xlu0 %v5434
      %v5436 = vpop.xlane.xlu0 %5435
      %v5437 = vsel %vm1968, %v5362, 0.0
      %5438 = vadd.xlane.f32.xlu0 %v5437
      %v5439 = vpop.xlane.xlu0 %5438
      %v5440 = vsel %vm1968, %v5364, 0.0
      %5441 = vadd.xlane.f32.xlu0 %v5440
      %v5442 = vpop.xlane.xlu0 %5441
      %v5443 = vsel %vm1968, %v5366, 0.0
      %5444 = vadd.xlane.f32.xlu0 %v5443
      %v5445 = vpop.xlane.xlu0 %5444
      %v5446 = vsel %vm1968, %v5368, 0.0
      %5447 = vadd.xlane.f32.xlu0 %v5446
      %v5448 = vpop.xlane.xlu0 %5447
      %v5449 = vsel %vm1968, %v5370, 0.0
      %5450 = vadd.xlane.f32.xlu0 %v5449
      %v5451 = vpop.xlane.xlu0 %5450
      %v5452 = vsel %vm1968, %v5372, 0.0
      %5453 = vadd.xlane.f32.xlu0 %v5452
      %v5454 = vpop.xlane.xlu0 %5453
      %v5455 = vsel %vm1968, %v5374, 0.0
      %5456 = vadd.xlane.f32.xlu0 %v5455
      %v5457 = vpop.xlane.xlu0 %5456
      %v5458 = vsel %vm1968, %v5376, 0.0
      %5459 = vadd.xlane.f32.xlu0 %v5458
      %v5460 = vpop.xlane.xlu0 %5459
      %v5461 = vsel %vm1968, %v5378, 0.0
      %5462 = vadd.xlane.f32.xlu0 %v5461
      %v5463 = vpop.xlane.xlu0 %5462
      %v5464 = vsel %vm1968, %v5380, 0.0
      %5465 = vadd.xlane.f32.xlu0 %v5464
      %v5466 = vpop.xlane.xlu0 %5465
      %v5467 = vsel %vm1968, %v5382, 0.0
      %5468 = vadd.xlane.f32.xlu0 %v5467
      %v5469 = vpop.xlane.xlu0 %5468
      %v5470 = vsel %vm1968, %v5384, 0.0
      %5471 = vadd.xlane.f32.xlu0 %v5470
      %v5472 = vpop.xlane.xlu0 %5471
      %v5473 = vsel %vm1968, %v5386, 0.0
      %5474 = vadd.xlane.f32.xlu0 %v5473
      %v5475 = vpop.xlane.xlu0 %5474
      %v5476 = vsel %vm1968, %v5388, 0.0
      %5477 = vadd.xlane.f32.xlu0 %v5476
      %v5478 = vpop.xlane.xlu0 %5477
      %v5479 = vsel %vm1968, %v5390, 0.0
      %5480 = vadd.xlane.f32.xlu0 %v5479
      %v5481 = vpop.xlane.xlu0 %5480
      %v5482 = vsel %vm1968, %v5392, 0.0
      %5483 = vadd.xlane.f32.xlu0 %v5482
      %v5484 = vpop.xlane.xlu0 %5483
      %v5485 = vsel %vm1968, %v5394, 0.0
      %5486 = vadd.xlane.f32.xlu0 %v5485
      %v5487 = vpop.xlane.xlu0 %5486
      %v5488 = vsel %vm1968, %v5396, 0.0
      %5489 = vadd.xlane.f32.xlu0 %v5488
      %v5490 = vpop.xlane.xlu0 %5489
      %v5491 = vsel %vm1968, %v5398, 0.0
      %5492 = vadd.xlane.f32.xlu0 %v5491
      %v5493 = vpop.xlane.xlu0 %5492
      %v5494 = vsel %vm1968, %v5400, 0.0
      %5495 = vadd.xlane.f32.xlu0 %v5494
      %v5496 = vpop.xlane.xlu0 %5495
      %v5497 = vpack.c.bf16 %v5338, %v5338
      %v5498 = vpack.c.bf16 %v5340, %v5340
      %v5499 = vpack.c.bf16 %v5342, %v5342
      %v5500 = vpack.c.bf16 %v5344, %v5344
      %v5501 = vpack.c.bf16 %v5346, %v5346
      %v5502 = vpack.c.bf16 %v5348, %v5348
      %v5503 = vpack.c.bf16 %v5350, %v5350
      %v5504 = vpack.c.bf16 %v5352, %v5352
      %v5505 = vpack.c.bf16 %v5354, %v5354
      %v5506 = vpack.c.bf16 %v5356, %v5356
      %v5507 = vpack.c.bf16 %v5358, %v5358
      %v5508 = vpack.c.bf16 %v5360, %v5360
      %v5509 = vpack.c.bf16 %v5362, %v5362
      %v5510 = vpack.c.bf16 %v5364, %v5364
      %v5511 = vpack.c.bf16 %v5366, %v5366
      %v5512 = vpack.c.bf16 %v5368, %v5368
      %v5513 = vpack.c.bf16 %v5370, %v5370
      %v5514 = vpack.c.bf16 %v5372, %v5372
      %v5515 = vpack.c.bf16 %v5374, %v5374
      %v5516 = vpack.c.bf16 %v5376, %v5376
      %v5517 = vpack.c.bf16 %v5378, %v5378
      %v5518 = vpack.c.bf16 %v5380, %v5380
      %v5519 = vpack.c.bf16 %v5382, %v5382
      %v5520 = vpack.c.bf16 %v5384, %v5384
      %v5521 = vpack.c.bf16 %v5386, %v5386
      %v5522 = vpack.c.bf16 %v5388, %v5388
      %v5523 = vpack.c.bf16 %v5390, %v5390
      %v5524 = vpack.c.bf16 %v5392, %v5392
      %v5525 = vpack.c.bf16 %v5394, %v5394
      %v5526 = vpack.c.bf16 %v5396, %v5396
      %v5527 = vpack.c.bf16 %v5398, %v5398
      %v5528 = vpack.c.bf16 %v5400, %v5400
      %v5537 = vunpack.c.l.b16 %v5497
      %v5538 = vunpack.c.l.b16 %v5498
      %v5539 = vunpack.c.l.b16 %v5499
      %v5540 = vunpack.c.l.b16 %v5500
      %v5541 = vunpack.c.l.b16 %v5501
      %v5542 = vunpack.c.l.b16 %v5502
      %v5543 = vunpack.c.l.b16 %v5503
      %v5544 = vunpack.c.l.b16 %v5504
      %v5545 = vpack.c.b16 %v5538, %v5537
      %v5546 = vpack.c.b16 %v5540, %v5539
      %v5547 = vpack.c.b16 %v5542, %v5541
      %v5548 = vpack.c.b16 %v5544, %v5543
      %5549 = vrot.lane.b32.xlu0 %v2325, 32
      %v5550 = vpop.permute.xlu0 %5549
      %5551 = vrot.lane.b32.xlu0 %v2326, 32
      %v5552 = vpop.permute.xlu0 %5551
      %5553 = vrot.lane.b32.xlu0 %v2327, 32
      %v5554 = vpop.permute.xlu0 %5553
      %5555 = vrot.lane.b32.xlu0 %v2328, 32
      %v5556 = vpop.permute.xlu0 %5555
      %v5562 = vsel %vm1968, %v5545, 0
      %v5565 = vsel %vm1968, %v5546, 0
      %v5568 = vsel %vm1968, %v5547, 0
      %v5571 = vsel %vm1968, %v5548, 0
      %5573 = vmatpush.bf16.msra.mxu0 0
      %5574 = vmatpush.bf16.msra.mxu0 0
      %5575 = vmatpush.bf16.msra.mxu0 0
      %5576 = vmatpush.bf16.msra.mxu0 0
      %5577 = vmatpush.bf16.msra.mxu0 %v5556
      %5578 = vmatpush.bf16.msra.mxu0 %v5554
      %5579 = vmatpush.bf16.msra.mxu0 %v5552
      %5580 = vmatpush.bf16.msra.mxu0 %v5550
      %5581 = vmatmul.bf16.gmra.mxu0 %v5562
      %v5582 = vpop.f32.mrf.mxu0
      %v5583 = vadd.f32 0.0, %v5582
      %v5584 = vpop.f32.mrf.mxu0
      %v5585 = vadd.f32 0.0, %v5584
      %5586 = vmatmul.bf16.gmra.mxu0 %v5565
      %v5587 = vpop.f32.mrf.mxu0
      %v5588 = vadd.f32 0.0, %v5587
      %v5589 = vpop.f32.mrf.mxu0
      %v5590 = vadd.f32 0.0, %v5589
      %5591 = vmatmul.bf16.gmra.mxu0 %v5568
      %v5592 = vpop.f32.mrf.mxu0
      %v5593 = vadd.f32 0.0, %v5592
      %v5594 = vpop.f32.mrf.mxu0
      %v5595 = vadd.f32 0.0, %v5594
      %5596 = vmatmul.bf16.gmra.mxu0 %v5571
      %v5597 = vpop.f32.mrf.mxu0
      %v5598 = vadd.f32 0.0, %v5597
      %v5599 = vpop.f32.mrf.mxu0
      %v5600 = vadd.f32 0.0, %v5599
      %5601 = vdwg.mxu0
      %v5610 = vunpack.c.l.b16 %v5505
      %v5611 = vunpack.c.l.b16 %v5506
      %v5612 = vunpack.c.l.b16 %v5507
      %v5613 = vunpack.c.l.b16 %v5508
      %v5614 = vunpack.c.l.b16 %v5509
      %v5615 = vunpack.c.l.b16 %v5510
      %v5616 = vunpack.c.l.b16 %v5511
      %v5617 = vunpack.c.l.b16 %v5512
      %v5618 = vpack.c.b16 %v5611, %v5610
      %v5619 = vpack.c.b16 %v5613, %v5612
      %v5620 = vpack.c.b16 %v5615, %v5614
      %v5621 = vpack.c.b16 %v5617, %v5616
      %5622 = vrot.lane.b32.xlu0 %v2410, 32
      %v5623 = vpop.permute.xlu0 %5622
      %5624 = vrot.lane.b32.xlu0 %v2411, 32
      %v5625 = vpop.permute.xlu0 %5624
      %5626 = vrot.lane.b32.xlu0 %v2412, 32
      %v5627 = vpop.permute.xlu0 %5626
      %5628 = vrot.lane.b32.xlu0 %v2413, 32
      %v5629 = vpop.permute.xlu0 %5628
      %v5635 = vsel %vm1968, %v5618, 0
      %v5638 = vsel %vm1968, %v5619, 0
      %v5641 = vsel %vm1968, %v5620, 0
      %v5644 = vsel %vm1968, %v5621, 0
      %5646 = vmatpush.bf16.msra.mxu0 0
      %5647 = vmatpush.bf16.msra.mxu0 0
      %5648 = vmatpush.bf16.msra.mxu0 0
      %5649 = vmatpush.bf16.msra.mxu0 0
      %5650 = vmatpush.bf16.msra.mxu0 %v5629
      %5651 = vmatpush.bf16.msra.mxu0 %v5627
      %5652 = vmatpush.bf16.msra.mxu0 %v5625
      %5653 = vmatpush.bf16.msra.mxu0 %v5623
      %5654 = vmatmul.bf16.gmra.mxu0 %v5635
      %v5655 = vpop.f32.mrf.mxu0
      %v5656 = vadd.f32 0.0, %v5655
      %v5657 = vpop.f32.mrf.mxu0
      %v5658 = vadd.f32 0.0, %v5657
      %5659 = vmatmul.bf16.gmra.mxu0 %v5638
      %v5660 = vpop.f32.mrf.mxu0
      %v5661 = vadd.f32 0.0, %v5660
      %v5662 = vpop.f32.mrf.mxu0
      %v5663 = vadd.f32 0.0, %v5662
      %5664 = vmatmul.bf16.gmra.mxu0 %v5641
      %v5665 = vpop.f32.mrf.mxu0
      %v5666 = vadd.f32 0.0, %v5665
      %v5667 = vpop.f32.mrf.mxu0
      %v5668 = vadd.f32 0.0, %v5667
      %5669 = vmatmul.bf16.gmra.mxu0 %v5644
      %v5670 = vpop.f32.mrf.mxu0
      %v5671 = vadd.f32 0.0, %v5670
      %v5672 = vpop.f32.mrf.mxu0
      %v5673 = vadd.f32 0.0, %v5672
      %5674 = vdwg.mxu0
      %v5683 = vunpack.c.l.b16 %v5513
      %v5684 = vunpack.c.l.b16 %v5514
      %v5685 = vunpack.c.l.b16 %v5515
      %v5686 = vunpack.c.l.b16 %v5516
      %v5687 = vunpack.c.l.b16 %v5517
      %v5688 = vunpack.c.l.b16 %v5518
      %v5689 = vunpack.c.l.b16 %v5519
      %v5690 = vunpack.c.l.b16 %v5520
      %v5691 = vpack.c.b16 %v5684, %v5683
      %v5692 = vpack.c.b16 %v5686, %v5685
      %v5693 = vpack.c.b16 %v5688, %v5687
      %v5694 = vpack.c.b16 %v5690, %v5689
      %5695 = vrot.lane.b32.xlu0 %v2495, 32
      %v5696 = vpop.permute.xlu0 %5695
      %5697 = vrot.lane.b32.xlu0 %v2496, 32
      %v5698 = vpop.permute.xlu0 %5697
      %5699 = vrot.lane.b32.xlu0 %v2497, 32
      %v5700 = vpop.permute.xlu0 %5699
      %5701 = vrot.lane.b32.xlu0 %v2498, 32
      %v5702 = vpop.permute.xlu0 %5701
      %v5708 = vsel %vm1968, %v5691, 0
      %v5711 = vsel %vm1968, %v5692, 0
      %v5714 = vsel %vm1968, %v5693, 0
      %v5717 = vsel %vm1968, %v5694, 0
      %5719 = vmatpush.bf16.msra.mxu0 0
      %5720 = vmatpush.bf16.msra.mxu0 0
      %5721 = vmatpush.bf16.msra.mxu0 0
      %5722 = vmatpush.bf16.msra.mxu0 0
      %5723 = vmatpush.bf16.msra.mxu0 %v5702
      %5724 = vmatpush.bf16.msra.mxu0 %v5700
      %5725 = vmatpush.bf16.msra.mxu0 %v5698
      %5726 = vmatpush.bf16.msra.mxu0 %v5696
      %5727 = vmatmul.bf16.gmra.mxu0 %v5708
      %v5728 = vpop.f32.mrf.mxu0
      %v5729 = vadd.f32 0.0, %v5728
      %v5730 = vpop.f32.mrf.mxu0
      %v5731 = vadd.f32 0.0, %v5730
      %5732 = vmatmul.bf16.gmra.mxu0 %v5711
      %v5733 = vpop.f32.mrf.mxu0
      %v5734 = vadd.f32 0.0, %v5733
      %v5735 = vpop.f32.mrf.mxu0
      %v5736 = vadd.f32 0.0, %v5735
      %5737 = vmatmul.bf16.gmra.mxu0 %v5714
      %v5738 = vpop.f32.mrf.mxu0
      %v5739 = vadd.f32 0.0, %v5738
      %v5740 = vpop.f32.mrf.mxu0
      %v5741 = vadd.f32 0.0, %v5740
      %5742 = vmatmul.bf16.gmra.mxu0 %v5717
      %v5743 = vpop.f32.mrf.mxu0
      %v5744 = vadd.f32 0.0, %v5743
      %v5745 = vpop.f32.mrf.mxu0
      %v5746 = vadd.f32 0.0, %v5745
      %5747 = vdwg.mxu0
      %v5756 = vunpack.c.l.b16 %v5521
      %v5757 = vunpack.c.l.b16 %v5522
      %v5758 = vunpack.c.l.b16 %v5523
      %v5759 = vunpack.c.l.b16 %v5524
      %v5760 = vunpack.c.l.b16 %v5525
      %v5761 = vunpack.c.l.b16 %v5526
      %v5762 = vunpack.c.l.b16 %v5527
      %v5763 = vunpack.c.l.b16 %v5528
      %v5764 = vpack.c.b16 %v5757, %v5756
      %v5765 = vpack.c.b16 %v5759, %v5758
      %v5766 = vpack.c.b16 %v5761, %v5760
      %v5767 = vpack.c.b16 %v5763, %v5762
      %5768 = vrot.lane.b32.xlu0 %v2580, 32
      %v5769 = vpop.permute.xlu0 %5768
      %5770 = vrot.lane.b32.xlu0 %v2581, 32
      %v5771 = vpop.permute.xlu0 %5770
      %5772 = vrot.lane.b32.xlu0 %v2582, 32
      %v5773 = vpop.permute.xlu0 %5772
      %5774 = vrot.lane.b32.xlu0 %v2583, 32
      %v5775 = vpop.permute.xlu0 %5774
      %v5781 = vsel %vm1968, %v5764, 0
      %v5784 = vsel %vm1968, %v5765, 0
      %v5787 = vsel %vm1968, %v5766, 0
      %v5790 = vsel %vm1968, %v5767, 0
      %5792 = vmatpush.bf16.msra.mxu0 0
      %5793 = vmatpush.bf16.msra.mxu0 0
      %5794 = vmatpush.bf16.msra.mxu0 0
      %5795 = vmatpush.bf16.msra.mxu0 0
      %5796 = vmatpush.bf16.msra.mxu0 %v5775
      %5797 = vmatpush.bf16.msra.mxu0 %v5773
      %5798 = vmatpush.bf16.msra.mxu0 %v5771
      %5799 = vmatpush.bf16.msra.mxu0 %v5769
      %5800 = vmatmul.bf16.gmra.mxu0 %v5781
      %v5801 = vpop.f32.mrf.mxu0
      %v5802 = vadd.f32 0.0, %v5801
      %v5803 = vpop.f32.mrf.mxu0
      %v5804 = vadd.f32 0.0, %v5803
      %5805 = vmatmul.bf16.gmra.mxu0 %v5784
      %v5806 = vpop.f32.mrf.mxu0
      %v5807 = vadd.f32 0.0, %v5806
      %v5808 = vpop.f32.mrf.mxu0
      %v5809 = vadd.f32 0.0, %v5808
      %5810 = vmatmul.bf16.gmra.mxu0 %v5787
      %v5811 = vpop.f32.mrf.mxu0
      %v5812 = vadd.f32 0.0, %v5811
      %v5813 = vpop.f32.mrf.mxu0
      %v5814 = vadd.f32 0.0, %v5813
      %5815 = vmatmul.bf16.gmra.mxu0 %v5790
      %v5816 = vpop.f32.mrf.mxu0
      %v5817 = vadd.f32 0.0, %v5816
      %v5818 = vpop.f32.mrf.mxu0
      %v5819 = vadd.f32 0.0, %v5818
      %5820 = vdwg.mxu0
      %v5821 = vrcp.pop %v5403
      %v5822 = vrcp.pop %v5406
      %v5823 = vrcp.pop %v5409
      %v5824 = vrcp.pop %v5412
      %v5825 = vrcp.pop %v5415
      %v5826 = vrcp.pop %v5418
      %v5827 = vrcp.pop %v5421
      %v5828 = vrcp.pop %v5424
      %v5829 = vrcp.pop %v5427
      %v5830 = vrcp.pop %v5430
      %v5831 = vrcp.pop %v5433
      %v5832 = vrcp.pop %v5436
      %v5833 = vrcp.pop %v5439
      %v5834 = vrcp.pop %v5442
      %v5835 = vrcp.pop %v5445
      %v5836 = vrcp.pop %v5448
      %v5837 = vrcp.pop %v5451
      %v5838 = vrcp.pop %v5454
      %v5839 = vrcp.pop %v5457
      %v5840 = vrcp.pop %v5460
      %v5841 = vrcp.pop %v5463
      %v5842 = vrcp.pop %v5466
      %v5843 = vrcp.pop %v5469
      %v5844 = vrcp.pop %v5472
      %v5845 = vrcp.pop %v5475
      %v5846 = vrcp.pop %v5478
      %v5847 = vrcp.pop %v5481
      %v5848 = vrcp.pop %v5484
      %v5849 = vrcp.pop %v5487
      %v5850 = vrcp.pop %v5490
      %v5851 = vrcp.pop %v5493
      %v5852 = vrcp.pop %v5496
      %v5853 = vmul.f32 %v5583, %v5821
      %v5854 = vmul.f32 %v5585, %v5822
      %v5855 = vmul.f32 %v5588, %v5823
      %v5856 = vmul.f32 %v5590, %v5824
      %v5857 = vmul.f32 %v5593, %v5825
      %v5858 = vmul.f32 %v5595, %v5826
      %v5859 = vmul.f32 %v5598, %v5827
      %v5860 = vmul.f32 %v5600, %v5828
      %v5861 = vmul.f32 %v5656, %v5829
      %v5862 = vmul.f32 %v5658, %v5830
      %v5863 = vmul.f32 %v5661, %v5831
      %v5864 = vmul.f32 %v5663, %v5832
      %v5865 = vmul.f32 %v5666, %v5833
      %v5866 = vmul.f32 %v5668, %v5834
      %v5867 = vmul.f32 %v5671, %v5835
      %v5868 = vmul.f32 %v5673, %v5836
      %v5869 = vmul.f32 %v5729, %v5837
      %v5870 = vmul.f32 %v5731, %v5838
      %v5871 = vmul.f32 %v5734, %v5839
      %v5872 = vmul.f32 %v5736, %v5840
      %v5873 = vmul.f32 %v5739, %v5841
      %v5874 = vmul.f32 %v5741, %v5842
      %v5875 = vmul.f32 %v5744, %v5843
      %v5876 = vmul.f32 %v5746, %v5844
      %v5877 = vmul.f32 %v5802, %v5845
      %v5878 = vmul.f32 %v5804, %v5846
      %v5879 = vmul.f32 %v5807, %v5847
      %v5880 = vmul.f32 %v5809, %v5848
      %v5881 = vmul.f32 %v5812, %v5849
      %v5882 = vmul.f32 %v5814, %v5850
      %v5883 = vmul.f32 %v5817, %v5851
      %v5884 = vmul.f32 %v5819, %v5852
      %5917 = vrot.lane.b32.xlu0 %v3725, 32
      %v5918 = vpop.permute.xlu0 %5917
      %5919 = vrot.lane.b32.xlu0 %v3726, 32
      %v5920 = vpop.permute.xlu0 %5919
      %5921 = vrot.lane.b32.xlu0 %v3727, 32
      %v5922 = vpop.permute.xlu0 %5921
      %5923 = vrot.lane.b32.xlu0 %v3728, 32
      %v5924 = vpop.permute.xlu0 %5923
      %5925 = vrot.lane.b32.xlu0 %v3729, 32
      %v5926 = vpop.permute.xlu0 %5925
      %5927 = vrot.lane.b32.xlu0 %v3730, 32
      %v5928 = vpop.permute.xlu0 %5927
      %5929 = vrot.lane.b32.xlu0 %v3731, 32
      %v5930 = vpop.permute.xlu0 %5929
      %5931 = vrot.lane.b32.xlu0 %v3732, 32
      %v5932 = vpop.permute.xlu0 %5931
      %5933 = vrot.lane.b32.xlu0 %v3733, 32
      %v5934 = vpop.permute.xlu0 %5933
      %5935 = vrot.lane.b32.xlu0 %v3734, 32
      %v5936 = vpop.permute.xlu0 %5935
      %5937 = vrot.lane.b32.xlu0 %v3735, 32
      %v5938 = vpop.permute.xlu0 %5937
      %5939 = vrot.lane.b32.xlu0 %v3736, 32
      %v5940 = vpop.permute.xlu0 %5939
      %5941 = vrot.lane.b32.xlu0 %v3737, 32
      %v5942 = vpop.permute.xlu0 %5941
      %5943 = vrot.lane.b32.xlu0 %v3738, 32
      %v5944 = vpop.permute.xlu0 %5943
      %5945 = vrot.lane.b32.xlu0 %v3739, 32
      %v5946 = vpop.permute.xlu0 %5945
      %5947 = vrot.lane.b32.xlu0 %v3740, 32
      %v5948 = vpop.permute.xlu0 %5947
      %5949 = vrot.lane.b32.xlu0 %v3741, 32
      %v5950 = vpop.permute.xlu0 %5949
      %5951 = vrot.lane.b32.xlu0 %v3742, 32
      %v5952 = vpop.permute.xlu0 %5951
      %5953 = vrot.lane.b32.xlu0 %v3743, 32
      %v5954 = vpop.permute.xlu0 %5953
      %5955 = vrot.lane.b32.xlu0 %v3744, 32
      %v5956 = vpop.permute.xlu0 %5955
      %5957 = vrot.lane.b32.xlu0 %v3745, 32
      %v5958 = vpop.permute.xlu0 %5957
      %5959 = vrot.lane.b32.xlu0 %v3746, 32
      %v5960 = vpop.permute.xlu0 %5959
      %5961 = vrot.lane.b32.xlu0 %v3747, 32
      %v5962 = vpop.permute.xlu0 %5961
      %5963 = vrot.lane.b32.xlu0 %v3748, 32
      %v5964 = vpop.permute.xlu0 %5963
      %5965 = vrot.lane.b32.xlu0 %v3749, 32
      %v5966 = vpop.permute.xlu0 %5965
      %5967 = vrot.lane.b32.xlu0 %v3750, 32
      %v5968 = vpop.permute.xlu0 %5967
      %5969 = vrot.lane.b32.xlu0 %v3751, 32
      %v5970 = vpop.permute.xlu0 %5969
      %5971 = vrot.lane.b32.xlu0 %v3752, 32
      %v5972 = vpop.permute.xlu0 %5971
      %5973 = vrot.lane.b32.xlu0 %v3753, 32
      %v5974 = vpop.permute.xlu0 %5973
      %5975 = vrot.lane.b32.xlu0 %v3754, 32
      %v5976 = vpop.permute.xlu0 %5975
      %5977 = vrot.lane.b32.xlu0 %v3755, 32
      %v5978 = vpop.permute.xlu0 %5977
      %5979 = vrot.lane.b32.xlu0 %v3756, 32
      %v5980 = vpop.permute.xlu0 %5979
      %6045 = vrot.lane.b32.xlu0 %v4789, 64
      %v6046 = vpop.permute.xlu0 %6045
      %6047 = vrot.lane.b32.xlu0 %v4790, 64
      %v6048 = vpop.permute.xlu0 %6047
      %6049 = vrot.lane.b32.xlu0 %v4791, 64
      %v6050 = vpop.permute.xlu0 %6049
      %6051 = vrot.lane.b32.xlu0 %v4792, 64
      %v6052 = vpop.permute.xlu0 %6051
      %6053 = vrot.lane.b32.xlu0 %v4793, 64
      %v6054 = vpop.permute.xlu0 %6053
      %6055 = vrot.lane.b32.xlu0 %v4794, 64
      %v6056 = vpop.permute.xlu0 %6055
      %6057 = vrot.lane.b32.xlu0 %v4795, 64
      %v6058 = vpop.permute.xlu0 %6057
      %6059 = vrot.lane.b32.xlu0 %v4796, 64
      %v6060 = vpop.permute.xlu0 %6059
      %6061 = vrot.lane.b32.xlu0 %v4797, 64
      %v6062 = vpop.permute.xlu0 %6061
      %6063 = vrot.lane.b32.xlu0 %v4798, 64
      %v6064 = vpop.permute.xlu0 %6063
      %6065 = vrot.lane.b32.xlu0 %v4799, 64
      %v6066 = vpop.permute.xlu0 %6065
      %6067 = vrot.lane.b32.xlu0 %v4800, 64
      %v6068 = vpop.permute.xlu0 %6067
      %6069 = vrot.lane.b32.xlu0 %v4801, 64
      %v6070 = vpop.permute.xlu0 %6069
      %6071 = vrot.lane.b32.xlu0 %v4802, 64
      %v6072 = vpop.permute.xlu0 %6071
      %6073 = vrot.lane.b32.xlu0 %v4803, 64
      %v6074 = vpop.permute.xlu0 %6073
      %6075 = vrot.lane.b32.xlu0 %v4804, 64
      %v6076 = vpop.permute.xlu0 %6075
      %6077 = vrot.lane.b32.xlu0 %v4805, 64
      %v6078 = vpop.permute.xlu0 %6077
      %6079 = vrot.lane.b32.xlu0 %v4806, 64
      %v6080 = vpop.permute.xlu0 %6079
      %6081 = vrot.lane.b32.xlu0 %v4807, 64
      %v6082 = vpop.permute.xlu0 %6081
      %6083 = vrot.lane.b32.xlu0 %v4808, 64
      %v6084 = vpop.permute.xlu0 %6083
      %6085 = vrot.lane.b32.xlu0 %v4809, 64
      %v6086 = vpop.permute.xlu0 %6085
      %6087 = vrot.lane.b32.xlu0 %v4810, 64
      %v6088 = vpop.permute.xlu0 %6087
      %6089 = vrot.lane.b32.xlu0 %v4811, 64
      %v6090 = vpop.permute.xlu0 %6089
      %6091 = vrot.lane.b32.xlu0 %v4812, 64
      %v6092 = vpop.permute.xlu0 %6091
      %6093 = vrot.lane.b32.xlu0 %v4813, 64
      %v6094 = vpop.permute.xlu0 %6093
      %6095 = vrot.lane.b32.xlu0 %v4814, 64
      %v6096 = vpop.permute.xlu0 %6095
      %6097 = vrot.lane.b32.xlu0 %v4815, 64
      %v6098 = vpop.permute.xlu0 %6097
      %6099 = vrot.lane.b32.xlu0 %v4816, 64
      %v6100 = vpop.permute.xlu0 %6099
      %6101 = vrot.lane.b32.xlu0 %v4817, 64
      %v6102 = vpop.permute.xlu0 %6101
      %6103 = vrot.lane.b32.xlu0 %v4818, 64
      %v6104 = vpop.permute.xlu0 %6103
      %6105 = vrot.lane.b32.xlu0 %v4819, 64
      %v6106 = vpop.permute.xlu0 %6105
      %6107 = vrot.lane.b32.xlu0 %v4820, 64
      %v6108 = vpop.permute.xlu0 %6107
      %6173 = vrot.lane.b32.xlu0 %v5853, 96
      %v6174 = vpop.permute.xlu0 %6173
      %6175 = vrot.lane.b32.xlu0 %v5854, 96
      %v6176 = vpop.permute.xlu0 %6175
      %6177 = vrot.lane.b32.xlu0 %v5855, 96
      %v6178 = vpop.permute.xlu0 %6177
      %6179 = vrot.lane.b32.xlu0 %v5856, 96
      %v6180 = vpop.permute.xlu0 %6179
      %6181 = vrot.lane.b32.xlu0 %v5857, 96
      %v6182 = vpop.permute.xlu0 %6181
      %6183 = vrot.lane.b32.xlu0 %v5858, 96
      %v6184 = vpop.permute.xlu0 %6183
      %6185 = vrot.lane.b32.xlu0 %v5859, 96
      %v6186 = vpop.permute.xlu0 %6185
      %6187 = vrot.lane.b32.xlu0 %v5860, 96
      %v6188 = vpop.permute.xlu0 %6187
      %6189 = vrot.lane.b32.xlu0 %v5861, 96
      %v6190 = vpop.permute.xlu0 %6189
      %6191 = vrot.lane.b32.xlu0 %v5862, 96
      %v6192 = vpop.permute.xlu0 %6191
      %6193 = vrot.lane.b32.xlu0 %v5863, 96
      %v6194 = vpop.permute.xlu0 %6193
      %6195 = vrot.lane.b32.xlu0 %v5864, 96
      %v6196 = vpop.permute.xlu0 %6195
      %6197 = vrot.lane.b32.xlu0 %v5865, 96
      %v6198 = vpop.permute.xlu0 %6197
      %6199 = vrot.lane.b32.xlu0 %v5866, 96
      %v6200 = vpop.permute.xlu0 %6199
      %6201 = vrot.lane.b32.xlu0 %v5867, 96
      %v6202 = vpop.permute.xlu0 %6201
      %6203 = vrot.lane.b32.xlu0 %v5868, 96
      %v6204 = vpop.permute.xlu0 %6203
      %6205 = vrot.lane.b32.xlu0 %v5869, 96
      %v6206 = vpop.permute.xlu0 %6205
      %6207 = vrot.lane.b32.xlu0 %v5870, 96
      %v6208 = vpop.permute.xlu0 %6207
      %6209 = vrot.lane.b32.xlu0 %v5871, 96
      %v6210 = vpop.permute.xlu0 %6209
      %6211 = vrot.lane.b32.xlu0 %v5872, 96
      %v6212 = vpop.permute.xlu0 %6211
      %6213 = vrot.lane.b32.xlu0 %v5873, 96
      %v6214 = vpop.permute.xlu0 %6213
      %6215 = vrot.lane.b32.xlu0 %v5874, 96
      %v6216 = vpop.permute.xlu0 %6215
      %6217 = vrot.lane.b32.xlu0 %v5875, 96
      %v6218 = vpop.permute.xlu0 %6217
      %6219 = vrot.lane.b32.xlu0 %v5876, 96
      %v6220 = vpop.permute.xlu0 %6219
      %6221 = vrot.lane.b32.xlu0 %v5877, 96
      %v6222 = vpop.permute.xlu0 %6221
      %6223 = vrot.lane.b32.xlu0 %v5878, 96
      %v6224 = vpop.permute.xlu0 %6223
      %6225 = vrot.lane.b32.xlu0 %v5879, 96
      %v6226 = vpop.permute.xlu0 %6225
      %6227 = vrot.lane.b32.xlu0 %v5880, 96
      %v6228 = vpop.permute.xlu0 %6227
      %6229 = vrot.lane.b32.xlu0 %v5881, 96
      %v6230 = vpop.permute.xlu0 %6229
      %6231 = vrot.lane.b32.xlu0 %v5882, 96
      %v6232 = vpop.permute.xlu0 %6231
      %6233 = vrot.lane.b32.xlu0 %v5883, 96
      %v6234 = vpop.permute.xlu0 %6233
      %6235 = vrot.lane.b32.xlu0 %v5884, 96
      %v6236 = vpop.permute.xlu0 %6235
      %v6269 = vsel %vm1635, %v2661, %v5918
      %v6270 = vsel %vm1635, %v2662, %v5920
      %v6271 = vsel %vm1635, %v2663, %v5922
      %v6272 = vsel %vm1635, %v2664, %v5924
      %v6273 = vsel %vm1635, %v2665, %v5926
      %v6274 = vsel %vm1635, %v2666, %v5928
      %v6275 = vsel %vm1635, %v2667, %v5930
      %v6276 = vsel %vm1635, %v2668, %v5932
      %v6277 = vsel %vm1635, %v2669, %v5934
      %v6278 = vsel %vm1635, %v2670, %v5936
      %v6279 = vsel %vm1635, %v2671, %v5938
      %v6280 = vsel %vm1635, %v2672, %v5940
      %v6281 = vsel %vm1635, %v2673, %v5942
      %v6282 = vsel %vm1635, %v2674, %v5944
      %v6283 = vsel %vm1635, %v2675, %v5946
      %v6284 = vsel %vm1635, %v2676, %v5948
      %v6285 = vsel %vm1635, %v2677, %v5950
      %v6286 = vsel %vm1635, %v2678, %v5952
      %v6287 = vsel %vm1635, %v2679, %v5954
      %v6288 = vsel %vm1635, %v2680, %v5956
      %v6289 = vsel %vm1635, %v2681, %v5958
      %v6290 = vsel %vm1635, %v2682, %v5960
      %v6291 = vsel %vm1635, %v2683, %v5962
      %v6292 = vsel %vm1635, %v2684, %v5964
      %v6293 = vsel %vm1635, %v2685, %v5966
      %v6294 = vsel %vm1635, %v2686, %v5968
      %v6295 = vsel %vm1635, %v2687, %v5970
      %v6296 = vsel %vm1635, %v2688, %v5972
      %v6297 = vsel %vm1635, %v2689, %v5974
      %v6298 = vsel %vm1635, %v2690, %v5976
      %v6299 = vsel %vm1635, %v2691, %v5978
      %v6300 = vsel %vm1635, %v2692, %v5980
      %v6301 = vsel %vm1968, %v6269, %v6046
      %v6302 = vsel %vm1968, %v6270, %v6048
      %v6303 = vsel %vm1968, %v6271, %v6050
      %v6304 = vsel %vm1968, %v6272, %v6052
      %v6305 = vsel %vm1968, %v6273, %v6054
      %v6306 = vsel %vm1968, %v6274, %v6056
      %v6307 = vsel %vm1968, %v6275, %v6058
      %v6308 = vsel %vm1968, %v6276, %v6060
      %v6309 = vsel %vm1968, %v6277, %v6062
      %v6310 = vsel %vm1968, %v6278, %v6064
      %v6311 = vsel %vm1968, %v6279, %v6066
      %v6312 = vsel %vm1968, %v6280, %v6068
      %v6313 = vsel %vm1968, %v6281, %v6070
      %v6314 = vsel %vm1968, %v6282, %v6072
      %v6315 = vsel %vm1968, %v6283, %v6074
      %v6316 = vsel %vm1968, %v6284, %v6076
      %v6317 = vsel %vm1968, %v6285, %v6078
      %v6318 = vsel %vm1968, %v6286, %v6080
      %v6319 = vsel %vm1968, %v6287, %v6082
      %v6320 = vsel %vm1968, %v6288, %v6084
      %v6321 = vsel %vm1968, %v6289, %v6086
      %v6322 = vsel %vm1968, %v6290, %v6088
      %v6323 = vsel %vm1968, %v6291, %v6090
      %v6324 = vsel %vm1968, %v6292, %v6092
      %v6325 = vsel %vm1968, %v6293, %v6094
      %v6326 = vsel %vm1968, %v6294, %v6096
      %v6327 = vsel %vm1968, %v6295, %v6098
      %v6328 = vsel %vm1968, %v6296, %v6100
      %v6329 = vsel %vm1968, %v6297, %v6102
      %v6330 = vsel %vm1968, %v6298, %v6104
      %v6331 = vsel %vm1968, %v6299, %v6106
      %v6332 = vsel %vm1968, %v6300, %v6108
      %vm6333 = vcmask 785408
      %v6334 = vsel %vm6333, %v6301, %v6174
      %v6335 = vsel %vm6333, %v6302, %v6176
      %v6336 = vsel %vm6333, %v6303, %v6178
      %v6337 = vsel %vm6333, %v6304, %v6180
      %v6338 = vsel %vm6333, %v6305, %v6182
      %v6339 = vsel %vm6333, %v6306, %v6184
      %v6340 = vsel %vm6333, %v6307, %v6186
      %v6341 = vsel %vm6333, %v6308, %v6188
      %v6342 = vsel %vm6333, %v6309, %v6190
      %v6343 = vsel %vm6333, %v6310, %v6192
      %v6344 = vsel %vm6333, %v6311, %v6194
      %v6345 = vsel %vm6333, %v6312, %v6196
      %v6346 = vsel %vm6333, %v6313, %v6198
      %v6347 = vsel %vm6333, %v6314, %v6200
      %v6348 = vsel %vm6333, %v6315, %v6202
      %v6349 = vsel %vm6333, %v6316, %v6204
      %v6350 = vsel %vm6333, %v6317, %v6206
      %v6351 = vsel %vm6333, %v6318, %v6208
      %v6352 = vsel %vm6333, %v6319, %v6210
      %v6353 = vsel %vm6333, %v6320, %v6212
      %v6354 = vsel %vm6333, %v6321, %v6214
      %v6355 = vsel %vm6333, %v6322, %v6216
      %v6356 = vsel %vm6333, %v6323, %v6218
      %v6357 = vsel %vm6333, %v6324, %v6220
      %v6358 = vsel %vm6333, %v6325, %v6222
      %v6359 = vsel %vm6333, %v6326, %v6224
      %v6360 = vsel %vm6333, %v6327, %v6226
      %v6361 = vsel %vm6333, %v6328, %v6228
      %v6362 = vsel %vm6333, %v6329, %v6230
      %v6363 = vsel %vm6333, %v6330, %v6232
      %v6364 = vsel %vm6333, %v6331, %v6234
      %v6365 = vsel %vm6333, %v6332, %v6236
      %v6366 = vpack.c.bf16 %v6335, %v6334
      %v6367 = vpack.c.bf16 %v6337, %v6336
      %v6368 = vpack.c.bf16 %v6339, %v6338
      %v6369 = vpack.c.bf16 %v6341, %v6340
      %v6370 = vpack.c.bf16 %v6343, %v6342
      %v6371 = vpack.c.bf16 %v6345, %v6344
      %v6372 = vpack.c.bf16 %v6347, %v6346
      %v6373 = vpack.c.bf16 %v6349, %v6348
      %v6374 = vpack.c.bf16 %v6351, %v6350
      %v6375 = vpack.c.bf16 %v6353, %v6352
      %v6376 = vpack.c.bf16 %v6355, %v6354
      %v6377 = vpack.c.bf16 %v6357, %v6356
      %v6378 = vpack.c.bf16 %v6359, %v6358
      %v6379 = vpack.c.bf16 %v6361, %v6360
      %v6380 = vpack.c.bf16 %v6363, %v6362
      %v6381 = vpack.c.bf16 %v6365, %v6364
      %v6382 = vld [vmem:[%s4] sm:$0xf]
      %v6383 = vld [vmem:[%s4 + $0x4] sm:$0xf]
      %v6384 = vld [vmem:[%s4 + $0x8] sm:$0xf]
      %v6385 = vld [vmem:[%s4 + $0xc] sm:$0xf]
      %v6386 = vld [vmem:[%s4 + $0x10] sm:$0xf]
      %v6387 = vld [vmem:[%s4 + $0x14] sm:$0xf]
      %v6388 = vld [vmem:[%s4 + $0x18] sm:$0xf]
      %v6389 = vld [vmem:[%s4 + $0x1c] sm:$0xf]
      %v6390 = vld [vmem:[%s4 + $0x20] sm:$0xf]
      %v6391 = vld [vmem:[%s4 + $0x24] sm:$0xf]
      %v6392 = vld [vmem:[%s4 + $0x28] sm:$0xf]
      %v6393 = vld [vmem:[%s4 + $0x2c] sm:$0xf]
      %v6394 = vld [vmem:[%s4 + $0x30] sm:$0xf]
      %v6395 = vld [vmem:[%s4 + $0x34] sm:$0xf]
      %v6396 = vld [vmem:[%s4 + $0x38] sm:$0xf]
      %v6397 = vld [vmem:[%s4 + $0x3c] sm:$0xf]
      %v6414 = vunpack.c.l.b16 %v6382
      %v6415 = vunpack.c.l.b16 %v6383
      %v6416 = vunpack.c.l.b16 %v6384
      %v6417 = vunpack.c.l.b16 %v6385
      %v6418 = vunpack.c.l.b16 %v6386
      %v6419 = vunpack.c.l.b16 %v6387
      %v6420 = vunpack.c.l.b16 %v6388
      %v6421 = vunpack.c.l.b16 %v6389
      %v6422 = vunpack.c.l.b16 %v6390
      %v6423 = vunpack.c.l.b16 %v6391
      %v6424 = vunpack.c.l.b16 %v6392
      %v6425 = vunpack.c.l.b16 %v6393
      %v6426 = vunpack.c.l.b16 %v6394
      %v6427 = vunpack.c.l.b16 %v6395
      %v6428 = vunpack.c.l.b16 %v6396
      %v6429 = vunpack.c.l.b16 %v6397
      %v6430 = vpack.c.b16 %v6415, %v6414
      %v6431 = vpack.c.b16 %v6417, %v6416
      %v6432 = vpack.c.b16 %v6419, %v6418
      %v6433 = vpack.c.b16 %v6421, %v6420
      %v6434 = vpack.c.b16 %v6423, %v6422
      %v6435 = vpack.c.b16 %v6425, %v6424
      %v6436 = vpack.c.b16 %v6427, %v6426
      %v6437 = vpack.c.b16 %v6429, %v6428
      %6446 = vmatpush.bf16.msra.mxu0 %v6437
      %6447 = vmatpush.bf16.msra.mxu0 %v6436
      %6448 = vmatpush.bf16.msra.mxu0 %v6435
      %6449 = vmatpush.bf16.msra.mxu0 %v6434
      %6450 = vmatpush.bf16.msra.mxu0 %v6433
      %6451 = vmatpush.bf16.msra.mxu0 %v6432
      %6452 = vmatpush.bf16.msra.mxu0 %v6431
      %6453 = vmatpush.bf16.msra.mxu0 %v6430
      %6454 = vmatmul.bf16.gmra.mxu0 %v6366
      %v6455 = vpop.f32.mrf.mxu0
      %v6456 = vadd.f32 0.0, %v6455
      %v6457 = vpop.f32.mrf.mxu0
      %v6458 = vadd.f32 0.0, %v6457
      %6459 = vmatmul.bf16.gmra.mxu0 %v6367
      %v6460 = vpop.f32.mrf.mxu0
      %v6461 = vadd.f32 0.0, %v6460
      %v6462 = vpop.f32.mrf.mxu0
      %v6463 = vadd.f32 0.0, %v6462
      %6464 = vmatmul.bf16.gmra.mxu0 %v6368
      %v6465 = vpop.f32.mrf.mxu0
      %v6466 = vadd.f32 0.0, %v6465
      %v6467 = vpop.f32.mrf.mxu0
      %v6468 = vadd.f32 0.0, %v6467
      %6469 = vmatmul.bf16.gmra.mxu0 %v6369
      %v6470 = vpop.f32.mrf.mxu0
      %v6471 = vadd.f32 0.0, %v6470
      %v6472 = vpop.f32.mrf.mxu0
      %v6473 = vadd.f32 0.0, %v6472
      %6474 = vmatmul.bf16.gmra.mxu0 %v6370
      %v6475 = vpop.f32.mrf.mxu0
      %v6476 = vadd.f32 0.0, %v6475
      %v6477 = vpop.f32.mrf.mxu0
      %v6478 = vadd.f32 0.0, %v6477
      %6479 = vmatmul.bf16.gmra.mxu0 %v6371
      %v6480 = vpop.f32.mrf.mxu0
      %v6481 = vadd.f32 0.0, %v6480
      %v6482 = vpop.f32.mrf.mxu0
      %v6483 = vadd.f32 0.0, %v6482
      %6484 = vmatmul.bf16.gmra.mxu0 %v6372
      %v6485 = vpop.f32.mrf.mxu0
      %v6486 = vadd.f32 0.0, %v6485
      %v6487 = vpop.f32.mrf.mxu0
      %v6488 = vadd.f32 0.0, %v6487
      %6489 = vmatmul.bf16.gmra.mxu0 %v6373
      %v6490 = vpop.f32.mrf.mxu0
      %v6491 = vadd.f32 0.0, %v6490
      %v6492 = vpop.f32.mrf.mxu0
      %v6493 = vadd.f32 0.0, %v6492
      %6494 = vmatmul.bf16.gmra.mxu0 %v6374
      %v6495 = vpop.f32.mrf.mxu0
      %v6496 = vadd.f32 0.0, %v6495
      %v6497 = vpop.f32.mrf.mxu0
      %v6498 = vadd.f32 0.0, %v6497
      %6499 = vmatmul.bf16.gmra.mxu0 %v6375
      %v6500 = vpop.f32.mrf.mxu0
      %v6501 = vadd.f32 0.0, %v6500
      %v6502 = vpop.f32.mrf.mxu0
      %v6503 = vadd.f32 0.0, %v6502
      %6504 = vmatmul.bf16.gmra.mxu0 %v6376
      %v6505 = vpop.f32.mrf.mxu0
      %v6506 = vadd.f32 0.0, %v6505
      %v6507 = vpop.f32.mrf.mxu0
      %v6508 = vadd.f32 0.0, %v6507
      %6509 = vmatmul.bf16.gmra.mxu0 %v6377
      %v6510 = vpop.f32.mrf.mxu0
      %v6511 = vadd.f32 0.0, %v6510
      %v6512 = vpop.f32.mrf.mxu0
      %v6513 = vadd.f32 0.0, %v6512
      %6514 = vmatmul.bf16.gmra.mxu0 %v6378
      %v6515 = vpop.f32.mrf.mxu0
      %v6516 = vadd.f32 0.0, %v6515
      %v6517 = vpop.f32.mrf.mxu0
      %v6518 = vadd.f32 0.0, %v6517
      %6519 = vmatmul.bf16.gmra.mxu0 %v6379
      %v6520 = vpop.f32.mrf.mxu0
      %v6521 = vadd.f32 0.0, %v6520
      %v6522 = vpop.f32.mrf.mxu0
      %v6523 = vadd.f32 0.0, %v6522
      %6524 = vmatmul.bf16.gmra.mxu0 %v6380
      %v6525 = vpop.f32.mrf.mxu0
      %v6526 = vadd.f32 0.0, %v6525
      %v6527 = vpop.f32.mrf.mxu0
      %v6528 = vadd.f32 0.0, %v6527
      %6529 = vmatmul.bf16.gmra.mxu0 %v6381
      %v6530 = vpop.f32.mrf.mxu0
      %v6531 = vadd.f32 0.0, %v6530
      %v6532 = vpop.f32.mrf.mxu0
      %v6533 = vadd.f32 0.0, %v6532
      %6534 = vdwg.mxu0
      %v6535 = vadd.f32 %v369, %v6456
      %v6536 = vadd.f32 %v370, %v6458
      %v6537 = vadd.f32 %v371, %v6461
      %v6538 = vadd.f32 %v372, %v6463
      %v6539 = vadd.f32 %v373, %v6466
      %v6540 = vadd.f32 %v374, %v6468
      %v6541 = vadd.f32 %v375, %v6471
      %v6542 = vadd.f32 %v376, %v6473
      %v6543 = vadd.f32 %v377, %v6476
      %v6544 = vadd.f32 %v378, %v6478
      %v6545 = vadd.f32 %v379, %v6481
      %v6546 = vadd.f32 %v380, %v6483
      %v6547 = vadd.f32 %v381, %v6486
      %v6548 = vadd.f32 %v382, %v6488
      %v6549 = vadd.f32 %v383, %v6491
      %v6550 = vadd.f32 %v384, %v6493
      %v6551 = vadd.f32 %v385, %v6496
      %v6552 = vadd.f32 %v386, %v6498
      %v6553 = vadd.f32 %v387, %v6501
      %v6554 = vadd.f32 %v388, %v6503
      %v6555 = vadd.f32 %v389, %v6506
      %v6556 = vadd.f32 %v390, %v6508
      %v6557 = vadd.f32 %v391, %v6511
      %v6558 = vadd.f32 %v392, %v6513
      %v6559 = vadd.f32 %v393, %v6516
      %v6560 = vadd.f32 %v394, %v6518
      %v6561 = vadd.f32 %v395, %v6521
      %v6562 = vadd.f32 %v396, %v6523
      %v6563 = vadd.f32 %v397, %v6526
      %v6564 = vadd.f32 %v398, %v6528
      %v6565 = vadd.f32 %v399, %v6531
      %v6566 = vadd.f32 %v400, %v6533
      %v6567 = vld [vmem:[%s5] sm:$0x1]
      %v6569 = vperm.slane %v6567, 0
      %v6571 = vadd.f32 %v6535, %v6569
      %v6572 = vadd.f32 %v6536, %v6569
      %v6573 = vadd.f32 %v6537, %v6569
      %v6574 = vadd.f32 %v6538, %v6569
      %v6575 = vadd.f32 %v6539, %v6569
      %v6576 = vadd.f32 %v6540, %v6569
      %v6577 = vadd.f32 %v6541, %v6569
      %v6578 = vadd.f32 %v6542, %v6569
      %v6579 = vadd.f32 %v6543, %v6569
      %v6580 = vadd.f32 %v6544, %v6569
      %v6581 = vadd.f32 %v6545, %v6569
      %v6582 = vadd.f32 %v6546, %v6569
      %v6583 = vadd.f32 %v6547, %v6569
      %v6584 = vadd.f32 %v6548, %v6569
      %v6585 = vadd.f32 %v6549, %v6569
      %v6586 = vadd.f32 %v6550, %v6569
      %v6587 = vadd.f32 %v6551, %v6569
      %v6588 = vadd.f32 %v6552, %v6569
      %v6589 = vadd.f32 %v6553, %v6569
      %v6590 = vadd.f32 %v6554, %v6569
      %v6591 = vadd.f32 %v6555, %v6569
      %v6592 = vadd.f32 %v6556, %v6569
      %v6593 = vadd.f32 %v6557, %v6569
      %v6594 = vadd.f32 %v6558, %v6569
      %v6595 = vadd.f32 %v6559, %v6569
      %v6596 = vadd.f32 %v6560, %v6569
      %v6597 = vadd.f32 %v6561, %v6569
      %v6598 = vadd.f32 %v6562, %v6569
      %v6599 = vadd.f32 %v6563, %v6569
      %v6600 = vadd.f32 %v6564, %v6569
      %v6601 = vadd.f32 %v6565, %v6569
      %v6602 = vadd.f32 %v6566, %v6569
      %6603 = vadd.xlane.f32.xlu0 %v6571
      %v6604 = vpop.xlane.xlu0 %6603
      %6605 = vadd.xlane.f32.xlu0 %v6572
      %v6606 = vpop.xlane.xlu0 %6605
      %6607 = vadd.xlane.f32.xlu0 %v6573
      %v6608 = vpop.xlane.xlu0 %6607
      %6609 = vadd.xlane.f32.xlu0 %v6574
      %v6610 = vpop.xlane.xlu0 %6609
      %6611 = vadd.xlane.f32.xlu0 %v6575
      %v6612 = vpop.xlane.xlu0 %6611
      %6613 = vadd.xlane.f32.xlu0 %v6576
      %v6614 = vpop.xlane.xlu0 %6613
      %6615 = vadd.xlane.f32.xlu0 %v6577
      %v6616 = vpop.xlane.xlu0 %6615
      %6617 = vadd.xlane.f32.xlu0 %v6578
      %v6618 = vpop.xlane.xlu0 %6617
      %6619 = vadd.xlane.f32.xlu0 %v6579
      %v6620 = vpop.xlane.xlu0 %6619
      %6621 = vadd.xlane.f32.xlu0 %v6580
      %v6622 = vpop.xlane.xlu0 %6621
      %6623 = vadd.xlane.f32.xlu0 %v6581
      %v6624 = vpop.xlane.xlu0 %6623
      %6625 = vadd.xlane.f32.xlu0 %v6582
      %v6626 = vpop.xlane.xlu0 %6625
      %6627 = vadd.xlane.f32.xlu0 %v6583
      %v6628 = vpop.xlane.xlu0 %6627
      %6629 = vadd.xlane.f32.xlu0 %v6584
      %v6630 = vpop.xlane.xlu0 %6629
      %6631 = vadd.xlane.f32.xlu0 %v6585
      %v6632 = vpop.xlane.xlu0 %6631
      %6633 = vadd.xlane.f32.xlu0 %v6586
      %v6634 = vpop.xlane.xlu0 %6633
      %6635 = vadd.xlane.f32.xlu0 %v6587
      %v6636 = vpop.xlane.xlu0 %6635
      %6637 = vadd.xlane.f32.xlu0 %v6588
      %v6638 = vpop.xlane.xlu0 %6637
      %6639 = vadd.xlane.f32.xlu0 %v6589
      %v6640 = vpop.xlane.xlu0 %6639
      %6641 = vadd.xlane.f32.xlu0 %v6590
      %v6642 = vpop.xlane.xlu0 %6641
      %6643 = vadd.xlane.f32.xlu0 %v6591
      %v6644 = vpop.xlane.xlu0 %6643
      %6645 = vadd.xlane.f32.xlu0 %v6592
      %v6646 = vpop.xlane.xlu0 %6645
      %6647 = vadd.xlane.f32.xlu0 %v6593
      %v6648 = vpop.xlane.xlu0 %6647
      %6649 = vadd.xlane.f32.xlu0 %v6594
      %v6650 = vpop.xlane.xlu0 %6649
      %6651 = vadd.xlane.f32.xlu0 %v6595
      %v6652 = vpop.xlane.xlu0 %6651
      %6653 = vadd.xlane.f32.xlu0 %v6596
      %v6654 = vpop.xlane.xlu0 %6653
      %6655 = vadd.xlane.f32.xlu0 %v6597
      %v6656 = vpop.xlane.xlu0 %6655
      %6657 = vadd.xlane.f32.xlu0 %v6598
      %v6658 = vpop.xlane.xlu0 %6657
      %6659 = vadd.xlane.f32.xlu0 %v6599
      %v6660 = vpop.xlane.xlu0 %6659
      %6661 = vadd.xlane.f32.xlu0 %v6600
      %v6662 = vpop.xlane.xlu0 %6661
      %6663 = vadd.xlane.f32.xlu0 %v6601
      %v6664 = vpop.xlane.xlu0 %6663
      %6665 = vadd.xlane.f32.xlu0 %v6602
      %v6666 = vpop.xlane.xlu0 %6665
      %v6667 = vmul.f32 %v6604, %v471
      %v6668 = vmul.f32 %v6606, %v471
      %v6669 = vmul.f32 %v6608, %v471
      %v6670 = vmul.f32 %v6610, %v471
      %v6671 = vmul.f32 %v6612, %v471
      %v6672 = vmul.f32 %v6614, %v471
      %v6673 = vmul.f32 %v6616, %v471
      %v6674 = vmul.f32 %v6618, %v471
      %v6675 = vmul.f32 %v6620, %v471
      %v6676 = vmul.f32 %v6622, %v471
      %v6677 = vmul.f32 %v6624, %v471
      %v6678 = vmul.f32 %v6626, %v471
      %v6679 = vmul.f32 %v6628, %v471
      %v6680 = vmul.f32 %v6630, %v471
      %v6681 = vmul.f32 %v6632, %v471
      %v6682 = vmul.f32 %v6634, %v471
      %v6683 = vmul.f32 %v6636, %v471
      %v6684 = vmul.f32 %v6638, %v471
      %v6685 = vmul.f32 %v6640, %v471
      %v6686 = vmul.f32 %v6642, %v471
      %v6687 = vmul.f32 %v6644, %v471
      %v6688 = vmul.f32 %v6646, %v471
      %v6689 = vmul.f32 %v6648, %v471
      %v6690 = vmul.f32 %v6650, %v471
      %v6691 = vmul.f32 %v6652, %v471
      %v6692 = vmul.f32 %v6654, %v471
      %v6693 = vmul.f32 %v6656, %v471
      %v6694 = vmul.f32 %v6658, %v471
      %v6695 = vmul.f32 %v6660, %v471
      %v6696 = vmul.f32 %v6662, %v471
      %v6697 = vmul.f32 %v6664, %v471
      %v6698 = vmul.f32 %v6666, %v471
      %v6699 = vsub.f32 %v6571, %v6667
      %v6700 = vsub.f32 %v6572, %v6668
      %v6701 = vsub.f32 %v6573, %v6669
      %v6702 = vsub.f32 %v6574, %v6670
      %v6703 = vsub.f32 %v6575, %v6671
      %v6704 = vsub.f32 %v6576, %v6672
      %v6705 = vsub.f32 %v6577, %v6673
      %v6706 = vsub.f32 %v6578, %v6674
      %v6707 = vsub.f32 %v6579, %v6675
      %v6708 = vsub.f32 %v6580, %v6676
      %v6709 = vsub.f32 %v6581, %v6677
      %v6710 = vsub.f32 %v6582, %v6678
      %v6711 = vsub.f32 %v6583, %v6679
      %v6712 = vsub.f32 %v6584, %v6680
      %v6713 = vsub.f32 %v6585, %v6681
      %v6714 = vsub.f32 %v6586, %v6682
      %v6715 = vsub.f32 %v6587, %v6683
      %v6716 = vsub.f32 %v6588, %v6684
      %v6717 = vsub.f32 %v6589, %v6685
      %v6718 = vsub.f32 %v6590, %v6686
      %v6719 = vsub.f32 %v6591, %v6687
      %v6720 = vsub.f32 %v6592, %v6688
      %v6721 = vsub.f32 %v6593, %v6689
      %v6722 = vsub.f32 %v6594, %v6690
      %v6723 = vsub.f32 %v6595, %v6691
      %v6724 = vsub.f32 %v6596, %v6692
      %v6725 = vsub.f32 %v6597, %v6693
      %v6726 = vsub.f32 %v6598, %v6694
      %v6727 = vsub.f32 %v6599, %v6695
      %v6728 = vsub.f32 %v6600, %v6696
      %v6729 = vsub.f32 %v6601, %v6697
      %v6730 = vsub.f32 %v6602, %v6698
      %v6731 = vmul.f32 %v6699, %v6699
      %v6732 = vmul.f32 %v6700, %v6700
      %v6733 = vmul.f32 %v6701, %v6701
      %v6734 = vmul.f32 %v6702, %v6702
      %v6735 = vmul.f32 %v6703, %v6703
      %v6736 = vmul.f32 %v6704, %v6704
      %v6737 = vmul.f32 %v6705, %v6705
      %v6738 = vmul.f32 %v6706, %v6706
      %v6739 = vmul.f32 %v6707, %v6707
      %v6740 = vmul.f32 %v6708, %v6708
      %v6741 = vmul.f32 %v6709, %v6709
      %v6742 = vmul.f32 %v6710, %v6710
      %v6743 = vmul.f32 %v6711, %v6711
      %v6744 = vmul.f32 %v6712, %v6712
      %v6745 = vmul.f32 %v6713, %v6713
      %v6746 = vmul.f32 %v6714, %v6714
      %v6747 = vmul.f32 %v6715, %v6715
      %v6748 = vmul.f32 %v6716, %v6716
      %v6749 = vmul.f32 %v6717, %v6717
      %v6750 = vmul.f32 %v6718, %v6718
      %v6751 = vmul.f32 %v6719, %v6719
      %v6752 = vmul.f32 %v6720, %v6720
      %v6753 = vmul.f32 %v6721, %v6721
      %v6754 = vmul.f32 %v6722, %v6722
      %v6755 = vmul.f32 %v6723, %v6723
      %v6756 = vmul.f32 %v6724, %v6724
      %v6757 = vmul.f32 %v6725, %v6725
      %v6758 = vmul.f32 %v6726, %v6726
      %v6759 = vmul.f32 %v6727, %v6727
      %v6760 = vmul.f32 %v6728, %v6728
      %v6761 = vmul.f32 %v6729, %v6729
      %v6762 = vmul.f32 %v6730, %v6730
      %6763 = vadd.xlane.f32.xlu0 %v6731
      %v6764 = vpop.xlane.xlu0 %6763
      %6765 = vadd.xlane.f32.xlu0 %v6732
      %v6766 = vpop.xlane.xlu0 %6765
      %6767 = vadd.xlane.f32.xlu0 %v6733
      %v6768 = vpop.xlane.xlu0 %6767
      %6769 = vadd.xlane.f32.xlu0 %v6734
      %v6770 = vpop.xlane.xlu0 %6769
      %6771 = vadd.xlane.f32.xlu0 %v6735
      %v6772 = vpop.xlane.xlu0 %6771
      %6773 = vadd.xlane.f32.xlu0 %v6736
      %v6774 = vpop.xlane.xlu0 %6773
      %6775 = vadd.xlane.f32.xlu0 %v6737
      %v6776 = vpop.xlane.xlu0 %6775
      %6777 = vadd.xlane.f32.xlu0 %v6738
      %v6778 = vpop.xlane.xlu0 %6777
      %6779 = vadd.xlane.f32.xlu0 %v6739
      %v6780 = vpop.xlane.xlu0 %6779
      %6781 = vadd.xlane.f32.xlu0 %v6740
      %v6782 = vpop.xlane.xlu0 %6781
      %6783 = vadd.xlane.f32.xlu0 %v6741
      %v6784 = vpop.xlane.xlu0 %6783
      %6785 = vadd.xlane.f32.xlu0 %v6742
      %v6786 = vpop.xlane.xlu0 %6785
      %6787 = vadd.xlane.f32.xlu0 %v6743
      %v6788 = vpop.xlane.xlu0 %6787
      %6789 = vadd.xlane.f32.xlu0 %v6744
      %v6790 = vpop.xlane.xlu0 %6789
      %6791 = vadd.xlane.f32.xlu0 %v6745
      %v6792 = vpop.xlane.xlu0 %6791
      %6793 = vadd.xlane.f32.xlu0 %v6746
      %v6794 = vpop.xlane.xlu0 %6793
      %6795 = vadd.xlane.f32.xlu0 %v6747
      %v6796 = vpop.xlane.xlu0 %6795
      %6797 = vadd.xlane.f32.xlu0 %v6748
      %v6798 = vpop.xlane.xlu0 %6797
      %6799 = vadd.xlane.f32.xlu0 %v6749
      %v6800 = vpop.xlane.xlu0 %6799
      %6801 = vadd.xlane.f32.xlu0 %v6750
      %v6802 = vpop.xlane.xlu0 %6801
      %6803 = vadd.xlane.f32.xlu0 %v6751
      %v6804 = vpop.xlane.xlu0 %6803
      %6805 = vadd.xlane.f32.xlu0 %v6752
      %v6806 = vpop.xlane.xlu0 %6805
      %6807 = vadd.xlane.f32.xlu0 %v6753
      %v6808 = vpop.xlane.xlu0 %6807
      %6809 = vadd.xlane.f32.xlu0 %v6754
      %v6810 = vpop.xlane.xlu0 %6809
      %6811 = vadd.xlane.f32.xlu0 %v6755
      %v6812 = vpop.xlane.xlu0 %6811
      %6813 = vadd.xlane.f32.xlu0 %v6756
      %v6814 = vpop.xlane.xlu0 %6813
      %6815 = vadd.xlane.f32.xlu0 %v6757
      %v6816 = vpop.xlane.xlu0 %6815
      %6817 = vadd.xlane.f32.xlu0 %v6758
      %v6818 = vpop.xlane.xlu0 %6817
      %6819 = vadd.xlane.f32.xlu0 %v6759
      %v6820 = vpop.xlane.xlu0 %6819
      %6821 = vadd.xlane.f32.xlu0 %v6760
      %v6822 = vpop.xlane.xlu0 %6821
      %6823 = vadd.xlane.f32.xlu0 %v6761
      %v6824 = vpop.xlane.xlu0 %6823
      %6825 = vadd.xlane.f32.xlu0 %v6762
      %v6826 = vpop.xlane.xlu0 %6825
      %v6827 = vmul.f32 %v6764, %v471
      %v6828 = vmul.f32 %v6766, %v471
      %v6829 = vmul.f32 %v6768, %v471
      %v6830 = vmul.f32 %v6770, %v471
      %v6831 = vmul.f32 %v6772, %v471
      %v6832 = vmul.f32 %v6774, %v471
      %v6833 = vmul.f32 %v6776, %v471
      %v6834 = vmul.f32 %v6778, %v471
      %v6835 = vmul.f32 %v6780, %v471
      %v6836 = vmul.f32 %v6782, %v471
      %v6837 = vmul.f32 %v6784, %v471
      %v6838 = vmul.f32 %v6786, %v471
      %v6839 = vmul.f32 %v6788, %v471
      %v6840 = vmul.f32 %v6790, %v471
      %v6841 = vmul.f32 %v6792, %v471
      %v6842 = vmul.f32 %v6794, %v471
      %v6843 = vmul.f32 %v6796, %v471
      %v6844 = vmul.f32 %v6798, %v471
      %v6845 = vmul.f32 %v6800, %v471
      %v6846 = vmul.f32 %v6802, %v471
      %v6847 = vmul.f32 %v6804, %v471
      %v6848 = vmul.f32 %v6806, %v471
      %v6849 = vmul.f32 %v6808, %v471
      %v6850 = vmul.f32 %v6810, %v471
      %v6851 = vmul.f32 %v6812, %v471
      %v6852 = vmul.f32 %v6814, %v471
      %v6853 = vmul.f32 %v6816, %v471
      %v6854 = vmul.f32 %v6818, %v471
      %v6855 = vmul.f32 %v6820, %v471
      %v6856 = vmul.f32 %v6822, %v471
      %v6857 = vmul.f32 %v6824, %v471
      %v6858 = vmul.f32 %v6826, %v471
      %v6859 = vadd.f32 %v6827, 1e-05
      %v6860 = vadd.f32 %v6828, 1e-05
      %v6861 = vadd.f32 %v6829, 1e-05
      %v6862 = vadd.f32 %v6830, 1e-05
      %v6863 = vadd.f32 %v6831, 1e-05
      %v6864 = vadd.f32 %v6832, 1e-05
      %v6865 = vadd.f32 %v6833, 1e-05
      %v6866 = vadd.f32 %v6834, 1e-05
      %v6867 = vadd.f32 %v6835, 1e-05
      %v6868 = vadd.f32 %v6836, 1e-05
      %v6869 = vadd.f32 %v6837, 1e-05
      %v6870 = vadd.f32 %v6838, 1e-05
      %v6871 = vadd.f32 %v6839, 1e-05
      %v6872 = vadd.f32 %v6840, 1e-05
      %v6873 = vadd.f32 %v6841, 1e-05
      %v6874 = vadd.f32 %v6842, 1e-05
      %v6875 = vadd.f32 %v6843, 1e-05
      %v6876 = vadd.f32 %v6844, 1e-05
      %v6877 = vadd.f32 %v6845, 1e-05
      %v6878 = vadd.f32 %v6846, 1e-05
      %v6879 = vadd.f32 %v6847, 1e-05
      %v6880 = vadd.f32 %v6848, 1e-05
      %v6881 = vadd.f32 %v6849, 1e-05
      %v6882 = vadd.f32 %v6850, 1e-05
      %v6883 = vadd.f32 %v6851, 1e-05
      %v6884 = vadd.f32 %v6852, 1e-05
      %v6885 = vadd.f32 %v6853, 1e-05
      %v6886 = vadd.f32 %v6854, 1e-05
      %v6887 = vadd.f32 %v6855, 1e-05
      %v6888 = vadd.f32 %v6856, 1e-05
      %v6889 = vadd.f32 %v6857, 1e-05
      %v6890 = vadd.f32 %v6858, 1e-05
      %v6891 = vrsqrt.pop %v6859
      %v6892 = vmul.f32 %v6891, %v6859
      %v6893 = vmul.f32 %v6892, %v6891
      %v6894 = vmul.f32 0.5, %v6893
      %v6895 = vsub.f32 1.5, %v6894
      %v6896 = vmul.f32 %v6891, %v6895
      %vm6897 = vweird.f32 %v6859
      %vm6898 = vweird.f32 %v6891
      %vm6899 = vmor %vm6897, %vm6898
      %v6900 = vsel %vm6899, %v6891, %v6896
      %v6901 = vrsqrt.pop %v6860
      %v6902 = vmul.f32 %v6901, %v6860
      %v6903 = vmul.f32 %v6902, %v6901
      %v6904 = vmul.f32 0.5, %v6903
      %v6905 = vsub.f32 1.5, %v6904
      %v6906 = vmul.f32 %v6901, %v6905
      %vm6907 = vweird.f32 %v6860
      %vm6908 = vweird.f32 %v6901
      %vm6909 = vmor %vm6907, %vm6908
      %v6910 = vsel %vm6909, %v6901, %v6906
      %v6911 = vrsqrt.pop %v6861
      %v6912 = vmul.f32 %v6911, %v6861
      %v6913 = vmul.f32 %v6912, %v6911
      %v6914 = vmul.f32 0.5, %v6913
      %v6915 = vsub.f32 1.5, %v6914
      %v6916 = vmul.f32 %v6911, %v6915
      %vm6917 = vweird.f32 %v6861
      %vm6918 = vweird.f32 %v6911
      %vm6919 = vmor %vm6917, %vm6918
      %v6920 = vsel %vm6919, %v6911, %v6916
      %v6921 = vrsqrt.pop %v6862
      %v6922 = vmul.f32 %v6921, %v6862
      %v6923 = vmul.f32 %v6922, %v6921
      %v6924 = vmul.f32 0.5, %v6923
      %v6925 = vsub.f32 1.5, %v6924
      %v6926 = vmul.f32 %v6921, %v6925
      %vm6927 = vweird.f32 %v6862
      %vm6928 = vweird.f32 %v6921
      %vm6929 = vmor %vm6927, %vm6928
      %v6930 = vsel %vm6929, %v6921, %v6926
      %v6931 = vrsqrt.pop %v6863
      %v6932 = vmul.f32 %v6931, %v6863
      %v6933 = vmul.f32 %v6932, %v6931
      %v6934 = vmul.f32 0.5, %v6933
      %v6935 = vsub.f32 1.5, %v6934
      %v6936 = vmul.f32 %v6931, %v6935
      %vm6937 = vweird.f32 %v6863
      %vm6938 = vweird.f32 %v6931
      %vm6939 = vmor %vm6937, %vm6938
      %v6940 = vsel %vm6939, %v6931, %v6936
      %v6941 = vrsqrt.pop %v6864
      %v6942 = vmul.f32 %v6941, %v6864
      %v6943 = vmul.f32 %v6942, %v6941
      %v6944 = vmul.f32 0.5, %v6943
      %v6945 = vsub.f32 1.5, %v6944
      %v6946 = vmul.f32 %v6941, %v6945
      %vm6947 = vweird.f32 %v6864
      %vm6948 = vweird.f32 %v6941
      %vm6949 = vmor %vm6947, %vm6948
      %v6950 = vsel %vm6949, %v6941, %v6946
      %v6951 = vrsqrt.pop %v6865
      %v6952 = vmul.f32 %v6951, %v6865
      %v6953 = vmul.f32 %v6952, %v6951
      %v6954 = vmul.f32 0.5, %v6953
      %v6955 = vsub.f32 1.5, %v6954
      %v6956 = vmul.f32 %v6951, %v6955
      %vm6957 = vweird.f32 %v6865
      %vm6958 = vweird.f32 %v6951
      %vm6959 = vmor %vm6957, %vm6958
      %v6960 = vsel %vm6959, %v6951, %v6956
      %v6961 = vrsqrt.pop %v6866
      %v6962 = vmul.f32 %v6961, %v6866
      %v6963 = vmul.f32 %v6962, %v6961
      %v6964 = vmul.f32 0.5, %v6963
      %v6965 = vsub.f32 1.5, %v6964
      %v6966 = vmul.f32 %v6961, %v6965
      %vm6967 = vweird.f32 %v6866
      %vm6968 = vweird.f32 %v6961
      %vm6969 = vmor %vm6967, %vm6968
      %v6970 = vsel %vm6969, %v6961, %v6966
      %v6971 = vrsqrt.pop %v6867
      %v6972 = vmul.f32 %v6971, %v6867
      %v6973 = vmul.f32 %v6972, %v6971
      %v6974 = vmul.f32 0.5, %v6973
      %v6975 = vsub.f32 1.5, %v6974
      %v6976 = vmul.f32 %v6971, %v6975
      %vm6977 = vweird.f32 %v6867
      %vm6978 = vweird.f32 %v6971
      %vm6979 = vmor %vm6977, %vm6978
      %v6980 = vsel %vm6979, %v6971, %v6976
      %v6981 = vrsqrt.pop %v6868
      %v6982 = vmul.f32 %v6981, %v6868
      %v6983 = vmul.f32 %v6982, %v6981
      %v6984 = vmul.f32 0.5, %v6983
      %v6985 = vsub.f32 1.5, %v6984
      %v6986 = vmul.f32 %v6981, %v6985
      %vm6987 = vweird.f32 %v6868
      %vm6988 = vweird.f32 %v6981
      %vm6989 = vmor %vm6987, %vm6988
      %v6990 = vsel %vm6989, %v6981, %v6986
      %v6991 = vrsqrt.pop %v6869
      %v6992 = vmul.f32 %v6991, %v6869
      %v6993 = vmul.f32 %v6992, %v6991
      %v6994 = vmul.f32 0.5, %v6993
      %v6995 = vsub.f32 1.5, %v6994
      %v6996 = vmul.f32 %v6991, %v6995
      %vm6997 = vweird.f32 %v6869
      %vm6998 = vweird.f32 %v6991
      %vm6999 = vmor %vm6997, %vm6998
      %v7000 = vsel %vm6999, %v6991, %v6996
      %v7001 = vrsqrt.pop %v6870
      %v7002 = vmul.f32 %v7001, %v6870
      %v7003 = vmul.f32 %v7002, %v7001
      %v7004 = vmul.f32 0.5, %v7003
      %v7005 = vsub.f32 1.5, %v7004
      %v7006 = vmul.f32 %v7001, %v7005
      %vm7007 = vweird.f32 %v6870
      %vm7008 = vweird.f32 %v7001
      %vm7009 = vmor %vm7007, %vm7008
      %v7010 = vsel %vm7009, %v7001, %v7006
      %v7011 = vrsqrt.pop %v6871
      %v7012 = vmul.f32 %v7011, %v6871
      %v7013 = vmul.f32 %v7012, %v7011
      %v7014 = vmul.f32 0.5, %v7013
      %v7015 = vsub.f32 1.5, %v7014
      %v7016 = vmul.f32 %v7011, %v7015
      %vm7017 = vweird.f32 %v6871
      %vm7018 = vweird.f32 %v7011
      %vm7019 = vmor %vm7017, %vm7018
      %v7020 = vsel %vm7019, %v7011, %v7016
      %v7021 = vrsqrt.pop %v6872
      %v7022 = vmul.f32 %v7021, %v6872
      %v7023 = vmul.f32 %v7022, %v7021
      %v7024 = vmul.f32 0.5, %v7023
      %v7025 = vsub.f32 1.5, %v7024
      %v7026 = vmul.f32 %v7021, %v7025
      %vm7027 = vweird.f32 %v6872
      %vm7028 = vweird.f32 %v7021
      %vm7029 = vmor %vm7027, %vm7028
      %v7030 = vsel %vm7029, %v7021, %v7026
      %v7031 = vrsqrt.pop %v6873
      %v7032 = vmul.f32 %v7031, %v6873
      %v7033 = vmul.f32 %v7032, %v7031
      %v7034 = vmul.f32 0.5, %v7033
      %v7035 = vsub.f32 1.5, %v7034
      %v7036 = vmul.f32 %v7031, %v7035
      %vm7037 = vweird.f32 %v6873
      %vm7038 = vweird.f32 %v7031
      %vm7039 = vmor %vm7037, %vm7038
      %v7040 = vsel %vm7039, %v7031, %v7036
      %v7041 = vrsqrt.pop %v6874
      %v7042 = vmul.f32 %v7041, %v6874
      %v7043 = vmul.f32 %v7042, %v7041
      %v7044 = vmul.f32 0.5, %v7043
      %v7045 = vsub.f32 1.5, %v7044
      %v7046 = vmul.f32 %v7041, %v7045
      %vm7047 = vweird.f32 %v6874
      %vm7048 = vweird.f32 %v7041
      %vm7049 = vmor %vm7047, %vm7048
      %v7050 = vsel %vm7049, %v7041, %v7046
      %v7051 = vrsqrt.pop %v6875
      %v7052 = vmul.f32 %v7051, %v6875
      %v7053 = vmul.f32 %v7052, %v7051
      %v7054 = vmul.f32 0.5, %v7053
      %v7055 = vsub.f32 1.5, %v7054
      %v7056 = vmul.f32 %v7051, %v7055
      %vm7057 = vweird.f32 %v6875
      %vm7058 = vweird.f32 %v7051
      %vm7059 = vmor %vm7057, %vm7058
      %v7060 = vsel %vm7059, %v7051, %v7056
      %v7061 = vrsqrt.pop %v6876
      %v7062 = vmul.f32 %v7061, %v6876
      %v7063 = vmul.f32 %v7062, %v7061
      %v7064 = vmul.f32 0.5, %v7063
      %v7065 = vsub.f32 1.5, %v7064
      %v7066 = vmul.f32 %v7061, %v7065
      %vm7067 = vweird.f32 %v6876
      %vm7068 = vweird.f32 %v7061
      %vm7069 = vmor %vm7067, %vm7068
      %v7070 = vsel %vm7069, %v7061, %v7066
      %v7071 = vrsqrt.pop %v6877
      %v7072 = vmul.f32 %v7071, %v6877
      %v7073 = vmul.f32 %v7072, %v7071
      %v7074 = vmul.f32 0.5, %v7073
      %v7075 = vsub.f32 1.5, %v7074
      %v7076 = vmul.f32 %v7071, %v7075
      %vm7077 = vweird.f32 %v6877
      %vm7078 = vweird.f32 %v7071
      %vm7079 = vmor %vm7077, %vm7078
      %v7080 = vsel %vm7079, %v7071, %v7076
      %v7081 = vrsqrt.pop %v6878
      %v7082 = vmul.f32 %v7081, %v6878
      %v7083 = vmul.f32 %v7082, %v7081
      %v7084 = vmul.f32 0.5, %v7083
      %v7085 = vsub.f32 1.5, %v7084
      %v7086 = vmul.f32 %v7081, %v7085
      %vm7087 = vweird.f32 %v6878
      %vm7088 = vweird.f32 %v7081
      %vm7089 = vmor %vm7087, %vm7088
      %v7090 = vsel %vm7089, %v7081, %v7086
      %v7091 = vrsqrt.pop %v6879
      %v7092 = vmul.f32 %v7091, %v6879
      %v7093 = vmul.f32 %v7092, %v7091
      %v7094 = vmul.f32 0.5, %v7093
      %v7095 = vsub.f32 1.5, %v7094
      %v7096 = vmul.f32 %v7091, %v7095
      %vm7097 = vweird.f32 %v6879
      %vm7098 = vweird.f32 %v7091
      %vm7099 = vmor %vm7097, %vm7098
      %v7100 = vsel %vm7099, %v7091, %v7096
      %v7101 = vrsqrt.pop %v6880
      %v7102 = vmul.f32 %v7101, %v6880
      %v7103 = vmul.f32 %v7102, %v7101
      %v7104 = vmul.f32 0.5, %v7103
      %v7105 = vsub.f32 1.5, %v7104
      %v7106 = vmul.f32 %v7101, %v7105
      %vm7107 = vweird.f32 %v6880
      %vm7108 = vweird.f32 %v7101
      %vm7109 = vmor %vm7107, %vm7108
      %v7110 = vsel %vm7109, %v7101, %v7106
      %v7111 = vrsqrt.pop %v6881
      %v7112 = vmul.f32 %v7111, %v6881
      %v7113 = vmul.f32 %v7112, %v7111
      %v7114 = vmul.f32 0.5, %v7113
      %v7115 = vsub.f32 1.5, %v7114
      %v7116 = vmul.f32 %v7111, %v7115
      %vm7117 = vweird.f32 %v6881
      %vm7118 = vweird.f32 %v7111
      %vm7119 = vmor %vm7117, %vm7118
      %v7120 = vsel %vm7119, %v7111, %v7116
      %v7121 = vrsqrt.pop %v6882
      %v7122 = vmul.f32 %v7121, %v6882
      %v7123 = vmul.f32 %v7122, %v7121
      %v7124 = vmul.f32 0.5, %v7123
      %v7125 = vsub.f32 1.5, %v7124
      %v7126 = vmul.f32 %v7121, %v7125
      %vm7127 = vweird.f32 %v6882
      %vm7128 = vweird.f32 %v7121
      %vm7129 = vmor %vm7127, %vm7128
      %v7130 = vsel %vm7129, %v7121, %v7126
      %v7131 = vrsqrt.pop %v6883
      %v7132 = vmul.f32 %v7131, %v6883
      %v7133 = vmul.f32 %v7132, %v7131
      %v7134 = vmul.f32 0.5, %v7133
      %v7135 = vsub.f32 1.5, %v7134
      %v7136 = vmul.f32 %v7131, %v7135
      %vm7137 = vweird.f32 %v6883
      %vm7138 = vweird.f32 %v7131
      %vm7139 = vmor %vm7137, %vm7138
      %v7140 = vsel %vm7139, %v7131, %v7136
      %v7141 = vrsqrt.pop %v6884
      %v7142 = vmul.f32 %v7141, %v6884
      %v7143 = vmul.f32 %v7142, %v7141
      %v7144 = vmul.f32 0.5, %v7143
      %v7145 = vsub.f32 1.5, %v7144
      %v7146 = vmul.f32 %v7141, %v7145
      %vm7147 = vweird.f32 %v6884
      %vm7148 = vweird.f32 %v7141
      %vm7149 = vmor %vm7147, %vm7148
      %v7150 = vsel %vm7149, %v7141, %v7146
      %v7151 = vrsqrt.pop %v6885
      %v7152 = vmul.f32 %v7151, %v6885
      %v7153 = vmul.f32 %v7152, %v7151
      %v7154 = vmul.f32 0.5, %v7153
      %v7155 = vsub.f32 1.5, %v7154
      %v7156 = vmul.f32 %v7151, %v7155
      %vm7157 = vweird.f32 %v6885
      %vm7158 = vweird.f32 %v7151
      %vm7159 = vmor %vm7157, %vm7158
      %v7160 = vsel %vm7159, %v7151, %v7156
      %v7161 = vrsqrt.pop %v6886
      %v7162 = vmul.f32 %v7161, %v6886
      %v7163 = vmul.f32 %v7162, %v7161
      %v7164 = vmul.f32 0.5, %v7163
      %v7165 = vsub.f32 1.5, %v7164
      %v7166 = vmul.f32 %v7161, %v7165
      %vm7167 = vweird.f32 %v6886
      %vm7168 = vweird.f32 %v7161
      %vm7169 = vmor %vm7167, %vm7168
      %v7170 = vsel %vm7169, %v7161, %v7166
      %v7171 = vrsqrt.pop %v6887
      %v7172 = vmul.f32 %v7171, %v6887
      %v7173 = vmul.f32 %v7172, %v7171
      %v7174 = vmul.f32 0.5, %v7173
      %v7175 = vsub.f32 1.5, %v7174
      %v7176 = vmul.f32 %v7171, %v7175
      %vm7177 = vweird.f32 %v6887
      %vm7178 = vweird.f32 %v7171
      %vm7179 = vmor %vm7177, %vm7178
      %v7180 = vsel %vm7179, %v7171, %v7176
      %v7181 = vrsqrt.pop %v6888
      %v7182 = vmul.f32 %v7181, %v6888
      %v7183 = vmul.f32 %v7182, %v7181
      %v7184 = vmul.f32 0.5, %v7183
      %v7185 = vsub.f32 1.5, %v7184
      %v7186 = vmul.f32 %v7181, %v7185
      %vm7187 = vweird.f32 %v6888
      %vm7188 = vweird.f32 %v7181
      %vm7189 = vmor %vm7187, %vm7188
      %v7190 = vsel %vm7189, %v7181, %v7186
      %v7191 = vrsqrt.pop %v6889
      %v7192 = vmul.f32 %v7191, %v6889
      %v7193 = vmul.f32 %v7192, %v7191
      %v7194 = vmul.f32 0.5, %v7193
      %v7195 = vsub.f32 1.5, %v7194
      %v7196 = vmul.f32 %v7191, %v7195
      %vm7197 = vweird.f32 %v6889
      %vm7198 = vweird.f32 %v7191
      %vm7199 = vmor %vm7197, %vm7198
      %v7200 = vsel %vm7199, %v7191, %v7196
      %v7201 = vrsqrt.pop %v6890
      %v7202 = vmul.f32 %v7201, %v6890
      %v7203 = vmul.f32 %v7202, %v7201
      %v7204 = vmul.f32 0.5, %v7203
      %v7205 = vsub.f32 1.5, %v7204
      %v7206 = vmul.f32 %v7201, %v7205
      %vm7207 = vweird.f32 %v6890
      %vm7208 = vweird.f32 %v7201
      %vm7209 = vmor %vm7207, %vm7208
      %v7210 = vsel %vm7209, %v7201, %v7206
      %v7211 = vmul.f32 %v6699, %v6900
      %v7212 = vmul.f32 %v6700, %v6910
      %v7213 = vmul.f32 %v6701, %v6920
      %v7214 = vmul.f32 %v6702, %v6930
      %v7215 = vmul.f32 %v6703, %v6940
      %v7216 = vmul.f32 %v6704, %v6950
      %v7217 = vmul.f32 %v6705, %v6960
      %v7218 = vmul.f32 %v6706, %v6970
      %v7219 = vmul.f32 %v6707, %v6980
      %v7220 = vmul.f32 %v6708, %v6990
      %v7221 = vmul.f32 %v6709, %v7000
      %v7222 = vmul.f32 %v6710, %v7010
      %v7223 = vmul.f32 %v6711, %v7020
      %v7224 = vmul.f32 %v6712, %v7030
      %v7225 = vmul.f32 %v6713, %v7040
      %v7226 = vmul.f32 %v6714, %v7050
      %v7227 = vmul.f32 %v6715, %v7060
      %v7228 = vmul.f32 %v6716, %v7070
      %v7229 = vmul.f32 %v6717, %v7080
      %v7230 = vmul.f32 %v6718, %v7090
      %v7231 = vmul.f32 %v6719, %v7100
      %v7232 = vmul.f32 %v6720, %v7110
      %v7233 = vmul.f32 %v6721, %v7120
      %v7234 = vmul.f32 %v6722, %v7130
      %v7235 = vmul.f32 %v6723, %v7140
      %v7236 = vmul.f32 %v6724, %v7150
      %v7237 = vmul.f32 %v6725, %v7160
      %v7238 = vmul.f32 %v6726, %v7170
      %v7239 = vmul.f32 %v6727, %v7180
      %v7240 = vmul.f32 %v6728, %v7190
      %v7241 = vmul.f32 %v6729, %v7200
      %v7242 = vmul.f32 %v6730, %v7210
      %v7243 = vpack.c.bf16 %v7212, %v7211
      %v7244 = vpack.c.bf16 %v7214, %v7213
      %v7245 = vpack.c.bf16 %v7216, %v7215
      %v7246 = vpack.c.bf16 %v7218, %v7217
      %v7247 = vpack.c.bf16 %v7220, %v7219
      %v7248 = vpack.c.bf16 %v7222, %v7221
      %v7249 = vpack.c.bf16 %v7224, %v7223
      %v7250 = vpack.c.bf16 %v7226, %v7225
      %v7251 = vpack.c.bf16 %v7228, %v7227
      %v7252 = vpack.c.bf16 %v7230, %v7229
      %v7253 = vpack.c.bf16 %v7232, %v7231
      %v7254 = vpack.c.bf16 %v7234, %v7233
      %v7255 = vpack.c.bf16 %v7236, %v7235
      %v7256 = vpack.c.bf16 %v7238, %v7237
      %v7257 = vpack.c.bf16 %v7240, %v7239
      %v7258 = vpack.c.bf16 %v7242, %v7241
      %v7259 = vld [vmem:[%s6] sm:$0xff]
      %v7260 = vld [vmem:[%s6 + $0x8] sm:$0xff]
      %v7261 = vld [vmem:[%s6 + $0x10] sm:$0xff]
      %v7262 = vld [vmem:[%s6 + $0x18] sm:$0xff]
      %v7263 = vld [vmem:[%s6 + $0x20] sm:$0xff]
      %v7264 = vld [vmem:[%s6 + $0x28] sm:$0xff]
      %v7265 = vld [vmem:[%s6 + $0x30] sm:$0xff]
      %v7266 = vld [vmem:[%s6 + $0x38] sm:$0xff]
      %v7267 = vld [vmem:[%s6 + $0x40] sm:$0xff]
      %v7268 = vld [vmem:[%s6 + $0x48] sm:$0xff]
      %v7269 = vld [vmem:[%s6 + $0x50] sm:$0xff]
      %v7270 = vld [vmem:[%s6 + $0x58] sm:$0xff]
      %v7271 = vld [vmem:[%s6 + $0x60] sm:$0xff]
      %v7272 = vld [vmem:[%s6 + $0x68] sm:$0xff]
      %v7273 = vld [vmem:[%s6 + $0x70] sm:$0xff]
      %v7274 = vld [vmem:[%s6 + $0x78] sm:$0xff]
      %v7275 = vld [vmem:[%s6 + $0x80] sm:$0xff]
      %v7276 = vld [vmem:[%s6 + $0x88] sm:$0xff]
      %v7277 = vld [vmem:[%s6 + $0x90] sm:$0xff]
      %v7278 = vld [vmem:[%s6 + $0x98] sm:$0xff]
      %v7279 = vld [vmem:[%s6 + $0xa0] sm:$0xff]
      %v7280 = vld [vmem:[%s6 + $0xa8] sm:$0xff]
      %v7281 = vld [vmem:[%s6 + $0xb0] sm:$0xff]
      %v7282 = vld [vmem:[%s6 + $0xb8] sm:$0xff]
      %v7283 = vld [vmem:[%s6 + $0xc0] sm:$0xff]
      %v7284 = vld [vmem:[%s6 + $0xc8] sm:$0xff]
      %v7285 = vld [vmem:[%s6 + $0xd0] sm:$0xff]
      %v7286 = vld [vmem:[%s6 + $0xd8] sm:$0xff]
      %v7287 = vld [vmem:[%s6 + $0xe0] sm:$0xff]
      %v7288 = vld [vmem:[%s6 + $0xe8] sm:$0xff]
      %v7289 = vld [vmem:[%s6 + $0xf0] sm:$0xff]
      %v7290 = vld [vmem:[%s6 + $0xf8] sm:$0xff]
      %v7291 = vld [vmem:[%s7] sm:$0xf]
      %v7293 = vperm.slane %v7291, 0
      %v7294 = vperm.slane %v7291, 1
      %v7295 = vperm.slane %v7291, 2
      %v7296 = vperm.slane %v7291, 3
      %v7333 = vunpack.c.l.b16 %v7259
      %v7334 = vunpack.c.h.b16 %v7259
      %v7335 = vunpack.c.l.b16 %v7260
      %v7336 = vunpack.c.h.b16 %v7260
      %v7337 = vunpack.c.l.b16 %v7261
      %v7338 = vunpack.c.h.b16 %v7261
      %v7339 = vunpack.c.l.b16 %v7262
      %v7340 = vunpack.c.h.b16 %v7262
      %v7341 = vunpack.c.l.b16 %v7263
      %v7342 = vunpack.c.h.b16 %v7263
      %v7343 = vunpack.c.l.b16 %v7264
      %v7344 = vunpack.c.h.b16 %v7264
      %v7345 = vunpack.c.l.b16 %v7265
      %v7346 = vunpack.c.h.b16 %v7265
      %v7347 = vunpack.c.l.b16 %v7266
      %v7348 = vunpack.c.h.b16 %v7266
      %v7349 = vunpack.c.l.b16 %v7267
      %v7350 = vunpack.c.h.b16 %v7267
      %v7351 = vunpack.c.l.b16 %v7268
      %v7352 = vunpack.c.h.b16 %v7268
      %v7353 = vunpack.c.l.b16 %v7269
      %v7354 = vunpack.c.h.b16 %v7269
      %v7355 = vunpack.c.l.b16 %v7270
      %v7356 = vunpack.c.h.b16 %v7270
      %v7357 = vunpack.c.l.b16 %v7271
      %v7358 = vunpack.c.h.b16 %v7271
      %v7359 = vunpack.c.l.b16 %v7272
      %v7360 = vunpack.c.h.b16 %v7272
      %v7361 = vunpack.c.l.b16 %v7273
      %v7362 = vunpack.c.h.b16 %v7273
      %v7363 = vunpack.c.l.b16 %v7274
      %v7364 = vunpack.c.h.b16 %v7274
      %v7365 = vunpack.c.l.b16 %v7275
      %v7366 = vunpack.c.h.b16 %v7275
      %v7367 = vunpack.c.l.b16 %v7276
      %v7368 = vunpack.c.h.b16 %v7276
      %v7369 = vunpack.c.l.b16 %v7277
      %v7370 = vunpack.c.h.b16 %v7277
      %v7371 = vunpack.c.l.b16 %v7278
      %v7372 = vunpack.c.h.b16 %v7278
      %v7373 = vunpack.c.l.b16 %v7279
      %v7374 = vunpack.c.h.b16 %v7279
      %v7375 = vunpack.c.l.b16 %v7280
      %v7376 = vunpack.c.h.b16 %v7280
      %v7377 = vunpack.c.l.b16 %v7281
      %v7378 = vunpack.c.h.b16 %v7281
      %v7379 = vunpack.c.l.b16 %v7282
      %v7380 = vunpack.c.h.b16 %v7282
      %v7381 = vunpack.c.l.b16 %v7283
      %v7382 = vunpack.c.h.b16 %v7283
      %v7383 = vunpack.c.l.b16 %v7284
      %v7384 = vunpack.c.h.b16 %v7284
      %v7385 = vunpack.c.l.b16 %v7285
      %v7386 = vunpack.c.h.b16 %v7285
      %v7387 = vunpack.c.l.b16 %v7286
      %v7388 = vunpack.c.h.b16 %v7286
      %v7389 = vunpack.c.l.b16 %v7287
      %v7390 = vunpack.c.h.b16 %v7287
      %v7391 = vunpack.c.l.b16 %v7288
      %v7392 = vunpack.c.h.b16 %v7288
      %v7393 = vunpack.c.l.b16 %v7289
      %v7394 = vunpack.c.h.b16 %v7289
      %v7395 = vunpack.c.l.b16 %v7290
      %v7396 = vunpack.c.h.b16 %v7290
      %v7397 = vpack.c.b16 %v7337, %v7333
      %v7398 = vpack.c.b16 %v7338, %v7334
      %v7399 = vpack.c.b16 %v7339, %v7335
      %v7400 = vpack.c.b16 %v7340, %v7336
      %v7401 = vpack.c.b16 %v7345, %v7341
      %v7402 = vpack.c.b16 %v7346, %v7342
      %v7403 = vpack.c.b16 %v7347, %v7343
      %v7404 = vpack.c.b16 %v7348, %v7344
      %v7405 = vpack.c.b16 %v7353, %v7349
      %v7406 = vpack.c.b16 %v7354, %v7350
      %v7407 = vpack.c.b16 %v7355, %v7351
      %v7408 = vpack.c.b16 %v7356, %v7352
      %v7409 = vpack.c.b16 %v7361, %v7357
      %v7410 = vpack.c.b16 %v7362, %v7358
      %v7411 = vpack.c.b16 %v7363, %v7359
      %v7412 = vpack.c.b16 %v7364, %v7360
      %v7413 = vpack.c.b16 %v7369, %v7365
      %v7414 = vpack.c.b16 %v7370, %v7366
      %v7415 = vpack.c.b16 %v7371, %v7367
      %v7416 = vpack.c.b16 %v7372, %v7368
      %v7417 = vpack.c.b16 %v7377, %v7373
      %v7418 = vpack.c.b16 %v7378, %v7374
      %v7419 = vpack.c.b16 %v7379, %v7375
      %v7420 = vpack.c.b16 %v7380, %v7376
      %v7421 = vpack.c.b16 %v7385, %v7381
      %v7422 = vpack.c.b16 %v7386, %v7382
      %v7423 = vpack.c.b16 %v7387, %v7383
      %v7424 = vpack.c.b16 %v7388, %v7384
      %v7425 = vpack.c.b16 %v7393, %v7389
      %v7426 = vpack.c.b16 %v7394, %v7390
      %v7427 = vpack.c.b16 %v7395, %v7391
      %v7428 = vpack.c.b16 %v7396, %v7392
      %7461 = vmatpush.bf16.msra.mxu0 %v7425
      %7462 = vmatpush.bf16.msra.mxu0 %v7421
      %7463 = vmatpush.bf16.msra.mxu0 %v7417
      %7464 = vmatpush.bf16.msra.mxu0 %v7413
      %7465 = vmatpush.bf16.msra.mxu0 %v7409
      %7466 = vmatpush.bf16.msra.mxu0 %v7405
      %7467 = vmatpush.bf16.msra.mxu0 %v7401
      %7468 = vmatpush.bf16.msra.mxu0 %v7397
      %7469 = vmatmul.bf16.gmra.mxu0 %v7243
      %v7470 = vpop.f32.mrf.mxu0
      %v7471 = vadd.f32 %v7293, %v7470
      %v7472 = vpop.f32.mrf.mxu0
      %v7473 = vadd.f32 %v7293, %v7472
      %7474 = vmatmul.bf16.gmra.mxu0 %v7244
      %v7475 = vpop.f32.mrf.mxu0
      %v7476 = vadd.f32 %v7293, %v7475
      %v7477 = vpop.f32.mrf.mxu0
      %v7478 = vadd.f32 %v7293, %v7477
      %7479 = vmatmul.bf16.gmra.mxu0 %v7245
      %v7480 = vpop.f32.mrf.mxu0
      %v7481 = vadd.f32 %v7293, %v7480
      %v7482 = vpop.f32.mrf.mxu0
      %v7483 = vadd.f32 %v7293, %v7482
      %7484 = vmatmul.bf16.gmra.mxu0 %v7246
      %v7485 = vpop.f32.mrf.mxu0
      %v7486 = vadd.f32 %v7293, %v7485
      %v7487 = vpop.f32.mrf.mxu0
      %v7488 = vadd.f32 %v7293, %v7487
      %7489 = vmatmul.bf16.gmra.mxu0 %v7247
      %v7490 = vpop.f32.mrf.mxu0
      %v7491 = vadd.f32 %v7293, %v7490
      %v7492 = vpop.f32.mrf.mxu0
      %v7493 = vadd.f32 %v7293, %v7492
      %7494 = vmatmul.bf16.gmra.mxu0 %v7248
      %v7495 = vpop.f32.mrf.mxu0
      %v7496 = vadd.f32 %v7293, %v7495
      %v7497 = vpop.f32.mrf.mxu0
      %v7498 = vadd.f32 %v7293, %v7497
      %7499 = vmatmul.bf16.gmra.mxu0 %v7249
      %v7500 = vpop.f32.mrf.mxu0
      %v7501 = vadd.f32 %v7293, %v7500
      %v7502 = vpop.f32.mrf.mxu0
      %v7503 = vadd.f32 %v7293, %v7502
      %7504 = vmatmul.bf16.gmra.mxu0 %v7250
      %v7505 = vpop.f32.mrf.mxu0
      %v7506 = vadd.f32 %v7293, %v7505
      %v7507 = vpop.f32.mrf.mxu0
      %v7508 = vadd.f32 %v7293, %v7507
      %7509 = vmatmul.bf16.gmra.mxu0 %v7251
      %v7510 = vpop.f32.mrf.mxu0
      %v7511 = vadd.f32 %v7293, %v7510
      %v7512 = vpop.f32.mrf.mxu0
      %v7513 = vadd.f32 %v7293, %v7512
      %7514 = vmatmul.bf16.gmra.mxu0 %v7252
      %v7515 = vpop.f32.mrf.mxu0
      %v7516 = vadd.f32 %v7293, %v7515
      %v7517 = vpop.f32.mrf.mxu0
      %v7518 = vadd.f32 %v7293, %v7517
      %7519 = vmatmul.bf16.gmra.mxu0 %v7253
      %v7520 = vpop.f32.mrf.mxu0
      %v7521 = vadd.f32 %v7293, %v7520
      %v7522 = vpop.f32.mrf.mxu0
      %v7523 = vadd.f32 %v7293, %v7522
      %7524 = vmatmul.bf16.gmra.mxu0 %v7254
      %v7525 = vpop.f32.mrf.mxu0
      %v7526 = vadd.f32 %v7293, %v7525
      %v7527 = vpop.f32.mrf.mxu0
      %v7528 = vadd.f32 %v7293, %v7527
      %7529 = vmatmul.bf16.gmra.mxu0 %v7255
      %v7530 = vpop.f32.mrf.mxu0
      %v7531 = vadd.f32 %v7293, %v7530
      %v7532 = vpop.f32.mrf.mxu0
      %v7533 = vadd.f32 %v7293, %v7532
      %7534 = vmatmul.bf16.gmra.mxu0 %v7256
      %v7535 = vpop.f32.mrf.mxu0
      %v7536 = vadd.f32 %v7293, %v7535
      %v7537 = vpop.f32.mrf.mxu0
      %v7538 = vadd.f32 %v7293, %v7537
      %7539 = vmatmul.bf16.gmra.mxu0 %v7257
      %v7540 = vpop.f32.mrf.mxu0
      %v7541 = vadd.f32 %v7293, %v7540
      %v7542 = vpop.f32.mrf.mxu0
      %v7543 = vadd.f32 %v7293, %v7542
      %7544 = vmatmul.bf16.gmra.mxu0 %v7258
      %v7545 = vpop.f32.mrf.mxu0
      %v7546 = vadd.f32 %v7293, %v7545
      %v7547 = vpop.f32.mrf.mxu0
      %v7548 = vadd.f32 %v7293, %v7547
      %7549 = vdwg.mxu0
      %7550 = vmatpush.bf16.msra.mxu0 %v7426
      %7551 = vmatpush.bf16.msra.mxu0 %v7422
      %7552 = vmatpush.bf16.msra.mxu0 %v7418
      %7553 = vmatpush.bf16.msra.mxu0 %v7414
      %7554 = vmatpush.bf16.msra.mxu0 %v7410
      %7555 = vmatpush.bf16.msra.mxu0 %v7406
      %7556 = vmatpush.bf16.msra.mxu0 %v7402
      %7557 = vmatpush.bf16.msra.mxu0 %v7398
      %7558 = vmatmul.bf16.gmra.mxu0 %v7243
      %v7559 = vpop.f32.mrf.mxu0
      %v7560 = vadd.f32 %v7294, %v7559
      %v7561 = vpop.f32.mrf.mxu0
      %v7562 = vadd.f32 %v7294, %v7561
      %7563 = vmatmul.bf16.gmra.mxu0 %v7244
      %v7564 = vpop.f32.mrf.mxu0
      %v7565 = vadd.f32 %v7294, %v7564
      %v7566 = vpop.f32.mrf.mxu0
      %v7567 = vadd.f32 %v7294, %v7566
      %7568 = vmatmul.bf16.gmra.mxu0 %v7245
      %v7569 = vpop.f32.mrf.mxu0
      %v7570 = vadd.f32 %v7294, %v7569
      %v7571 = vpop.f32.mrf.mxu0
      %v7572 = vadd.f32 %v7294, %v7571
      %7573 = vmatmul.bf16.gmra.mxu0 %v7246
      %v7574 = vpop.f32.mrf.mxu0
      %v7575 = vadd.f32 %v7294, %v7574
      %v7576 = vpop.f32.mrf.mxu0
      %v7577 = vadd.f32 %v7294, %v7576
      %7578 = vmatmul.bf16.gmra.mxu0 %v7247
      %v7579 = vpop.f32.mrf.mxu0
      %v7580 = vadd.f32 %v7294, %v7579
      %v7581 = vpop.f32.mrf.mxu0
      %v7582 = vadd.f32 %v7294, %v7581
      %7583 = vmatmul.bf16.gmra.mxu0 %v7248
      %v7584 = vpop.f32.mrf.mxu0
      %v7585 = vadd.f32 %v7294, %v7584
      %v7586 = vpop.f32.mrf.mxu0
      %v7587 = vadd.f32 %v7294, %v7586
      %7588 = vmatmul.bf16.gmra.mxu0 %v7249
      %v7589 = vpop.f32.mrf.mxu0
      %v7590 = vadd.f32 %v7294, %v7589
      %v7591 = vpop.f32.mrf.mxu0
      %v7592 = vadd.f32 %v7294, %v7591
      %7593 = vmatmul.bf16.gmra.mxu0 %v7250
      %v7594 = vpop.f32.mrf.mxu0
      %v7595 = vadd.f32 %v7294, %v7594
      %v7596 = vpop.f32.mrf.mxu0
      %v7597 = vadd.f32 %v7294, %v7596
      %7598 = vmatmul.bf16.gmra.mxu0 %v7251
      %v7599 = vpop.f32.mrf.mxu0
      %v7600 = vadd.f32 %v7294, %v7599
      %v7601 = vpop.f32.mrf.mxu0
      %v7602 = vadd.f32 %v7294, %v7601
      %7603 = vmatmul.bf16.gmra.mxu0 %v7252
      %v7604 = vpop.f32.mrf.mxu0
      %v7605 = vadd.f32 %v7294, %v7604
      %v7606 = vpop.f32.mrf.mxu0
      %v7607 = vadd.f32 %v7294, %v7606
      %7608 = vmatmul.bf16.gmra.mxu0 %v7253
      %v7609 = vpop.f32.mrf.mxu0
      %v7610 = vadd.f32 %v7294, %v7609
      %v7611 = vpop.f32.mrf.mxu0
      %v7612 = vadd.f32 %v7294, %v7611
      %7613 = vmatmul.bf16.gmra.mxu0 %v7254
      %v7614 = vpop.f32.mrf.mxu0
      %v7615 = vadd.f32 %v7294, %v7614
      %v7616 = vpop.f32.mrf.mxu0
      %v7617 = vadd.f32 %v7294, %v7616
      %7618 = vmatmul.bf16.gmra.mxu0 %v7255
      %v7619 = vpop.f32.mrf.mxu0
      %v7620 = vadd.f32 %v7294, %v7619
      %v7621 = vpop.f32.mrf.mxu0
      %v7622 = vadd.f32 %v7294, %v7621
      %7623 = vmatmul.bf16.gmra.mxu0 %v7256
      %v7624 = vpop.f32.mrf.mxu0
      %v7625 = vadd.f32 %v7294, %v7624
      %v7626 = vpop.f32.mrf.mxu0
      %v7627 = vadd.f32 %v7294, %v7626
      %7628 = vmatmul.bf16.gmra.mxu0 %v7257
      %v7629 = vpop.f32.mrf.mxu0
      %v7630 = vadd.f32 %v7294, %v7629
      %v7631 = vpop.f32.mrf.mxu0
      %v7632 = vadd.f32 %v7294, %v7631
      %7633 = vmatmul.bf16.gmra.mxu0 %v7258
      %v7634 = vpop.f32.mrf.mxu0
      %v7635 = vadd.f32 %v7294, %v7634
      %v7636 = vpop.f32.mrf.mxu0
      %v7637 = vadd.f32 %v7294, %v7636
      %7638 = vdwg.mxu0
      %7639 = vmatpush.bf16.msra.mxu0 %v7427
      %7640 = vmatpush.bf16.msra.mxu0 %v7423
      %7641 = vmatpush.bf16.msra.mxu0 %v7419
      %7642 = vmatpush.bf16.msra.mxu0 %v7415
      %7643 = vmatpush.bf16.msra.mxu0 %v7411
      %7644 = vmatpush.bf16.msra.mxu0 %v7407
      %7645 = vmatpush.bf16.msra.mxu0 %v7403
      %7646 = vmatpush.bf16.msra.mxu0 %v7399
      %7647 = vmatmul.bf16.gmra.mxu0 %v7243
      %v7648 = vpop.f32.mrf.mxu0
      %v7649 = vadd.f32 %v7295, %v7648
      %v7650 = vpop.f32.mrf.mxu0
      %v7651 = vadd.f32 %v7295, %v7650
      %7652 = vmatmul.bf16.gmra.mxu0 %v7244
      %v7653 = vpop.f32.mrf.mxu0
      %v7654 = vadd.f32 %v7295, %v7653
      %v7655 = vpop.f32.mrf.mxu0
      %v7656 = vadd.f32 %v7295, %v7655
      %7657 = vmatmul.bf16.gmra.mxu0 %v7245
      %v7658 = vpop.f32.mrf.mxu0
      %v7659 = vadd.f32 %v7295, %v7658
      %v7660 = vpop.f32.mrf.mxu0
      %v7661 = vadd.f32 %v7295, %v7660
      %7662 = vmatmul.bf16.gmra.mxu0 %v7246
      %v7663 = vpop.f32.mrf.mxu0
      %v7664 = vadd.f32 %v7295, %v7663
      %v7665 = vpop.f32.mrf.mxu0
      %v7666 = vadd.f32 %v7295, %v7665
      %7667 = vmatmul.bf16.gmra.mxu0 %v7247
      %v7668 = vpop.f32.mrf.mxu0
      %v7669 = vadd.f32 %v7295, %v7668
      %v7670 = vpop.f32.mrf.mxu0
      %v7671 = vadd.f32 %v7295, %v7670
      %7672 = vmatmul.bf16.gmra.mxu0 %v7248
      %v7673 = vpop.f32.mrf.mxu0
      %v7674 = vadd.f32 %v7295, %v7673
      %v7675 = vpop.f32.mrf.mxu0
      %v7676 = vadd.f32 %v7295, %v7675
      %7677 = vmatmul.bf16.gmra.mxu0 %v7249
      %v7678 = vpop.f32.mrf.mxu0
      %v7679 = vadd.f32 %v7295, %v7678
      %v7680 = vpop.f32.mrf.mxu0
      %v7681 = vadd.f32 %v7295, %v7680
      %7682 = vmatmul.bf16.gmra.mxu0 %v7250
      %v7683 = vpop.f32.mrf.mxu0
      %v7684 = vadd.f32 %v7295, %v7683
      %v7685 = vpop.f32.mrf.mxu0
      %v7686 = vadd.f32 %v7295, %v7685
      %7687 = vmatmul.bf16.gmra.mxu0 %v7251
      %v7688 = vpop.f32.mrf.mxu0
      %v7689 = vadd.f32 %v7295, %v7688
      %v7690 = vpop.f32.mrf.mxu0
      %v7691 = vadd.f32 %v7295, %v7690
      %7692 = vmatmul.bf16.gmra.mxu0 %v7252
      %v7693 = vpop.f32.mrf.mxu0
      %v7694 = vadd.f32 %v7295, %v7693
      %v7695 = vpop.f32.mrf.mxu0
      %v7696 = vadd.f32 %v7295, %v7695
      %7697 = vmatmul.bf16.gmra.mxu0 %v7253
      %v7698 = vpop.f32.mrf.mxu0
      %v7699 = vadd.f32 %v7295, %v7698
      %v7700 = vpop.f32.mrf.mxu0
      %v7701 = vadd.f32 %v7295, %v7700
      %7702 = vmatmul.bf16.gmra.mxu0 %v7254
      %v7703 = vpop.f32.mrf.mxu0
      %v7704 = vadd.f32 %v7295, %v7703
      %v7705 = vpop.f32.mrf.mxu0
      %v7706 = vadd.f32 %v7295, %v7705
      %7707 = vmatmul.bf16.gmra.mxu0 %v7255
      %v7708 = vpop.f32.mrf.mxu0
      %v7709 = vadd.f32 %v7295, %v7708
      %v7710 = vpop.f32.mrf.mxu0
      %v7711 = vadd.f32 %v7295, %v7710
      %7712 = vmatmul.bf16.gmra.mxu0 %v7256
      %v7713 = vpop.f32.mrf.mxu0
      %v7714 = vadd.f32 %v7295, %v7713
      %v7715 = vpop.f32.mrf.mxu0
      %v7716 = vadd.f32 %v7295, %v7715
      %7717 = vmatmul.bf16.gmra.mxu0 %v7257
      %v7718 = vpop.f32.mrf.mxu0
      %v7719 = vadd.f32 %v7295, %v7718
      %v7720 = vpop.f32.mrf.mxu0
      %v7721 = vadd.f32 %v7295, %v7720
      %7722 = vmatmul.bf16.gmra.mxu0 %v7258
      %v7723 = vpop.f32.mrf.mxu0
      %v7724 = vadd.f32 %v7295, %v7723
      %v7725 = vpop.f32.mrf.mxu0
      %v7726 = vadd.f32 %v7295, %v7725
      %7727 = vdwg.mxu0
      %7728 = vmatpush.bf16.msra.mxu0 %v7428
      %7729 = vmatpush.bf16.msra.mxu0 %v7424
      %7730 = vmatpush.bf16.msra.mxu0 %v7420
      %7731 = vmatpush.bf16.msra.mxu0 %v7416
      %7732 = vmatpush.bf16.msra.mxu0 %v7412
      %7733 = vmatpush.bf16.msra.mxu0 %v7408
      %7734 = vmatpush.bf16.msra.mxu0 %v7404
      %7735 = vmatpush.bf16.msra.mxu0 %v7400
      %7736 = vmatmul.bf16.gmra.mxu0 %v7243
      %v7737 = vpop.f32.mrf.mxu0
      %v7738 = vadd.f32 %v7296, %v7737
      %v7739 = vpop.f32.mrf.mxu0
      %v7740 = vadd.f32 %v7296, %v7739
      %7741 = vmatmul.bf16.gmra.mxu0 %v7244
      %v7742 = vpop.f32.mrf.mxu0
      %v7743 = vadd.f32 %v7296, %v7742
      %v7744 = vpop.f32.mrf.mxu0
      %v7745 = vadd.f32 %v7296, %v7744
      %7746 = vmatmul.bf16.gmra.mxu0 %v7245
      %v7747 = vpop.f32.mrf.mxu0
      %v7748 = vadd.f32 %v7296, %v7747
      %v7749 = vpop.f32.mrf.mxu0
      %v7750 = vadd.f32 %v7296, %v7749
      %7751 = vmatmul.bf16.gmra.mxu0 %v7246
      %v7752 = vpop.f32.mrf.mxu0
      %v7753 = vadd.f32 %v7296, %v7752
      %v7754 = vpop.f32.mrf.mxu0
      %v7755 = vadd.f32 %v7296, %v7754
      %7756 = vmatmul.bf16.gmra.mxu0 %v7247
      %v7757 = vpop.f32.mrf.mxu0
      %v7758 = vadd.f32 %v7296, %v7757
      %v7759 = vpop.f32.mrf.mxu0
      %v7760 = vadd.f32 %v7296, %v7759
      %7761 = vmatmul.bf16.gmra.mxu0 %v7248
      %v7762 = vpop.f32.mrf.mxu0
      %v7763 = vadd.f32 %v7296, %v7762
      %v7764 = vpop.f32.mrf.mxu0
      %v7765 = vadd.f32 %v7296, %v7764
      %7766 = vmatmul.bf16.gmra.mxu0 %v7249
      %v7767 = vpop.f32.mrf.mxu0
      %v7768 = vadd.f32 %v7296, %v7767
      %v7769 = vpop.f32.mrf.mxu0
      %v7770 = vadd.f32 %v7296, %v7769
      %7771 = vmatmul.bf16.gmra.mxu0 %v7250
      %v7772 = vpop.f32.mrf.mxu0
      %v7773 = vadd.f32 %v7296, %v7772
      %v7774 = vpop.f32.mrf.mxu0
      %v7775 = vadd.f32 %v7296, %v7774
      %7776 = vmatmul.bf16.gmra.mxu0 %v7251
      %v7777 = vpop.f32.mrf.mxu0
      %v7778 = vadd.f32 %v7296, %v7777
      %v7779 = vpop.f32.mrf.mxu0
      %v7780 = vadd.f32 %v7296, %v7779
      %7781 = vmatmul.bf16.gmra.mxu0 %v7252
      %v7782 = vpop.f32.mrf.mxu0
      %v7783 = vadd.f32 %v7296, %v7782
      %v7784 = vpop.f32.mrf.mxu0
      %v7785 = vadd.f32 %v7296, %v7784
      %7786 = vmatmul.bf16.gmra.mxu0 %v7253
      %v7787 = vpop.f32.mrf.mxu0
      %v7788 = vadd.f32 %v7296, %v7787
      %v7789 = vpop.f32.mrf.mxu0
      %v7790 = vadd.f32 %v7296, %v7789
      %7791 = vmatmul.bf16.gmra.mxu0 %v7254
      %v7792 = vpop.f32.mrf.mxu0
      %v7793 = vadd.f32 %v7296, %v7792
      %v7794 = vpop.f32.mrf.mxu0
      %v7795 = vadd.f32 %v7296, %v7794
      %7796 = vmatmul.bf16.gmra.mxu0 %v7255
      %v7797 = vpop.f32.mrf.mxu0
      %v7798 = vadd.f32 %v7296, %v7797
      %v7799 = vpop.f32.mrf.mxu0
      %v7800 = vadd.f32 %v7296, %v7799
      %7801 = vmatmul.bf16.gmra.mxu0 %v7256
      %v7802 = vpop.f32.mrf.mxu0
      %v7803 = vadd.f32 %v7296, %v7802
      %v7804 = vpop.f32.mrf.mxu0
      %v7805 = vadd.f32 %v7296, %v7804
      %7806 = vmatmul.bf16.gmra.mxu0 %v7257
      %v7807 = vpop.f32.mrf.mxu0
      %v7808 = vadd.f32 %v7296, %v7807
      %v7809 = vpop.f32.mrf.mxu0
      %v7810 = vadd.f32 %v7296, %v7809
      %7811 = vmatmul.bf16.gmra.mxu0 %v7258
      %v7812 = vpop.f32.mrf.mxu0
      %v7813 = vadd.f32 %v7296, %v7812
      %v7814 = vpop.f32.mrf.mxu0
      %v7815 = vadd.f32 %v7296, %v7814
      %7816 = vdwg.mxu0
      %v7817 = vmul.f32 %v7471, 0.5
      %v7818 = vmul.f32 %v7560, 0.5
      %v7819 = vmul.f32 %v7649, 0.5
      %v7820 = vmul.f32 %v7738, 0.5
      %v7821 = vmul.f32 %v7473, 0.5
      %v7822 = vmul.f32 %v7562, 0.5
      %v7823 = vmul.f32 %v7651, 0.5
      %v7824 = vmul.f32 %v7740, 0.5
      %v7825 = vmul.f32 %v7476, 0.5
      %v7826 = vmul.f32 %v7565, 0.5
      %v7827 = vmul.f32 %v7654, 0.5
      %v7828 = vmul.f32 %v7743, 0.5
      %v7829 = vmul.f32 %v7478, 0.5
      %v7830 = vmul.f32 %v7567, 0.5
      %v7831 = vmul.f32 %v7656, 0.5
      %v7832 = vmul.f32 %v7745, 0.5
      %v7833 = vmul.f32 %v7481, 0.5
      %v7834 = vmul.f32 %v7570, 0.5
      %v7835 = vmul.f32 %v7659, 0.5
      %v7836 = vmul.f32 %v7748, 0.5
      %v7837 = vmul.f32 %v7483, 0.5
      %v7838 = vmul.f32 %v7572, 0.5
      %v7839 = vmul.f32 %v7661, 0.5
      %v7840 = vmul.f32 %v7750, 0.5
      %v7841 = vmul.f32 %v7486, 0.5
      %v7842 = vmul.f32 %v7575, 0.5
      %v7843 = vmul.f32 %v7664, 0.5
      %v7844 = vmul.f32 %v7753, 0.5
      %v7845 = vmul.f32 %v7488, 0.5
      %v7846 = vmul.f32 %v7577, 0.5
      %v7847 = vmul.f32 %v7666, 0.5
      %v7848 = vmul.f32 %v7755, 0.5
      %v7849 = vmul.f32 %v7491, 0.5
      %v7850 = vmul.f32 %v7580, 0.5
      %v7851 = vmul.f32 %v7669, 0.5
      %v7852 = vmul.f32 %v7758, 0.5
      %v7853 = vmul.f32 %v7493, 0.5
      %v7854 = vmul.f32 %v7582, 0.5
      %v7855 = vmul.f32 %v7671, 0.5
      %v7856 = vmul.f32 %v7760, 0.5
      %v7857 = vmul.f32 %v7496, 0.5
      %v7858 = vmul.f32 %v7585, 0.5
      %v7859 = vmul.f32 %v7674, 0.5
      %v7860 = vmul.f32 %v7763, 0.5
      %v7861 = vmul.f32 %v7498, 0.5
      %v7862 = vmul.f32 %v7587, 0.5
      %v7863 = vmul.f32 %v7676, 0.5
      %v7864 = vmul.f32 %v7765, 0.5
      %v7865 = vmul.f32 %v7501, 0.5
      %v7866 = vmul.f32 %v7590, 0.5
      %v7867 = vmul.f32 %v7679, 0.5
      %v7868 = vmul.f32 %v7768, 0.5
      %v7869 = vmul.f32 %v7503, 0.5
      %v7870 = vmul.f32 %v7592, 0.5
      %v7871 = vmul.f32 %v7681, 0.5
      %v7872 = vmul.f32 %v7770, 0.5
      %v7873 = vmul.f32 %v7506, 0.5
      %v7874 = vmul.f32 %v7595, 0.5
      %v7875 = vmul.f32 %v7684, 0.5
      %v7876 = vmul.f32 %v7773, 0.5
      %v7877 = vmul.f32 %v7508, 0.5
      %v7878 = vmul.f32 %v7597, 0.5
      %v7879 = vmul.f32 %v7686, 0.5
      %v7880 = vmul.f32 %v7775, 0.5
      %v7881 = vmul.f32 %v7511, 0.5
      %v7882 = vmul.f32 %v7600, 0.5
      %v7883 = vmul.f32 %v7689, 0.5
      %v7884 = vmul.f32 %v7778, 0.5
      %v7885 = vmul.f32 %v7513, 0.5
      %v7886 = vmul.f32 %v7602, 0.5
      %v7887 = vmul.f32 %v7691, 0.5
      %v7888 = vmul.f32 %v7780, 0.5
      %v7889 = vmul.f32 %v7516, 0.5
      %v7890 = vmul.f32 %v7605, 0.5
      %v7891 = vmul.f32 %v7694, 0.5
      %v7892 = vmul.f32 %v7783, 0.5
      %v7893 = vmul.f32 %v7518, 0.5
      %v7894 = vmul.f32 %v7607, 0.5
      %v7895 = vmul.f32 %v7696, 0.5
      %v7896 = vmul.f32 %v7785, 0.5
      %v7897 = vmul.f32 %v7521, 0.5
      %v7898 = vmul.f32 %v7610, 0.5
      %v7899 = vmul.f32 %v7699, 0.5
      %v7900 = vmul.f32 %v7788, 0.5
      %v7901 = vmul.f32 %v7523, 0.5
      %v7902 = vmul.f32 %v7612, 0.5
      %v7903 = vmul.f32 %v7701, 0.5
      %v7904 = vmul.f32 %v7790, 0.5
      %v7905 = vmul.f32 %v7526, 0.5
      %v7906 = vmul.f32 %v7615, 0.5
      %v7907 = vmul.f32 %v7704, 0.5
      %v7908 = vmul.f32 %v7793, 0.5
      %v7909 = vmul.f32 %v7528, 0.5
      %v7910 = vmul.f32 %v7617, 0.5
      %v7911 = vmul.f32 %v7706, 0.5
      %v7912 = vmul.f32 %v7795, 0.5
      %v7913 = vmul.f32 %v7531, 0.5
      %v7914 = vmul.f32 %v7620, 0.5
      %v7915 = vmul.f32 %v7709, 0.5
      %v7916 = vmul.f32 %v7798, 0.5
      %v7917 = vmul.f32 %v7533, 0.5
      %v7918 = vmul.f32 %v7622, 0.5
      %v7919 = vmul.f32 %v7711, 0.5
      %v7920 = vmul.f32 %v7800, 0.5
      %v7921 = vmul.f32 %v7536, 0.5
      %v7922 = vmul.f32 %v7625, 0.5
      %v7923 = vmul.f32 %v7714, 0.5
      %v7924 = vmul.f32 %v7803, 0.5
      %v7925 = vmul.f32 %v7538, 0.5
      %v7926 = vmul.f32 %v7627, 0.5
      %v7927 = vmul.f32 %v7716, 0.5
      %v7928 = vmul.f32 %v7805, 0.5
      %v7929 = vmul.f32 %v7541, 0.5
      %v7930 = vmul.f32 %v7630, 0.5
      %v7931 = vmul.f32 %v7719, 0.5
      %v7932 = vmul.f32 %v7808, 0.5
      %v7933 = vmul.f32 %v7543, 0.5
      %v7934 = vmul.f32 %v7632, 0.5
      %v7935 = vmul.f32 %v7721, 0.5
      %v7936 = vmul.f32 %v7810, 0.5
      %v7937 = vmul.f32 %v7546, 0.5
      %v7938 = vmul.f32 %v7635, 0.5
      %v7939 = vmul.f32 %v7724, 0.5
      %v7940 = vmul.f32 %v7813, 0.5
      %v7941 = vmul.f32 %v7548, 0.5
      %v7942 = vmul.f32 %v7637, 0.5
      %v7943 = vmul.f32 %v7726, 0.5
      %v7944 = vmul.f32 %v7815, 0.5
      %v7945 = vmul.f32 %v7471, 0.044715
      %v7946 = vmul.f32 %v7560, 0.044715
      %v7947 = vmul.f32 %v7649, 0.044715
      %v7948 = vmul.f32 %v7738, 0.044715
      %v7949 = vmul.f32 %v7473, 0.044715
      %v7950 = vmul.f32 %v7562, 0.044715
      %v7951 = vmul.f32 %v7651, 0.044715
      %v7952 = vmul.f32 %v7740, 0.044715
      %v7953 = vmul.f32 %v7476, 0.044715
      %v7954 = vmul.f32 %v7565, 0.044715
      %v7955 = vmul.f32 %v7654, 0.044715
      %v7956 = vmul.f32 %v7743, 0.044715
      %v7957 = vmul.f32 %v7478, 0.044715
      %v7958 = vmul.f32 %v7567, 0.044715
      %v7959 = vmul.f32 %v7656, 0.044715
      %v7960 = vmul.f32 %v7745, 0.044715
      %v7961 = vmul.f32 %v7481, 0.044715
      %v7962 = vmul.f32 %v7570, 0.044715
      %v7963 = vmul.f32 %v7659, 0.044715
      %v7964 = vmul.f32 %v7748, 0.044715
      %v7965 = vmul.f32 %v7483, 0.044715
      %v7966 = vmul.f32 %v7572, 0.044715
      %v7967 = vmul.f32 %v7661, 0.044715
      %v7968 = vmul.f32 %v7750, 0.044715
      %v7969 = vmul.f32 %v7486, 0.044715
      %v7970 = vmul.f32 %v7575, 0.044715
      %v7971 = vmul.f32 %v7664, 0.044715
      %v7972 = vmul.f32 %v7753, 0.044715
      %v7973 = vmul.f32 %v7488, 0.044715
      %v7974 = vmul.f32 %v7577, 0.044715
      %v7975 = vmul.f32 %v7666, 0.044715
      %v7976 = vmul.f32 %v7755, 0.044715
      %v7977 = vmul.f32 %v7491, 0.044715
      %v7978 = vmul.f32 %v7580, 0.044715
      %v7979 = vmul.f32 %v7669, 0.044715
      %v7980 = vmul.f32 %v7758, 0.044715
      %v7981 = vmul.f32 %v7493, 0.044715
      %v7982 = vmul.f32 %v7582, 0.044715
      %v7983 = vmul.f32 %v7671, 0.044715
      %v7984 = vmul.f32 %v7760, 0.044715
      %v7985 = vmul.f32 %v7496, 0.044715
      %v7986 = vmul.f32 %v7585, 0.044715
      %v7987 = vmul.f32 %v7674, 0.044715
      %v7988 = vmul.f32 %v7763, 0.044715
      %v7989 = vmul.f32 %v7498, 0.044715
      %v7990 = vmul.f32 %v7587, 0.044715
      %v7991 = vmul.f32 %v7676, 0.044715
      %v7992 = vmul.f32 %v7765, 0.044715
      %v7993 = vmul.f32 %v7501, 0.044715
      %v7994 = vmul.f32 %v7590, 0.044715
      %v7995 = vmul.f32 %v7679, 0.044715
      %v7996 = vmul.f32 %v7768, 0.044715
      %v7997 = vmul.f32 %v7503, 0.044715
      %v7998 = vmul.f32 %v7592, 0.044715
      %v7999 = vmul.f32 %v7681, 0.044715
      %v8000 = vmul.f32 %v7770, 0.044715
      %v8001 = vmul.f32 %v7506, 0.044715
      %v8002 = vmul.f32 %v7595, 0.044715
      %v8003 = vmul.f32 %v7684, 0.044715
      %v8004 = vmul.f32 %v7773, 0.044715
      %v8005 = vmul.f32 %v7508, 0.044715
      %v8006 = vmul.f32 %v7597, 0.044715
      %v8007 = vmul.f32 %v7686, 0.044715
      %v8008 = vmul.f32 %v7775, 0.044715
      %v8009 = vmul.f32 %v7511, 0.044715
      %v8010 = vmul.f32 %v7600, 0.044715
      %v8011 = vmul.f32 %v7689, 0.044715
      %v8012 = vmul.f32 %v7778, 0.044715
      %v8013 = vmul.f32 %v7513, 0.044715
      %v8014 = vmul.f32 %v7602, 0.044715
      %v8015 = vmul.f32 %v7691, 0.044715
      %v8016 = vmul.f32 %v7780, 0.044715
      %v8017 = vmul.f32 %v7516, 0.044715
      %v8018 = vmul.f32 %v7605, 0.044715
      %v8019 = vmul.f32 %v7694, 0.044715
      %v8020 = vmul.f32 %v7783, 0.044715
      %v8021 = vmul.f32 %v7518, 0.044715
      %v8022 = vmul.f32 %v7607, 0.044715
      %v8023 = vmul.f32 %v7696, 0.044715
      %v8024 = vmul.f32 %v7785, 0.044715
      %v8025 = vmul.f32 %v7521, 0.044715
      %v8026 = vmul.f32 %v7610, 0.044715
      %v8027 = vmul.f32 %v7699, 0.044715
      %v8028 = vmul.f32 %v7788, 0.044715
      %v8029 = vmul.f32 %v7523, 0.044715
      %v8030 = vmul.f32 %v7612, 0.044715
      %v8031 = vmul.f32 %v7701, 0.044715
      %v8032 = vmul.f32 %v7790, 0.044715
      %v8033 = vmul.f32 %v7526, 0.044715
      %v8034 = vmul.f32 %v7615, 0.044715
      %v8035 = vmul.f32 %v7704, 0.044715
      %v8036 = vmul.f32 %v7793, 0.044715
      %v8037 = vmul.f32 %v7528, 0.044715
      %v8038 = vmul.f32 %v7617, 0.044715
      %v8039 = vmul.f32 %v7706, 0.044715
      %v8040 = vmul.f32 %v7795, 0.044715
      %v8041 = vmul.f32 %v7531, 0.044715
      %v8042 = vmul.f32 %v7620, 0.044715
      %v8043 = vmul.f32 %v7709, 0.044715
      %v8044 = vmul.f32 %v7798, 0.044715
      %v8045 = vmul.f32 %v7533, 0.044715
      %v8046 = vmul.f32 %v7622, 0.044715
      %v8047 = vmul.f32 %v7711, 0.044715
      %v8048 = vmul.f32 %v7800, 0.044715
      %v8049 = vmul.f32 %v7536, 0.044715
      %v8050 = vmul.f32 %v7625, 0.044715
      %v8051 = vmul.f32 %v7714, 0.044715
      %v8052 = vmul.f32 %v7803, 0.044715
      %v8053 = vmul.f32 %v7538, 0.044715
      %v8054 = vmul.f32 %v7627, 0.044715
      %v8055 = vmul.f32 %v7716, 0.044715
      %v8056 = vmul.f32 %v7805, 0.044715
      %v8057 = vmul.f32 %v7541, 0.044715
      %v8058 = vmul.f32 %v7630, 0.044715
      %v8059 = vmul.f32 %v7719, 0.044715
      %v8060 = vmul.f32 %v7808, 0.044715
      %v8061 = vmul.f32 %v7543, 0.044715
      %v8062 = vmul.f32 %v7632, 0.044715
      %v8063 = vmul.f32 %v7721, 0.044715
      %v8064 = vmul.f32 %v7810, 0.044715
      %v8065 = vmul.f32 %v7546, 0.044715
      %v8066 = vmul.f32 %v7635, 0.044715
      %v8067 = vmul.f32 %v7724, 0.044715
      %v8068 = vmul.f32 %v7813, 0.044715
      %v8069 = vmul.f32 %v7548, 0.044715
      %v8070 = vmul.f32 %v7637, 0.044715
      %v8071 = vmul.f32 %v7726, 0.044715
      %v8072 = vmul.f32 %v7815, 0.044715
      %v8073 = vmul.f32 %v7945, %v7471
      %v8074 = vmul.f32 %v7946, %v7560
      %v8075 = vmul.f32 %v7947, %v7649
      %v8076 = vmul.f32 %v7948, %v7738
      %v8077 = vmul.f32 %v7949, %v7473
      %v8078 = vmul.f32 %v7950, %v7562
      %v8079 = vmul.f32 %v7951, %v7651
      %v8080 = vmul.f32 %v7952, %v7740
      %v8081 = vmul.f32 %v7953, %v7476
      %v8082 = vmul.f32 %v7954, %v7565
      %v8083 = vmul.f32 %v7955, %v7654
      %v8084 = vmul.f32 %v7956, %v7743
      %v8085 = vmul.f32 %v7957, %v7478
      %v8086 = vmul.f32 %v7958, %v7567
      %v8087 = vmul.f32 %v7959, %v7656
      %v8088 = vmul.f32 %v7960, %v7745
      %v8089 = vmul.f32 %v7961, %v7481
      %v8090 = vmul.f32 %v7962, %v7570
      %v8091 = vmul.f32 %v7963, %v7659
      %v8092 = vmul.f32 %v7964, %v7748
      %v8093 = vmul.f32 %v7965, %v7483
      %v8094 = vmul.f32 %v7966, %v7572
      %v8095 = vmul.f32 %v7967, %v7661
      %v8096 = vmul.f32 %v7968, %v7750
      %v8097 = vmul.f32 %v7969, %v7486
      %v8098 = vmul.f32 %v7970, %v7575
      %v8099 = vmul.f32 %v7971, %v7664
      %v8100 = vmul.f32 %v7972, %v7753
      %v8101 = vmul.f32 %v7973, %v7488
      %v8102 = vmul.f32 %v7974, %v7577
      %v8103 = vmul.f32 %v7975, %v7666
      %v8104 = vmul.f32 %v7976, %v7755
      %v8105 = vmul.f32 %v7977, %v7491
      %v8106 = vmul.f32 %v7978, %v7580
      %v8107 = vmul.f32 %v7979, %v7669
      %v8108 = vmul.f32 %v7980, %v7758
      %v8109 = vmul.f32 %v7981, %v7493
      %v8110 = vmul.f32 %v7982, %v7582
      %v8111 = vmul.f32 %v7983, %v7671
      %v8112 = vmul.f32 %v7984, %v7760
      %v8113 = vmul.f32 %v7985, %v7496
      %v8114 = vmul.f32 %v7986, %v7585
      %v8115 = vmul.f32 %v7987, %v7674
      %v8116 = vmul.f32 %v7988, %v7763
      %v8117 = vmul.f32 %v7989, %v7498
      %v8118 = vmul.f32 %v7990, %v7587
      %v8119 = vmul.f32 %v7991, %v7676
      %v8120 = vmul.f32 %v7992, %v7765
      %v8121 = vmul.f32 %v7993, %v7501
      %v8122 = vmul.f32 %v7994, %v7590
      %v8123 = vmul.f32 %v7995, %v7679
      %v8124 = vmul.f32 %v7996, %v7768
      %v8125 = vmul.f32 %v7997, %v7503
      %v8126 = vmul.f32 %v7998, %v7592
      %v8127 = vmul.f32 %v7999, %v7681
      %v8128 = vmul.f32 %v8000, %v7770
      %v8129 = vmul.f32 %v8001, %v7506
      %v8130 = vmul.f32 %v8002, %v7595
      %v8131 = vmul.f32 %v8003, %v7684
      %v8132 = vmul.f32 %v8004, %v7773
      %v8133 = vmul.f32 %v8005, %v7508
      %v8134 = vmul.f32 %v8006, %v7597
      %v8135 = vmul.f32 %v8007, %v7686
      %v8136 = vmul.f32 %v8008, %v7775
      %v8137 = vmul.f32 %v8009, %v7511
      %v8138 = vmul.f32 %v8010, %v7600
      %v8139 = vmul.f32 %v8011, %v7689
      %v8140 = vmul.f32 %v8012, %v7778
      %v8141 = vmul.f32 %v8013, %v7513
      %v8142 = vmul.f32 %v8014, %v7602
      %v8143 = vmul.f32 %v8015, %v7691
      %v8144 = vmul.f32 %v8016, %v7780
      %v8145 = vmul.f32 %v8017, %v7516
      %v8146 = vmul.f32 %v8018, %v7605
      %v8147 = vmul.f32 %v8019, %v7694
      %v8148 = vmul.f32 %v8020, %v7783
      %v8149 = vmul.f32 %v8021, %v7518
      %v8150 = vmul.f32 %v8022, %v7607
      %v8151 = vmul.f32 %v8023, %v7696
      %v8152 = vmul.f32 %v8024, %v7785
      %v8153 = vmul.f32 %v8025, %v7521
      %v8154 = vmul.f32 %v8026, %v7610
      %v8155 = vmul.f32 %v8027, %v7699
      %v8156 = vmul.f32 %v8028, %v7788
      %v8157 = vmul.f32 %v8029, %v7523
      %v8158 = vmul.f32 %v8030, %v7612
      %v8159 = vmul.f32 %v8031, %v7701
      %v8160 = vmul.f32 %v8032, %v7790
      %v8161 = vmul.f32 %v8033, %v7526
      %v8162 = vmul.f32 %v8034, %v7615
      %v8163 = vmul.f32 %v8035, %v7704
      %v8164 = vmul.f32 %v8036, %v7793
      %v8165 = vmul.f32 %v8037, %v7528
      %v8166 = vmul.f32 %v8038, %v7617
      %v8167 = vmul.f32 %v8039, %v7706
      %v8168 = vmul.f32 %v8040, %v7795
      %v8169 = vmul.f32 %v8041, %v7531
      %v8170 = vmul.f32 %v8042, %v7620
      %v8171 = vmul.f32 %v8043, %v7709
      %v8172 = vmul.f32 %v8044, %v7798
      %v8173 = vmul.f32 %v8045, %v7533
      %v8174 = vmul.f32 %v8046, %v7622
      %v8175 = vmul.f32 %v8047, %v7711
      %v8176 = vmul.f32 %v8048, %v7800
      %v8177 = vmul.f32 %v8049, %v7536
      %v8178 = vmul.f32 %v8050, %v7625
      %v8179 = vmul.f32 %v8051, %v7714
      %v8180 = vmul.f32 %v8052, %v7803
      %v8181 = vmul.f32 %v8053, %v7538
      %v8182 = vmul.f32 %v8054, %v7627
      %v8183 = vmul.f32 %v8055, %v7716
      %v8184 = vmul.f32 %v8056, %v7805
      %v8185 = vmul.f32 %v8057, %v7541
      %v8186 = vmul.f32 %v8058, %v7630
      %v8187 = vmul.f32 %v8059, %v7719
      %v8188 = vmul.f32 %v8060, %v7808
      %v8189 = vmul.f32 %v8061, %v7543
      %v8190 = vmul.f32 %v8062, %v7632
      %v8191 = vmul.f32 %v8063, %v7721
      %v8192 = vmul.f32 %v8064, %v7810
      %v8193 = vmul.f32 %v8065, %v7546
      %v8194 = vmul.f32 %v8066, %v7635
      %v8195 = vmul.f32 %v8067, %v7724
      %v8196 = vmul.f32 %v8068, %v7813
      %v8197 = vmul.f32 %v8069, %v7548
      %v8198 = vmul.f32 %v8070, %v7637
      %v8199 = vmul.f32 %v8071, %v7726
      %v8200 = vmul.f32 %v8072, %v7815
      %v8201 = vmul.f32 %v8073, %v7471
      %v8202 = vmul.f32 %v8074, %v7560
      %v8203 = vmul.f32 %v8075, %v7649
      %v8204 = vmul.f32 %v8076, %v7738
      %v8205 = vmul.f32 %v8077, %v7473
      %v8206 = vmul.f32 %v8078, %v7562
      %v8207 = vmul.f32 %v8079, %v7651
      %v8208 = vmul.f32 %v8080, %v7740
      %v8209 = vmul.f32 %v8081, %v7476
      %v8210 = vmul.f32 %v8082, %v7565
      %v8211 = vmul.f32 %v8083, %v7654
      %v8212 = vmul.f32 %v8084, %v7743
      %v8213 = vmul.f32 %v8085, %v7478
      %v8214 = vmul.f32 %v8086, %v7567
      %v8215 = vmul.f32 %v8087, %v7656
      %v8216 = vmul.f32 %v8088, %v7745
      %v8217 = vmul.f32 %v8089, %v7481
      %v8218 = vmul.f32 %v8090, %v7570
      %v8219 = vmul.f32 %v8091, %v7659
      %v8220 = vmul.f32 %v8092, %v7748
      %v8221 = vmul.f32 %v8093, %v7483
      %v8222 = vmul.f32 %v8094, %v7572
      %v8223 = vmul.f32 %v8095, %v7661
      %v8224 = vmul.f32 %v8096, %v7750
      %v8225 = vmul.f32 %v8097, %v7486
      %v8226 = vmul.f32 %v8098, %v7575
      %v8227 = vmul.f32 %v8099, %v7664
      %v8228 = vmul.f32 %v8100, %v7753
      %v8229 = vmul.f32 %v8101, %v7488
      %v8230 = vmul.f32 %v8102, %v7577
      %v8231 = vmul.f32 %v8103, %v7666
      %v8232 = vmul.f32 %v8104, %v7755
      %v8233 = vmul.f32 %v8105, %v7491
      %v8234 = vmul.f32 %v8106, %v7580
      %v8235 = vmul.f32 %v8107, %v7669
      %v8236 = vmul.f32 %v8108, %v7758
      %v8237 = vmul.f32 %v8109, %v7493
      %v8238 = vmul.f32 %v8110, %v7582
      %v8239 = vmul.f32 %v8111, %v7671
      %v8240 = vmul.f32 %v8112, %v7760
      %v8241 = vmul.f32 %v8113, %v7496
      %v8242 = vmul.f32 %v8114, %v7585
      %v8243 = vmul.f32 %v8115, %v7674
      %v8244 = vmul.f32 %v8116, %v7763
      %v8245 = vmul.f32 %v8117, %v7498
      %v8246 = vmul.f32 %v8118, %v7587
      %v8247 = vmul.f32 %v8119, %v7676
      %v8248 = vmul.f32 %v8120, %v7765
      %v8249 = vmul.f32 %v8121, %v7501
      %v8250 = vmul.f32 %v8122, %v7590
      %v8251 = vmul.f32 %v8123, %v7679
      %v8252 = vmul.f32 %v8124, %v7768
      %v8253 = vmul.f32 %v8125, %v7503
      %v8254 = vmul.f32 %v8126, %v7592
      %v8255 = vmul.f32 %v8127, %v7681
      %v8256 = vmul.f32 %v8128, %v7770
      %v8257 = vmul.f32 %v8129, %v7506
      %v8258 = vmul.f32 %v8130, %v7595
      %v8259 = vmul.f32 %v8131, %v7684
      %v8260 = vmul.f32 %v8132, %v7773
      %v8261 = vmul.f32 %v8133, %v7508
      %v8262 = vmul.f32 %v8134, %v7597
      %v8263 = vmul.f32 %v8135, %v7686
      %v8264 = vmul.f32 %v8136, %v7775
      %v8265 = vmul.f32 %v8137, %v7511
      %v8266 = vmul.f32 %v8138, %v7600
      %v8267 = vmul.f32 %v8139, %v7689
      %v8268 = vmul.f32 %v8140, %v7778
      %v8269 = vmul.f32 %v8141, %v7513
      %v8270 = vmul.f32 %v8142, %v7602
      %v8271 = vmul.f32 %v8143, %v7691
      %v8272 = vmul.f32 %v8144, %v7780
      %v8273 = vmul.f32 %v8145, %v7516
      %v8274 = vmul.f32 %v8146, %v7605
      %v8275 = vmul.f32 %v8147, %v7694
      %v8276 = vmul.f32 %v8148, %v7783
      %v8277 = vmul.f32 %v8149, %v7518
      %v8278 = vmul.f32 %v8150, %v7607
      %v8279 = vmul.f32 %v8151, %v7696
      %v8280 = vmul.f32 %v8152, %v7785
      %v8281 = vmul.f32 %v8153, %v7521
      %v8282 = vmul.f32 %v8154, %v7610
      %v8283 = vmul.f32 %v8155, %v7699
      %v8284 = vmul.f32 %v8156, %v7788
      %v8285 = vmul.f32 %v8157, %v7523
      %v8286 = vmul.f32 %v8158, %v7612
      %v8287 = vmul.f32 %v8159, %v7701
      %v8288 = vmul.f32 %v8160, %v7790
      %v8289 = vmul.f32 %v8161, %v7526
      %v8290 = vmul.f32 %v8162, %v7615
      %v8291 = vmul.f32 %v8163, %v7704
      %v8292 = vmul.f32 %v8164, %v7793
      %v8293 = vmul.f32 %v8165, %v7528
      %v8294 = vmul.f32 %v8166, %v7617
      %v8295 = vmul.f32 %v8167, %v7706
      %v8296 = vmul.f32 %v8168, %v7795
      %v8297 = vmul.f32 %v8169, %v7531
      %v8298 = vmul.f32 %v8170, %v7620
      %v8299 = vmul.f32 %v8171, %v7709
      %v8300 = vmul.f32 %v8172, %v7798
      %v8301 = vmul.f32 %v8173, %v7533
      %v8302 = vmul.f32 %v8174, %v7622
      %v8303 = vmul.f32 %v8175, %v7711
      %v8304 = vmul.f32 %v8176, %v7800
      %v8305 = vmul.f32 %v8177, %v7536
      %v8306 = vmul.f32 %v8178, %v7625
      %v8307 = vmul.f32 %v8179, %v7714
      %v8308 = vmul.f32 %v8180, %v7803
      %v8309 = vmul.f32 %v8181, %v7538
      %v8310 = vmul.f32 %v8182, %v7627
      %v8311 = vmul.f32 %v8183, %v7716
      %v8312 = vmul.f32 %v8184, %v7805
      %v8313 = vmul.f32 %v8185, %v7541
      %v8314 = vmul.f32 %v8186, %v7630
      %v8315 = vmul.f32 %v8187, %v7719
      %v8316 = vmul.f32 %v8188, %v7808
      %v8317 = vmul.f32 %v8189, %v7543
      %v8318 = vmul.f32 %v8190, %v7632
      %v8319 = vmul.f32 %v8191, %v7721
      %v8320 = vmul.f32 %v8192, %v7810
      %v8321 = vmul.f32 %v8193, %v7546
      %v8322 = vmul.f32 %v8194, %v7635
      %v8323 = vmul.f32 %v8195, %v7724
      %v8324 = vmul.f32 %v8196, %v7813
      %v8325 = vmul.f32 %v8197, %v7548
      %v8326 = vmul.f32 %v8198, %v7637
      %v8327 = vmul.f32 %v8199, %v7726
      %v8328 = vmul.f32 %v8200, %v7815
      %v8329 = vadd.f32 %v7471, %v8201
      %v8330 = vadd.f32 %v7560, %v8202
      %v8331 = vadd.f32 %v7649, %v8203
      %v8332 = vadd.f32 %v7738, %v8204
      %v8333 = vadd.f32 %v7473, %v8205
      %v8334 = vadd.f32 %v7562, %v8206
      %v8335 = vadd.f32 %v7651, %v8207
      %v8336 = vadd.f32 %v7740, %v8208
      %v8337 = vadd.f32 %v7476, %v8209
      %v8338 = vadd.f32 %v7565, %v8210
      %v8339 = vadd.f32 %v7654, %v8211
      %v8340 = vadd.f32 %v7743, %v8212
      %v8341 = vadd.f32 %v7478, %v8213
      %v8342 = vadd.f32 %v7567, %v8214
      %v8343 = vadd.f32 %v7656, %v8215
      %v8344 = vadd.f32 %v7745, %v8216
      %v8345 = vadd.f32 %v7481, %v8217
      %v8346 = vadd.f32 %v7570, %v8218
      %v8347 = vadd.f32 %v7659, %v8219
      %v8348 = vadd.f32 %v7748, %v8220
      %v8349 = vadd.f32 %v7483, %v8221
      %v8350 = vadd.f32 %v7572, %v8222
      %v8351 = vadd.f32 %v7661, %v8223
      %v8352 = vadd.f32 %v7750, %v8224
      %v8353 = vadd.f32 %v7486, %v8225
      %v8354 = vadd.f32 %v7575, %v8226
      %v8355 = vadd.f32 %v7664, %v8227
      %v8356 = vadd.f32 %v7753, %v8228
      %v8357 = vadd.f32 %v7488, %v8229
      %v8358 = vadd.f32 %v7577, %v8230
      %v8359 = vadd.f32 %v7666, %v8231
      %v8360 = vadd.f32 %v7755, %v8232
      %v8361 = vadd.f32 %v7491, %v8233
      %v8362 = vadd.f32 %v7580, %v8234
      %v8363 = vadd.f32 %v7669, %v8235
      %v8364 = vadd.f32 %v7758, %v8236
      %v8365 = vadd.f32 %v7493, %v8237
      %v8366 = vadd.f32 %v7582, %v8238
      %v8367 = vadd.f32 %v7671, %v8239
      %v8368 = vadd.f32 %v7760, %v8240
      %v8369 = vadd.f32 %v7496, %v8241
      %v8370 = vadd.f32 %v7585, %v8242
      %v8371 = vadd.f32 %v7674, %v8243
      %v8372 = vadd.f32 %v7763, %v8244
      %v8373 = vadd.f32 %v7498, %v8245
      %v8374 = vadd.f32 %v7587, %v8246
      %v8375 = vadd.f32 %v7676, %v8247
      %v8376 = vadd.f32 %v7765, %v8248
      %v8377 = vadd.f32 %v7501, %v8249
      %v8378 = vadd.f32 %v7590, %v8250
      %v8379 = vadd.f32 %v7679, %v8251
      %v8380 = vadd.f32 %v7768, %v8252
      %v8381 = vadd.f32 %v7503, %v8253
      %v8382 = vadd.f32 %v7592, %v8254
      %v8383 = vadd.f32 %v7681, %v8255
      %v8384 = vadd.f32 %v7770, %v8256
      %v8385 = vadd.f32 %v7506, %v8257
      %v8386 = vadd.f32 %v7595, %v8258
      %v8387 = vadd.f32 %v7684, %v8259
      %v8388 = vadd.f32 %v7773, %v8260
      %v8389 = vadd.f32 %v7508, %v8261
      %v8390 = vadd.f32 %v7597, %v8262
      %v8391 = vadd.f32 %v7686, %v8263
      %v8392 = vadd.f32 %v7775, %v8264
      %v8393 = vadd.f32 %v7511, %v8265
      %v8394 = vadd.f32 %v7600, %v8266
      %v8395 = vadd.f32 %v7689, %v8267
      %v8396 = vadd.f32 %v7778, %v8268
      %v8397 = vadd.f32 %v7513, %v8269
      %v8398 = vadd.f32 %v7602, %v8270
      %v8399 = vadd.f32 %v7691, %v8271
      %v8400 = vadd.f32 %v7780, %v8272
      %v8401 = vadd.f32 %v7516, %v8273
      %v8402 = vadd.f32 %v7605, %v8274
      %v8403 = vadd.f32 %v7694, %v8275
      %v8404 = vadd.f32 %v7783, %v8276
      %v8405 = vadd.f32 %v7518, %v8277
      %v8406 = vadd.f32 %v7607, %v8278
      %v8407 = vadd.f32 %v7696, %v8279
      %v8408 = vadd.f32 %v7785, %v8280
      %v8409 = vadd.f32 %v7521, %v8281
      %v8410 = vadd.f32 %v7610, %v8282
      %v8411 = vadd.f32 %v7699, %v8283
      %v8412 = vadd.f32 %v7788, %v8284
      %v8413 = vadd.f32 %v7523, %v8285
      %v8414 = vadd.f32 %v7612, %v8286
      %v8415 = vadd.f32 %v7701, %v8287
      %v8416 = vadd.f32 %v7790, %v8288
      %v8417 = vadd.f32 %v7526, %v8289
      %v8418 = vadd.f32 %v7615, %v8290
      %v8419 = vadd.f32 %v7704, %v8291
      %v8420 = vadd.f32 %v7793, %v8292
      %v8421 = vadd.f32 %v7528, %v8293
      %v8422 = vadd.f32 %v7617, %v8294
      %v8423 = vadd.f32 %v7706, %v8295
      %v8424 = vadd.f32 %v7795, %v8296
      %v8425 = vadd.f32 %v7531, %v8297
      %v8426 = vadd.f32 %v7620, %v8298
      %v8427 = vadd.f32 %v7709, %v8299
      %v8428 = vadd.f32 %v7798, %v8300
      %v8429 = vadd.f32 %v7533, %v8301
      %v8430 = vadd.f32 %v7622, %v8302
      %v8431 = vadd.f32 %v7711, %v8303
      %v8432 = vadd.f32 %v7800, %v8304
      %v8433 = vadd.f32 %v7536, %v8305
      %v8434 = vadd.f32 %v7625, %v8306
      %v8435 = vadd.f32 %v7714, %v8307
      %v8436 = vadd.f32 %v7803, %v8308
      %v8437 = vadd.f32 %v7538, %v8309
      %v8438 = vadd.f32 %v7627, %v8310
      %v8439 = vadd.f32 %v7716, %v8311
      %v8440 = vadd.f32 %v7805, %v8312
      %v8441 = vadd.f32 %v7541, %v8313
      %v8442 = vadd.f32 %v7630, %v8314
      %v8443 = vadd.f32 %v7719, %v8315
      %v8444 = vadd.f32 %v7808, %v8316
      %v8445 = vadd.f32 %v7543, %v8317
      %v8446 = vadd.f32 %v7632, %v8318
      %v8447 = vadd.f32 %v7721, %v8319
      %v8448 = vadd.f32 %v7810, %v8320
      %v8449 = vadd.f32 %v7546, %v8321
      %v8450 = vadd.f32 %v7635, %v8322
      %v8451 = vadd.f32 %v7724, %v8323
      %v8452 = vadd.f32 %v7813, %v8324
      %v8453 = vadd.f32 %v7548, %v8325
      %v8454 = vadd.f32 %v7637, %v8326
      %v8455 = vadd.f32 %v7726, %v8327
      %v8456 = vadd.f32 %v7815, %v8328
      %v8457 = vmul.f32 %v8329, 0.7978846
      %v8458 = vmul.f32 %v8330, 0.7978846
      %v8459 = vmul.f32 %v8331, 0.7978846
      %v8460 = vmul.f32 %v8332, 0.7978846
      %v8461 = vmul.f32 %v8333, 0.7978846
      %v8462 = vmul.f32 %v8334, 0.7978846
      %v8463 = vmul.f32 %v8335, 0.7978846
      %v8464 = vmul.f32 %v8336, 0.7978846
      %v8465 = vmul.f32 %v8337, 0.7978846
      %v8466 = vmul.f32 %v8338, 0.7978846
      %v8467 = vmul.f32 %v8339, 0.7978846
      %v8468 = vmul.f32 %v8340, 0.7978846
      %v8469 = vmul.f32 %v8341, 0.7978846
      %v8470 = vmul.f32 %v8342, 0.7978846
      %v8471 = vmul.f32 %v8343, 0.7978846
      %v8472 = vmul.f32 %v8344, 0.7978846
      %v8473 = vmul.f32 %v8345, 0.7978846
      %v8474 = vmul.f32 %v8346, 0.7978846
      %v8475 = vmul.f32 %v8347, 0.7978846
      %v8476 = vmul.f32 %v8348, 0.7978846
      %v8477 = vmul.f32 %v8349, 0.7978846
      %v8478 = vmul.f32 %v8350, 0.7978846
      %v8479 = vmul.f32 %v8351, 0.7978846
      %v8480 = vmul.f32 %v8352, 0.7978846
      %v8481 = vmul.f32 %v8353, 0.7978846
      %v8482 = vmul.f32 %v8354, 0.7978846
      %v8483 = vmul.f32 %v8355, 0.7978846
      %v8484 = vmul.f32 %v8356, 0.7978846
      %v8485 = vmul.f32 %v8357, 0.7978846
      %v8486 = vmul.f32 %v8358, 0.7978846
      %v8487 = vmul.f32 %v8359, 0.7978846
      %v8488 = vmul.f32 %v8360, 0.7978846
      %v8489 = vmul.f32 %v8361, 0.7978846
      %v8490 = vmul.f32 %v8362, 0.7978846
      %v8491 = vmul.f32 %v8363, 0.7978846
      %v8492 = vmul.f32 %v8364, 0.7978846
      %v8493 = vmul.f32 %v8365, 0.7978846
      %v8494 = vmul.f32 %v8366, 0.7978846
      %v8495 = vmul.f32 %v8367, 0.7978846
      %v8496 = vmul.f32 %v8368, 0.7978846
      %v8497 = vmul.f32 %v8369, 0.7978846
      %v8498 = vmul.f32 %v8370, 0.7978846
      %v8499 = vmul.f32 %v8371, 0.7978846
      %v8500 = vmul.f32 %v8372, 0.7978846
      %v8501 = vmul.f32 %v8373, 0.7978846
      %v8502 = vmul.f32 %v8374, 0.7978846
      %v8503 = vmul.f32 %v8375, 0.7978846
      %v8504 = vmul.f32 %v8376, 0.7978846
      %v8505 = vmul.f32 %v8377, 0.7978846
      %v8506 = vmul.f32 %v8378, 0.7978846
      %v8507 = vmul.f32 %v8379, 0.7978846
      %v8508 = vmul.f32 %v8380, 0.7978846
      %v8509 = vmul.f32 %v8381, 0.7978846
      %v8510 = vmul.f32 %v8382, 0.7978846
      %v8511 = vmul.f32 %v8383, 0.7978846
      %v8512 = vmul.f32 %v8384, 0.7978846
      %v8513 = vmul.f32 %v8385, 0.7978846
      %v8514 = vmul.f32 %v8386, 0.7978846
      %v8515 = vmul.f32 %v8387, 0.7978846
      %v8516 = vmul.f32 %v8388, 0.7978846
      %v8517 = vmul.f32 %v8389, 0.7978846
      %v8518 = vmul.f32 %v8390, 0.7978846
      %v8519 = vmul.f32 %v8391, 0.7978846
      %v8520 = vmul.f32 %v8392, 0.7978846
      %v8521 = vmul.f32 %v8393, 0.7978846
      %v8522 = vmul.f32 %v8394, 0.7978846
      %v8523 = vmul.f32 %v8395, 0.7978846
      %v8524 = vmul.f32 %v8396, 0.7978846
      %v8525 = vmul.f32 %v8397, 0.7978846
      %v8526 = vmul.f32 %v8398, 0.7978846
      %v8527 = vmul.f32 %v8399, 0.7978846
      %v8528 = vmul.f32 %v8400, 0.7978846
      %v8529 = vmul.f32 %v8401, 0.7978846
      %v8530 = vmul.f32 %v8402, 0.7978846
      %v8531 = vmul.f32 %v8403, 0.7978846
      %v8532 = vmul.f32 %v8404, 0.7978846
      %v8533 = vmul.f32 %v8405, 0.7978846
      %v8534 = vmul.f32 %v8406, 0.7978846
      %v8535 = vmul.f32 %v8407, 0.7978846
      %v8536 = vmul.f32 %v8408, 0.7978846
      %v8537 = vmul.f32 %v8409, 0.7978846
      %v8538 = vmul.f32 %v8410, 0.7978846
      %v8539 = vmul.f32 %v8411, 0.7978846
      %v8540 = vmul.f32 %v8412, 0.7978846
      %v8541 = vmul.f32 %v8413, 0.7978846
      %v8542 = vmul.f32 %v8414, 0.7978846
      %v8543 = vmul.f32 %v8415, 0.7978846
      %v8544 = vmul.f32 %v8416, 0.7978846
      %v8545 = vmul.f32 %v8417, 0.7978846
      %v8546 = vmul.f32 %v8418, 0.7978846
      %v8547 = vmul.f32 %v8419, 0.7978846
      %v8548 = vmul.f32 %v8420, 0.7978846
      %v8549 = vmul.f32 %v8421, 0.7978846
      %v8550 = vmul.f32 %v8422, 0.7978846
      %v8551 = vmul.f32 %v8423, 0.7978846
      %v8552 = vmul.f32 %v8424, 0.7978846
      %v8553 = vmul.f32 %v8425, 0.7978846
      %v8554 = vmul.f32 %v8426, 0.7978846
      %v8555 = vmul.f32 %v8427, 0.7978846
      %v8556 = vmul.f32 %v8428, 0.7978846
      %v8557 = vmul.f32 %v8429, 0.7978846
      %v8558 = vmul.f32 %v8430, 0.7978846
      %v8559 = vmul.f32 %v8431, 0.7978846
      %v8560 = vmul.f32 %v8432, 0.7978846
      %v8561 = vmul.f32 %v8433, 0.7978846
      %v8562 = vmul.f32 %v8434, 0.7978846
      %v8563 = vmul.f32 %v8435, 0.7978846
      %v8564 = vmul.f32 %v8436, 0.7978846
      %v8565 = vmul.f32 %v8437, 0.7978846
      %v8566 = vmul.f32 %v8438, 0.7978846
      %v8567 = vmul.f32 %v8439, 0.7978846
      %v8568 = vmul.f32 %v8440, 0.7978846
      %v8569 = vmul.f32 %v8441, 0.7978846
      %v8570 = vmul.f32 %v8442, 0.7978846
      %v8571 = vmul.f32 %v8443, 0.7978846
      %v8572 = vmul.f32 %v8444, 0.7978846
      %v8573 = vmul.f32 %v8445, 0.7978846
      %v8574 = vmul.f32 %v8446, 0.7978846
      %v8575 = vmul.f32 %v8447, 0.7978846
      %v8576 = vmul.f32 %v8448, 0.7978846
      %v8577 = vmul.f32 %v8449, 0.7978846
      %v8578 = vmul.f32 %v8450, 0.7978846
      %v8579 = vmul.f32 %v8451, 0.7978846
      %v8580 = vmul.f32 %v8452, 0.7978846
      %v8581 = vmul.f32 %v8453, 0.7978846
      %v8582 = vmul.f32 %v8454, 0.7978846
      %v8583 = vmul.f32 %v8455, 0.7978846
      %v8584 = vmul.f32 %v8456, 0.7978846
      %v8585 = vtanh.pop %v8457
      %v8586 = vtanh.pop %v8458
      %v8587 = vtanh.pop %v8459
      %v8588 = vtanh.pop %v8460
      %v8589 = vtanh.pop %v8461
      %v8590 = vtanh.pop %v8462
      %v8591 = vtanh.pop %v8463
      %v8592 = vtanh.pop %v8464
      %v8593 = vtanh.pop %v8465
      %v8594 = vtanh.pop %v8466
      %v8595 = vtanh.pop %v8467
      %v8596 = vtanh.pop %v8468
      %v8597 = vtanh.pop %v8469
      %v8598 = vtanh.pop %v8470
      %v8599 = vtanh.pop %v8471
      %v8600 = vtanh.pop %v8472
      %v8601 = vtanh.pop %v8473
      %v8602 = vtanh.pop %v8474
      %v8603 = vtanh.pop %v8475
      %v8604 = vtanh.pop %v8476
      %v8605 = vtanh.pop %v8477
      %v8606 = vtanh.pop %v8478
      %v8607 = vtanh.pop %v8479
      %v8608 = vtanh.pop %v8480
      %v8609 = vtanh.pop %v8481
      %v8610 = vtanh.pop %v8482
      %v8611 = vtanh.pop %v8483
      %v8612 = vtanh.pop %v8484
      %v8613 = vtanh.pop %v8485
      %v8614 = vtanh.pop %v8486
      %v8615 = vtanh.pop %v8487
      %v8616 = vtanh.pop %v8488
      %v8617 = vtanh.pop %v8489
      %v8618 = vtanh.pop %v8490
      %v8619 = vtanh.pop %v8491
      %v8620 = vtanh.pop %v8492
      %v8621 = vtanh.pop %v8493
      %v8622 = vtanh.pop %v8494
      %v8623 = vtanh.pop %v8495
      %v8624 = vtanh.pop %v8496
      %v8625 = vtanh.pop %v8497
      %v8626 = vtanh.pop %v8498
      %v8627 = vtanh.pop %v8499
      %v8628 = vtanh.pop %v8500
      %v8629 = vtanh.pop %v8501
      %v8630 = vtanh.pop %v8502
      %v8631 = vtanh.pop %v8503
      %v8632 = vtanh.pop %v8504
      %v8633 = vtanh.pop %v8505
      %v8634 = vtanh.pop %v8506
      %v8635 = vtanh.pop %v8507
      %v8636 = vtanh.pop %v8508
      %v8637 = vtanh.pop %v8509
      %v8638 = vtanh.pop %v8510
      %v8639 = vtanh.pop %v8511
      %v8640 = vtanh.pop %v8512
      %v8641 = vtanh.pop %v8513
      %v8642 = vtanh.pop %v8514
      %v8643 = vtanh.pop %v8515
      %v8644 = vtanh.pop %v8516
      %v8645 = vtanh.pop %v8517
      %v8646 = vtanh.pop %v8518
      %v8647 = vtanh.pop %v8519
      %v8648 = vtanh.pop %v8520
      %v8649 = vtanh.pop %v8521
      %v8650 = vtanh.pop %v8522
      %v8651 = vtanh.pop %v8523
      %v8652 = vtanh.pop %v8524
      %v8653 = vtanh.pop %v8525
      %v8654 = vtanh.pop %v8526
      %v8655 = vtanh.pop %v8527
      %v8656 = vtanh.pop %v8528
      %v8657 = vtanh.pop %v8529
      %v8658 = vtanh.pop %v8530
      %v8659 = vtanh.pop %v8531
      %v8660 = vtanh.pop %v8532
      %v8661 = vtanh.pop %v8533
      %v8662 = vtanh.pop %v8534
      %v8663 = vtanh.pop %v8535
      %v8664 = vtanh.pop %v8536
      %v8665 = vtanh.pop %v8537
      %v8666 = vtanh.pop %v8538
      %v8667 = vtanh.pop %v8539
      %v8668 = vtanh.pop %v8540
      %v8669 = vtanh.pop %v8541
      %v8670 = vtanh.pop %v8542
      %v8671 = vtanh.pop %v8543
      %v8672 = vtanh.pop %v8544
      %v8673 = vtanh.pop %v8545
      %v8674 = vtanh.pop %v8546
      %v8675 = vtanh.pop %v8547
      %v8676 = vtanh.pop %v8548
      %v8677 = vtanh.pop %v8549
      %v8678 = vtanh.pop %v8550
      %v8679 = vtanh.pop %v8551
      %v8680 = vtanh.pop %v8552
      %v8681 = vtanh.pop %v8553
      %v8682 = vtanh.pop %v8554
      %v8683 = vtanh.pop %v8555
      %v8684 = vtanh.pop %v8556
      %v8685 = vtanh.pop %v8557
      %v8686 = vtanh.pop %v8558
      %v8687 = vtanh.pop %v8559
      %v8688 = vtanh.pop %v8560
      %v8689 = vtanh.pop %v8561
      %v8690 = vtanh.pop %v8562
      %v8691 = vtanh.pop %v8563
      %v8692 = vtanh.pop %v8564
      %v8693 = vtanh.pop %v8565
      %v8694 = vtanh.pop %v8566
      %v8695 = vtanh.pop %v8567
      %v8696 = vtanh.pop %v8568
      %v8697 = vtanh.pop %v8569
      %v8698 = vtanh.pop %v8570
      %v8699 = vtanh.pop %v8571
      %v8700 = vtanh.pop %v8572
      %v8701 = vtanh.pop %v8573
      %v8702 = vtanh.pop %v8574
      %v8703 = vtanh.pop %v8575
      %v8704 = vtanh.pop %v8576
      %v8705 = vtanh.pop %v8577
      %v8706 = vtanh.pop %v8578
      %v8707 = vtanh.pop %v8579
      %v8708 = vtanh.pop %v8580
      %v8709 = vtanh.pop %v8581
      %v8710 = vtanh.pop %v8582
      %v8711 = vtanh.pop %v8583
      %v8712 = vtanh.pop %v8584
      %v8713 = vadd.f32 %v8585, 1.0
      %v8714 = vadd.f32 %v8586, 1.0
      %v8715 = vadd.f32 %v8587, 1.0
      %v8716 = vadd.f32 %v8588, 1.0
      %v8717 = vadd.f32 %v8589, 1.0
      %v8718 = vadd.f32 %v8590, 1.0
      %v8719 = vadd.f32 %v8591, 1.0
      %v8720 = vadd.f32 %v8592, 1.0
      %v8721 = vadd.f32 %v8593, 1.0
      %v8722 = vadd.f32 %v8594, 1.0
      %v8723 = vadd.f32 %v8595, 1.0
      %v8724 = vadd.f32 %v8596, 1.0
      %v8725 = vadd.f32 %v8597, 1.0
      %v8726 = vadd.f32 %v8598, 1.0
      %v8727 = vadd.f32 %v8599, 1.0
      %v8728 = vadd.f32 %v8600, 1.0
      %v8729 = vadd.f32 %v8601, 1.0
      %v8730 = vadd.f32 %v8602, 1.0
      %v8731 = vadd.f32 %v8603, 1.0
      %v8732 = vadd.f32 %v8604, 1.0
      %v8733 = vadd.f32 %v8605, 1.0
      %v8734 = vadd.f32 %v8606, 1.0
      %v8735 = vadd.f32 %v8607, 1.0
      %v8736 = vadd.f32 %v8608, 1.0
      %v8737 = vadd.f32 %v8609, 1.0
      %v8738 = vadd.f32 %v8610, 1.0
      %v8739 = vadd.f32 %v8611, 1.0
      %v8740 = vadd.f32 %v8612, 1.0
      %v8741 = vadd.f32 %v8613, 1.0
      %v8742 = vadd.f32 %v8614, 1.0
      %v8743 = vadd.f32 %v8615, 1.0
      %v8744 = vadd.f32 %v8616, 1.0
      %v8745 = vadd.f32 %v8617, 1.0
      %v8746 = vadd.f32 %v8618, 1.0
      %v8747 = vadd.f32 %v8619, 1.0
      %v8748 = vadd.f32 %v8620, 1.0
      %v8749 = vadd.f32 %v8621, 1.0
      %v8750 = vadd.f32 %v8622, 1.0
      %v8751 = vadd.f32 %v8623, 1.0
      %v8752 = vadd.f32 %v8624, 1.0
      %v8753 = vadd.f32 %v8625, 1.0
      %v8754 = vadd.f32 %v8626, 1.0
      %v8755 = vadd.f32 %v8627, 1.0
      %v8756 = vadd.f32 %v8628, 1.0
      %v8757 = vadd.f32 %v8629, 1.0
      %v8758 = vadd.f32 %v8630, 1.0
      %v8759 = vadd.f32 %v8631, 1.0
      %v8760 = vadd.f32 %v8632, 1.0
      %v8761 = vadd.f32 %v8633, 1.0
      %v8762 = vadd.f32 %v8634, 1.0
      %v8763 = vadd.f32 %v8635, 1.0
      %v8764 = vadd.f32 %v8636, 1.0
      %v8765 = vadd.f32 %v8637, 1.0
      %v8766 = vadd.f32 %v8638, 1.0
      %v8767 = vadd.f32 %v8639, 1.0
      %v8768 = vadd.f32 %v8640, 1.0
      %v8769 = vadd.f32 %v8641, 1.0
      %v8770 = vadd.f32 %v8642, 1.0
      %v8771 = vadd.f32 %v8643, 1.0
      %v8772 = vadd.f32 %v8644, 1.0
      %v8773 = vadd.f32 %v8645, 1.0
      %v8774 = vadd.f32 %v8646, 1.0
      %v8775 = vadd.f32 %v8647, 1.0
      %v8776 = vadd.f32 %v8648, 1.0
      %v8777 = vadd.f32 %v8649, 1.0
      %v8778 = vadd.f32 %v8650, 1.0
      %v8779 = vadd.f32 %v8651, 1.0
      %v8780 = vadd.f32 %v8652, 1.0
      %v8781 = vadd.f32 %v8653, 1.0
      %v8782 = vadd.f32 %v8654, 1.0
      %v8783 = vadd.f32 %v8655, 1.0
      %v8784 = vadd.f32 %v8656, 1.0
      %v8785 = vadd.f32 %v8657, 1.0
      %v8786 = vadd.f32 %v8658, 1.0
      %v8787 = vadd.f32 %v8659, 1.0
      %v8788 = vadd.f32 %v8660, 1.0
      %v8789 = vadd.f32 %v8661, 1.0
      %v8790 = vadd.f32 %v8662, 1.0
      %v8791 = vadd.f32 %v8663, 1.0
      %v8792 = vadd.f32 %v8664, 1.0
      %v8793 = vadd.f32 %v8665, 1.0
      %v8794 = vadd.f32 %v8666, 1.0
      %v8795 = vadd.f32 %v8667, 1.0
      %v8796 = vadd.f32 %v8668, 1.0
      %v8797 = vadd.f32 %v8669, 1.0
      %v8798 = vadd.f32 %v8670, 1.0
      %v8799 = vadd.f32 %v8671, 1.0
      %v8800 = vadd.f32 %v8672, 1.0
      %v8801 = vadd.f32 %v8673, 1.0
      %v8802 = vadd.f32 %v8674, 1.0
      %v8803 = vadd.f32 %v8675, 1.0
      %v8804 = vadd.f32 %v8676, 1.0
      %v8805 = vadd.f32 %v8677, 1.0
      %v8806 = vadd.f32 %v8678, 1.0
      %v8807 = vadd.f32 %v8679, 1.0
      %v8808 = vadd.f32 %v8680, 1.0
      %v8809 = vadd.f32 %v8681, 1.0
      %v8810 = vadd.f32 %v8682, 1.0
      %v8811 = vadd.f32 %v8683, 1.0
      %v8812 = vadd.f32 %v8684, 1.0
      %v8813 = vadd.f32 %v8685, 1.0
      %v8814 = vadd.f32 %v8686, 1.0
      %v8815 = vadd.f32 %v8687, 1.0
      %v8816 = vadd.f32 %v8688, 1.0
      %v8817 = vadd.f32 %v8689, 1.0
      %v8818 = vadd.f32 %v8690, 1.0
      %v8819 = vadd.f32 %v8691, 1.0
      %v8820 = vadd.f32 %v8692, 1.0
      %v8821 = vadd.f32 %v8693, 1.0
      %v8822 = vadd.f32 %v8694, 1.0
      %v8823 = vadd.f32 %v8695, 1.0
      %v8824 = vadd.f32 %v8696, 1.0
      %v8825 = vadd.f32 %v8697, 1.0
      %v8826 = vadd.f32 %v8698, 1.0
      %v8827 = vadd.f32 %v8699, 1.0
      %v8828 = vadd.f32 %v8700, 1.0
      %v8829 = vadd.f32 %v8701, 1.0
      %v8830 = vadd.f32 %v8702, 1.0
      %v8831 = vadd.f32 %v8703, 1.0
      %v8832 = vadd.f32 %v8704, 1.0
      %v8833 = vadd.f32 %v8705, 1.0
      %v8834 = vadd.f32 %v8706, 1.0
      %v8835 = vadd.f32 %v8707, 1.0
      %v8836 = vadd.f32 %v8708, 1.0
      %v8837 = vadd.f32 %v8709, 1.0
      %v8838 = vadd.f32 %v8710, 1.0
      %v8839 = vadd.f32 %v8711, 1.0
      %v8840 = vadd.f32 %v8712, 1.0
      %v8841 = vmul.f32 %v7817, %v8713
      %v8842 = vmul.f32 %v7818, %v8714
      %v8843 = vmul.f32 %v7819, %v8715
      %v8844 = vmul.f32 %v7820, %v8716
      %v8845 = vmul.f32 %v7821, %v8717
      %v8846 = vmul.f32 %v7822, %v8718
      %v8847 = vmul.f32 %v7823, %v8719
      %v8848 = vmul.f32 %v7824, %v8720
      %v8849 = vmul.f32 %v7825, %v8721
      %v8850 = vmul.f32 %v7826, %v8722
      %v8851 = vmul.f32 %v7827, %v8723
      %v8852 = vmul.f32 %v7828, %v8724
      %v8853 = vmul.f32 %v7829, %v8725
      %v8854 = vmul.f32 %v7830, %v8726
      %v8855 = vmul.f32 %v7831, %v8727
      %v8856 = vmul.f32 %v7832, %v8728
      %v8857 = vmul.f32 %v7833, %v8729
      %v8858 = vmul.f32 %v7834, %v8730
      %v8859 = vmul.f32 %v7835, %v8731
      %v8860 = vmul.f32 %v7836, %v8732
      %v8861 = vmul.f32 %v7837, %v8733
      %v8862 = vmul.f32 %v7838, %v8734
      %v8863 = vmul.f32 %v7839, %v8735
      %v8864 = vmul.f32 %v7840, %v8736
      %v8865 = vmul.f32 %v7841, %v8737
      %v8866 = vmul.f32 %v7842, %v8738
      %v8867 = vmul.f32 %v7843, %v8739
      %v8868 = vmul.f32 %v7844, %v8740
      %v8869 = vmul.f32 %v7845, %v8741
      %v8870 = vmul.f32 %v7846, %v8742
      %v8871 = vmul.f32 %v7847, %v8743
      %v8872 = vmul.f32 %v7848, %v8744
      %v8873 = vmul.f32 %v7849, %v8745
      %v8874 = vmul.f32 %v7850, %v8746
      %v8875 = vmul.f32 %v7851, %v8747
      %v8876 = vmul.f32 %v7852, %v8748
      %v8877 = vmul.f32 %v7853, %v8749
      %v8878 = vmul.f32 %v7854, %v8750
      %v8879 = vmul.f32 %v7855, %v8751
      %v8880 = vmul.f32 %v7856, %v8752
      %v8881 = vmul.f32 %v7857, %v8753
      %v8882 = vmul.f32 %v7858, %v8754
      %v8883 = vmul.f32 %v7859, %v8755
      %v8884 = vmul.f32 %v7860, %v8756
      %v8885 = vmul.f32 %v7861, %v8757
      %v8886 = vmul.f32 %v7862, %v8758
      %v8887 = vmul.f32 %v7863, %v8759
      %v8888 = vmul.f32 %v7864, %v8760
      %v8889 = vmul.f32 %v7865, %v8761
      %v8890 = vmul.f32 %v7866, %v8762
      %v8891 = vmul.f32 %v7867, %v8763
      %v8892 = vmul.f32 %v7868, %v8764
      %v8893 = vmul.f32 %v7869, %v8765
      %v8894 = vmul.f32 %v7870, %v8766
      %v8895 = vmul.f32 %v7871, %v8767
      %v8896 = vmul.f32 %v7872, %v8768
      %v8897 = vmul.f32 %v7873, %v8769
      %v8898 = vmul.f32 %v7874, %v8770
      %v8899 = vmul.f32 %v7875, %v8771
      %v8900 = vmul.f32 %v7876, %v8772
      %v8901 = vmul.f32 %v7877, %v8773
      %v8902 = vmul.f32 %v7878, %v8774
      %v8903 = vmul.f32 %v7879, %v8775
      %v8904 = vmul.f32 %v7880, %v8776
      %v8905 = vmul.f32 %v7881, %v8777
      %v8906 = vmul.f32 %v7882, %v8778
      %v8907 = vmul.f32 %v7883, %v8779
      %v8908 = vmul.f32 %v7884, %v8780
      %v8909 = vmul.f32 %v7885, %v8781
      %v8910 = vmul.f32 %v7886, %v8782
      %v8911 = vmul.f32 %v7887, %v8783
      %v8912 = vmul.f32 %v7888, %v8784
      %v8913 = vmul.f32 %v7889, %v8785
      %v8914 = vmul.f32 %v7890, %v8786
      %v8915 = vmul.f32 %v7891, %v8787
      %v8916 = vmul.f32 %v7892, %v8788
      %v8917 = vmul.f32 %v7893, %v8789
      %v8918 = vmul.f32 %v7894, %v8790
      %v8919 = vmul.f32 %v7895, %v8791
      %v8920 = vmul.f32 %v7896, %v8792
      %v8921 = vmul.f32 %v7897, %v8793
      %v8922 = vmul.f32 %v7898, %v8794
      %v8923 = vmul.f32 %v7899, %v8795
      %v8924 = vmul.f32 %v7900, %v8796
      %v8925 = vmul.f32 %v7901, %v8797
      %v8926 = vmul.f32 %v7902, %v8798
      %v8927 = vmul.f32 %v7903, %v8799
      %v8928 = vmul.f32 %v7904, %v8800
      %v8929 = vmul.f32 %v7905, %v8801
      %v8930 = vmul.f32 %v7906, %v8802
      %v8931 = vmul.f32 %v7907, %v8803
      %v8932 = vmul.f32 %v7908, %v8804
      %v8933 = vmul.f32 %v7909, %v8805
      %v8934 = vmul.f32 %v7910, %v8806
      %v8935 = vmul.f32 %v7911, %v8807
      %v8936 = vmul.f32 %v7912, %v8808
      %v8937 = vmul.f32 %v7913, %v8809
      %v8938 = vmul.f32 %v7914, %v8810
      %v8939 = vmul.f32 %v7915, %v8811
      %v8940 = vmul.f32 %v7916, %v8812
      %v8941 = vmul.f32 %v7917, %v8813
      %v8942 = vmul.f32 %v7918, %v8814
      %v8943 = vmul.f32 %v7919, %v8815
      %v8944 = vmul.f32 %v7920, %v8816
      %v8945 = vmul.f32 %v7921, %v8817
      %v8946 = vmul.f32 %v7922, %v8818
      %v8947 = vmul.f32 %v7923, %v8819
      %v8948 = vmul.f32 %v7924, %v8820
      %v8949 = vmul.f32 %v7925, %v8821
      %v8950 = vmul.f32 %v7926, %v8822
      %v8951 = vmul.f32 %v7927, %v8823
      %v8952 = vmul.f32 %v7928, %v8824
      %v8953 = vmul.f32 %v7929, %v8825
      %v8954 = vmul.f32 %v7930, %v8826
      %v8955 = vmul.f32 %v7931, %v8827
      %v8956 = vmul.f32 %v7932, %v8828
      %v8957 = vmul.f32 %v7933, %v8829
      %v8958 = vmul.f32 %v7934, %v8830
      %v8959 = vmul.f32 %v7935, %v8831
      %v8960 = vmul.f32 %v7936, %v8832
      %v8961 = vmul.f32 %v7937, %v8833
      %v8962 = vmul.f32 %v7938, %v8834
      %v8963 = vmul.f32 %v7939, %v8835
      %v8964 = vmul.f32 %v7940, %v8836
      %v8965 = vmul.f32 %v7941, %v8837
      %v8966 = vmul.f32 %v7942, %v8838
      %v8967 = vmul.f32 %v7943, %v8839
      %v8968 = vmul.f32 %v7944, %v8840
      %v8969 = vpack.c.bf16 %v8845, %v8841
      %v8970 = vpack.c.bf16 %v8846, %v8842
      %v8971 = vpack.c.bf16 %v8847, %v8843
      %v8972 = vpack.c.bf16 %v8848, %v8844
      %v8973 = vpack.c.bf16 %v8853, %v8849
      %v8974 = vpack.c.bf16 %v8854, %v8850
      %v8975 = vpack.c.bf16 %v8855, %v8851
      %v8976 = vpack.c.bf16 %v8856, %v8852
      %v8977 = vpack.c.bf16 %v8861, %v8857
      %v8978 = vpack.c.bf16 %v8862, %v8858
      %v8979 = vpack.c.bf16 %v8863, %v8859
      %v8980 = vpack.c.bf16 %v8864, %v8860
      %v8981 = vpack.c.bf16 %v8869, %v8865
      %v8982 = vpack.c.bf16 %v8870, %v8866
      %v8983 = vpack.c.bf16 %v8871, %v8867
      %v8984 = vpack.c.bf16 %v8872, %v8868
      %v8985 = vpack.c.bf16 %v8877, %v8873
      %v8986 = vpack.c.bf16 %v8878, %v8874
      %v8987 = vpack.c.bf16 %v8879, %v8875
      %v8988 = vpack.c.bf16 %v8880, %v8876
      %v8989 = vpack.c.bf16 %v8885, %v8881
      %v8990 = vpack.c.bf16 %v8886, %v8882
      %v8991 = vpack.c.bf16 %v8887, %v8883
      %v8992 = vpack.c.bf16 %v8888, %v8884
      %v8993 = vpack.c.bf16 %v8893, %v8889
      %v8994 = vpack.c.bf16 %v8894, %v8890
      %v8995 = vpack.c.bf16 %v8895, %v8891
      %v8996 = vpack.c.bf16 %v8896, %v8892
      %v8997 = vpack.c.bf16 %v8901, %v8897
      %v8998 = vpack.c.bf16 %v8902, %v8898
      %v8999 = vpack.c.bf16 %v8903, %v8899
      %v9000 = vpack.c.bf16 %v8904, %v8900
      %v9001 = vpack.c.bf16 %v8909, %v8905
      %v9002 = vpack.c.bf16 %v8910, %v8906
      %v9003 = vpack.c.bf16 %v8911, %v8907
      %v9004 = vpack.c.bf16 %v8912, %v8908
      %v9005 = vpack.c.bf16 %v8917, %v8913
      %v9006 = vpack.c.bf16 %v8918, %v8914
      %v9007 = vpack.c.bf16 %v8919, %v8915
      %v9008 = vpack.c.bf16 %v8920, %v8916
      %v9009 = vpack.c.bf16 %v8925, %v8921
      %v9010 = vpack.c.bf16 %v8926, %v8922
      %v9011 = vpack.c.bf16 %v8927, %v8923
      %v9012 = vpack.c.bf16 %v8928, %v8924
      %v9013 = vpack.c.bf16 %v8933, %v8929
      %v9014 = vpack.c.bf16 %v8934, %v8930
      %v9015 = vpack.c.bf16 %v8935, %v8931
      %v9016 = vpack.c.bf16 %v8936, %v8932
      %v9017 = vpack.c.bf16 %v8941, %v8937
      %v9018 = vpack.c.bf16 %v8942, %v8938
      %v9019 = vpack.c.bf16 %v8943, %v8939
      %v9020 = vpack.c.bf16 %v8944, %v8940
      %v9021 = vpack.c.bf16 %v8949, %v8945
      %v9022 = vpack.c.bf16 %v8950, %v8946
      %v9023 = vpack.c.bf16 %v8951, %v8947
      %v9024 = vpack.c.bf16 %v8952, %v8948
      %v9025 = vpack.c.bf16 %v8957, %v8953
      %v9026 = vpack.c.bf16 %v8958, %v8954
      %v9027 = vpack.c.bf16 %v8959, %v8955
      %v9028 = vpack.c.bf16 %v8960, %v8956
      %v9029 = vpack.c.bf16 %v8965, %v8961
      %v9030 = vpack.c.bf16 %v8966, %v8962
      %v9031 = vpack.c.bf16 %v8967, %v8963
      %v9032 = vpack.c.bf16 %v8968, %v8964
      %v9033 = vld [vmem:[%s8] sm:$0xf]
      %v9034 = vld [vmem:[%s8 + $0x4] sm:$0xf]
      %v9035 = vld [vmem:[%s8 + $0x8] sm:$0xf]
      %v9036 = vld [vmem:[%s8 + $0xc] sm:$0xf]
      %v9037 = vld [vmem:[%s8 + $0x10] sm:$0xf]
      %v9038 = vld [vmem:[%s8 + $0x14] sm:$0xf]
      %v9039 = vld [vmem:[%s8 + $0x18] sm:$0xf]
      %v9040 = vld [vmem:[%s8 + $0x1c] sm:$0xf]
      %v9041 = vld [vmem:[%s8 + $0x20] sm:$0xf]
      %v9042 = vld [vmem:[%s8 + $0x24] sm:$0xf]
      %v9043 = vld [vmem:[%s8 + $0x28] sm:$0xf]
      %v9044 = vld [vmem:[%s8 + $0x2c] sm:$0xf]
      %v9045 = vld [vmem:[%s8 + $0x30] sm:$0xf]
      %v9046 = vld [vmem:[%s8 + $0x34] sm:$0xf]
      %v9047 = vld [vmem:[%s8 + $0x38] sm:$0xf]
      %v9048 = vld [vmem:[%s8 + $0x3c] sm:$0xf]
      %v9049 = vld [vmem:[%s8 + $0x40] sm:$0xf]
      %v9050 = vld [vmem:[%s8 + $0x44] sm:$0xf]
      %v9051 = vld [vmem:[%s8 + $0x48] sm:$0xf]
      %v9052 = vld [vmem:[%s8 + $0x4c] sm:$0xf]
      %v9053 = vld [vmem:[%s8 + $0x50] sm:$0xf]
      %v9054 = vld [vmem:[%s8 + $0x54] sm:$0xf]
      %v9055 = vld [vmem:[%s8 + $0x58] sm:$0xf]
      %v9056 = vld [vmem:[%s8 + $0x5c] sm:$0xf]
      %v9057 = vld [vmem:[%s8 + $0x60] sm:$0xf]
      %v9058 = vld [vmem:[%s8 + $0x64] sm:$0xf]
      %v9059 = vld [vmem:[%s8 + $0x68] sm:$0xf]
      %v9060 = vld [vmem:[%s8 + $0x6c] sm:$0xf]
      %v9061 = vld [vmem:[%s8 + $0x70] sm:$0xf]
      %v9062 = vld [vmem:[%s8 + $0x74] sm:$0xf]
      %v9063 = vld [vmem:[%s8 + $0x78] sm:$0xf]
      %v9064 = vld [vmem:[%s8 + $0x7c] sm:$0xf]
      %v9065 = vld [vmem:[%s8 + $0x80] sm:$0xf]
      %v9066 = vld [vmem:[%s8 + $0x84] sm:$0xf]
      %v9067 = vld [vmem:[%s8 + $0x88] sm:$0xf]
      %v9068 = vld [vmem:[%s8 + $0x8c] sm:$0xf]
      %v9069 = vld [vmem:[%s8 + $0x90] sm:$0xf]
      %v9070 = vld [vmem:[%s8 + $0x94] sm:$0xf]
      %v9071 = vld [vmem:[%s8 + $0x98] sm:$0xf]
      %v9072 = vld [vmem:[%s8 + $0x9c] sm:$0xf]
      %v9073 = vld [vmem:[%s8 + $0xa0] sm:$0xf]
      %v9074 = vld [vmem:[%s8 + $0xa4] sm:$0xf]
      %v9075 = vld [vmem:[%s8 + $0xa8] sm:$0xf]
      %v9076 = vld [vmem:[%s8 + $0xac] sm:$0xf]
      %v9077 = vld [vmem:[%s8 + $0xb0] sm:$0xf]
      %v9078 = vld [vmem:[%s8 + $0xb4] sm:$0xf]
      %v9079 = vld [vmem:[%s8 + $0xb8] sm:$0xf]
      %v9080 = vld [vmem:[%s8 + $0xbc] sm:$0xf]
      %v9081 = vld [vmem:[%s8 + $0xc0] sm:$0xf]
      %v9082 = vld [vmem:[%s8 + $0xc4] sm:$0xf]
      %v9083 = vld [vmem:[%s8 + $0xc8] sm:$0xf]
      %v9084 = vld [vmem:[%s8 + $0xcc] sm:$0xf]
      %v9085 = vld [vmem:[%s8 + $0xd0] sm:$0xf]
      %v9086 = vld [vmem:[%s8 + $0xd4] sm:$0xf]
      %v9087 = vld [vmem:[%s8 + $0xd8] sm:$0xf]
      %v9088 = vld [vmem:[%s8 + $0xdc] sm:$0xf]
      %v9089 = vld [vmem:[%s8 + $0xe0] sm:$0xf]
      %v9090 = vld [vmem:[%s8 + $0xe4] sm:$0xf]
      %v9091 = vld [vmem:[%s8 + $0xe8] sm:$0xf]
      %v9092 = vld [vmem:[%s8 + $0xec] sm:$0xf]
      %v9093 = vld [vmem:[%s8 + $0xf0] sm:$0xf]
      %v9094 = vld [vmem:[%s8 + $0xf4] sm:$0xf]
      %v9095 = vld [vmem:[%s8 + $0xf8] sm:$0xf]
      %v9096 = vld [vmem:[%s8 + $0xfc] sm:$0xf]
      %v9097 = vld [vmem:[%s9] sm:$0x1]
      %v9099 = vperm.slane %v9097, 0
      %v9165 = vunpack.c.l.b16 %v9033
      %v9166 = vunpack.c.l.b16 %v9034
      %v9167 = vunpack.c.l.b16 %v9035
      %v9168 = vunpack.c.l.b16 %v9036
      %v9169 = vunpack.c.l.b16 %v9037
      %v9170 = vunpack.c.l.b16 %v9038
      %v9171 = vunpack.c.l.b16 %v9039
      %v9172 = vunpack.c.l.b16 %v9040
      %v9173 = vunpack.c.l.b16 %v9041
      %v9174 = vunpack.c.l.b16 %v9042
      %v9175 = vunpack.c.l.b16 %v9043
      %v9176 = vunpack.c.l.b16 %v9044
      %v9177 = vunpack.c.l.b16 %v9045
      %v9178 = vunpack.c.l.b16 %v9046
      %v9179 = vunpack.c.l.b16 %v9047
      %v9180 = vunpack.c.l.b16 %v9048
      %v9181 = vunpack.c.l.b16 %v9049
      %v9182 = vunpack.c.l.b16 %v9050
      %v9183 = vunpack.c.l.b16 %v9051
      %v9184 = vunpack.c.l.b16 %v9052
      %v9185 = vunpack.c.l.b16 %v9053
      %v9186 = vunpack.c.l.b16 %v9054
      %v9187 = vunpack.c.l.b16 %v9055
      %v9188 = vunpack.c.l.b16 %v9056
      %v9189 = vunpack.c.l.b16 %v9057
      %v9190 = vunpack.c.l.b16 %v9058
      %v9191 = vunpack.c.l.b16 %v9059
      %v9192 = vunpack.c.l.b16 %v9060
      %v9193 = vunpack.c.l.b16 %v9061
      %v9194 = vunpack.c.l.b16 %v9062
      %v9195 = vunpack.c.l.b16 %v9063
      %v9196 = vunpack.c.l.b16 %v9064
      %v9197 = vunpack.c.l.b16 %v9065
      %v9198 = vunpack.c.l.b16 %v9066
      %v9199 = vunpack.c.l.b16 %v9067
      %v9200 = vunpack.c.l.b16 %v9068
      %v9201 = vunpack.c.l.b16 %v9069
      %v9202 = vunpack.c.l.b16 %v9070
      %v9203 = vunpack.c.l.b16 %v9071
      %v9204 = vunpack.c.l.b16 %v9072
      %v9205 = vunpack.c.l.b16 %v9073
      %v9206 = vunpack.c.l.b16 %v9074
      %v9207 = vunpack.c.l.b16 %v9075
      %v9208 = vunpack.c.l.b16 %v9076
      %v9209 = vunpack.c.l.b16 %v9077
      %v9210 = vunpack.c.l.b16 %v9078
      %v9211 = vunpack.c.l.b16 %v9079
      %v9212 = vunpack.c.l.b16 %v9080
      %v9213 = vunpack.c.l.b16 %v9081
      %v9214 = vunpack.c.l.b16 %v9082
      %v9215 = vunpack.c.l.b16 %v9083
      %v9216 = vunpack.c.l.b16 %v9084
      %v9217 = vunpack.c.l.b16 %v9085
      %v9218 = vunpack.c.l.b16 %v9086
      %v9219 = vunpack.c.l.b16 %v9087
      %v9220 = vunpack.c.l.b16 %v9088
      %v9221 = vunpack.c.l.b16 %v9089
      %v9222 = vunpack.c.l.b16 %v9090
      %v9223 = vunpack.c.l.b16 %v9091
      %v9224 = vunpack.c.l.b16 %v9092
      %v9225 = vunpack.c.l.b16 %v9093
      %v9226 = vunpack.c.l.b16 %v9094
      %v9227 = vunpack.c.l.b16 %v9095
      %v9228 = vunpack.c.l.b16 %v9096
      %v9229 = vpack.c.b16 %v9166, %v9165
      %v9230 = vpack.c.b16 %v9168, %v9167
      %v9231 = vpack.c.b16 %v9170, %v9169
      %v9232 = vpack.c.b16 %v9172, %v9171
      %v9233 = vpack.c.b16 %v9174, %v9173
      %v9234 = vpack.c.b16 %v9176, %v9175
      %v9235 = vpack.c.b16 %v9178, %v9177
      %v9236 = vpack.c.b16 %v9180, %v9179
      %v9237 = vpack.c.b16 %v9182, %v9181
      %v9238 = vpack.c.b16 %v9184, %v9183
      %v9239 = vpack.c.b16 %v9186, %v9185
      %v9240 = vpack.c.b16 %v9188, %v9187
      %v9241 = vpack.c.b16 %v9190, %v9189
      %v9242 = vpack.c.b16 %v9192, %v9191
      %v9243 = vpack.c.b16 %v9194, %v9193
      %v9244 = vpack.c.b16 %v9196, %v9195
      %v9245 = vpack.c.b16 %v9198, %v9197
      %v9246 = vpack.c.b16 %v9200, %v9199
      %v9247 = vpack.c.b16 %v9202, %v9201
      %v9248 = vpack.c.b16 %v9204, %v9203
      %v9249 = vpack.c.b16 %v9206, %v9205
      %v9250 = vpack.c.b16 %v9208, %v9207
      %v9251 = vpack.c.b16 %v9210, %v9209
      %v9252 = vpack.c.b16 %v9212, %v9211
      %v9253 = vpack.c.b16 %v9214, %v9213
      %v9254 = vpack.c.b16 %v9216, %v9215
      %v9255 = vpack.c.b16 %v9218, %v9217
      %v9256 = vpack.c.b16 %v9220, %v9219
      %v9257 = vpack.c.b16 %v9222, %v9221
      %v9258 = vpack.c.b16 %v9224, %v9223
      %v9259 = vpack.c.b16 %v9226, %v9225
      %v9260 = vpack.c.b16 %v9228, %v9227
      %9293 = vmatpush.bf16.msra.mxu0 %v9236
      %9294 = vmatpush.bf16.msra.mxu0 %v9235
      %9295 = vmatpush.bf16.msra.mxu0 %v9234
      %9296 = vmatpush.bf16.msra.mxu0 %v9233
      %9297 = vmatpush.bf16.msra.mxu0 %v9232
      %9298 = vmatpush.bf16.msra.mxu0 %v9231
      %9299 = vmatpush.bf16.msra.mxu0 %v9230
      %9300 = vmatpush.bf16.msra.mxu0 %v9229
      %9301 = vmatmul.bf16.gmra.mxu0 %v8969
      %v9302 = vpop.f32.mrf.mxu0
      %v9303 = vadd.f32 %v9099, %v9302
      %v9304 = vpop.f32.mrf.mxu0
      %v9305 = vadd.f32 %v9099, %v9304
      %9306 = vmatmul.bf16.gmra.mxu0 %v8973
      %v9307 = vpop.f32.mrf.mxu0
      %v9308 = vadd.f32 %v9099, %v9307
      %v9309 = vpop.f32.mrf.mxu0
      %v9310 = vadd.f32 %v9099, %v9309
      %9311 = vmatmul.bf16.gmra.mxu0 %v8977
      %v9312 = vpop.f32.mrf.mxu0
      %v9313 = vadd.f32 %v9099, %v9312
      %v9314 = vpop.f32.mrf.mxu0
      %v9315 = vadd.f32 %v9099, %v9314
      %9316 = vmatmul.bf16.gmra.mxu0 %v8981
      %v9317 = vpop.f32.mrf.mxu0
      %v9318 = vadd.f32 %v9099, %v9317
      %v9319 = vpop.f32.mrf.mxu0
      %v9320 = vadd.f32 %v9099, %v9319
      %9321 = vmatmul.bf16.gmra.mxu0 %v8985
      %v9322 = vpop.f32.mrf.mxu0
      %v9323 = vadd.f32 %v9099, %v9322
      %v9324 = vpop.f32.mrf.mxu0
      %v9325 = vadd.f32 %v9099, %v9324
      %9326 = vmatmul.bf16.gmra.mxu0 %v8989
      %v9327 = vpop.f32.mrf.mxu0
      %v9328 = vadd.f32 %v9099, %v9327
      %v9329 = vpop.f32.mrf.mxu0
      %v9330 = vadd.f32 %v9099, %v9329
      %9331 = vmatmul.bf16.gmra.mxu0 %v8993
      %v9332 = vpop.f32.mrf.mxu0
      %v9333 = vadd.f32 %v9099, %v9332
      %v9334 = vpop.f32.mrf.mxu0
      %v9335 = vadd.f32 %v9099, %v9334
      %9336 = vmatmul.bf16.gmra.mxu0 %v8997
      %v9337 = vpop.f32.mrf.mxu0
      %v9338 = vadd.f32 %v9099, %v9337
      %v9339 = vpop.f32.mrf.mxu0
      %v9340 = vadd.f32 %v9099, %v9339
      %9341 = vmatmul.bf16.gmra.mxu0 %v9001
      %v9342 = vpop.f32.mrf.mxu0
      %v9343 = vadd.f32 %v9099, %v9342
      %v9344 = vpop.f32.mrf.mxu0
      %v9345 = vadd.f32 %v9099, %v9344
      %9346 = vmatmul.bf16.gmra.mxu0 %v9005
      %v9347 = vpop.f32.mrf.mxu0
      %v9348 = vadd.f32 %v9099, %v9347
      %v9349 = vpop.f32.mrf.mxu0
      %v9350 = vadd.f32 %v9099, %v9349
      %9351 = vmatmul.bf16.gmra.mxu0 %v9009
      %v9352 = vpop.f32.mrf.mxu0
      %v9353 = vadd.f32 %v9099, %v9352
      %v9354 = vpop.f32.mrf.mxu0
      %v9355 = vadd.f32 %v9099, %v9354
      %9356 = vmatmul.bf16.gmra.mxu0 %v9013
      %v9357 = vpop.f32.mrf.mxu0
      %v9358 = vadd.f32 %v9099, %v9357
      %v9359 = vpop.f32.mrf.mxu0
      %v9360 = vadd.f32 %v9099, %v9359
      %9361 = vmatmul.bf16.gmra.mxu0 %v9017
      %v9362 = vpop.f32.mrf.mxu0
      %v9363 = vadd.f32 %v9099, %v9362
      %v9364 = vpop.f32.mrf.mxu0
      %v9365 = vadd.f32 %v9099, %v9364
      %9366 = vmatmul.bf16.gmra.mxu0 %v9021
      %v9367 = vpop.f32.mrf.mxu0
      %v9368 = vadd.f32 %v9099, %v9367
      %v9369 = vpop.f32.mrf.mxu0
      %v9370 = vadd.f32 %v9099, %v9369
      %9371 = vmatmul.bf16.gmra.mxu0 %v9025
      %v9372 = vpop.f32.mrf.mxu0
      %v9373 = vadd.f32 %v9099, %v9372
      %v9374 = vpop.f32.mrf.mxu0
      %v9375 = vadd.f32 %v9099, %v9374
      %9376 = vmatmul.bf16.gmra.mxu0 %v9029
      %v9377 = vpop.f32.mrf.mxu0
      %v9378 = vadd.f32 %v9099, %v9377
      %v9379 = vpop.f32.mrf.mxu0
      %v9380 = vadd.f32 %v9099, %v9379
      %9381 = vdwg.mxu0
      %9382 = vmatpush.bf16.msra.mxu0 %v9244
      %9383 = vmatpush.bf16.msra.mxu0 %v9243
      %9384 = vmatpush.bf16.msra.mxu0 %v9242
      %9385 = vmatpush.bf16.msra.mxu0 %v9241
      %9386 = vmatpush.bf16.msra.mxu0 %v9240
      %9387 = vmatpush.bf16.msra.mxu0 %v9239
      %9388 = vmatpush.bf16.msra.mxu0 %v9238
      %9389 = vmatpush.bf16.msra.mxu0 %v9237
      %9390 = vmatmul.bf16.gmra.mxu0 %v8970
      %v9391 = vpop.f32.mrf.mxu0
      %v9392 = vadd.f32 %v9303, %v9391
      %v9393 = vpop.f32.mrf.mxu0
      %v9394 = vadd.f32 %v9305, %v9393
      %9395 = vmatmul.bf16.gmra.mxu0 %v8974
      %v9396 = vpop.f32.mrf.mxu0
      %v9397 = vadd.f32 %v9308, %v9396
      %v9398 = vpop.f32.mrf.mxu0
      %v9399 = vadd.f32 %v9310, %v9398
      %9400 = vmatmul.bf16.gmra.mxu0 %v8978
      %v9401 = vpop.f32.mrf.mxu0
      %v9402 = vadd.f32 %v9313, %v9401
      %v9403 = vpop.f32.mrf.mxu0
      %v9404 = vadd.f32 %v9315, %v9403
      %9405 = vmatmul.bf16.gmra.mxu0 %v8982
      %v9406 = vpop.f32.mrf.mxu0
      %v9407 = vadd.f32 %v9318, %v9406
      %v9408 = vpop.f32.mrf.mxu0
      %v9409 = vadd.f32 %v9320, %v9408
      %9410 = vmatmul.bf16.gmra.mxu0 %v8986
      %v9411 = vpop.f32.mrf.mxu0
      %v9412 = vadd.f32 %v9323, %v9411
      %v9413 = vpop.f32.mrf.mxu0
      %v9414 = vadd.f32 %v9325, %v9413
      %9415 = vmatmul.bf16.gmra.mxu0 %v8990
      %v9416 = vpop.f32.mrf.mxu0
      %v9417 = vadd.f32 %v9328, %v9416
      %v9418 = vpop.f32.mrf.mxu0
      %v9419 = vadd.f32 %v9330, %v9418
      %9420 = vmatmul.bf16.gmra.mxu0 %v8994
      %v9421 = vpop.f32.mrf.mxu0
      %v9422 = vadd.f32 %v9333, %v9421
      %v9423 = vpop.f32.mrf.mxu0
      %v9424 = vadd.f32 %v9335, %v9423
      %9425 = vmatmul.bf16.gmra.mxu0 %v8998
      %v9426 = vpop.f32.mrf.mxu0
      %v9427 = vadd.f32 %v9338, %v9426
      %v9428 = vpop.f32.mrf.mxu0
      %v9429 = vadd.f32 %v9340, %v9428
      %9430 = vmatmul.bf16.gmra.mxu0 %v9002
      %v9431 = vpop.f32.mrf.mxu0
      %v9432 = vadd.f32 %v9343, %v9431
      %v9433 = vpop.f32.mrf.mxu0
      %v9434 = vadd.f32 %v9345, %v9433
      %9435 = vmatmul.bf16.gmra.mxu0 %v9006
      %v9436 = vpop.f32.mrf.mxu0
      %v9437 = vadd.f32 %v9348, %v9436
      %v9438 = vpop.f32.mrf.mxu0
      %v9439 = vadd.f32 %v9350, %v9438
      %9440 = vmatmul.bf16.gmra.mxu0 %v9010
      %v9441 = vpop.f32.mrf.mxu0
      %v9442 = vadd.f32 %v9353, %v9441
      %v9443 = vpop.f32.mrf.mxu0
      %v9444 = vadd.f32 %v9355, %v9443
      %9445 = vmatmul.bf16.gmra.mxu0 %v9014
      %v9446 = vpop.f32.mrf.mxu0
      %v9447 = vadd.f32 %v9358, %v9446
      %v9448 = vpop.f32.mrf.mxu0
      %v9449 = vadd.f32 %v9360, %v9448
      %9450 = vmatmul.bf16.gmra.mxu0 %v9018
      %v9451 = vpop.f32.mrf.mxu0
      %v9452 = vadd.f32 %v9363, %v9451
      %v9453 = vpop.f32.mrf.mxu0
      %v9454 = vadd.f32 %v9365, %v9453
      %9455 = vmatmul.bf16.gmra.mxu0 %v9022
      %v9456 = vpop.f32.mrf.mxu0
      %v9457 = vadd.f32 %v9368, %v9456
      %v9458 = vpop.f32.mrf.mxu0
      %v9459 = vadd.f32 %v9370, %v9458
      %9460 = vmatmul.bf16.gmra.mxu0 %v9026
      %v9461 = vpop.f32.mrf.mxu0
      %v9462 = vadd.f32 %v9373, %v9461
      %v9463 = vpop.f32.mrf.mxu0
      %v9464 = vadd.f32 %v9375, %v9463
      %9465 = vmatmul.bf16.gmra.mxu0 %v9030
      %v9466 = vpop.f32.mrf.mxu0
      %v9467 = vadd.f32 %v9378, %v9466
      %v9468 = vpop.f32.mrf.mxu0
      %v9469 = vadd.f32 %v9380, %v9468
      %9470 = vdwg.mxu0
      %9471 = vmatpush.bf16.msra.mxu0 %v9252
      %9472 = vmatpush.bf16.msra.mxu0 %v9251
      %9473 = vmatpush.bf16.msra.mxu0 %v9250
      %9474 = vmatpush.bf16.msra.mxu0 %v9249
      %9475 = vmatpush.bf16.msra.mxu0 %v9248
      %9476 = vmatpush.bf16.msra.mxu0 %v9247
      %9477 = vmatpush.bf16.msra.mxu0 %v9246
      %9478 = vmatpush.bf16.msra.mxu0 %v9245
      %9479 = vmatmul.bf16.gmra.mxu0 %v8971
      %v9480 = vpop.f32.mrf.mxu0
      %v9481 = vadd.f32 %v9392, %v9480
      %v9482 = vpop.f32.mrf.mxu0
      %v9483 = vadd.f32 %v9394, %v9482
      %9484 = vmatmul.bf16.gmra.mxu0 %v8975
      %v9485 = vpop.f32.mrf.mxu0
      %v9486 = vadd.f32 %v9397, %v9485
      %v9487 = vpop.f32.mrf.mxu0
      %v9488 = vadd.f32 %v9399, %v9487
      %9489 = vmatmul.bf16.gmra.mxu0 %v8979
      %v9490 = vpop.f32.mrf.mxu0
      %v9491 = vadd.f32 %v9402, %v9490
      %v9492 = vpop.f32.mrf.mxu0
      %v9493 = vadd.f32 %v9404, %v9492
      %9494 = vmatmul.bf16.gmra.mxu0 %v8983
      %v9495 = vpop.f32.mrf.mxu0
      %v9496 = vadd.f32 %v9407, %v9495
      %v9497 = vpop.f32.mrf.mxu0
      %v9498 = vadd.f32 %v9409, %v9497
      %9499 = vmatmul.bf16.gmra.mxu0 %v8987
      %v9500 = vpop.f32.mrf.mxu0
      %v9501 = vadd.f32 %v9412, %v9500
      %v9502 = vpop.f32.mrf.mxu0
      %v9503 = vadd.f32 %v9414, %v9502
      %9504 = vmatmul.bf16.gmra.mxu0 %v8991
      %v9505 = vpop.f32.mrf.mxu0
      %v9506 = vadd.f32 %v9417, %v9505
      %v9507 = vpop.f32.mrf.mxu0
      %v9508 = vadd.f32 %v9419, %v9507
      %9509 = vmatmul.bf16.gmra.mxu0 %v8995
      %v9510 = vpop.f32.mrf.mxu0
      %v9511 = vadd.f32 %v9422, %v9510
      %v9512 = vpop.f32.mrf.mxu0
      %v9513 = vadd.f32 %v9424, %v9512
      %9514 = vmatmul.bf16.gmra.mxu0 %v8999
      %v9515 = vpop.f32.mrf.mxu0
      %v9516 = vadd.f32 %v9427, %v9515
      %v9517 = vpop.f32.mrf.mxu0
      %v9518 = vadd.f32 %v9429, %v9517
      %9519 = vmatmul.bf16.gmra.mxu0 %v9003
      %v9520 = vpop.f32.mrf.mxu0
      %v9521 = vadd.f32 %v9432, %v9520
      %v9522 = vpop.f32.mrf.mxu0
      %v9523 = vadd.f32 %v9434, %v9522
      %9524 = vmatmul.bf16.gmra.mxu0 %v9007
      %v9525 = vpop.f32.mrf.mxu0
      %v9526 = vadd.f32 %v9437, %v9525
      %v9527 = vpop.f32.mrf.mxu0
      %v9528 = vadd.f32 %v9439, %v9527
      %9529 = vmatmul.bf16.gmra.mxu0 %v9011
      %v9530 = vpop.f32.mrf.mxu0
      %v9531 = vadd.f32 %v9442, %v9530
      %v9532 = vpop.f32.mrf.mxu0
      %v9533 = vadd.f32 %v9444, %v9532
      %9534 = vmatmul.bf16.gmra.mxu0 %v9015
      %v9535 = vpop.f32.mrf.mxu0
      %v9536 = vadd.f32 %v9447, %v9535
      %v9537 = vpop.f32.mrf.mxu0
      %v9538 = vadd.f32 %v9449, %v9537
      %9539 = vmatmul.bf16.gmra.mxu0 %v9019
      %v9540 = vpop.f32.mrf.mxu0
      %v9541 = vadd.f32 %v9452, %v9540
      %v9542 = vpop.f32.mrf.mxu0
      %v9543 = vadd.f32 %v9454, %v9542
      %9544 = vmatmul.bf16.gmra.mxu0 %v9023
      %v9545 = vpop.f32.mrf.mxu0
      %v9546 = vadd.f32 %v9457, %v9545
      %v9547 = vpop.f32.mrf.mxu0
      %v9548 = vadd.f32 %v9459, %v9547
      %9549 = vmatmul.bf16.gmra.mxu0 %v9027
      %v9550 = vpop.f32.mrf.mxu0
      %v9551 = vadd.f32 %v9462, %v9550
      %v9552 = vpop.f32.mrf.mxu0
      %v9553 = vadd.f32 %v9464, %v9552
      %9554 = vmatmul.bf16.gmra.mxu0 %v9031
      %v9555 = vpop.f32.mrf.mxu0
      %v9556 = vadd.f32 %v9467, %v9555
      %v9557 = vpop.f32.mrf.mxu0
      %v9558 = vadd.f32 %v9469, %v9557
      %9559 = vdwg.mxu0
      %9560 = vmatpush.bf16.msra.mxu0 %v9260
      %9561 = vmatpush.bf16.msra.mxu0 %v9259
      %9562 = vmatpush.bf16.msra.mxu0 %v9258
      %9563 = vmatpush.bf16.msra.mxu0 %v9257
      %9564 = vmatpush.bf16.msra.mxu0 %v9256
      %9565 = vmatpush.bf16.msra.mxu0 %v9255
      %9566 = vmatpush.bf16.msra.mxu0 %v9254
      %9567 = vmatpush.bf16.msra.mxu0 %v9253
      %9568 = vmatmul.bf16.gmra.mxu0 %v8972
      %v9569 = vpop.f32.mrf.mxu0
      %v9570 = vadd.f32 %v9481, %v9569
      %v9571 = vpop.f32.mrf.mxu0
      %v9572 = vadd.f32 %v9483, %v9571
      %9573 = vmatmul.bf16.gmra.mxu0 %v8976
      %v9574 = vpop.f32.mrf.mxu0
      %v9575 = vadd.f32 %v9486, %v9574
      %v9576 = vpop.f32.mrf.mxu0
      %v9577 = vadd.f32 %v9488, %v9576
      %9578 = vmatmul.bf16.gmra.mxu0 %v8980
      %v9579 = vpop.f32.mrf.mxu0
      %v9580 = vadd.f32 %v9491, %v9579
      %v9581 = vpop.f32.mrf.mxu0
      %v9582 = vadd.f32 %v9493, %v9581
      %9583 = vmatmul.bf16.gmra.mxu0 %v8984
      %v9584 = vpop.f32.mrf.mxu0
      %v9585 = vadd.f32 %v9496, %v9584
      %v9586 = vpop.f32.mrf.mxu0
      %v9587 = vadd.f32 %v9498, %v9586
      %9588 = vmatmul.bf16.gmra.mxu0 %v8988
      %v9589 = vpop.f32.mrf.mxu0
      %v9590 = vadd.f32 %v9501, %v9589
      %v9591 = vpop.f32.mrf.mxu0
      %v9592 = vadd.f32 %v9503, %v9591
      %9593 = vmatmul.bf16.gmra.mxu0 %v8992
      %v9594 = vpop.f32.mrf.mxu0
      %v9595 = vadd.f32 %v9506, %v9594
      %v9596 = vpop.f32.mrf.mxu0
      %v9597 = vadd.f32 %v9508, %v9596
      %9598 = vmatmul.bf16.gmra.mxu0 %v8996
      %v9599 = vpop.f32.mrf.mxu0
      %v9600 = vadd.f32 %v9511, %v9599
      %v9601 = vpop.f32.mrf.mxu0
      %v9602 = vadd.f32 %v9513, %v9601
      %9603 = vmatmul.bf16.gmra.mxu0 %v9000
      %v9604 = vpop.f32.mrf.mxu0
      %v9605 = vadd.f32 %v9516, %v9604
      %v9606 = vpop.f32.mrf.mxu0
      %v9607 = vadd.f32 %v9518, %v9606
      %9608 = vmatmul.bf16.gmra.mxu0 %v9004
      %v9609 = vpop.f32.mrf.mxu0
      %v9610 = vadd.f32 %v9521, %v9609
      %v9611 = vpop.f32.mrf.mxu0
      %v9612 = vadd.f32 %v9523, %v9611
      %9613 = vmatmul.bf16.gmra.mxu0 %v9008
      %v9614 = vpop.f32.mrf.mxu0
      %v9615 = vadd.f32 %v9526, %v9614
      %v9616 = vpop.f32.mrf.mxu0
      %v9617 = vadd.f32 %v9528, %v9616
      %9618 = vmatmul.bf16.gmra.mxu0 %v9012
      %v9619 = vpop.f32.mrf.mxu0
      %v9620 = vadd.f32 %v9531, %v9619
      %v9621 = vpop.f32.mrf.mxu0
      %v9622 = vadd.f32 %v9533, %v9621
      %9623 = vmatmul.bf16.gmra.mxu0 %v9016
      %v9624 = vpop.f32.mrf.mxu0
      %v9625 = vadd.f32 %v9536, %v9624
      %v9626 = vpop.f32.mrf.mxu0
      %v9627 = vadd.f32 %v9538, %v9626
      %9628 = vmatmul.bf16.gmra.mxu0 %v9020
      %v9629 = vpop.f32.mrf.mxu0
      %v9630 = vadd.f32 %v9541, %v9629
      %v9631 = vpop.f32.mrf.mxu0
      %v9632 = vadd.f32 %v9543, %v9631
      %9633 = vmatmul.bf16.gmra.mxu0 %v9024
      %v9634 = vpop.f32.mrf.mxu0
      %v9635 = vadd.f32 %v9546, %v9634
      %v9636 = vpop.f32.mrf.mxu0
      %v9637 = vadd.f32 %v9548, %v9636
      %9638 = vmatmul.bf16.gmra.mxu0 %v9028
      %v9639 = vpop.f32.mrf.mxu0
      %v9640 = vadd.f32 %v9551, %v9639
      %v9641 = vpop.f32.mrf.mxu0
      %v9642 = vadd.f32 %v9553, %v9641
      %9643 = vmatmul.bf16.gmra.mxu0 %v9032
      %v9644 = vpop.f32.mrf.mxu0
      %v9645 = vadd.f32 %v9556, %v9644
      %v9646 = vpop.f32.mrf.mxu0
      %v9647 = vadd.f32 %v9558, %v9646
      %9648 = vdwg.mxu0
      %v9649 = vadd.f32 %v6571, %v9570
      %v9650 = vadd.f32 %v6572, %v9572
      %v9651 = vadd.f32 %v6573, %v9575
      %v9652 = vadd.f32 %v6574, %v9577
      %v9653 = vadd.f32 %v6575, %v9580
      %v9654 = vadd.f32 %v6576, %v9582
      %v9655 = vadd.f32 %v6577, %v9585
      %v9656 = vadd.f32 %v6578, %v9587
      %v9657 = vadd.f32 %v6579, %v9590
      %v9658 = vadd.f32 %v6580, %v9592
      %v9659 = vadd.f32 %v6581, %v9595
      %v9660 = vadd.f32 %v6582, %v9597
      %v9661 = vadd.f32 %v6583, %v9600
      %v9662 = vadd.f32 %v6584, %v9602
      %v9663 = vadd.f32 %v6585, %v9605
      %v9664 = vadd.f32 %v6586, %v9607
      %v9665 = vadd.f32 %v6587, %v9610
      %v9666 = vadd.f32 %v6588, %v9612
      %v9667 = vadd.f32 %v6589, %v9615
      %v9668 = vadd.f32 %v6590, %v9617
      %v9669 = vadd.f32 %v6591, %v9620
      %v9670 = vadd.f32 %v6592, %v9622
      %v9671 = vadd.f32 %v6593, %v9625
      %v9672 = vadd.f32 %v6594, %v9627
      %v9673 = vadd.f32 %v6595, %v9630
      %v9674 = vadd.f32 %v6596, %v9632
      %v9675 = vadd.f32 %v6597, %v9635
      %v9676 = vadd.f32 %v6598, %v9637
      %v9677 = vadd.f32 %v6599, %v9640
      %v9678 = vadd.f32 %v6600, %v9642
      %v9679 = vadd.f32 %v6601, %v9645
      %v9680 = vadd.f32 %v6602, %v9647
      %9681 = vst [vmem:[%s366] sm:$0xff] %v9649
      %9682 = vst [vmem:[%s366 + $0x8] sm:$0xff] %v9650
      %9683 = vst [vmem:[%s366 + $0x10] sm:$0xff] %v9651
      %9684 = vst [vmem:[%s366 + $0x18] sm:$0xff] %v9652
      %9685 = vst [vmem:[%s366 + $0x20] sm:$0xff] %v9653
      %9686 = vst [vmem:[%s366 + $0x28] sm:$0xff] %v9654
      %9687 = vst [vmem:[%s366 + $0x30] sm:$0xff] %v9655
      %9688 = vst [vmem:[%s366 + $0x38] sm:$0xff] %v9656
      %9689 = vst [vmem:[%s366 + $0x40] sm:$0xff] %v9657
      %9690 = vst [vmem:[%s366 + $0x48] sm:$0xff] %v9658
      %9691 = vst [vmem:[%s366 + $0x50] sm:$0xff] %v9659
      %9692 = vst [vmem:[%s366 + $0x58] sm:$0xff] %v9660
      %9693 = vst [vmem:[%s366 + $0x60] sm:$0xff] %v9661
      %9694 = vst [vmem:[%s366 + $0x68] sm:$0xff] %v9662
      %9695 = vst [vmem:[%s366 + $0x70] sm:$0xff] %v9663
      %9696 = vst [vmem:[%s366 + $0x78] sm:$0xff] %v9664
      %9697 = vst [vmem:[%s366 + $0x80] sm:$0xff] %v9665
      %9698 = vst [vmem:[%s366 + $0x88] sm:$0xff] %v9666
      %9699 = vst [vmem:[%s366 + $0x90] sm:$0xff] %v9667
      %9700 = vst [vmem:[%s366 + $0x98] sm:$0xff] %v9668
      %9701 = vst [vmem:[%s366 + $0xa0] sm:$0xff] %v9669
      %9702 = vst [vmem:[%s366 + $0xa8] sm:$0xff] %v9670
      %9703 = vst [vmem:[%s366 + $0xb0] sm:$0xff] %v9671
      %9704 = vst [vmem:[%s366 + $0xb8] sm:$0xff] %v9672
      %9705 = vst [vmem:[%s366 + $0xc0] sm:$0xff] %v9673
      %9706 = vst [vmem:[%s366 + $0xc8] sm:$0xff] %v9674
      %9707 = vst [vmem:[%s366 + $0xd0] sm:$0xff] %v9675
      %9708 = vst [vmem:[%s366 + $0xd8] sm:$0xff] %v9676
      %9709 = vst [vmem:[%s366 + $0xe0] sm:$0xff] %v9677
      %9710 = vst [vmem:[%s366 + $0xe8] sm:$0xff] %v9678
      %9711 = vst [vmem:[%s366 + $0xf0] sm:$0xff] %v9679
      %9712 = vst [vmem:[%s366 + $0xf8] sm:$0xff] %v9680
      %s9713 = smul.u32 4, %s21
      %p9714 = scmp.lt.s32.totalorder %s9713, 15
      %s9715 = scalar_select %p9714, %s9713, 15
      %s9716 = smul.addr %s9715, 8
      %s9717 = smul.addr %s9716, 8
      %s9718 = scalar_lea.vmem %s10, %s9717
      // Predicated region
      $region61: #{swin_block_forward.1} parent=59 // pred_check
        %p9719 = pneg %p254
      $region62: #{swin_block_forward.1} parent=59 // pred_check_branch
        %9721 = sbr.rel (%p9719) target = $region64
      $region63: #{swin_block_forward.1} parent=59 // pred_region
        %s9722 = smul.u32 4, %s21
      $region64: #{swin_block_forward.1} parent=59 // pred_fallthru
        _
    $region60: #{swin_block_forward.1} parent=5 // pred_fallthru
      _
    %p9723 = scmp.le.s32.totalorder 2, %s16
    // Predicated region
    $region65: #{swin_block_forward.1} parent=5 // pred_check
      %p9724 = pneg %p9723
    $region66: #{swin_block_forward.1} parent=5 // pred_check_branch
      %9726 = sbr.rel (%p9724) target = $region68
    $region67: #{swin_block_forward.1} parent=5 // pred_region
      %s9727 = ssub.s32 %s16, 2
      // Predicated region
      $region69: #{swin_block_forward.1} parent=67 // pred_check
        %p9728 = pneg %p260
      $region70: #{swin_block_forward.1} parent=67 // pred_check_branch
        %9730 = sbr.rel (%p9728) target = $region72
      $region71: #{swin_block_forward.1} parent=67 // pred_region
        %s9731 = smul.u32 4, %s22
        %p9732 = scmp.lt.s32.totalorder %s9731, 15
        %s9733 = scalar_select %p9732, %s9731, 15
        %s9734 = smul.addr %s9733, 8
        %s9735 = smul.addr %s9734, 8
        %s9736 = scalar_lea.vmem %s10, %s9735
      $region72: #{swin_block_forward.1} parent=67 // pred_fallthru
        _
    $region68: #{swin_block_forward.1} parent=5 // pred_fallthru
      _
  $region6: #{swin_block_forward.1} parent=0 // loop_footer
    %s20 = sadd.s32 1, %s16
  $region7: #{swin_block_forward.1} parent=0 // loop_footer_branch
    %15 = sbr.rel target = $region3
  $region8: #{swin_block_forward.1} parent=0 // loop_exit
    _

</llo_original>
